<compile_context>
chip_gen: v7x
topology: tpu7x:2x2x1
jax: 0.10.0
libtpu: 0.0.40
codegen_flags: <defaults>
</compile_context>

<pallas_src>
import functools

import jax
import jax.numpy as jnp
from jax.experimental import pallas as pl
from jax.experimental.pallas import tpu as pltpu


# --------------------------- in-kernel helpers ------------------------------ #

def _conv3x3_relu_into(out_ref, read_tap, w_ref, b_ref):
    """out_ref[r, :] = relu(bias + sum_{dy,dx} tap(dy,dx)[r, :] @ w[dy, dx])."""
    first = True
    for dy in range(3):
        for dx in range(3):
            t = jnp.dot(read_tap(dy, dx), w_ref[dy, dx],
                        preferred_element_type=jnp.float32)
            if first:
                out_ref[...] = t
                first = False
            else:
                out_ref[...] += t
    out_ref[...] = jnp.maximum(out_ref[...] + b_ref[...], 0.0)


def _pool_row(src_ref, top, bot, wo):
    """One output row of a 2x2 max-pool: 4 stride-2 reads + 3 elementwise max."""
    return jnp.maximum(
        jnp.maximum(src_ref[pl.ds(top, wo, stride=2), :],
                    src_ref[pl.ds(top + 1, wo, stride=2), :]),
        jnp.maximum(src_ref[pl.ds(bot, wo, stride=2), :],
                    src_ref[pl.ds(bot + 1, wo, stride=2), :]))


def _pool2x2_into_padded(src_ref, pw_src, h, w, dst_ref, pw_dst):
    """Max-pool the valid region of src and store it into dst's 1-px interior."""
    ho, wo = h // 2, w // 2
    for r in range(ho):
        row = _pool_row(src_ref, 2 * r * pw_src, (2 * r + 1) * pw_src, wo)
        dst_ref[pl.ds((r + 1) * pw_dst + 1, wo), :] = row


def _pool2x2_then_fc1(src_ref, pw_src, h, w, f1w_ref):
    """Max-pool the last conv output and immediately contract with fc1.

    The contraction runs over (pooled position, channel); with the tiny
    post-pool grid (ho*wo positions) a short static loop of (1,C)@(C,128)
    matmuls is cheaper/safer than an in-kernel sublane->lane reshape.
    """
    ho, wo = h // 2, w // 2
    acc = jnp.zeros((1, f1w_ref.shape[-1]), jnp.float32)
    for r in range(ho):
        row = _pool_row(src_ref, 2 * r * pw_src, (2 * r + 1) * pw_src, wo)
        for c in range(wo):
            acc = acc + jnp.dot(row[c:c + 1, :], f1w_ref[r * wo + c],
                                preferred_element_type=jnp.float32)
    return acc


# ------------------------------ fused kernel -------------------------------- #

def _net_kernel(spatial, xin_ref,
                c1w_ref, c1b_ref, c2w_ref, c2b_ref, c3w_ref, c3b_ref,
                f1w_ref, f1b_ref, f2w_ref, f2b_ref,
                o_ref,
                cout1, pin2, cout2, pin3, cout3):
    h1, w1 = spatial
    h2, w2 = h1 // 2, w1 // 2
    h3, w3 = h2 // 2, w2 // 2
    pw1, pw2, pw3 = w1 + 2, w2 + 2, w3 + 2

    # conv2/conv3 read zero-padded inputs from scratch: clear halo + overrun
    # tail (the valid interior is fully overwritten by the pool stores below).
    pin2[...] = jnp.zeros_like(pin2)
    pin3[...] = jnp.zeros_like(pin3)

    # conv1 (3->32) + ReLU over the whole padded grid, then pool -> pin2 interior
    _conv3x3_relu_into(
        cout1,
        lambda dy, dx: xin_ref[0, pl.ds(dy * pw1 + dx, cout1.shape[0]), :],
        c1w_ref, c1b_ref)
    _pool2x2_into_padded(cout1, pw1, h1, w1, pin2, pw2)

    # conv2 (32->64) + ReLU, then pool -> pin3 interior
    _conv3x3_relu_into(
        cout2,
        lambda dy, dx: pin2[pl.ds(dy * pw2 + dx, cout2.shape[0]), :],
        c2w_ref, c2b_ref)
    _pool2x2_into_padded(cout2, pw2, h2, w2, pin3, pw3)

    # conv3 (64->128) + ReLU
    _conv3x3_relu_into(
        cout3,
        lambda dy, dx: pin3[pl.ds(dy * pw3 + dx, cout3.shape[0]), :],
        c3w_ref, c3b_ref)

    # pool3 + fc1 + ReLU + fc2 + sigmoid (all tiny, stays in VMEM)
    feat = _pool2x2_then_fc1(cout3, pw3, h3, w3, f1w_ref)
    feat = jnp.maximum(feat + f1b_ref[...], 0.0)                        # (1,128)
    y = jnp.sum(feat * f2w_ref[...], axis=1, keepdims=True) + f2b_ref[...]
    o_ref[0] = 1.0 / (1.0 + jnp.exp(-y))                                # sigmoid


# --------------------------------- wrapper ---------------------------------- #

def _const_map(ndim):
    return lambda b: (0,) * ndim


@jax.jit
def net_forward(x_nchw, params):
    """Forward pass of `Net` for NCHW float32 input, fully fused on-TPU."""
    x = jnp.transpose(x_nchw, (0, 2, 3, 1)).astype(jnp.float32)        # NHWC
    B, H, W, Cin = x.shape
    assert H % 8 == 0 and W % 8 == 0, "spatial dims must be divisible by 8"
    H2, W2, H3, W3 = H // 2, W // 2, H // 4, W // 4
    ph1, pw1 = H + 2, W + 2
    rows1 = ph1 * pw1 + 2 * pw1 + 2          # padded image + tap-overrun tail
    rows2 = (H2 + 2) * (W2 + 2) + 2 * (W2 + 2) + 2
    rows3 = (H3 + 2) * (W3 + 2) + 2 * (W3 + 2) + 2

    # zero-pad spatially (padding=1), flatten rows, append an overrun tail so
    # every shifted 3x3-tap read inside the kernel stays in bounds.
    xp = jnp.pad(x, ((0, 0), (1, 1), (1, 1), (0, 0)))
    xflat = jnp.pad(xp.reshape(B, ph1 * pw1, Cin),
                    ((0, 0), (0, 2 * pw1 + 2), (0, 0)))

    args = (xflat,
            params["conv1_w"], params["conv1_b"],
            params["conv2_w"], params["conv2_b"],
            params["conv3_w"], params["conv3_b"],
            params["fc1_w"], params["fc1_b"],
            params["fc2_w"], params["fc2_b"])

    in_specs = [pl.BlockSpec((1, rows1, Cin), lambda b: (b, 0, 0))]
    in_specs += [pl.BlockSpec(a.shape, _const_map(a.ndim)) for a in args[1:]]

    out = pl.pallas_call(
        functools.partial(_net_kernel, (H, W)),
        out_shape=jax.ShapeDtypeStruct((B, 1, 1), jnp.float32),
        grid=(B,),
        in_specs=in_specs,
        out_specs=pl.BlockSpec((1, 1, 1), lambda b: (b, 0, 0)),
        scratch_shapes=[
            pltpu.VMEM((ph1 * pw1, 32), jnp.float32),             # conv1 out
            pltpu.VMEM((rows2, 32), jnp.float32),                 # padded conv2 in
            pltpu.VMEM(((H2 + 2) * (W2 + 2), 64), jnp.float32),   # conv2 out
            pltpu.VMEM((rows3, 64), jnp.float32),                 # padded conv3 in
            pltpu.VMEM(((H3 + 2) * (W3 + 2), 128), jnp.float32),  # conv3 out
        ],
        compiler_params=pltpu.CompilerParams(
            dimension_semantics=("parallel",)),   # v7x: batch across 2 TCs
    )(*args)
    return out.reshape(B, 1)


# ------------------------------ params / reference -------------------------- #

def init_params(image_size=(16, 16)):
    """Random weights in the layouts consumed by the kernel.

    Mapping from PyTorch `Net` parameters:
      convN_w: convN.weight (Cout,Cin,3,3) -> transpose(2,3,1,0) = (3,3,Cin,Cout)
      convN_b: convN.bias (Cout,)          -> reshape (1,Cout)
      fc1_w:   fc1.weight (128, 128*h8*w8) -> .reshape(128,128,h8,w8)
                 .transpose(2,3,1,0).reshape(h8*w8,128,128)
               (the NCHW-flatten permutation is folded into the weight so the
                kernel consumes the NHWC pool3 output directly)
      fc1_b: (128,)->(1,128); fc2_w: fc2.weight (1,128) as-is; fc2_b: (1,)->(1,1)
    """
    key = jax.random.PRNGKey(0)
    ks = jax.random.split(key, 10)
    H, W = image_size
    hw = (H // 8) * (W // 8)

    def rnd(k, shape, fan_in):
        return jax.random.normal(k, shape, jnp.float32) / jnp.sqrt(fan_in)

    return dict(
        conv1_w=rnd(ks[0], (3, 3, 3, 32), 3 * 9),
        conv1_b=rnd(ks[1], (1, 32), 3 * 9),
        conv2_w=rnd(ks[2], (3, 3, 32, 64), 32 * 9),
        conv2_b=rnd(ks[3], (1, 64), 32 * 9),
        conv3_w=rnd(ks[4], (3, 3, 64, 128), 64 * 9),
        conv3_b=rnd(ks[5], (1, 128), 64 * 9),
        fc1_w=rnd(ks[6], (hw, 128, 128), 128 * hw),
        fc1_b=rnd(ks[7], (1, 128), 128 * hw),
        fc2_w=rnd(ks[8], (1, 128), 128),
        fc2_b=rnd(ks[9], (1, 1), 128),
    )


def _reference_forward(x_nchw, params):
    """Pure-JAX/XLA reference with identical weight layouts (correctness check)."""
    x = jnp.transpose(x_nchw, (0, 2, 3, 1)).astype(jnp.float32)

    def conv_relu(z, w, b):
        z = jax.lax.conv_general_dilated(
            z, w, window_strides=(1, 1), padding="SAME",
            dimension_numbers=("NHWC", "HWIO", "NHWC"))
        return jax.nn.relu(z + b.reshape(1, 1, 1, -1))

    def pool(z):
        return jax.lax.reduce_window(z, -jnp.inf, jax.lax.max,
                                     (1, 2, 2, 1), (1, 2, 2, 1), "VALID")

    x = pool(conv_relu(x, params["conv1_w"], params["conv1_b"]))
    x = pool(conv_relu(x, params["conv2_w"], params["conv2_b"]))
    x = pool(conv_relu(x, params["conv3_w"], params["conv3_b"]))
    B, hp, wp, c = x.shape
    feat = x.reshape(B, hp * wp, c)
    h = jax.nn.relu(jnp.einsum("bkc,kco->bo", feat, params["fc1_w"])
                    + params["fc1_b"])
    y = jnp.sum(h * params["fc2_w"], axis=1, keepdims=True) + params["fc2_b"]
    return jax.nn.sigmoid(y)


if __name__ == "__main__":
    # Small shapes consistent with the module: batch=2, channels=3, spatial=16
    # (divisible by 8 so the three 2x2 pools and the fc1 sizing line up).
    # TODO(synk): the original spec uses 250x250; its activations (~32 MB per
    # conv1 slab) do not fit this fully-VMEM-resident fusion and would need a
    # row-strip-tiled variant.
    image_size = (16, 16)
    params = init_params(image_size)
    x = jax.random.normal(jax.random.PRNGKey(0),
                          (2, 3, image_size[0], image_size[1]), jnp.float32)

    out = jax.block_until_ready(net_forward(x, params))
    assert out.shape == (2, 1) and out.dtype == jnp.float32
    assert bool(jnp.all(jnp.isfinite(out)))
    assert bool(jnp.all((out >= 0.0) & (out <= 1.0)))

    # numerical check against the XLA reference (loose tol: both paths use the
    # TPU matmul units with reduced-precision internal passes).
    ref = jax.block_until_ready(_reference_forward(x, params))
    assert float(jnp.max(jnp.abs(out - ref))) < 5e-2

    print("KERNEL_OK")
</pallas_src>

<mosaic_0001>
module attributes {stable_mosaic.version = 11 : i64} {
  func.func @_net_kernel(%arg0: i32, %arg1: memref<1x362x3xf32, #tpu.memory_space<vmem>>, %arg2: memref<3x3x3x32xf32, #tpu.memory_space<vmem>>, %arg3: memref<1x32xf32, #tpu.memory_space<vmem>>, %arg4: memref<3x3x32x64xf32, #tpu.memory_space<vmem>>, %arg5: memref<1x64xf32, #tpu.memory_space<vmem>>, %arg6: memref<3x3x64x128xf32, #tpu.memory_space<vmem>>, %arg7: memref<1x128xf32, #tpu.memory_space<vmem>>, %arg8: memref<4x128x128xf32, #tpu.memory_space<vmem>>, %arg9: memref<1x128xf32, #tpu.memory_space<vmem>>, %arg10: memref<1x128xf32, #tpu.memory_space<vmem>>, %arg11: memref<1x1xf32, #tpu.memory_space<vmem>>, %arg12: memref<1x1x1xf32, #tpu.memory_space<vmem>>, %arg13: memref<324x32xf32, #tpu.memory_space<vmem>>, %arg14: memref<122x32xf32, #tpu.memory_space<vmem>>, %arg15: memref<100x64xf32, #tpu.memory_space<vmem>>, %arg16: memref<50x64xf32, #tpu.memory_space<vmem>>, %arg17: memref<36x128xf32, #tpu.memory_space<vmem>>) attributes {dimension_semantics = [#tpu.dimension_semantics<parallel>], iteration_bounds = array<i64: 2>, scalar_prefetch = 0 : i64, scratch_operands = 5 : i64, tpu.core_type = #tpu.core_type<tc>, window_params = [{transform_indices = @transform_0, window_bounds = array<i64: 1, 362, 3>}, {pipeline_mode = #tpu.pipeline_mode<synchronous>, transform_indices = @transform_1, window_bounds = array<i64: 3, 3, 3, 32>}, {pipeline_mode = #tpu.pipeline_mode<synchronous>, transform_indices = @transform_2, window_bounds = array<i64: 1, 32>}, {pipeline_mode = #tpu.pipeline_mode<synchronous>, transform_indices = @transform_3, window_bounds = array<i64: 3, 3, 32, 64>}, {pipeline_mode = #tpu.pipeline_mode<synchronous>, transform_indices = @transform_4, window_bounds = array<i64: 1, 64>}, {pipeline_mode = #tpu.pipeline_mode<synchronous>, transform_indices = @transform_5, window_bounds = array<i64: 3, 3, 64, 128>}, {pipeline_mode = #tpu.pipeline_mode<synchronous>, transform_indices = @transform_6, window_bounds = array<i64: 1, 128>}, {pipeline_mode = #tpu.pipeline_mode<synchronous>, transform_indices = @transform_7, window_bounds = array<i64: 4, 128, 128>}, {pipeline_mode = #tpu.pipeline_mode<synchronous>, transform_indices = @transform_8, window_bounds = array<i64: 1, 128>}, {pipeline_mode = #tpu.pipeline_mode<synchronous>, transform_indices = @transform_9, window_bounds = array<i64: 1, 128>}, {pipeline_mode = #tpu.pipeline_mode<synchronous>, transform_indices = @transform_10, window_bounds = array<i64: 1, 1>}, {transform_indices = @transform_11, window_bounds = array<i64: 1, 1, 1>}]} {
    %cst = arith.constant 0.000000e+00 : f32
    %0 = vector.broadcast %cst : f32 to vector<122x32xf32>
    %c0 = arith.constant 0 : index
    %c0_0 = arith.constant 0 : index
    %1 = vector.load %arg14[%c0, %c0_0] : memref<122x32xf32, #tpu.memory_space<vmem>>, vector<122x32xf32>
    tpu.vector_store %arg14[%c0, %c0_0], %0 {strides = array<i32>} : memref<122x32xf32, #tpu.memory_space<vmem>>, vector<122x32xf32>,
    %cst_1 = arith.constant 0.000000e+00 : f32
    %2 = vector.broadcast %cst_1 : f32 to vector<50x64xf32>
    %c0_2 = arith.constant 0 : index
    %c0_3 = arith.constant 0 : index
    %3 = vector.load %arg16[%c0_2, %c0_3] : memref<50x64xf32, #tpu.memory_space<vmem>>, vector<50x64xf32>
    tpu.vector_store %arg16[%c0_2, %c0_3], %2 {strides = array<i32>} : memref<50x64xf32, #tpu.memory_space<vmem>>, vector<50x64xf32>,
    %c0_4 = arith.constant 0 : index
    %c0_5 = arith.constant 0 : index
    %c0_6 = arith.constant 0 : index
    %4 = vector.load %arg1[%c0_4, %c0_5, %c0_6] : memref<1x362x3xf32, #tpu.memory_space<vmem>>, vector<1x324x3xf32>
    %5 = vector.shape_cast %4 : vector<1x324x3xf32> to vector<324x3xf32>
    %c0_7 = arith.constant 0 : index
    %c0_8 = arith.constant 0 : index
    %c0_9 = arith.constant 0 : index
    %c0_10 = arith.constant 0 : index
    %6 = vector.load %arg2[%c0_7, %c0_8, %c0_9, %c0_10] : memref<3x3x3x32xf32, #tpu.memory_space<vmem>>, vector<1x1x3x32xf32>
    %7 = vector.shape_cast %6 : vector<1x1x3x32xf32> to vector<3x32xf32>
    %cst_11 = arith.constant dense<0.000000e+00> : vector<324x32xf32>
    %8 = tpu.matmul %5, %7, %cst_11 {dimension_numbers = #tpu.dot_dimension_numbers<[1], [0], [0], [1], [0, 0, 1, 1], [], []>} : vector<324x3xf32>, vector<3x32xf32>, vector<324x32xf32> -> vector<324x32xf32>
    %c0_12 = arith.constant 0 : index
    %c0_13 = arith.constant 0 : index
    %9 = vector.load %arg13[%c0_12, %c0_13] : memref<324x32xf32, #tpu.memory_space<vmem>>, vector<324x32xf32>
    tpu.vector_store %arg13[%c0_12, %c0_13], %8 {strides = array<i32>} : memref<324x32xf32, #tpu.memory_space<vmem>>, vector<324x32xf32>,
    %c0_14 = arith.constant 0 : index
    %c1 = arith.constant 1 : index
    %c0_15 = arith.constant 0 : index
    %10 = vector.load %arg1[%c0_14, %c1, %c0_15] : memref<1x362x3xf32, #tpu.memory_space<vmem>>, vector<1x324x3xf32>
    %11 = vector.shape_cast %10 : vector<1x324x3xf32> to vector<324x3xf32>
    %c0_16 = arith.constant 0 : index
    %c1_17 = arith.constant 1 : index
    %c0_18 = arith.constant 0 : index
    %c0_19 = arith.constant 0 : index
    %12 = vector.load %arg2[%c0_16, %c1_17, %c0_18, %c0_19] : memref<3x3x3x32xf32, #tpu.memory_space<vmem>>, vector<1x1x3x32xf32>
    %13 = vector.shape_cast %12 : vector<1x1x3x32xf32> to vector<3x32xf32>
    %cst_20 = arith.constant dense<0.000000e+00> : vector<324x32xf32>
    %14 = tpu.matmul %11, %13, %cst_20 {dimension_numbers = #tpu.dot_dimension_numbers<[1], [0], [0], [1], [0, 0, 1, 1], [], []>} : vector<324x3xf32>, vector<3x32xf32>, vector<324x32xf32> -> vector<324x32xf32>
    %c0_21 = arith.constant 0 : index
    %c0_22 = arith.constant 0 : index
    %15 = vector.load %arg13[%c0_21, %c0_22] : memref<324x32xf32, #tpu.memory_space<vmem>>, vector<324x32xf32>
    %16 = arith.addf %15, %14 : vector<324x32xf32>
    %c0_23 = arith.constant 0 : index
    %c0_24 = arith.constant 0 : index
    %17 = vector.load %arg13[%c0_23, %c0_24] : memref<324x32xf32, #tpu.memory_space<vmem>>, vector<324x32xf32>
    tpu.vector_store %arg13[%c0_23, %c0_24], %16 {strides = array<i32>} : memref<324x32xf32, #tpu.memory_space<vmem>>, vector<324x32xf32>,
    %c0_25 = arith.constant 0 : index
    %c2 = arith.constant 2 : index
    %c0_26 = arith.constant 0 : index
    %18 = vector.load %arg1[%c0_25, %c2, %c0_26] : memref<1x362x3xf32, #tpu.memory_space<vmem>>, vector<1x324x3xf32>
    %19 = vector.shape_cast %18 : vector<1x324x3xf32> to vector<324x3xf32>
    %c0_27 = arith.constant 0 : index
    %c2_28 = arith.constant 2 : index
    %c0_29 = arith.constant 0 : index
    %c0_30 = arith.constant 0 : index
    %20 = vector.load %arg2[%c0_27, %c2_28, %c0_29, %c0_30] : memref<3x3x3x32xf32, #tpu.memory_space<vmem>>, vector<1x1x3x32xf32>
    %21 = vector.shape_cast %20 : vector<1x1x3x32xf32> to vector<3x32xf32>
    %cst_31 = arith.constant dense<0.000000e+00> : vector<324x32xf32>
    %22 = tpu.matmul %19, %21, %cst_31 {dimension_numbers = #tpu.dot_dimension_numbers<[1], [0], [0], [1], [0, 0, 1, 1], [], []>} : vector<324x3xf32>, vector<3x32xf32>, vector<324x32xf32> -> vector<324x32xf32>
    %c0_32 = arith.constant 0 : index
    %c0_33 = arith.constant 0 : index
    %23 = vector.load %arg13[%c0_32, %c0_33] : memref<324x32xf32, #tpu.memory_space<vmem>>, vector<324x32xf32>
    %24 = arith.addf %23, %22 : vector<324x32xf32>
    %c0_34 = arith.constant 0 : index
    %c0_35 = arith.constant 0 : index
    %25 = vector.load %arg13[%c0_34, %c0_35] : memref<324x32xf32, #tpu.memory_space<vmem>>, vector<324x32xf32>
    tpu.vector_store %arg13[%c0_34, %c0_35], %24 {strides = array<i32>} : memref<324x32xf32, #tpu.memory_space<vmem>>, vector<324x32xf32>,
    %c0_36 = arith.constant 0 : index
    %c18 = arith.constant 18 : index
    %c0_37 = arith.constant 0 : index
    %26 = vector.load %arg1[%c0_36, %c18, %c0_37] : memref<1x362x3xf32, #tpu.memory_space<vmem>>, vector<1x324x3xf32>
    %27 = vector.shape_cast %26 : vector<1x324x3xf32> to vector<324x3xf32>
    %c1_38 = arith.constant 1 : index
    %c0_39 = arith.constant 0 : index
    %c0_40 = arith.constant 0 : index
    %c0_41 = arith.constant 0 : index
    %28 = vector.load %arg2[%c1_38, %c0_39, %c0_40, %c0_41] : memref<3x3x3x32xf32, #tpu.memory_space<vmem>>, vector<1x1x3x32xf32>
    %29 = vector.shape_cast %28 : vector<1x1x3x32xf32> to vector<3x32xf32>
    %cst_42 = arith.constant dense<0.000000e+00> : vector<324x32xf32>
    %30 = tpu.matmul %27, %29, %cst_42 {dimension_numbers = #tpu.dot_dimension_numbers<[1], [0], [0], [1], [0, 0, 1, 1], [], []>} : vector<324x3xf32>, vector<3x32xf32>, vector<324x32xf32> -> vector<324x32xf32>
    %c0_43 = arith.constant 0 : index
    %c0_44 = arith.constant 0 : index
    %31 = vector.load %arg13[%c0_43, %c0_44] : memref<324x32xf32, #tpu.memory_space<vmem>>, vector<324x32xf32>
    %32 = arith.addf %31, %30 : vector<324x32xf32>
    %c0_45 = arith.constant 0 : index
    %c0_46 = arith.constant 0 : index
    %33 = vector.load %arg13[%c0_45, %c0_46] : memref<324x32xf32, #tpu.memory_space<vmem>>, vector<324x32xf32>
    tpu.vector_store %arg13[%c0_45, %c0_46], %32 {strides = array<i32>} : memref<324x32xf32, #tpu.memory_space<vmem>>, vector<324x32xf32>,
    %c0_47 = arith.constant 0 : index
    %c19 = arith.constant 19 : index
    %c0_48 = arith.constant 0 : index
    %34 = vector.load %arg1[%c0_47, %c19, %c0_48] : memref<1x362x3xf32, #tpu.memory_space<vmem>>, vector<1x324x3xf32>
    %35 = vector.shape_cast %34 : vector<1x324x3xf32> to vector<324x3xf32>
    %c1_49 = arith.constant 1 : index
    %c1_50 = arith.constant 1 : index
    %c0_51 = arith.constant 0 : index
    %c0_52 = arith.constant 0 : index
    %36 = vector.load %arg2[%c1_49, %c1_50, %c0_51, %c0_52] : memref<3x3x3x32xf32, #tpu.memory_space<vmem>>, vector<1x1x3x32xf32>
    %37 = vector.shape_cast %36 : vector<1x1x3x32xf32> to vector<3x32xf32>
    %cst_53 = arith.constant dense<0.000000e+00> : vector<324x32xf32>
    %38 = tpu.matmul %35, %37, %cst_53 {dimension_numbers = #tpu.dot_dimension_numbers<[1], [0], [0], [1], [0, 0, 1, 1], [], []>} : vector<324x3xf32>, vector<3x32xf32>, vector<324x32xf32> -> vector<324x32xf32>
    %c0_54 = arith.constant 0 : index
    %c0_55 = arith.constant 0 : index
    %39 = vector.load %arg13[%c0_54, %c0_55] : memref<324x32xf32, #tpu.memory_space<vmem>>, vector<324x32xf32>
    %40 = arith.addf %39, %38 : vector<324x32xf32>
    %c0_56 = arith.constant 0 : index
    %c0_57 = arith.constant 0 : index
    %41 = vector.load %arg13[%c0_56, %c0_57] : memref<324x32xf32, #tpu.memory_space<vmem>>, vector<324x32xf32>
    tpu.vector_store %arg13[%c0_56, %c0_57], %40 {strides = array<i32>} : memref<324x32xf32, #tpu.memory_space<vmem>>, vector<324x32xf32>,
    %c0_58 = arith.constant 0 : index
    %c20 = arith.constant 20 : index
    %c0_59 = arith.constant 0 : index
    %42 = vector.load %arg1[%c0_58, %c20, %c0_59] : memref<1x362x3xf32, #tpu.memory_space<vmem>>, vector<1x324x3xf32>
    %43 = vector.shape_cast %42 : vector<1x324x3xf32> to vector<324x3xf32>
    %c1_60 = arith.constant 1 : index
    %c2_61 = arith.constant 2 : index
    %c0_62 = arith.constant 0 : index
    %c0_63 = arith.constant 0 : index
    %44 = vector.load %arg2[%c1_60, %c2_61, %c0_62, %c0_63] : memref<3x3x3x32xf32, #tpu.memory_space<vmem>>, vector<1x1x3x32xf32>
    %45 = vector.shape_cast %44 : vector<1x1x3x32xf32> to vector<3x32xf32>
    %cst_64 = arith.constant dense<0.000000e+00> : vector<324x32xf32>
    %46 = tpu.matmul %43, %45, %cst_64 {dimension_numbers = #tpu.dot_dimension_numbers<[1], [0], [0], [1], [0, 0, 1, 1], [], []>} : vector<324x3xf32>, vector<3x32xf32>, vector<324x32xf32> -> vector<324x32xf32>
    %c0_65 = arith.constant 0 : index
    %c0_66 = arith.constant 0 : index
    %47 = vector.load %arg13[%c0_65, %c0_66] : memref<324x32xf32, #tpu.memory_space<vmem>>, vector<324x32xf32>
    %48 = arith.addf %47, %46 : vector<324x32xf32>
    %c0_67 = arith.constant 0 : index
    %c0_68 = arith.constant 0 : index
    %49 = vector.load %arg13[%c0_67, %c0_68] : memref<324x32xf32, #tpu.memory_space<vmem>>, vector<324x32xf32>
    tpu.vector_store %arg13[%c0_67, %c0_68], %48 {strides = array<i32>} : memref<324x32xf32, #tpu.memory_space<vmem>>, vector<324x32xf32>,
    %c0_69 = arith.constant 0 : index
    %c36 = arith.constant 36 : index
    %c0_70 = arith.constant 0 : index
    %50 = vector.load %arg1[%c0_69, %c36, %c0_70] : memref<1x362x3xf32, #tpu.memory_space<vmem>>, vector<1x324x3xf32>
    %51 = vector.shape_cast %50 : vector<1x324x3xf32> to vector<324x3xf32>
    %c2_71 = arith.constant 2 : index
    %c0_72 = arith.constant 0 : index
    %c0_73 = arith.constant 0 : index
    %c0_74 = arith.constant 0 : index
    %52 = vector.load %arg2[%c2_71, %c0_72, %c0_73, %c0_74] : memref<3x3x3x32xf32, #tpu.memory_space<vmem>>, vector<1x1x3x32xf32>
    %53 = vector.shape_cast %52 : vector<1x1x3x32xf32> to vector<3x32xf32>
    %cst_75 = arith.constant dense<0.000000e+00> : vector<324x32xf32>
    %54 = tpu.matmul %51, %53, %cst_75 {dimension_numbers = #tpu.dot_dimension_numbers<[1], [0], [0], [1], [0, 0, 1, 1], [], []>} : vector<324x3xf32>, vector<3x32xf32>, vector<324x32xf32> -> vector<324x32xf32>
    %c0_76 = arith.constant 0 : index
    %c0_77 = arith.constant 0 : index
    %55 = vector.load %arg13[%c0_76, %c0_77] : memref<324x32xf32, #tpu.memory_space<vmem>>, vector<324x32xf32>
    %56 = arith.addf %55, %54 : vector<324x32xf32>
    %c0_78 = arith.constant 0 : index
    %c0_79 = arith.constant 0 : index
    %57 = vector.load %arg13[%c0_78, %c0_79] : memref<324x32xf32, #tpu.memory_space<vmem>>, vector<324x32xf32>
    tpu.vector_store %arg13[%c0_78, %c0_79], %56 {strides = array<i32>} : memref<324x32xf32, #tpu.memory_space<vmem>>, vector<324x32xf32>,
    %c0_80 = arith.constant 0 : index
    %c37 = arith.constant 37 : index
    %c0_81 = arith.constant 0 : index
    %58 = vector.load %arg1[%c0_80, %c37, %c0_81] : memref<1x362x3xf32, #tpu.memory_space<vmem>>, vector<1x324x3xf32>
    %59 = vector.shape_cast %58 : vector<1x324x3xf32> to vector<324x3xf32>
    %c2_82 = arith.constant 2 : index
    %c1_83 = arith.constant 1 : index
    %c0_84 = arith.constant 0 : index
    %c0_85 = arith.constant 0 : index
    %60 = vector.load %arg2[%c2_82, %c1_83, %c0_84, %c0_85] : memref<3x3x3x32xf32, #tpu.memory_space<vmem>>, vector<1x1x3x32xf32>
    %61 = vector.shape_cast %60 : vector<1x1x3x32xf32> to vector<3x32xf32>
    %cst_86 = arith.constant dense<0.000000e+00> : vector<324x32xf32>
    %62 = tpu.matmul %59, %61, %cst_86 {dimension_numbers = #tpu.dot_dimension_numbers<[1], [0], [0], [1], [0, 0, 1, 1], [], []>} : vector<324x3xf32>, vector<3x32xf32>, vector<324x32xf32> -> vector<324x32xf32>
    %c0_87 = arith.constant 0 : index
    %c0_88 = arith.constant 0 : index
    %63 = vector.load %arg13[%c0_87, %c0_88] : memref<324x32xf32, #tpu.memory_space<vmem>>, vector<324x32xf32>
    %64 = arith.addf %63, %62 : vector<324x32xf32>
    %c0_89 = arith.constant 0 : index
    %c0_90 = arith.constant 0 : index
    %65 = vector.load %arg13[%c0_89, %c0_90] : memref<324x32xf32, #tpu.memory_space<vmem>>, vector<324x32xf32>
    tpu.vector_store %arg13[%c0_89, %c0_90], %64 {strides = array<i32>} : memref<324x32xf32, #tpu.memory_space<vmem>>, vector<324x32xf32>,
    %c0_91 = arith.constant 0 : index
    %c38 = arith.constant 38 : index
    %c0_92 = arith.constant 0 : index
    %66 = vector.load %arg1[%c0_91, %c38, %c0_92] : memref<1x362x3xf32, #tpu.memory_space<vmem>>, vector<1x324x3xf32>
    %67 = vector.shape_cast %66 : vector<1x324x3xf32> to vector<324x3xf32>
    %c2_93 = arith.constant 2 : index
    %c2_94 = arith.constant 2 : index
    %c0_95 = arith.constant 0 : index
    %c0_96 = arith.constant 0 : index
    %68 = vector.load %arg2[%c2_93, %c2_94, %c0_95, %c0_96] : memref<3x3x3x32xf32, #tpu.memory_space<vmem>>, vector<1x1x3x32xf32>
    %69 = vector.shape_cast %68 : vector<1x1x3x32xf32> to vector<3x32xf32>
    %cst_97 = arith.constant dense<0.000000e+00> : vector<324x32xf32>
    %70 = tpu.matmul %67, %69, %cst_97 {dimension_numbers = #tpu.dot_dimension_numbers<[1], [0], [0], [1], [0, 0, 1, 1], [], []>} : vector<324x3xf32>, vector<3x32xf32>, vector<324x32xf32> -> vector<324x32xf32>
    %c0_98 = arith.constant 0 : index
    %c0_99 = arith.constant 0 : index
    %71 = vector.load %arg13[%c0_98, %c0_99] : memref<324x32xf32, #tpu.memory_space<vmem>>, vector<324x32xf32>
    %72 = arith.addf %71, %70 : vector<324x32xf32>
    %c0_100 = arith.constant 0 : index
    %c0_101 = arith.constant 0 : index
    %73 = vector.load %arg13[%c0_100, %c0_101] : memref<324x32xf32, #tpu.memory_space<vmem>>, vector<324x32xf32>
    tpu.vector_store %arg13[%c0_100, %c0_101], %72 {strides = array<i32>} : memref<324x32xf32, #tpu.memory_space<vmem>>, vector<324x32xf32>,
    %c0_102 = arith.constant 0 : index
    %c0_103 = arith.constant 0 : index
    %74 = vector.load %arg13[%c0_102, %c0_103] : memref<324x32xf32, #tpu.memory_space<vmem>>, vector<324x32xf32>
    %c0_104 = arith.constant 0 : index
    %c0_105 = arith.constant 0 : index
    %75 = vector.load %arg3[%c0_104, %c0_105] : memref<1x32xf32, #tpu.memory_space<vmem>>, vector<1x32xf32>
    %76 = vector.broadcast %75 : vector<1x32xf32> to vector<324x32xf32>
    %77 = arith.addf %74, %76 : vector<324x32xf32>
    %cst_106 = arith.constant 0.000000e+00 : f32
    %78 = vector.broadcast %cst_106 : f32 to vector<324x32xf32>
    %79 = arith.maximumf %77, %78 : vector<324x32xf32>
    %c0_107 = arith.constant 0 : index
    %c0_108 = arith.constant 0 : index
    %80 = vector.load %arg13[%c0_107, %c0_108] : memref<324x32xf32, #tpu.memory_space<vmem>>, vector<324x32xf32>
    tpu.vector_store %arg13[%c0_107, %c0_108], %79 {strides = array<i32>} : memref<324x32xf32, #tpu.memory_space<vmem>>, vector<324x32xf32>,
    %c0_109 = arith.constant 0 : index
    %c0_110 = arith.constant 0 : index
    %81 = tpu.strided_load %arg13[%c0_109, %c0_110] {strides = array<i32: 2, 1>} : memref<324x32xf32, #tpu.memory_space<vmem>>, vector<8x32xf32>
    %c1_111 = arith.constant 1 : index
    %c0_112 = arith.constant 0 : index
    %82 = tpu.strided_load %arg13[%c1_111, %c0_112] {strides = array<i32: 2, 1>} : memref<324x32xf32, #tpu.memory_space<vmem>>, vector<8x32xf32>
    %83 = arith.maximumf %81, %82 : vector<8x32xf32>
    %c18_113 = arith.constant 18 : index
    %c0_114 = arith.constant 0 : index
    %84 = tpu.strided_load %arg13[%c18_113, %c0_114] {strides = array<i32: 2, 1>} : memref<324x32xf32, #tpu.memory_space<vmem>>, vector<8x32xf32>
    %c19_115 = arith.constant 19 : index
    %c0_116 = arith.constant 0 : index
    %85 = tpu.strided_load %arg13[%c19_115, %c0_116] {strides = array<i32: 2, 1>} : memref<324x32xf32, #tpu.memory_space<vmem>>, vector<8x32xf32>
    %86 = arith.maximumf %84, %85 : vector<8x32xf32>
    %87 = arith.maximumf %83, %86 : vector<8x32xf32>
    %c11 = arith.constant 11 : index
    %c0_117 = arith.constant 0 : index
    %88 = vector.load %arg14[%c11, %c0_117] : memref<122x32xf32, #tpu.memory_space<vmem>>, vector<8x32xf32>
    tpu.vector_store %arg14[%c11, %c0_117], %87 {strides = array<i32>} : memref<122x32xf32, #tpu.memory_space<vmem>>, vector<8x32xf32>,
    %c36_118 = arith.constant 36 : index
    %c0_119 = arith.constant 0 : index
    %89 = tpu.strided_load %arg13[%c36_118, %c0_119] {strides = array<i32: 2, 1>} : memref<324x32xf32, #tpu.memory_space<vmem>>, vector<8x32xf32>
    %c37_120 = arith.constant 37 : index
    %c0_121 = arith.constant 0 : index
    %90 = tpu.strided_load %arg13[%c37_120, %c0_121] {strides = array<i32: 2, 1>} : memref<324x32xf32, #tpu.memory_space<vmem>>, vector<8x32xf32>
    %91 = arith.maximumf %89, %90 : vector<8x32xf32>
    %c54 = arith.constant 54 : index
    %c0_122 = arith.constant 0 : index
    %92 = tpu.strided_load %arg13[%c54, %c0_122] {strides = array<i32: 2, 1>} : memref<324x32xf32, #tpu.memory_space<vmem>>, vector<8x32xf32>
    %c55 = arith.constant 55 : index
    %c0_123 = arith.constant 0 : index
    %93 = tpu.strided_load %arg13[%c55, %c0_123] {strides = array<i32: 2, 1>} : memref<324x32xf32, #tpu.memory_space<vmem>>, vector<8x32xf32>
    %94 = arith.maximumf %92, %93 : vector<8x32xf32>
    %95 = arith.maximumf %91, %94 : vector<8x32xf32>
    %c21 = arith.constant 21 : index
    %c0_124 = arith.constant 0 : index
    %96 = vector.load %arg14[%c21, %c0_124] : memref<122x32xf32, #tpu.memory_space<vmem>>, vector<8x32xf32>
    tpu.vector_store %arg14[%c21, %c0_124], %95 {strides = array<i32>} : memref<122x32xf32, #tpu.memory_space<vmem>>, vector<8x32xf32>,
    %c72 = arith.constant 72 : index
    %c0_125 = arith.constant 0 : index
    %97 = tpu.strided_load %arg13[%c72, %c0_125] {strides = array<i32: 2, 1>} : memref<324x32xf32, #tpu.memory_space<vmem>>, vector<8x32xf32>
    %c73 = arith.constant 73 : index
    %c0_126 = arith.constant 0 : index
    %98 = tpu.strided_load %arg13[%c73, %c0_126] {strides = array<i32: 2, 1>} : memref<324x32xf32, #tpu.memory_space<vmem>>, vector<8x32xf32>
    %99 = arith.maximumf %97, %98 : vector<8x32xf32>
    %c90 = arith.constant 90 : index
    %c0_127 = arith.constant 0 : index
    %100 = tpu.strided_load %arg13[%c90, %c0_127] {strides = array<i32: 2, 1>} : memref<324x32xf32, #tpu.memory_space<vmem>>, vector<8x32xf32>
    %c91 = arith.constant 91 : index
    %c0_128 = arith.constant 0 : index
    %101 = tpu.strided_load %arg13[%c91, %c0_128] {strides = array<i32: 2, 1>} : memref<324x32xf32, #tpu.memory_space<vmem>>, vector<8x32xf32>
    %102 = arith.maximumf %100, %101 : vector<8x32xf32>
    %103 = arith.maximumf %99, %102 : vector<8x32xf32>
    %c31 = arith.constant 31 : index
    %c0_129 = arith.constant 0 : index
    %104 = vector.load %arg14[%c31, %c0_129] : memref<122x32xf32, #tpu.memory_space<vmem>>, vector<8x32xf32>
    tpu.vector_store %arg14[%c31, %c0_129], %103 {strides = array<i32>} : memref<122x32xf32, #tpu.memory_space<vmem>>, vector<8x32xf32>,
    %c108 = arith.constant 108 : index
    %c0_130 = arith.constant 0 : index
    %105 = tpu.strided_load %arg13[%c108, %c0_130] {strides = array<i32: 2, 1>} : memref<324x32xf32, #tpu.memory_space<vmem>>, vector<8x32xf32>
    %c109 = arith.constant 109 : index
    %c0_131 = arith.constant 0 : index
    %106 = tpu.strided_load %arg13[%c109, %c0_131] {strides = array<i32: 2, 1>} : memref<324x32xf32, #tpu.memory_space<vmem>>, vector<8x32xf32>
    %107 = arith.maximumf %105, %106 : vector<8x32xf32>
    %c126 = arith.constant 126 : index
    %c0_132 = arith.constant 0 : index
    %108 = tpu.strided_load %arg13[%c126, %c0_132] {strides = array<i32: 2, 1>} : memref<324x32xf32, #tpu.memory_space<vmem>>, vector<8x32xf32>
    %c127 = arith.constant 127 : index
    %c0_133 = arith.constant 0 : index
    %109 = tpu.strided_load %arg13[%c127, %c0_133] {strides = array<i32: 2, 1>} : memref<324x32xf32, #tpu.memory_space<vmem>>, vector<8x32xf32>
    %110 = arith.maximumf %108, %109 : vector<8x32xf32>
    %111 = arith.maximumf %107, %110 : vector<8x32xf32>
    %c41 = arith.constant 41 : index
    %c0_134 = arith.constant 0 : index
    %112 = vector.load %arg14[%c41, %c0_134] : memref<122x32xf32, #tpu.memory_space<vmem>>, vector<8x32xf32>
    tpu.vector_store %arg14[%c41, %c0_134], %111 {strides = array<i32>} : memref<122x32xf32, #tpu.memory_space<vmem>>, vector<8x32xf32>,
    %c144 = arith.constant 144 : index
    %c0_135 = arith.constant 0 : index
    %113 = tpu.strided_load %arg13[%c144, %c0_135] {strides = array<i32: 2, 1>} : memref<324x32xf32, #tpu.memory_space<vmem>>, vector<8x32xf32>
    %c145 = arith.constant 145 : index
    %c0_136 = arith.constant 0 : index
    %114 = tpu.strided_load %arg13[%c145, %c0_136] {strides = array<i32: 2, 1>} : memref<324x32xf32, #tpu.memory_space<vmem>>, vector<8x32xf32>
    %115 = arith.maximumf %113, %114 : vector<8x32xf32>
    %c162 = arith.constant 162 : index
    %c0_137 = arith.constant 0 : index
    %116 = tpu.strided_load %arg13[%c162, %c0_137] {strides = array<i32: 2, 1>} : memref<324x32xf32, #tpu.memory_space<vmem>>, vector<8x32xf32>
    %c163 = arith.constant 163 : index
    %c0_138 = arith.constant 0 : index
    %117 = tpu.strided_load %arg13[%c163, %c0_138] {strides = array<i32: 2, 1>} : memref<324x32xf32, #tpu.memory_space<vmem>>, vector<8x32xf32>
    %118 = arith.maximumf %116, %117 : vector<8x32xf32>
    %119 = arith.maximumf %115, %118 : vector<8x32xf32>
    %c51 = arith.constant 51 : index
    %c0_139 = arith.constant 0 : index
    %120 = vector.load %arg14[%c51, %c0_139] : memref<122x32xf32, #tpu.memory_space<vmem>>, vector<8x32xf32>
    tpu.vector_store %arg14[%c51, %c0_139], %119 {strides = array<i32>} : memref<122x32xf32, #tpu.memory_space<vmem>>, vector<8x32xf32>,
    %c180 = arith.constant 180 : index
    %c0_140 = arith.constant 0 : index
    %121 = tpu.strided_load %arg13[%c180, %c0_140] {strides = array<i32: 2, 1>} : memref<324x32xf32, #tpu.memory_space<vmem>>, vector<8x32xf32>
    %c181 = arith.constant 181 : index
    %c0_141 = arith.constant 0 : index
    %122 = tpu.strided_load %arg13[%c181, %c0_141] {strides = array<i32: 2, 1>} : memref<324x32xf32, #tpu.memory_space<vmem>>, vector<8x32xf32>
    %123 = arith.maximumf %121, %122 : vector<8x32xf32>
    %c198 = arith.constant 198 : index
    %c0_142 = arith.constant 0 : index
    %124 = tpu.strided_load %arg13[%c198, %c0_142] {strides = array<i32: 2, 1>} : memref<324x32xf32, #tpu.memory_space<vmem>>, vector<8x32xf32>
    %c199 = arith.constant 199 : index
    %c0_143 = arith.constant 0 : index
    %125 = tpu.strided_load %arg13[%c199, %c0_143] {strides = array<i32: 2, 1>} : memref<324x32xf32, #tpu.memory_space<vmem>>, vector<8x32xf32>
    %126 = arith.maximumf %124, %125 : vector<8x32xf32>
    %127 = arith.maximumf %123, %126 : vector<8x32xf32>
    %c61 = arith.constant 61 : index
    %c0_144 = arith.constant 0 : index
    %128 = vector.load %arg14[%c61, %c0_144] : memref<122x32xf32, #tpu.memory_space<vmem>>, vector<8x32xf32>
    tpu.vector_store %arg14[%c61, %c0_144], %127 {strides = array<i32>} : memref<122x32xf32, #tpu.memory_space<vmem>>, vector<8x32xf32>,
    %c216 = arith.constant 216 : index
    %c0_145 = arith.constant 0 : index
    %129 = tpu.strided_load %arg13[%c216, %c0_145] {strides = array<i32: 2, 1>} : memref<324x32xf32, #tpu.memory_space<vmem>>, vector<8x32xf32>
    %c217 = arith.constant 217 : index
    %c0_146 = arith.constant 0 : index
    %130 = tpu.strided_load %arg13[%c217, %c0_146] {strides = array<i32: 2, 1>} : memref<324x32xf32, #tpu.memory_space<vmem>>, vector<8x32xf32>
    %131 = arith.maximumf %129, %130 : vector<8x32xf32>
    %c234 = arith.constant 234 : index
    %c0_147 = arith.constant 0 : index
    %132 = tpu.strided_load %arg13[%c234, %c0_147] {strides = array<i32: 2, 1>} : memref<324x32xf32, #tpu.memory_space<vmem>>, vector<8x32xf32>
    %c235 = arith.constant 235 : index
    %c0_148 = arith.constant 0 : index
    %133 = tpu.strided_load %arg13[%c235, %c0_148] {strides = array<i32: 2, 1>} : memref<324x32xf32, #tpu.memory_space<vmem>>, vector<8x32xf32>
    %134 = arith.maximumf %132, %133 : vector<8x32xf32>
    %135 = arith.maximumf %131, %134 : vector<8x32xf32>
    %c71 = arith.constant 71 : index
    %c0_149 = arith.constant 0 : index
    %136 = vector.load %arg14[%c71, %c0_149] : memref<122x32xf32, #tpu.memory_space<vmem>>, vector<8x32xf32>
    tpu.vector_store %arg14[%c71, %c0_149], %135 {strides = array<i32>} : memref<122x32xf32, #tpu.memory_space<vmem>>, vector<8x32xf32>,
    %c252 = arith.constant 252 : index
    %c0_150 = arith.constant 0 : index
    %137 = tpu.strided_load %arg13[%c252, %c0_150] {strides = array<i32: 2, 1>} : memref<324x32xf32, #tpu.memory_space<vmem>>, vector<8x32xf32>
    %c253 = arith.constant 253 : index
    %c0_151 = arith.constant 0 : index
    %138 = tpu.strided_load %arg13[%c253, %c0_151] {strides = array<i32: 2, 1>} : memref<324x32xf32, #tpu.memory_space<vmem>>, vector<8x32xf32>
    %139 = arith.maximumf %137, %138 : vector<8x32xf32>
    %c270 = arith.constant 270 : index
    %c0_152 = arith.constant 0 : index
    %140 = tpu.strided_load %arg13[%c270, %c0_152] {strides = array<i32: 2, 1>} : memref<324x32xf32, #tpu.memory_space<vmem>>, vector<8x32xf32>
    %c271 = arith.constant 271 : index
    %c0_153 = arith.constant 0 : index
    %141 = tpu.strided_load %arg13[%c271, %c0_153] {strides = array<i32: 2, 1>} : memref<324x32xf32, #tpu.memory_space<vmem>>, vector<8x32xf32>
    %142 = arith.maximumf %140, %141 : vector<8x32xf32>
    %143 = arith.maximumf %139, %142 : vector<8x32xf32>
    %c81 = arith.constant 81 : index
    %c0_154 = arith.constant 0 : index
    %144 = vector.load %arg14[%c81, %c0_154] : memref<122x32xf32, #tpu.memory_space<vmem>>, vector<8x32xf32>
    tpu.vector_store %arg14[%c81, %c0_154], %143 {strides = array<i32>} : memref<122x32xf32, #tpu.memory_space<vmem>>, vector<8x32xf32>,
    %c0_155 = arith.constant 0 : index
    %c0_156 = arith.constant 0 : index
    %145 = vector.load %arg14[%c0_155, %c0_156] : memref<122x32xf32, #tpu.memory_space<vmem>>, vector<100x32xf32>
    %c0_157 = arith.constant 0 : index
    %c0_158 = arith.constant 0 : index
    %c0_159 = arith.constant 0 : index
    %c0_160 = arith.constant 0 : index
    %146 = vector.load %arg4[%c0_157, %c0_158, %c0_159, %c0_160] : memref<3x3x32x64xf32, #tpu.memory_space<vmem>>, vector<1x1x32x64xf32>
    %147 = vector.shape_cast %146 : vector<1x1x32x64xf32> to vector<32x64xf32>
    %cst_161 = arith.constant dense<0.000000e+00> : vector<100x64xf32>
    %148 = tpu.matmul %145, %147, %cst_161 {dimension_numbers = #tpu.dot_dimension_numbers<[1], [0], [0], [1], [0, 0, 1, 1], [], []>} : vector<100x32xf32>, vector<32x64xf32>, vector<100x64xf32> -> vector<100x64xf32>
    %c0_162 = arith.constant 0 : index
    %c0_163 = arith.constant 0 : index
    %149 = vector.load %arg15[%c0_162, %c0_163] : memref<100x64xf32, #tpu.memory_space<vmem>>, vector<100x64xf32>
    tpu.vector_store %arg15[%c0_162, %c0_163], %148 {strides = array<i32>} : memref<100x64xf32, #tpu.memory_space<vmem>>, vector<100x64xf32>,
    %c1_164 = arith.constant 1 : index
    %c0_165 = arith.constant 0 : index
    %150 = vector.load %arg14[%c1_164, %c0_165] : memref<122x32xf32, #tpu.memory_space<vmem>>, vector<100x32xf32>
    %c0_166 = arith.constant 0 : index
    %c1_167 = arith.constant 1 : index
    %c0_168 = arith.constant 0 : index
    %c0_169 = arith.constant 0 : index
    %151 = vector.load %arg4[%c0_166, %c1_167, %c0_168, %c0_169] : memref<3x3x32x64xf32, #tpu.memory_space<vmem>>, vector<1x1x32x64xf32>
    %152 = vector.shape_cast %151 : vector<1x1x32x64xf32> to vector<32x64xf32>
    %cst_170 = arith.constant dense<0.000000e+00> : vector<100x64xf32>
    %153 = tpu.matmul %150, %152, %cst_170 {dimension_numbers = #tpu.dot_dimension_numbers<[1], [0], [0], [1], [0, 0, 1, 1], [], []>} : vector<100x32xf32>, vector<32x64xf32>, vector<100x64xf32> -> vector<100x64xf32>
    %c0_171 = arith.constant 0 : index
    %c0_172 = arith.constant 0 : index
    %154 = vector.load %arg15[%c0_171, %c0_172] : memref<100x64xf32, #tpu.memory_space<vmem>>, vector<100x64xf32>
    %155 = arith.addf %154, %153 : vector<100x64xf32>
    %c0_173 = arith.constant 0 : index
    %c0_174 = arith.constant 0 : index
    %156 = vector.load %arg15[%c0_173, %c0_174] : memref<100x64xf32, #tpu.memory_space<vmem>>, vector<100x64xf32>
    tpu.vector_store %arg15[%c0_173, %c0_174], %155 {strides = array<i32>} : memref<100x64xf32, #tpu.memory_space<vmem>>, vector<100x64xf32>,
    %c2_175 = arith.constant 2 : index
    %c0_176 = arith.constant 0 : index
    %157 = vector.load %arg14[%c2_175, %c0_176] : memref<122x32xf32, #tpu.memory_space<vmem>>, vector<100x32xf32>
    %c0_177 = arith.constant 0 : index
    %c2_178 = arith.constant 2 : index
    %c0_179 = arith.constant 0 : index
    %c0_180 = arith.constant 0 : index
    %158 = vector.load %arg4[%c0_177, %c2_178, %c0_179, %c0_180] : memref<3x3x32x64xf32, #tpu.memory_space<vmem>>, vector<1x1x32x64xf32>
    %159 = vector.shape_cast %158 : vector<1x1x32x64xf32> to vector<32x64xf32>
    %cst_181 = arith.constant dense<0.000000e+00> : vector<100x64xf32>
    %160 = tpu.matmul %157, %159, %cst_181 {dimension_numbers = #tpu.dot_dimension_numbers<[1], [0], [0], [1], [0, 0, 1, 1], [], []>} : vector<100x32xf32>, vector<32x64xf32>, vector<100x64xf32> -> vector<100x64xf32>
    %c0_182 = arith.constant 0 : index
    %c0_183 = arith.constant 0 : index
    %161 = vector.load %arg15[%c0_182, %c0_183] : memref<100x64xf32, #tpu.memory_space<vmem>>, vector<100x64xf32>
    %162 = arith.addf %161, %160 : vector<100x64xf32>
    %c0_184 = arith.constant 0 : index
    %c0_185 = arith.constant 0 : index
    %163 = vector.load %arg15[%c0_184, %c0_185] : memref<100x64xf32, #tpu.memory_space<vmem>>, vector<100x64xf32>
    tpu.vector_store %arg15[%c0_184, %c0_185], %162 {strides = array<i32>} : memref<100x64xf32, #tpu.memory_space<vmem>>, vector<100x64xf32>,
    %c10 = arith.constant 10 : index
    %c0_186 = arith.constant 0 : index
    %164 = vector.load %arg14[%c10, %c0_186] : memref<122x32xf32, #tpu.memory_space<vmem>>, vector<100x32xf32>
    %c1_187 = arith.constant 1 : index
    %c0_188 = arith.constant 0 : index
    %c0_189 = arith.constant 0 : index
    %c0_190 = arith.constant 0 : index
    %165 = vector.load %arg4[%c1_187, %c0_188, %c0_189, %c0_190] : memref<3x3x32x64xf32, #tpu.memory_space<vmem>>, vector<1x1x32x64xf32>
    %166 = vector.shape_cast %165 : vector<1x1x32x64xf32> to vector<32x64xf32>
    %cst_191 = arith.constant dense<0.000000e+00> : vector<100x64xf32>
    %167 = tpu.matmul %164, %166, %cst_191 {dimension_numbers = #tpu.dot_dimension_numbers<[1], [0], [0], [1], [0, 0, 1, 1], [], []>} : vector<100x32xf32>, vector<32x64xf32>, vector<100x64xf32> -> vector<100x64xf32>
    %c0_192 = arith.constant 0 : index
    %c0_193 = arith.constant 0 : index
    %168 = vector.load %arg15[%c0_192, %c0_193] : memref<100x64xf32, #tpu.memory_space<vmem>>, vector<100x64xf32>
    %169 = arith.addf %168, %167 : vector<100x64xf32>
    %c0_194 = arith.constant 0 : index
    %c0_195 = arith.constant 0 : index
    %170 = vector.load %arg15[%c0_194, %c0_195] : memref<100x64xf32, #tpu.memory_space<vmem>>, vector<100x64xf32>
    tpu.vector_store %arg15[%c0_194, %c0_195], %169 {strides = array<i32>} : memref<100x64xf32, #tpu.memory_space<vmem>>, vector<100x64xf32>,
    %c11_196 = arith.constant 11 : index
    %c0_197 = arith.constant 0 : index
    %171 = vector.load %arg14[%c11_196, %c0_197] : memref<122x32xf32, #tpu.memory_space<vmem>>, vector<100x32xf32>
    %c1_198 = arith.constant 1 : index
    %c1_199 = arith.constant 1 : index
    %c0_200 = arith.constant 0 : index
    %c0_201 = arith.constant 0 : index
    %172 = vector.load %arg4[%c1_198, %c1_199, %c0_200, %c0_201] : memref<3x3x32x64xf32, #tpu.memory_space<vmem>>, vector<1x1x32x64xf32>
    %173 = vector.shape_cast %172 : vector<1x1x32x64xf32> to vector<32x64xf32>
    %cst_202 = arith.constant dense<0.000000e+00> : vector<100x64xf32>
    %174 = tpu.matmul %171, %173, %cst_202 {dimension_numbers = #tpu.dot_dimension_numbers<[1], [0], [0], [1], [0, 0, 1, 1], [], []>} : vector<100x32xf32>, vector<32x64xf32>, vector<100x64xf32> -> vector<100x64xf32>
    %c0_203 = arith.constant 0 : index
    %c0_204 = arith.constant 0 : index
    %175 = vector.load %arg15[%c0_203, %c0_204] : memref<100x64xf32, #tpu.memory_space<vmem>>, vector<100x64xf32>
    %176 = arith.addf %175, %174 : vector<100x64xf32>
    %c0_205 = arith.constant 0 : index
    %c0_206 = arith.constant 0 : index
    %177 = vector.load %arg15[%c0_205, %c0_206] : memref<100x64xf32, #tpu.memory_space<vmem>>, vector<100x64xf32>
    tpu.vector_store %arg15[%c0_205, %c0_206], %176 {strides = array<i32>} : memref<100x64xf32, #tpu.memory_space<vmem>>, vector<100x64xf32>,
    %c12 = arith.constant 12 : index
    %c0_207 = arith.constant 0 : index
    %178 = vector.load %arg14[%c12, %c0_207] : memref<122x32xf32, #tpu.memory_space<vmem>>, vector<100x32xf32>
    %c1_208 = arith.constant 1 : index
    %c2_209 = arith.constant 2 : index
    %c0_210 = arith.constant 0 : index
    %c0_211 = arith.constant 0 : index
    %179 = vector.load %arg4[%c1_208, %c2_209, %c0_210, %c0_211] : memref<3x3x32x64xf32, #tpu.memory_space<vmem>>, vector<1x1x32x64xf32>
    %180 = vector.shape_cast %179 : vector<1x1x32x64xf32> to vector<32x64xf32>
    %cst_212 = arith.constant dense<0.000000e+00> : vector<100x64xf32>
    %181 = tpu.matmul %178, %180, %cst_212 {dimension_numbers = #tpu.dot_dimension_numbers<[1], [0], [0], [1], [0, 0, 1, 1], [], []>} : vector<100x32xf32>, vector<32x64xf32>, vector<100x64xf32> -> vector<100x64xf32>
    %c0_213 = arith.constant 0 : index
    %c0_214 = arith.constant 0 : index
    %182 = vector.load %arg15[%c0_213, %c0_214] : memref<100x64xf32, #tpu.memory_space<vmem>>, vector<100x64xf32>
    %183 = arith.addf %182, %181 : vector<100x64xf32>
    %c0_215 = arith.constant 0 : index
    %c0_216 = arith.constant 0 : index
    %184 = vector.load %arg15[%c0_215, %c0_216] : memref<100x64xf32, #tpu.memory_space<vmem>>, vector<100x64xf32>
    tpu.vector_store %arg15[%c0_215, %c0_216], %183 {strides = array<i32>} : memref<100x64xf32, #tpu.memory_space<vmem>>, vector<100x64xf32>,
    %c20_217 = arith.constant 20 : index
    %c0_218 = arith.constant 0 : index
    %185 = vector.load %arg14[%c20_217, %c0_218] : memref<122x32xf32, #tpu.memory_space<vmem>>, vector<100x32xf32>
    %c2_219 = arith.constant 2 : index
    %c0_220 = arith.constant 0 : index
    %c0_221 = arith.constant 0 : index
    %c0_222 = arith.constant 0 : index
    %186 = vector.load %arg4[%c2_219, %c0_220, %c0_221, %c0_222] : memref<3x3x32x64xf32, #tpu.memory_space<vmem>>, vector<1x1x32x64xf32>
    %187 = vector.shape_cast %186 : vector<1x1x32x64xf32> to vector<32x64xf32>
    %cst_223 = arith.constant dense<0.000000e+00> : vector<100x64xf32>
    %188 = tpu.matmul %185, %187, %cst_223 {dimension_numbers = #tpu.dot_dimension_numbers<[1], [0], [0], [1], [0, 0, 1, 1], [], []>} : vector<100x32xf32>, vector<32x64xf32>, vector<100x64xf32> -> vector<100x64xf32>
    %c0_224 = arith.constant 0 : index
    %c0_225 = arith.constant 0 : index
    %189 = vector.load %arg15[%c0_224, %c0_225] : memref<100x64xf32, #tpu.memory_space<vmem>>, vector<100x64xf32>
    %190 = arith.addf %189, %188 : vector<100x64xf32>
    %c0_226 = arith.constant 0 : index
    %c0_227 = arith.constant 0 : index
    %191 = vector.load %arg15[%c0_226, %c0_227] : memref<100x64xf32, #tpu.memory_space<vmem>>, vector<100x64xf32>
    tpu.vector_store %arg15[%c0_226, %c0_227], %190 {strides = array<i32>} : memref<100x64xf32, #tpu.memory_space<vmem>>, vector<100x64xf32>,
    %c21_228 = arith.constant 21 : index
    %c0_229 = arith.constant 0 : index
    %192 = vector.load %arg14[%c21_228, %c0_229] : memref<122x32xf32, #tpu.memory_space<vmem>>, vector<100x32xf32>
    %c2_230 = arith.constant 2 : index
    %c1_231 = arith.constant 1 : index
    %c0_232 = arith.constant 0 : index
    %c0_233 = arith.constant 0 : index
    %193 = vector.load %arg4[%c2_230, %c1_231, %c0_232, %c0_233] : memref<3x3x32x64xf32, #tpu.memory_space<vmem>>, vector<1x1x32x64xf32>
    %194 = vector.shape_cast %193 : vector<1x1x32x64xf32> to vector<32x64xf32>
    %cst_234 = arith.constant dense<0.000000e+00> : vector<100x64xf32>
    %195 = tpu.matmul %192, %194, %cst_234 {dimension_numbers = #tpu.dot_dimension_numbers<[1], [0], [0], [1], [0, 0, 1, 1], [], []>} : vector<100x32xf32>, vector<32x64xf32>, vector<100x64xf32> -> vector<100x64xf32>
    %c0_235 = arith.constant 0 : index
    %c0_236 = arith.constant 0 : index
    %196 = vector.load %arg15[%c0_235, %c0_236] : memref<100x64xf32, #tpu.memory_space<vmem>>, vector<100x64xf32>
    %197 = arith.addf %196, %195 : vector<100x64xf32>
    %c0_237 = arith.constant 0 : index
    %c0_238 = arith.constant 0 : index
    %198 = vector.load %arg15[%c0_237, %c0_238] : memref<100x64xf32, #tpu.memory_space<vmem>>, vector<100x64xf32>
    tpu.vector_store %arg15[%c0_237, %c0_238], %197 {strides = array<i32>} : memref<100x64xf32, #tpu.memory_space<vmem>>, vector<100x64xf32>,
    %c22 = arith.constant 22 : index
    %c0_239 = arith.constant 0 : index
    %199 = vector.load %arg14[%c22, %c0_239] : memref<122x32xf32, #tpu.memory_space<vmem>>, vector<100x32xf32>
    %c2_240 = arith.constant 2 : index
    %c2_241 = arith.constant 2 : index
    %c0_242 = arith.constant 0 : index
    %c0_243 = arith.constant 0 : index
    %200 = vector.load %arg4[%c2_240, %c2_241, %c0_242, %c0_243] : memref<3x3x32x64xf32, #tpu.memory_space<vmem>>, vector<1x1x32x64xf32>
    %201 = vector.shape_cast %200 : vector<1x1x32x64xf32> to vector<32x64xf32>
    %cst_244 = arith.constant dense<0.000000e+00> : vector<100x64xf32>
    %202 = tpu.matmul %199, %201, %cst_244 {dimension_numbers = #tpu.dot_dimension_numbers<[1], [0], [0], [1], [0, 0, 1, 1], [], []>} : vector<100x32xf32>, vector<32x64xf32>, vector<100x64xf32> -> vector<100x64xf32>
    %c0_245 = arith.constant 0 : index
    %c0_246 = arith.constant 0 : index
    %203 = vector.load %arg15[%c0_245, %c0_246] : memref<100x64xf32, #tpu.memory_space<vmem>>, vector<100x64xf32>
    %204 = arith.addf %203, %202 : vector<100x64xf32>
    %c0_247 = arith.constant 0 : index
    %c0_248 = arith.constant 0 : index
    %205 = vector.load %arg15[%c0_247, %c0_248] : memref<100x64xf32, #tpu.memory_space<vmem>>, vector<100x64xf32>
    tpu.vector_store %arg15[%c0_247, %c0_248], %204 {strides = array<i32>} : memref<100x64xf32, #tpu.memory_space<vmem>>, vector<100x64xf32>,
    %c0_249 = arith.constant 0 : index
    %c0_250 = arith.constant 0 : index
    %206 = vector.load %arg15[%c0_249, %c0_250] : memref<100x64xf32, #tpu.memory_space<vmem>>, vector<100x64xf32>
    %c0_251 = arith.constant 0 : index
    %c0_252 = arith.constant 0 : index
    %207 = vector.load %arg5[%c0_251, %c0_252] : memref<1x64xf32, #tpu.memory_space<vmem>>, vector<1x64xf32>
    %208 = vector.broadcast %207 : vector<1x64xf32> to vector<100x64xf32>
    %209 = arith.addf %206, %208 : vector<100x64xf32>
    %cst_253 = arith.constant 0.000000e+00 : f32
    %210 = vector.broadcast %cst_253 : f32 to vector<100x64xf32>
    %211 = arith.maximumf %209, %210 : vector<100x64xf32>
    %c0_254 = arith.constant 0 : index
    %c0_255 = arith.constant 0 : index
    %212 = vector.load %arg15[%c0_254, %c0_255] : memref<100x64xf32, #tpu.memory_space<vmem>>, vector<100x64xf32>
    tpu.vector_store %arg15[%c0_254, %c0_255], %211 {strides = array<i32>} : memref<100x64xf32, #tpu.memory_space<vmem>>, vector<100x64xf32>,
    %c0_256 = arith.constant 0 : index
    %c0_257 = arith.constant 0 : index
    %213 = tpu.strided_load %arg15[%c0_256, %c0_257] {strides = array<i32: 2, 1>} : memref<100x64xf32, #tpu.memory_space<vmem>>, vector<4x64xf32>
    %c1_258 = arith.constant 1 : index
    %c0_259 = arith.constant 0 : index
    %214 = tpu.strided_load %arg15[%c1_258, %c0_259] {strides = array<i32: 2, 1>} : memref<100x64xf32, #tpu.memory_space<vmem>>, vector<4x64xf32>
    %215 = arith.maximumf %213, %214 : vector<4x64xf32>
    %c10_260 = arith.constant 10 : index
    %c0_261 = arith.constant 0 : index
    %216 = tpu.strided_load %arg15[%c10_260, %c0_261] {strides = array<i32: 2, 1>} : memref<100x64xf32, #tpu.memory_space<vmem>>, vector<4x64xf32>
    %c11_262 = arith.constant 11 : index
    %c0_263 = arith.constant 0 : index
    %217 = tpu.strided_load %arg15[%c11_262, %c0_263] {strides = array<i32: 2, 1>} : memref<100x64xf32, #tpu.memory_space<vmem>>, vector<4x64xf32>
    %218 = arith.maximumf %216, %217 : vector<4x64xf32>
    %219 = arith.maximumf %215, %218 : vector<4x64xf32>
    %c7 = arith.constant 7 : index
    %c0_264 = arith.constant 0 : index
    %220 = vector.load %arg16[%c7, %c0_264] : memref<50x64xf32, #tpu.memory_space<vmem>>, vector<4x64xf32>
    tpu.vector_store %arg16[%c7, %c0_264], %219 {strides = array<i32>} : memref<50x64xf32, #tpu.memory_space<vmem>>, vector<4x64xf32>,
    %c20_265 = arith.constant 20 : index
    %c0_266 = arith.constant 0 : index
    %221 = tpu.strided_load %arg15[%c20_265, %c0_266] {strides = array<i32: 2, 1>} : memref<100x64xf32, #tpu.memory_space<vmem>>, vector<4x64xf32>
    %c21_267 = arith.constant 21 : index
    %c0_268 = arith.constant 0 : index
    %222 = tpu.strided_load %arg15[%c21_267, %c0_268] {strides = array<i32: 2, 1>} : memref<100x64xf32, #tpu.memory_space<vmem>>, vector<4x64xf32>
    %223 = arith.maximumf %221, %222 : vector<4x64xf32>
    %c30 = arith.constant 30 : index
    %c0_269 = arith.constant 0 : index
    %224 = tpu.strided_load %arg15[%c30, %c0_269] {strides = array<i32: 2, 1>} : memref<100x64xf32, #tpu.memory_space<vmem>>, vector<4x64xf32>
    %c31_270 = arith.constant 31 : index
    %c0_271 = arith.constant 0 : index
    %225 = tpu.strided_load %arg15[%c31_270, %c0_271] {strides = array<i32: 2, 1>} : memref<100x64xf32, #tpu.memory_space<vmem>>, vector<4x64xf32>
    %226 = arith.maximumf %224, %225 : vector<4x64xf32>
    %227 = arith.maximumf %223, %226 : vector<4x64xf32>
    %c13 = arith.constant 13 : index
    %c0_272 = arith.constant 0 : index
    %228 = vector.load %arg16[%c13, %c0_272] : memref<50x64xf32, #tpu.memory_space<vmem>>, vector<4x64xf32>
    tpu.vector_store %arg16[%c13, %c0_272], %227 {strides = array<i32>} : memref<50x64xf32, #tpu.memory_space<vmem>>, vector<4x64xf32>,
    %c40 = arith.constant 40 : index
    %c0_273 = arith.constant 0 : index
    %229 = tpu.strided_load %arg15[%c40, %c0_273] {strides = array<i32: 2, 1>} : memref<100x64xf32, #tpu.memory_space<vmem>>, vector<4x64xf32>
    %c41_274 = arith.constant 41 : index
    %c0_275 = arith.constant 0 : index
    %230 = tpu.strided_load %arg15[%c41_274, %c0_275] {strides = array<i32: 2, 1>} : memref<100x64xf32, #tpu.memory_space<vmem>>, vector<4x64xf32>
    %231 = arith.maximumf %229, %230 : vector<4x64xf32>
    %c50 = arith.constant 50 : index
    %c0_276 = arith.constant 0 : index
    %232 = tpu.strided_load %arg15[%c50, %c0_276] {strides = array<i32: 2, 1>} : memref<100x64xf32, #tpu.memory_space<vmem>>, vector<4x64xf32>
    %c51_277 = arith.constant 51 : index
    %c0_278 = arith.constant 0 : index
    %233 = tpu.strided_load %arg15[%c51_277, %c0_278] {strides = array<i32: 2, 1>} : memref<100x64xf32, #tpu.memory_space<vmem>>, vector<4x64xf32>
    %234 = arith.maximumf %232, %233 : vector<4x64xf32>
    %235 = arith.maximumf %231, %234 : vector<4x64xf32>
    %c19_279 = arith.constant 19 : index
    %c0_280 = arith.constant 0 : index
    %236 = vector.load %arg16[%c19_279, %c0_280] : memref<50x64xf32, #tpu.memory_space<vmem>>, vector<4x64xf32>
    tpu.vector_store %arg16[%c19_279, %c0_280], %235 {strides = array<i32>} : memref<50x64xf32, #tpu.memory_space<vmem>>, vector<4x64xf32>,
    %c60 = arith.constant 60 : index
    %c0_281 = arith.constant 0 : index
    %237 = tpu.strided_load %arg15[%c60, %c0_281] {strides = array<i32: 2, 1>} : memref<100x64xf32, #tpu.memory_space<vmem>>, vector<4x64xf32>
    %c61_282 = arith.constant 61 : index
    %c0_283 = arith.constant 0 : index
    %238 = tpu.strided_load %arg15[%c61_282, %c0_283] {strides = array<i32: 2, 1>} : memref<100x64xf32, #tpu.memory_space<vmem>>, vector<4x64xf32>
    %239 = arith.maximumf %237, %238 : vector<4x64xf32>
    %c70 = arith.constant 70 : index
    %c0_284 = arith.constant 0 : index
    %240 = tpu.strided_load %arg15[%c70, %c0_284] {strides = array<i32: 2, 1>} : memref<100x64xf32, #tpu.memory_space<vmem>>, vector<4x64xf32>
    %c71_285 = arith.constant 71 : index
    %c0_286 = arith.constant 0 : index
    %241 = tpu.strided_load %arg15[%c71_285, %c0_286] {strides = array<i32: 2, 1>} : memref<100x64xf32, #tpu.memory_space<vmem>>, vector<4x64xf32>
    %242 = arith.maximumf %240, %241 : vector<4x64xf32>
    %243 = arith.maximumf %239, %242 : vector<4x64xf32>
    %c25 = arith.constant 25 : index
    %c0_287 = arith.constant 0 : index
    %244 = vector.load %arg16[%c25, %c0_287] : memref<50x64xf32, #tpu.memory_space<vmem>>, vector<4x64xf32>
    tpu.vector_store %arg16[%c25, %c0_287], %243 {strides = array<i32>} : memref<50x64xf32, #tpu.memory_space<vmem>>, vector<4x64xf32>,
    %c0_288 = arith.constant 0 : index
    %c0_289 = arith.constant 0 : index
    %245 = vector.load %arg16[%c0_288, %c0_289] : memref<50x64xf32, #tpu.memory_space<vmem>>, vector<36x64xf32>
    %c0_290 = arith.constant 0 : index
    %c0_291 = arith.constant 0 : index
    %c0_292 = arith.constant 0 : index
    %c0_293 = arith.constant 0 : index
    %246 = vector.load %arg6[%c0_290, %c0_291, %c0_292, %c0_293] : memref<3x3x64x128xf32, #tpu.memory_space<vmem>>, vector<1x1x64x128xf32>
    %247 = vector.shape_cast %246 : vector<1x1x64x128xf32> to vector<64x128xf32>
    %cst_294 = arith.constant dense<0.000000e+00> : vector<36x128xf32>
    %248 = tpu.matmul %245, %247, %cst_294 {dimension_numbers = #tpu.dot_dimension_numbers<[1], [0], [0], [1], [0, 0, 1, 1], [], []>} : vector<36x64xf32>, vector<64x128xf32>, vector<36x128xf32> -> vector<36x128xf32>
    %c0_295 = arith.constant 0 : index
    %c0_296 = arith.constant 0 : index
    %249 = vector.load %arg17[%c0_295, %c0_296] : memref<36x128xf32, #tpu.memory_space<vmem>>, vector<36x128xf32>
    tpu.vector_store %arg17[%c0_295, %c0_296], %248 {strides = array<i32>} : memref<36x128xf32, #tpu.memory_space<vmem>>, vector<36x128xf32>,
    %c1_297 = arith.constant 1 : index
    %c0_298 = arith.constant 0 : index
    %250 = vector.load %arg16[%c1_297, %c0_298] : memref<50x64xf32, #tpu.memory_space<vmem>>, vector<36x64xf32>
    %c0_299 = arith.constant 0 : index
    %c1_300 = arith.constant 1 : index
    %c0_301 = arith.constant 0 : index
    %c0_302 = arith.constant 0 : index
    %251 = vector.load %arg6[%c0_299, %c1_300, %c0_301, %c0_302] : memref<3x3x64x128xf32, #tpu.memory_space<vmem>>, vector<1x1x64x128xf32>
    %252 = vector.shape_cast %251 : vector<1x1x64x128xf32> to vector<64x128xf32>
    %cst_303 = arith.constant dense<0.000000e+00> : vector<36x128xf32>
    %253 = tpu.matmul %250, %252, %cst_303 {dimension_numbers = #tpu.dot_dimension_numbers<[1], [0], [0], [1], [0, 0, 1, 1], [], []>} : vector<36x64xf32>, vector<64x128xf32>, vector<36x128xf32> -> vector<36x128xf32>
    %c0_304 = arith.constant 0 : index
    %c0_305 = arith.constant 0 : index
    %254 = vector.load %arg17[%c0_304, %c0_305] : memref<36x128xf32, #tpu.memory_space<vmem>>, vector<36x128xf32>
    %255 = arith.addf %254, %253 : vector<36x128xf32>
    %c0_306 = arith.constant 0 : index
    %c0_307 = arith.constant 0 : index
    %256 = vector.load %arg17[%c0_306, %c0_307] : memref<36x128xf32, #tpu.memory_space<vmem>>, vector<36x128xf32>
    tpu.vector_store %arg17[%c0_306, %c0_307], %255 {strides = array<i32>} : memref<36x128xf32, #tpu.memory_space<vmem>>, vector<36x128xf32>,
    %c2_308 = arith.constant 2 : index
    %c0_309 = arith.constant 0 : index
    %257 = vector.load %arg16[%c2_308, %c0_309] : memref<50x64xf32, #tpu.memory_space<vmem>>, vector<36x64xf32>
    %c0_310 = arith.constant 0 : index
    %c2_311 = arith.constant 2 : index
    %c0_312 = arith.constant 0 : index
    %c0_313 = arith.constant 0 : index
    %258 = vector.load %arg6[%c0_310, %c2_311, %c0_312, %c0_313] : memref<3x3x64x128xf32, #tpu.memory_space<vmem>>, vector<1x1x64x128xf32>
    %259 = vector.shape_cast %258 : vector<1x1x64x128xf32> to vector<64x128xf32>
    %cst_314 = arith.constant dense<0.000000e+00> : vector<36x128xf32>
    %260 = tpu.matmul %257, %259, %cst_314 {dimension_numbers = #tpu.dot_dimension_numbers<[1], [0], [0], [1], [0, 0, 1, 1], [], []>} : vector<36x64xf32>, vector<64x128xf32>, vector<36x128xf32> -> vector<36x128xf32>
    %c0_315 = arith.constant 0 : index
    %c0_316 = arith.constant 0 : index
    %261 = vector.load %arg17[%c0_315, %c0_316] : memref<36x128xf32, #tpu.memory_space<vmem>>, vector<36x128xf32>
    %262 = arith.addf %261, %260 : vector<36x128xf32>
    %c0_317 = arith.constant 0 : index
    %c0_318 = arith.constant 0 : index
    %263 = vector.load %arg17[%c0_317, %c0_318] : memref<36x128xf32, #tpu.memory_space<vmem>>, vector<36x128xf32>
    tpu.vector_store %arg17[%c0_317, %c0_318], %262 {strides = array<i32>} : memref<36x128xf32, #tpu.memory_space<vmem>>, vector<36x128xf32>,
    %c6 = arith.constant 6 : index
    %c0_319 = arith.constant 0 : index
    %264 = vector.load %arg16[%c6, %c0_319] : memref<50x64xf32, #tpu.memory_space<vmem>>, vector<36x64xf32>
    %c1_320 = arith.constant 1 : index
    %c0_321 = arith.constant 0 : index
    %c0_322 = arith.constant 0 : index
    %c0_323 = arith.constant 0 : index
    %265 = vector.load %arg6[%c1_320, %c0_321, %c0_322, %c0_323] : memref<3x3x64x128xf32, #tpu.memory_space<vmem>>, vector<1x1x64x128xf32>
    %266 = vector.shape_cast %265 : vector<1x1x64x128xf32> to vector<64x128xf32>
    %cst_324 = arith.constant dense<0.000000e+00> : vector<36x128xf32>
    %267 = tpu.matmul %264, %266, %cst_324 {dimension_numbers = #tpu.dot_dimension_numbers<[1], [0], [0], [1], [0, 0, 1, 1], [], []>} : vector<36x64xf32>, vector<64x128xf32>, vector<36x128xf32> -> vector<36x128xf32>
    %c0_325 = arith.constant 0 : index
    %c0_326 = arith.constant 0 : index
    %268 = vector.load %arg17[%c0_325, %c0_326] : memref<36x128xf32, #tpu.memory_space<vmem>>, vector<36x128xf32>
    %269 = arith.addf %268, %267 : vector<36x128xf32>
    %c0_327 = arith.constant 0 : index
    %c0_328 = arith.constant 0 : index
    %270 = vector.load %arg17[%c0_327, %c0_328] : memref<36x128xf32, #tpu.memory_space<vmem>>, vector<36x128xf32>
    tpu.vector_store %arg17[%c0_327, %c0_328], %269 {strides = array<i32>} : memref<36x128xf32, #tpu.memory_space<vmem>>, vector<36x128xf32>,
    %c7_329 = arith.constant 7 : index
    %c0_330 = arith.constant 0 : index
    %271 = vector.load %arg16[%c7_329, %c0_330] : memref<50x64xf32, #tpu.memory_space<vmem>>, vector<36x64xf32>
    %c1_331 = arith.constant 1 : index
    %c1_332 = arith.constant 1 : index
    %c0_333 = arith.constant 0 : index
    %c0_334 = arith.constant 0 : index
    %272 = vector.load %arg6[%c1_331, %c1_332, %c0_333, %c0_334] : memref<3x3x64x128xf32, #tpu.memory_space<vmem>>, vector<1x1x64x128xf32>
    %273 = vector.shape_cast %272 : vector<1x1x64x128xf32> to vector<64x128xf32>
    %cst_335 = arith.constant dense<0.000000e+00> : vector<36x128xf32>
    %274 = tpu.matmul %271, %273, %cst_335 {dimension_numbers = #tpu.dot_dimension_numbers<[1], [0], [0], [1], [0, 0, 1, 1], [], []>} : vector<36x64xf32>, vector<64x128xf32>, vector<36x128xf32> -> vector<36x128xf32>
    %c0_336 = arith.constant 0 : index
    %c0_337 = arith.constant 0 : index
    %275 = vector.load %arg17[%c0_336, %c0_337] : memref<36x128xf32, #tpu.memory_space<vmem>>, vector<36x128xf32>
    %276 = arith.addf %275, %274 : vector<36x128xf32>
    %c0_338 = arith.constant 0 : index
    %c0_339 = arith.constant 0 : index
    %277 = vector.load %arg17[%c0_338, %c0_339] : memref<36x128xf32, #tpu.memory_space<vmem>>, vector<36x128xf32>
    tpu.vector_store %arg17[%c0_338, %c0_339], %276 {strides = array<i32>} : memref<36x128xf32, #tpu.memory_space<vmem>>, vector<36x128xf32>,
    %c8 = arith.constant 8 : index
    %c0_340 = arith.constant 0 : index
    %278 = vector.load %arg16[%c8, %c0_340] : memref<50x64xf32, #tpu.memory_space<vmem>>, vector<36x64xf32>
    %c1_341 = arith.constant 1 : index
    %c2_342 = arith.constant 2 : index
    %c0_343 = arith.constant 0 : index
    %c0_344 = arith.constant 0 : index
    %279 = vector.load %arg6[%c1_341, %c2_342, %c0_343, %c0_344] : memref<3x3x64x128xf32, #tpu.memory_space<vmem>>, vector<1x1x64x128xf32>
    %280 = vector.shape_cast %279 : vector<1x1x64x128xf32> to vector<64x128xf32>
    %cst_345 = arith.constant dense<0.000000e+00> : vector<36x128xf32>
    %281 = tpu.matmul %278, %280, %cst_345 {dimension_numbers = #tpu.dot_dimension_numbers<[1], [0], [0], [1], [0, 0, 1, 1], [], []>} : vector<36x64xf32>, vector<64x128xf32>, vector<36x128xf32> -> vector<36x128xf32>
    %c0_346 = arith.constant 0 : index
    %c0_347 = arith.constant 0 : index
    %282 = vector.load %arg17[%c0_346, %c0_347] : memref<36x128xf32, #tpu.memory_space<vmem>>, vector<36x128xf32>
    %283 = arith.addf %282, %281 : vector<36x128xf32>
    %c0_348 = arith.constant 0 : index
    %c0_349 = arith.constant 0 : index
    %284 = vector.load %arg17[%c0_348, %c0_349] : memref<36x128xf32, #tpu.memory_space<vmem>>, vector<36x128xf32>
    tpu.vector_store %arg17[%c0_348, %c0_349], %283 {strides = array<i32>} : memref<36x128xf32, #tpu.memory_space<vmem>>, vector<36x128xf32>,
    %c12_350 = arith.constant 12 : index
    %c0_351 = arith.constant 0 : index
    %285 = vector.load %arg16[%c12_350, %c0_351] : memref<50x64xf32, #tpu.memory_space<vmem>>, vector<36x64xf32>
    %c2_352 = arith.constant 2 : index
    %c0_353 = arith.constant 0 : index
    %c0_354 = arith.constant 0 : index
    %c0_355 = arith.constant 0 : index
    %286 = vector.load %arg6[%c2_352, %c0_353, %c0_354, %c0_355] : memref<3x3x64x128xf32, #tpu.memory_space<vmem>>, vector<1x1x64x128xf32>
    %287 = vector.shape_cast %286 : vector<1x1x64x128xf32> to vector<64x128xf32>
    %cst_356 = arith.constant dense<0.000000e+00> : vector<36x128xf32>
    %288 = tpu.matmul %285, %287, %cst_356 {dimension_numbers = #tpu.dot_dimension_numbers<[1], [0], [0], [1], [0, 0, 1, 1], [], []>} : vector<36x64xf32>, vector<64x128xf32>, vector<36x128xf32> -> vector<36x128xf32>
    %c0_357 = arith.constant 0 : index
    %c0_358 = arith.constant 0 : index
    %289 = vector.load %arg17[%c0_357, %c0_358] : memref<36x128xf32, #tpu.memory_space<vmem>>, vector<36x128xf32>
    %290 = arith.addf %289, %288 : vector<36x128xf32>
    %c0_359 = arith.constant 0 : index
    %c0_360 = arith.constant 0 : index
    %291 = vector.load %arg17[%c0_359, %c0_360] : memref<36x128xf32, #tpu.memory_space<vmem>>, vector<36x128xf32>
    tpu.vector_store %arg17[%c0_359, %c0_360], %290 {strides = array<i32>} : memref<36x128xf32, #tpu.memory_space<vmem>>, vector<36x128xf32>,
    %c13_361 = arith.constant 13 : index
    %c0_362 = arith.constant 0 : index
    %292 = vector.load %arg16[%c13_361, %c0_362] : memref<50x64xf32, #tpu.memory_space<vmem>>, vector<36x64xf32>
    %c2_363 = arith.constant 2 : index
    %c1_364 = arith.constant 1 : index
    %c0_365 = arith.constant 0 : index
    %c0_366 = arith.constant 0 : index
    %293 = vector.load %arg6[%c2_363, %c1_364, %c0_365, %c0_366] : memref<3x3x64x128xf32, #tpu.memory_space<vmem>>, vector<1x1x64x128xf32>
    %294 = vector.shape_cast %293 : vector<1x1x64x128xf32> to vector<64x128xf32>
    %cst_367 = arith.constant dense<0.000000e+00> : vector<36x128xf32>
    %295 = tpu.matmul %292, %294, %cst_367 {dimension_numbers = #tpu.dot_dimension_numbers<[1], [0], [0], [1], [0, 0, 1, 1], [], []>} : vector<36x64xf32>, vector<64x128xf32>, vector<36x128xf32> -> vector<36x128xf32>
    %c0_368 = arith.constant 0 : index
    %c0_369 = arith.constant 0 : index
    %296 = vector.load %arg17[%c0_368, %c0_369] : memref<36x128xf32, #tpu.memory_space<vmem>>, vector<36x128xf32>
    %297 = arith.addf %296, %295 : vector<36x128xf32>
    %c0_370 = arith.constant 0 : index
    %c0_371 = arith.constant 0 : index
    %298 = vector.load %arg17[%c0_370, %c0_371] : memref<36x128xf32, #tpu.memory_space<vmem>>, vector<36x128xf32>
    tpu.vector_store %arg17[%c0_370, %c0_371], %297 {strides = array<i32>} : memref<36x128xf32, #tpu.memory_space<vmem>>, vector<36x128xf32>,
    %c14 = arith.constant 14 : index
    %c0_372 = arith.constant 0 : index
    %299 = vector.load %arg16[%c14, %c0_372] : memref<50x64xf32, #tpu.memory_space<vmem>>, vector<36x64xf32>
    %c2_373 = arith.constant 2 : index
    %c2_374 = arith.constant 2 : index
    %c0_375 = arith.constant 0 : index
    %c0_376 = arith.constant 0 : index
    %300 = vector.load %arg6[%c2_373, %c2_374, %c0_375, %c0_376] : memref<3x3x64x128xf32, #tpu.memory_space<vmem>>, vector<1x1x64x128xf32>
    %301 = vector.shape_cast %300 : vector<1x1x64x128xf32> to vector<64x128xf32>
    %cst_377 = arith.constant dense<0.000000e+00> : vector<36x128xf32>
    %302 = tpu.matmul %299, %301, %cst_377 {dimension_numbers = #tpu.dot_dimension_numbers<[1], [0], [0], [1], [0, 0, 1, 1], [], []>} : vector<36x64xf32>, vector<64x128xf32>, vector<36x128xf32> -> vector<36x128xf32>
    %c0_378 = arith.constant 0 : index
    %c0_379 = arith.constant 0 : index
    %303 = vector.load %arg17[%c0_378, %c0_379] : memref<36x128xf32, #tpu.memory_space<vmem>>, vector<36x128xf32>
    %304 = arith.addf %303, %302 : vector<36x128xf32>
    %c0_380 = arith.constant 0 : index
    %c0_381 = arith.constant 0 : index
    %305 = vector.load %arg17[%c0_380, %c0_381] : memref<36x128xf32, #tpu.memory_space<vmem>>, vector<36x128xf32>
    tpu.vector_store %arg17[%c0_380, %c0_381], %304 {strides = array<i32>} : memref<36x128xf32, #tpu.memory_space<vmem>>, vector<36x128xf32>,
    %c0_382 = arith.constant 0 : index
    %c0_383 = arith.constant 0 : index
    %306 = vector.load %arg17[%c0_382, %c0_383] : memref<36x128xf32, #tpu.memory_space<vmem>>, vector<36x128xf32>
    %c0_384 = arith.constant 0 : index
    %c0_385 = arith.constant 0 : index
    %307 = vector.load %arg7[%c0_384, %c0_385] : memref<1x128xf32, #tpu.memory_space<vmem>>, vector<1x128xf32>
    %308 = vector.broadcast %307 : vector<1x128xf32> to vector<36x128xf32>
    %309 = arith.addf %306, %308 : vector<36x128xf32>
    %cst_386 = arith.constant 0.000000e+00 : f32
    %310 = vector.broadcast %cst_386 : f32 to vector<36x128xf32>
    %311 = arith.maximumf %309, %310 : vector<36x128xf32>
    %c0_387 = arith.constant 0 : index
    %c0_388 = arith.constant 0 : index
    %312 = vector.load %arg17[%c0_387, %c0_388] : memref<36x128xf32, #tpu.memory_space<vmem>>, vector<36x128xf32>
    tpu.vector_store %arg17[%c0_387, %c0_388], %311 {strides = array<i32>} : memref<36x128xf32, #tpu.memory_space<vmem>>, vector<36x128xf32>,
    %cst_389 = arith.constant 0.000000e+00 : f32
    %313 = vector.broadcast %cst_389 : f32 to vector<1x128xf32>
    %c0_390 = arith.constant 0 : index
    %c0_391 = arith.constant 0 : index
    %314 = tpu.strided_load %arg17[%c0_390, %c0_391] {strides = array<i32: 2, 1>} : memref<36x128xf32, #tpu.memory_space<vmem>>, vector<2x128xf32>
    %c1_392 = arith.constant 1 : index
    %c0_393 = arith.constant 0 : index
    %315 = tpu.strided_load %arg17[%c1_392, %c0_393] {strides = array<i32: 2, 1>} : memref<36x128xf32, #tpu.memory_space<vmem>>, vector<2x128xf32>
    %316 = arith.maximumf %314, %315 : vector<2x128xf32>
    %c6_394 = arith.constant 6 : index
    %c0_395 = arith.constant 0 : index
    %317 = tpu.strided_load %arg17[%c6_394, %c0_395] {strides = array<i32: 2, 1>} : memref<36x128xf32, #tpu.memory_space<vmem>>, vector<2x128xf32>
    %c7_396 = arith.constant 7 : index
    %c0_397 = arith.constant 0 : index
    %318 = tpu.strided_load %arg17[%c7_396, %c0_397] {strides = array<i32: 2, 1>} : memref<36x128xf32, #tpu.memory_space<vmem>>, vector<2x128xf32>
    %319 = arith.maximumf %317, %318 : vector<2x128xf32>
    %320 = arith.maximumf %316, %319 : vector<2x128xf32>
    %321 = vector.extract_strided_slice %320 {offsets = [0, 0], sizes = [1, 128], strides = [1, 1]} : vector<2x128xf32> to vector<1x128xf32>
    %c0_398 = arith.constant 0 : index
    %c0_399 = arith.constant 0 : index
    %c0_400 = arith.constant 0 : index
    %322 = vector.load %arg8[%c0_398, %c0_399, %c0_400] : memref<4x128x128xf32, #tpu.memory_space<vmem>>, vector<1x128x128xf32>
    %323 = vector.shape_cast %322 : vector<1x128x128xf32> to vector<128x128xf32>
    %cst_401 = arith.constant dense<0.000000e+00> : vector<1x128xf32>
    %324 = tpu.matmul %321, %323, %cst_401 {dimension_numbers = #tpu.dot_dimension_numbers<[1], [0], [0], [1], [0, 0, 1, 1], [], []>} : vector<1x128xf32>, vector<128x128xf32>, vector<1x128xf32> -> vector<1x128xf32>
    %325 = arith.addf %313, %324 : vector<1x128xf32>
    %326 = vector.extract_strided_slice %320 {offsets = [1, 0], sizes = [1, 128], strides = [1, 1]} : vector<2x128xf32> to vector<1x128xf32>
    %c1_402 = arith.constant 1 : index
    %c0_403 = arith.constant 0 : index
    %c0_404 = arith.constant 0 : index
    %327 = vector.load %arg8[%c1_402, %c0_403, %c0_404] : memref<4x128x128xf32, #tpu.memory_space<vmem>>, vector<1x128x128xf32>
    %328 = vector.shape_cast %327 : vector<1x128x128xf32> to vector<128x128xf32>
    %cst_405 = arith.constant dense<0.000000e+00> : vector<1x128xf32>
    %329 = tpu.matmul %326, %328, %cst_405 {dimension_numbers = #tpu.dot_dimension_numbers<[1], [0], [0], [1], [0, 0, 1, 1], [], []>} : vector<1x128xf32>, vector<128x128xf32>, vector<1x128xf32> -> vector<1x128xf32>
    %330 = arith.addf %325, %329 : vector<1x128xf32>
    %c12_406 = arith.constant 12 : index
    %c0_407 = arith.constant 0 : index
    %331 = tpu.strided_load %arg17[%c12_406, %c0_407] {strides = array<i32: 2, 1>} : memref<36x128xf32, #tpu.memory_space<vmem>>, vector<2x128xf32>
    %c13_408 = arith.constant 13 : index
    %c0_409 = arith.constant 0 : index
    %332 = tpu.strided_load %arg17[%c13_408, %c0_409] {strides = array<i32: 2, 1>} : memref<36x128xf32, #tpu.memory_space<vmem>>, vector<2x128xf32>
    %333 = arith.maximumf %331, %332 : vector<2x128xf32>
    %c18_410 = arith.constant 18 : index
    %c0_411 = arith.constant 0 : index
    %334 = tpu.strided_load %arg17[%c18_410, %c0_411] {strides = array<i32: 2, 1>} : memref<36x128xf32, #tpu.memory_space<vmem>>, vector<2x128xf32>
    %c19_412 = arith.constant 19 : index
    %c0_413 = arith.constant 0 : index
    %335 = tpu.strided_load %arg17[%c19_412, %c0_413] {strides = array<i32: 2, 1>} : memref<36x128xf32, #tpu.memory_space<vmem>>, vector<2x128xf32>
    %336 = arith.maximumf %334, %335 : vector<2x128xf32>
    %337 = arith.maximumf %333, %336 : vector<2x128xf32>
    %338 = vector.extract_strided_slice %337 {offsets = [0, 0], sizes = [1, 128], strides = [1, 1]} : vector<2x128xf32> to vector<1x128xf32>
    %c2_414 = arith.constant 2 : index
    %c0_415 = arith.constant 0 : index
    %c0_416 = arith.constant 0 : index
    %339 = vector.load %arg8[%c2_414, %c0_415, %c0_416] : memref<4x128x128xf32, #tpu.memory_space<vmem>>, vector<1x128x128xf32>
    %340 = vector.shape_cast %339 : vector<1x128x128xf32> to vector<128x128xf32>
    %cst_417 = arith.constant dense<0.000000e+00> : vector<1x128xf32>
    %341 = tpu.matmul %338, %340, %cst_417 {dimension_numbers = #tpu.dot_dimension_numbers<[1], [0], [0], [1], [0, 0, 1, 1], [], []>} : vector<1x128xf32>, vector<128x128xf32>, vector<1x128xf32> -> vector<1x128xf32>
    %342 = arith.addf %330, %341 : vector<1x128xf32>
    %343 = vector.extract_strided_slice %337 {offsets = [1, 0], sizes = [1, 128], strides = [1, 1]} : vector<2x128xf32> to vector<1x128xf32>
    %c3 = arith.constant 3 : index
    %c0_418 = arith.constant 0 : index
    %c0_419 = arith.constant 0 : index
    %344 = vector.load %arg8[%c3, %c0_418, %c0_419] : memref<4x128x128xf32, #tpu.memory_space<vmem>>, vector<1x128x128xf32>
    %345 = vector.shape_cast %344 : vector<1x128x128xf32> to vector<128x128xf32>
    %cst_420 = arith.constant dense<0.000000e+00> : vector<1x128xf32>
    %346 = tpu.matmul %343, %345, %cst_420 {dimension_numbers = #tpu.dot_dimension_numbers<[1], [0], [0], [1], [0, 0, 1, 1], [], []>} : vector<1x128xf32>, vector<128x128xf32>, vector<1x128xf32> -> vector<1x128xf32>
    %347 = arith.addf %342, %346 : vector<1x128xf32>
    %c0_421 = arith.constant 0 : index
    %c0_422 = arith.constant 0 : index
    %348 = vector.load %arg9[%c0_421, %c0_422] : memref<1x128xf32, #tpu.memory_space<vmem>>, vector<1x128xf32>
    %349 = arith.addf %347, %348 : vector<1x128xf32>
    %cst_423 = arith.constant 0.000000e+00 : f32
    %350 = vector.broadcast %cst_423 : f32 to vector<1x128xf32>
    %351 = arith.maximumf %349, %350 : vector<1x128xf32>
    %c0_424 = arith.constant 0 : index
    %c0_425 = arith.constant 0 : index
    %352 = vector.load %arg10[%c0_424, %c0_425] : memref<1x128xf32, #tpu.memory_space<vmem>>, vector<1x128xf32>
    %353 = arith.mulf %351, %352 : vector<1x128xf32>
    %cst_426 = arith.constant dense<0.000000e+00> : vector<1xf32>
    %354 = vector.multi_reduction <add>, %353, %cst_426 [1] : vector<1x128xf32> to vector<1xf32>
    %355 = vector.shape_cast %354 : vector<1xf32> to vector<1x1xf32>
    %c0_427 = arith.constant 0 : index
    %c0_428 = arith.constant 0 : index
    %356 = vector.load %arg11[%c0_427, %c0_428] : memref<1x1xf32, #tpu.memory_space<vmem>>, vector<1x1xf32>
    %357 = arith.addf %355, %356 : vector<1x1xf32>
    %cst_429 = arith.constant 0.000000e+00 : f32
    %358 = vector.broadcast %cst_429 : f32 to vector<1x1xf32>
    %359 = arith.subf %358, %357 : vector<1x1xf32>
    %360 = math.exp %359 : vector<1x1xf32>
    %cst_430 = arith.constant 1.000000e+00 : f32
    %361 = vector.broadcast %cst_430 : f32 to vector<1x1xf32>
    %362 = arith.addf %361, %360 : vector<1x1xf32>
    %cst_431 = arith.constant 1.000000e+00 : f32
    %363 = vector.broadcast %cst_431 : f32 to vector<1x1xf32>
    %364 = arith.divf %363, %362 : vector<1x1xf32>
    %c0_432 = arith.constant 0 : index
    %c0_433 = arith.constant 0 : index
    %c0_434 = arith.constant 0 : index
    %365 = vector.load %arg12[%c0_432, %c0_433, %c0_434] : memref<1x1x1xf32, #tpu.memory_space<vmem>>, vector<1x1x1xf32>
    %366 = vector.shape_cast %365 : vector<1x1x1xf32> to vector<1x1xf32>
    %367 = vector.shape_cast %364 : vector<1x1xf32> to vector<1x1x1xf32>
    tpu.vector_store %arg12[%c0_432, %c0_433, %c0_434], %367 {strides = array<i32>} : memref<1x1x1xf32, #tpu.memory_space<vmem>>, vector<1x1x1xf32>,
    return
  }
  func.func @transform_0(%arg0: i32) -> (i32, i32, i32) {
    %c0_i32 = arith.constant 0 : i32
    %c0_i32_0 = arith.constant 0 : i32
    %c0_i32_1 = arith.constant 0 : i32
    return %arg0, %c0_i32, %c0_i32_0 : i32, i32, i32
  }
  func.func @transform_1(%arg0: i32) -> (i32, i32, i32, i32) {
    %c0_i32 = arith.constant 0 : i32
    %c0_i32_0 = arith.constant 0 : i32
    %c0_i32_1 = arith.constant 0 : i32
    %c0_i32_2 = arith.constant 0 : i32
    %c0_i32_3 = arith.constant 0 : i32
    return %c0_i32, %c0_i32_0, %c0_i32_1, %c0_i32_2 : i32, i32, i32, i32
  }
  func.func @transform_2(%arg0: i32) -> (i32, i32) {
    %c0_i32 = arith.constant 0 : i32
    %c0_i32_0 = arith.constant 0 : i32
    %c0_i32_1 = arith.constant 0 : i32
    return %c0_i32, %c0_i32_0 : i32, i32
  }
  func.func @transform_3(%arg0: i32) -> (i32, i32, i32, i32) {
    %c0_i32 = arith.constant 0 : i32
    %c0_i32_0 = arith.constant 0 : i32
    %c0_i32_1 = arith.constant 0 : i32
    %c0_i32_2 = arith.constant 0 : i32
    %c0_i32_3 = arith.constant 0 : i32
    return %c0_i32, %c0_i32_0, %c0_i32_1, %c0_i32_2 : i32, i32, i32, i32
  }
  func.func @transform_4(%arg0: i32) -> (i32, i32) {
    %c0_i32 = arith.constant 0 : i32
    %c0_i32_0 = arith.constant 0 : i32
    %c0_i32_1 = arith.constant 0 : i32
    return %c0_i32, %c0_i32_0 : i32, i32
  }
  func.func @transform_5(%arg0: i32) -> (i32, i32, i32, i32) {
    %c0_i32 = arith.constant 0 : i32
    %c0_i32_0 = arith.constant 0 : i32
    %c0_i32_1 = arith.constant 0 : i32
    %c0_i32_2 = arith.constant 0 : i32
    %c0_i32_3 = arith.constant 0 : i32
    return %c0_i32, %c0_i32_0, %c0_i32_1, %c0_i32_2 : i32, i32, i32, i32
  }
  func.func @transform_6(%arg0: i32) -> (i32, i32) {
    %c0_i32 = arith.constant 0 : i32
    %c0_i32_0 = arith.constant 0 : i32
    %c0_i32_1 = arith.constant 0 : i32
    return %c0_i32, %c0_i32_0 : i32, i32
  }
  func.func @transform_7(%arg0: i32) -> (i32, i32, i32) {
    %c0_i32 = arith.constant 0 : i32
    %c0_i32_0 = arith.constant 0 : i32
    %c0_i32_1 = arith.constant 0 : i32
    %c0_i32_2 = arith.constant 0 : i32
    return %c0_i32, %c0_i32_0, %c0_i32_1 : i32, i32, i32
  }
  func.func @transform_8(%arg0: i32) -> (i32, i32) {
    %c0_i32 = arith.constant 0 : i32
    %c0_i32_0 = arith.constant 0 : i32
    %c0_i32_1 = arith.constant 0 : i32
    return %c0_i32, %c0_i32_0 : i32, i32
  }
  func.func @transform_9(%arg0: i32) -> (i32, i32) {
    %c0_i32 = arith.constant 0 : i32
    %c0_i32_0 = arith.constant 0 : i32
    %c0_i32_1 = arith.constant 0 : i32
    return %c0_i32, %c0_i32_0 : i32, i32
  }
  func.func @transform_10(%arg0: i32) -> (i32, i32) {
    %c0_i32 = arith.constant 0 : i32
    %c0_i32_0 = arith.constant 0 : i32
    %c0_i32_1 = arith.constant 0 : i32
    return %c0_i32, %c0_i32_0 : i32, i32
  }
  func.func @transform_11(%arg0: i32) -> (i32, i32, i32) {
    %c0_i32 = arith.constant 0 : i32
    %c0_i32_0 = arith.constant 0 : i32
    %c0_i32_1 = arith.constant 0 : i32
    return %arg0, %c0_i32, %c0_i32_0 : i32, i32, i32
  }
}

</mosaic_0001>

<llo_original>
// kernel: net_forward.1
$region0: #{net_forward.1}
  #allocation0 [shape = 'u32[]', space=smem, size = 0x4, offset = 0x4, fixed_abs, tag = 'smem constant byte address 0x4 - core index']
  #allocation1 [shape = 'u32[144,128]{1,0:T(1,128)}', space=vmem, size = 0x12000, scoped, tag = 'internal scratch']
  #allocation2 [shape = 'f32[324,32]{1,0:T(8,128)}', space=vmem, size = 0x29000, scoped, tag = 'scratch operand']
  #allocation3 [shape = 'f32[122,32]{1,0:T(8,128)}', space=vmem, size = 0x10000, scoped, tag = 'scratch operand']
  #allocation4 [shape = 'f32[100,64]{1,0:T(8,128)}', space=vmem, size = 0xd000, scoped, tag = 'scratch operand']
  #allocation5 [shape = 'f32[50,64]{1,0:T(8,128)}', space=vmem, size = 0x7000, scoped, tag = 'scratch operand']
  #allocation6 [shape = 'f32[36,128]{1,0:T(8,128)}', space=vmem, size = 0x5000, scoped, tag = 'scratch operand']
  #allocation7 [shape = 'f32[1,1]{1,0:T(1,128)S(1)}', space=vmem, size = 0x200, scoped, tag = 'scoped memory for net_forward.1']
  %s0 = inlined_call_operand.vmem [shape: f32[2,362,3], index: 0, kind: input, shape index: {}]
  %s1 = inlined_call_operand.vmem [shape: f32[3,3,3,32], index: 1, kind: input, shape index: {}]
  %s2 = inlined_call_operand.vmem [shape: f32[1,32], index: 2, kind: input, shape index: {}]
  %s3 = inlined_call_operand.vmem [shape: f32[3,3,32,64], index: 3, kind: input, shape index: {}]
  %s4 = inlined_call_operand.vmem [shape: f32[1,64], index: 4, kind: input, shape index: {}]
  %s5 = inlined_call_operand.vmem [shape: f32[3,3,64,128], index: 5, kind: input, shape index: {}]
  %s6 = inlined_call_operand.vmem [shape: f32[1,128], index: 6, kind: input, shape index: {}]
  %s7 = inlined_call_operand.vmem [shape: f32[4,128,128], index: 7, kind: input, shape index: {}]
  %s8 = inlined_call_operand.vmem [shape: f32[1,128], index: 8, kind: input, shape index: {}]
  %s9 = inlined_call_operand.vmem [shape: f32[1,128], index: 9, kind: input, shape index: {}]
  %s10 = inlined_call_operand.<no memory space> [shape: f32[1,1], index: 10, kind: input, shape index: {}]
  %s11 = inlined_call_operand.vmem [shape: f32[2,1,1], index: 11, kind: output, shape index: {}]
  %s12 = sld [smem:[#allocation0]]
  $region77: #{net_forward.1} parent=0
    _
  %s14 = ssub.s32 1, %s12
  %s15 = scalar_select 0, %s14, %s12
  %v16 = vstv %s10
  %17 = vst [vmem:[#allocation7] sm:$0x1] %v16
  loop: start=0, step=1, limit=4
  $region2: #{net_forward.1} parent=0 // loop_pre_header
    _
  $region3: #{net_forward.1} parent=0 // loop_header
    %s19 = sphi 0, %s23
    %p20 = scmp.ge.s32.totalorder %s19, 4
    %s29 = sphi 0, %s31
    %s32 = sphi 0, %s29
    %s33 = sphi 0, %s32
    %s49 = sphi 0, %s33
    %s53 = sphi 0, %s53
    %s55 = sphi 0, %s53
    %s56 = sphi 0, %s55
    %s70 = sphi 0, %s56
    %s74 = sphi 0, %s74
    %s76 = sphi 0, %s74
    %s77 = sphi 0, %s76
    %s91 = sphi 0, %s77
    %s95 = sphi 0, %s95
    %s97 = sphi 0, %s95
    %s98 = sphi 0, %s97
    %s112 = sphi 0, %s98
    %s116 = sphi 0, %s116
    %s118 = sphi 0, %s116
    %s119 = sphi 0, %s118
    %s133 = sphi 0, %s119
    %s137 = sphi 0, %s137
    %s139 = sphi 0, %s137
    %s140 = sphi 0, %s139
    %s154 = sphi 0, %s140
    %s158 = sphi 0, %s158
    %s160 = sphi 0, %s158
    %s161 = sphi 0, %s160
    %s175 = sphi 0, %s161
    %s179 = sphi 0, %s179
    %s181 = sphi 0, %s179
    %s182 = sphi 0, %s181
    %s196 = sphi 0, %s182
    %s200 = sphi 0, %s200
    %s202 = sphi 0, %s200
    %s203 = sphi 0, %s202
    %s217 = sphi 0, %s203
    %s221 = sphi 0, %s221
    %s223 = sphi 0, %s221
    %s224 = sphi 0, %s223
    %s238 = sphi 0, %s224
    %s242 = sphi 0, %s242
    %s244 = sphi 0, %s242
    %s245 = sphi 0, %s244
    %s259 = sphi 0, %s245
    %s265 = sphi 0, %s267
    %s268 = sphi 0, %s265
    %s269 = sphi 0, %s268
    %s285 = sphi 0, %s269
  $region4: #{net_forward.1} parent=0 // loop_header_branch
    %22 = sbr.rel (%p20) target = $region8
  $region5: #{net_forward.1} parent=0 // loop_body
    %s24 = ssub.s32 %s19, 1
    %s25 = ssub.s32 %s19, 2
    %s26 = sadd.s32 %s19, 1
    %s27 = ssub.s32 %s19, %s26
    %p28 = scmp.eq.s32.totalorder %s27, 0
    %s30 = sadd.s32 %s29, 1
    %s31 = scalar_select %p28, %s29, %s30
    %p34 = pneg %p28
    %p35 = scmp.eq.s32.totalorder %s19, 1
    %p36 = por %p34, %p35
    %p37 = scmp.ne.s32.totalorder %s29, %s32
    %p38 = scmp.eq.s32.totalorder %s19, 0
    %p39 = por %p37, %p38
    %p40 = scmp.ne.s32.totalorder %s29, %s32
    %p41 = scmp.eq.s32.totalorder %s24, 1
    %p42 = por %p40, %p41
    %p43 = scmp.ne.s32.totalorder %s32, %s33
    %p44 = scmp.eq.s32.totalorder %s24, 0
    %p45 = por %p43, %p44
    %p46 = scmp.ne.s32.totalorder %s32, %s33
    %p47 = scmp.eq.s32.totalorder %s25, 1
    %p48 = por %p46, %p47
    %p50 = scmp.ne.s32.totalorder %s33, %s49
    %p51 = scmp.eq.s32.totalorder %s25, 0
    %p52 = por %p50, %p51
    %s54 = sadd.s32 %s53, 1
    %p57 = scmp.eq.s32.totalorder %s19, 1
    %p58 = scmp.ne.s32.totalorder %s53, %s55
    %p59 = scmp.eq.s32.totalorder %s19, 0
    %p60 = por %p58, %p59
    %p61 = scmp.ne.s32.totalorder %s53, %s55
    %p62 = scmp.eq.s32.totalorder %s24, 1
    %p63 = por %p61, %p62
    %p64 = scmp.ne.s32.totalorder %s55, %s56
    %p65 = scmp.eq.s32.totalorder %s24, 0
    %p66 = por %p64, %p65
    %p67 = scmp.ne.s32.totalorder %s55, %s56
    %p68 = scmp.eq.s32.totalorder %s25, 1
    %p69 = por %p67, %p68
    %p71 = scmp.ne.s32.totalorder %s56, %s70
    %p72 = scmp.eq.s32.totalorder %s25, 0
    %p73 = por %p71, %p72
    %s75 = sadd.s32 %s74, 1
    %p78 = scmp.eq.s32.totalorder %s19, 1
    %p79 = scmp.ne.s32.totalorder %s74, %s76
    %p80 = scmp.eq.s32.totalorder %s19, 0
    %p81 = por %p79, %p80
    %p82 = scmp.ne.s32.totalorder %s74, %s76
    %p83 = scmp.eq.s32.totalorder %s24, 1
    %p84 = por %p82, %p83
    %p85 = scmp.ne.s32.totalorder %s76, %s77
    %p86 = scmp.eq.s32.totalorder %s24, 0
    %p87 = por %p85, %p86
    %p88 = scmp.ne.s32.totalorder %s76, %s77
    %p89 = scmp.eq.s32.totalorder %s25, 1
    %p90 = por %p88, %p89
    %p92 = scmp.ne.s32.totalorder %s77, %s91
    %p93 = scmp.eq.s32.totalorder %s25, 0
    %p94 = por %p92, %p93
    %s96 = sadd.s32 %s95, 1
    %p99 = scmp.eq.s32.totalorder %s19, 1
    %p100 = scmp.ne.s32.totalorder %s95, %s97
    %p101 = scmp.eq.s32.totalorder %s19, 0
    %p102 = por %p100, %p101
    %p103 = scmp.ne.s32.totalorder %s95, %s97
    %p104 = scmp.eq.s32.totalorder %s24, 1
    %p105 = por %p103, %p104
    %p106 = scmp.ne.s32.totalorder %s97, %s98
    %p107 = scmp.eq.s32.totalorder %s24, 0
    %p108 = por %p106, %p107
    %p109 = scmp.ne.s32.totalorder %s97, %s98
    %p110 = scmp.eq.s32.totalorder %s25, 1
    %p111 = por %p109, %p110
    %p113 = scmp.ne.s32.totalorder %s98, %s112
    %p114 = scmp.eq.s32.totalorder %s25, 0
    %p115 = por %p113, %p114
    %s117 = sadd.s32 %s116, 1
    %p120 = scmp.eq.s32.totalorder %s19, 1
    %p121 = scmp.ne.s32.totalorder %s116, %s118
    %p122 = scmp.eq.s32.totalorder %s19, 0
    %p123 = por %p121, %p122
    %p124 = scmp.ne.s32.totalorder %s116, %s118
    %p125 = scmp.eq.s32.totalorder %s24, 1
    %p126 = por %p124, %p125
    %p127 = scmp.ne.s32.totalorder %s118, %s119
    %p128 = scmp.eq.s32.totalorder %s24, 0
    %p129 = por %p127, %p128
    %p130 = scmp.ne.s32.totalorder %s118, %s119
    %p131 = scmp.eq.s32.totalorder %s25, 1
    %p132 = por %p130, %p131
    %p134 = scmp.ne.s32.totalorder %s119, %s133
    %p135 = scmp.eq.s32.totalorder %s25, 0
    %p136 = por %p134, %p135
    %s138 = sadd.s32 %s137, 1
    %p141 = scmp.eq.s32.totalorder %s19, 1
    %p142 = scmp.ne.s32.totalorder %s137, %s139
    %p143 = scmp.eq.s32.totalorder %s19, 0
    %p144 = por %p142, %p143
    %p145 = scmp.ne.s32.totalorder %s137, %s139
    %p146 = scmp.eq.s32.totalorder %s24, 1
    %p147 = por %p145, %p146
    %p148 = scmp.ne.s32.totalorder %s139, %s140
    %p149 = scmp.eq.s32.totalorder %s24, 0
    %p150 = por %p148, %p149
    %p151 = scmp.ne.s32.totalorder %s139, %s140
    %p152 = scmp.eq.s32.totalorder %s25, 1
    %p153 = por %p151, %p152
    %p155 = scmp.ne.s32.totalorder %s140, %s154
    %p156 = scmp.eq.s32.totalorder %s25, 0
    %p157 = por %p155, %p156
    %s159 = sadd.s32 %s158, 1
    %p162 = scmp.eq.s32.totalorder %s19, 1
    %p163 = scmp.ne.s32.totalorder %s158, %s160
    %p164 = scmp.eq.s32.totalorder %s19, 0
    %p165 = por %p163, %p164
    %p166 = scmp.ne.s32.totalorder %s158, %s160
    %p167 = scmp.eq.s32.totalorder %s24, 1
    %p168 = por %p166, %p167
    %p169 = scmp.ne.s32.totalorder %s160, %s161
    %p170 = scmp.eq.s32.totalorder %s24, 0
    %p171 = por %p169, %p170
    %p172 = scmp.ne.s32.totalorder %s160, %s161
    %p173 = scmp.eq.s32.totalorder %s25, 1
    %p174 = por %p172, %p173
    %p176 = scmp.ne.s32.totalorder %s161, %s175
    %p177 = scmp.eq.s32.totalorder %s25, 0
    %p178 = por %p176, %p177
    %s180 = sadd.s32 %s179, 1
    %p183 = scmp.eq.s32.totalorder %s19, 1
    %p184 = scmp.ne.s32.totalorder %s179, %s181
    %p185 = scmp.eq.s32.totalorder %s19, 0
    %p186 = por %p184, %p185
    %p187 = scmp.ne.s32.totalorder %s179, %s181
    %p188 = scmp.eq.s32.totalorder %s24, 1
    %p189 = por %p187, %p188
    %p190 = scmp.ne.s32.totalorder %s181, %s182
    %p191 = scmp.eq.s32.totalorder %s24, 0
    %p192 = por %p190, %p191
    %p193 = scmp.ne.s32.totalorder %s181, %s182
    %p194 = scmp.eq.s32.totalorder %s25, 1
    %p195 = por %p193, %p194
    %p197 = scmp.ne.s32.totalorder %s182, %s196
    %p198 = scmp.eq.s32.totalorder %s25, 0
    %p199 = por %p197, %p198
    %s201 = sadd.s32 %s200, 1
    %p204 = scmp.eq.s32.totalorder %s19, 1
    %p205 = scmp.ne.s32.totalorder %s200, %s202
    %p206 = scmp.eq.s32.totalorder %s19, 0
    %p207 = por %p205, %p206
    %p208 = scmp.ne.s32.totalorder %s200, %s202
    %p209 = scmp.eq.s32.totalorder %s24, 1
    %p210 = por %p208, %p209
    %p211 = scmp.ne.s32.totalorder %s202, %s203
    %p212 = scmp.eq.s32.totalorder %s24, 0
    %p213 = por %p211, %p212
    %p214 = scmp.ne.s32.totalorder %s202, %s203
    %p215 = scmp.eq.s32.totalorder %s25, 1
    %p216 = por %p214, %p215
    %p218 = scmp.ne.s32.totalorder %s203, %s217
    %p219 = scmp.eq.s32.totalorder %s25, 0
    %p220 = por %p218, %p219
    %s222 = sadd.s32 %s221, 1
    %p225 = scmp.eq.s32.totalorder %s19, 1
    %p226 = scmp.ne.s32.totalorder %s221, %s223
    %p227 = scmp.eq.s32.totalorder %s19, 0
    %p228 = por %p226, %p227
    %p229 = scmp.ne.s32.totalorder %s221, %s223
    %p230 = scmp.eq.s32.totalorder %s24, 1
    %p231 = por %p229, %p230
    %p232 = scmp.ne.s32.totalorder %s223, %s224
    %p233 = scmp.eq.s32.totalorder %s24, 0
    %p234 = por %p232, %p233
    %p235 = scmp.ne.s32.totalorder %s223, %s224
    %p236 = scmp.eq.s32.totalorder %s25, 1
    %p237 = por %p235, %p236
    %p239 = scmp.ne.s32.totalorder %s224, %s238
    %p240 = scmp.eq.s32.totalorder %s25, 0
    %p241 = por %p239, %p240
    %s243 = sadd.s32 %s242, 1
    %p246 = scmp.eq.s32.totalorder %s19, 1
    %p247 = scmp.ne.s32.totalorder %s242, %s244
    %p248 = scmp.eq.s32.totalorder %s19, 0
    %p249 = por %p247, %p248
    %p250 = scmp.ne.s32.totalorder %s242, %s244
    %p251 = scmp.eq.s32.totalorder %s24, 1
    %p252 = por %p250, %p251
    %p253 = scmp.ne.s32.totalorder %s244, %s245
    %p254 = scmp.eq.s32.totalorder %s24, 0
    %p255 = por %p253, %p254
    %p256 = scmp.ne.s32.totalorder %s244, %s245
    %p257 = scmp.eq.s32.totalorder %s25, 1
    %p258 = por %p256, %p257
    %p260 = scmp.ne.s32.totalorder %s245, %s259
    %p261 = scmp.eq.s32.totalorder %s25, 0
    %p262 = por %p260, %p261
    %s263 = ssub.s32 %s19, %s26
    %p264 = scmp.eq.s32.totalorder %s263, 0
    %s266 = sadd.s32 %s265, 1
    %s267 = scalar_select %p264, %s265, %s266
    %p270 = pneg %p264
    %p271 = scmp.eq.s32.totalorder %s19, 1
    %p272 = por %p270, %p271
    %p273 = scmp.ne.s32.totalorder %s265, %s268
    %p274 = scmp.eq.s32.totalorder %s19, 0
    %p275 = por %p273, %p274
    %p276 = scmp.ne.s32.totalorder %s265, %s268
    %p277 = scmp.eq.s32.totalorder %s24, 1
    %p278 = por %p276, %p277
    %p279 = scmp.ne.s32.totalorder %s268, %s269
    %p280 = scmp.eq.s32.totalorder %s24, 0
    %p281 = por %p279, %p280
    %p282 = scmp.ne.s32.totalorder %s268, %s269
    %p283 = scmp.eq.s32.totalorder %s25, 1
    %p284 = por %p282, %p283
    %p286 = scmp.ne.s32.totalorder %s269, %s285
    %p287 = scmp.eq.s32.totalorder %s25, 0
    %p288 = por %p286, %p287
    %p289 = scmp.le.s32.totalorder 1, %s19
    %p290 = scmp.lt.s32.totalorder %s19, 3
    %p291 = pnand %p289, %p290
    %p292 = pneg %p291
    // Predicated region
    $region9: #{net_forward.1} parent=5 // pred_check
      _
    $region10: #{net_forward.1} parent=5 // pred_check_branch
      %294 = sbr.rel (%p291) target = $region12
    $region11: #{net_forward.1} parent=5 // pred_region
      %s295 = ssub.s32 %s19, 1
      // Predicated region
      $region13: #{net_forward.1} parent=11 // pred_check
        %p296 = pneg %p66
      $region14: #{net_forward.1} parent=11 // pred_check_branch
        %298 = sbr.rel (%p296) target = $region16
      $region15: #{net_forward.1} parent=11 // pred_region
        _
      $region16: #{net_forward.1} parent=11 // pred_fallthru
        _
      // Predicated region
      $region17: #{net_forward.1} parent=11 // pred_check
        %p299 = pneg %p87
      $region18: #{net_forward.1} parent=11 // pred_check_branch
        %301 = sbr.rel (%p299) target = $region20
      $region19: #{net_forward.1} parent=11 // pred_region
        _
      $region20: #{net_forward.1} parent=11 // pred_fallthru
        _
      // Predicated region
      $region21: #{net_forward.1} parent=11 // pred_check
        %p302 = pneg %p108
      $region22: #{net_forward.1} parent=11 // pred_check_branch
        %304 = sbr.rel (%p302) target = $region24
      $region23: #{net_forward.1} parent=11 // pred_region
        _
      $region24: #{net_forward.1} parent=11 // pred_fallthru
        _
      // Predicated region
      $region25: #{net_forward.1} parent=11 // pred_check
        %p305 = pneg %p129
      $region26: #{net_forward.1} parent=11 // pred_check_branch
        %307 = sbr.rel (%p305) target = $region28
      $region27: #{net_forward.1} parent=11 // pred_region
        _
      $region28: #{net_forward.1} parent=11 // pred_fallthru
        _
      // Predicated region
      $region29: #{net_forward.1} parent=11 // pred_check
        %p308 = pneg %p150
      $region30: #{net_forward.1} parent=11 // pred_check_branch
        %310 = sbr.rel (%p308) target = $region32
      $region31: #{net_forward.1} parent=11 // pred_region
        _
      $region32: #{net_forward.1} parent=11 // pred_fallthru
        _
      // Predicated region
      $region33: #{net_forward.1} parent=11 // pred_check
        %p311 = pneg %p171
      $region34: #{net_forward.1} parent=11 // pred_check_branch
        %313 = sbr.rel (%p311) target = $region36
      $region35: #{net_forward.1} parent=11 // pred_region
        _
      $region36: #{net_forward.1} parent=11 // pred_fallthru
        _
      // Predicated region
      $region37: #{net_forward.1} parent=11 // pred_check
        %p314 = pneg %p192
      $region38: #{net_forward.1} parent=11 // pred_check_branch
        %316 = sbr.rel (%p314) target = $region40
      $region39: #{net_forward.1} parent=11 // pred_region
        _
      $region40: #{net_forward.1} parent=11 // pred_fallthru
        _
      // Predicated region
      $region41: #{net_forward.1} parent=11 // pred_check
        %p317 = pneg %p213
      $region42: #{net_forward.1} parent=11 // pred_check_branch
        %319 = sbr.rel (%p317) target = $region44
      $region43: #{net_forward.1} parent=11 // pred_region
        _
      $region44: #{net_forward.1} parent=11 // pred_fallthru
        _
      // Predicated region
      $region45: #{net_forward.1} parent=11 // pred_check
        %p320 = pneg %p234
      $region46: #{net_forward.1} parent=11 // pred_check_branch
        %322 = sbr.rel (%p320) target = $region48
      $region47: #{net_forward.1} parent=11 // pred_region
        _
      $region48: #{net_forward.1} parent=11 // pred_fallthru
        _
      // Predicated region
      $region49: #{net_forward.1} parent=11 // pred_check
        %p323 = pneg %p255
      $region50: #{net_forward.1} parent=11 // pred_check_branch
        %325 = sbr.rel (%p323) target = $region52
      $region51: #{net_forward.1} parent=11 // pred_region
        _
      $region52: #{net_forward.1} parent=11 // pred_fallthru
        _
    $region12: #{net_forward.1} parent=5 // pred_fallthru
      _
    %p326 = scmp.lt.s32.totalorder %s19, 2
    // Predicated region
    $region53: #{net_forward.1} parent=5 // pred_check
      %p327 = pneg %p326
    $region54: #{net_forward.1} parent=5 // pred_check_branch
      %329 = sbr.rel (%p327) target = $region56
    $region55: #{net_forward.1} parent=5 // pred_region
      // Predicated region
      $region57: #{net_forward.1} parent=55 // pred_check
        %p330 = pneg %p39
      $region58: #{net_forward.1} parent=55 // pred_check_branch
        %332 = sbr.rel (%p330) target = $region60
      $region59: #{net_forward.1} parent=55 // pred_region
        %p333 = scmp.lt.s32.totalorder %s19, 1
        %s334 = scalar_select %p333, %s19, 1
        %s335 = smul.addr %s334, 46
        %s336 = smul.addr %s335, 8
        %s337 = scalar_lea.vmem %s0, %s336
      $region60: #{net_forward.1} parent=55 // pred_fallthru
        _
    $region56: #{net_forward.1} parent=5 // pred_fallthru
      _
    %p338 = scmp.le.s32.totalorder 1, %s19
    %p339 = scmp.lt.s32.totalorder %s19, 3
    %p340 = pnand %p338, %p339
    %p341 = pneg %p340
    // Predicated region
    $region61: #{net_forward.1} parent=5 // pred_check
      _
    $region62: #{net_forward.1} parent=5 // pred_check_branch
      %343 = sbr.rel (%p340) target = $region64
    $region63: #{net_forward.1} parent=5 // pred_region
      %s344 = ssub.s32 %s19, 1
      %p345 = scmp.lt.s32.totalorder %s24, 1
      %s346 = scalar_select %p345, %s24, 1
      %s347 = smul.addr %s346, 46
      %s348 = smul.addr %s347, 8
      %s349 = scalar_lea.vmem %s0, %s348
      %p350 = pneg %p45
      %p351 = pneg %p42
      %p352 = pneg %p66
      %p353 = pneg %p63
      %p354 = pneg %p87
      %p355 = pneg %p84
      %p356 = pneg %p108
      %p357 = pneg %p105
      %p358 = pneg %p129
      %p359 = pneg %p126
      %p360 = pneg %p150
      %p361 = pneg %p147
      %p362 = pneg %p171
      %p363 = pneg %p168
      %p364 = pneg %p192
      %p365 = pneg %p189
      %p366 = pneg %p213
      %p367 = pneg %p210
      %p368 = pneg %p234
      %p369 = pneg %p231
      %p370 = pneg %p255
      %p371 = pneg %p252
      %p372 = pneg %p281
      %p373 = pneg %p278
      %p374 = scmp.lt.s32.totalorder %s24, 1
      %s375 = scalar_select %p374, %s24, 1
      %s376 = scalar_lea.vmem %s11, %s375
      %p377 = scmp.lt.s32.totalorder %s24, 1
      %s378 = scalar_select %p377, %s24, 1
      %s379 = smul.addr %s378, 46
      %s380 = smul.addr %s379, 8
      %s381 = scalar_lea.vmem %s0, %s380
      %p382 = scmp.lt.s32.totalorder %s24, 1
      %s383 = scalar_select %p382, %s24, 1
      %s384 = scalar_lea.vmem %s11, %s383
      %vm385 = vcmask 261120
      %386 = vst.msk [vmem:[#allocation3] sm:$0xff] %vm385, 0.0
      %387 = vst.msk [vmem:[#allocation3 + $0x8] sm:$0xff] %vm385, 0.0
      %388 = vst.msk [vmem:[#allocation3 + $0x10] sm:$0xff] %vm385, 0.0
      %389 = vst.msk [vmem:[#allocation3 + $0x18] sm:$0xff] %vm385, 0.0
      %390 = vst.msk [vmem:[#allocation3 + $0x20] sm:$0xff] %vm385, 0.0
      %391 = vst.msk [vmem:[#allocation3 + $0x28] sm:$0xff] %vm385, 0.0
      %392 = vst.msk [vmem:[#allocation3 + $0x30] sm:$0xff] %vm385, 0.0
      %393 = vst.msk [vmem:[#allocation3 + $0x38] sm:$0xff] %vm385, 0.0
      %394 = vst.msk [vmem:[#allocation3 + $0x40] sm:$0xff] %vm385, 0.0
      %395 = vst.msk [vmem:[#allocation3 + $0x48] sm:$0xff] %vm385, 0.0
      %396 = vst.msk [vmem:[#allocation3 + $0x50] sm:$0xff] %vm385, 0.0
      %397 = vst.msk [vmem:[#allocation3 + $0x58] sm:$0xff] %vm385, 0.0
      %398 = vst.msk [vmem:[#allocation3 + $0x60] sm:$0xff] %vm385, 0.0
      %399 = vst.msk [vmem:[#allocation3 + $0x68] sm:$0xff] %vm385, 0.0
      %400 = vst.msk [vmem:[#allocation3 + $0x70] sm:$0xff] %vm385, 0.0
      %vm401 = vcmask 254976
      %402 = vst.msk [vmem:[#allocation3 + $0x78] sm:$0x3] %vm401, 0.0
      %vm403 = vcmask 523264
      %404 = vst.msk [vmem:[#allocation5] sm:$0xff] %vm403, 0.0
      %405 = vst.msk [vmem:[#allocation5 + $0x8] sm:$0xff] %vm403, 0.0
      %406 = vst.msk [vmem:[#allocation5 + $0x10] sm:$0xff] %vm403, 0.0
      %407 = vst.msk [vmem:[#allocation5 + $0x18] sm:$0xff] %vm403, 0.0
      %408 = vst.msk [vmem:[#allocation5 + $0x20] sm:$0xff] %vm403, 0.0
      %409 = vst.msk [vmem:[#allocation5 + $0x28] sm:$0xff] %vm403, 0.0
      %vm410 = vcmask 517120
      %411 = vst.msk [vmem:[#allocation5 + $0x30] sm:$0x3] %vm410, 0.0
      %v412 = vld [vmem:[%s381] sm:$0xff]
      %v413 = vld [vmem:[%s381 + $0x8] sm:$0xff]
      %v414 = vld [vmem:[%s381 + $0x10] sm:$0xff]
      %v415 = vld [vmem:[%s381 + $0x18] sm:$0xff]
      %v416 = vld [vmem:[%s381 + $0x20] sm:$0xff]
      %v417 = vld [vmem:[%s381 + $0x28] sm:$0xff]
      %v418 = vld [vmem:[%s381 + $0x30] sm:$0xff]
      %v419 = vld [vmem:[%s381 + $0x38] sm:$0xff]
      %v420 = vld [vmem:[%s381 + $0x40] sm:$0xff]
      %v421 = vld [vmem:[%s381 + $0x48] sm:$0xff]
      %v422 = vld [vmem:[%s381 + $0x50] sm:$0xff]
      %v423 = vld [vmem:[%s381 + $0x58] sm:$0xff]
      %v424 = vld [vmem:[%s381 + $0x60] sm:$0xff]
      %v425 = vld [vmem:[%s381 + $0x68] sm:$0xff]
      %v426 = vld [vmem:[%s381 + $0x70] sm:$0xff]
      %v427 = vld [vmem:[%s381 + $0x78] sm:$0xff]
      %v428 = vld [vmem:[%s381 + $0x80] sm:$0xff]
      %v429 = vld [vmem:[%s381 + $0x88] sm:$0xff]
      %v430 = vld [vmem:[%s381 + $0x90] sm:$0xff]
      %v431 = vld [vmem:[%s381 + $0x98] sm:$0xff]
      %v432 = vld [vmem:[%s381 + $0xa0] sm:$0xff]
      %v433 = vld [vmem:[%s381 + $0xa8] sm:$0xff]
      %v434 = vld [vmem:[%s381 + $0xb0] sm:$0xff]
      %v435 = vld [vmem:[%s381 + $0xb8] sm:$0xff]
      %v436 = vld [vmem:[%s381 + $0xc0] sm:$0xff]
      %v437 = vld [vmem:[%s381 + $0xc8] sm:$0xff]
      %v438 = vld [vmem:[%s381 + $0xd0] sm:$0xff]
      %v439 = vld [vmem:[%s381 + $0xd8] sm:$0xff]
      %v440 = vld [vmem:[%s381 + $0xe0] sm:$0xff]
      %v441 = vld [vmem:[%s381 + $0xe8] sm:$0xff]
      %v442 = vld [vmem:[%s381 + $0xf0] sm:$0xff]
      %v443 = vld [vmem:[%s381 + $0xf8] sm:$0xff]
      %v444 = vld [vmem:[%s381 + $0x100] sm:$0xff]
      %v445 = vld [vmem:[%s381 + $0x108] sm:$0xff]
      %v446 = vld [vmem:[%s381 + $0x110] sm:$0xff]
      %v447 = vld [vmem:[%s381 + $0x118] sm:$0xff]
      %v448 = vld [vmem:[%s381 + $0x120] sm:$0xff]
      %v449 = vld [vmem:[%s381 + $0x128] sm:$0xff]
      %v450 = vld [vmem:[%s381 + $0x130] sm:$0xff]
      %v451 = vld [vmem:[%s381 + $0x138] sm:$0xff]
      %v452 = vld [vmem:[%s381 + $0x140] sm:$0xf]
      %v453 = vld [vmem:[%s1] sm:$0x7]
      %vm454 = vcmask 23552
      %v456 = vsel %vm454, %v412, 0
      %v459 = vsel %vm454, %v413, 0
      %v462 = vsel %vm454, %v414, 0
      %v465 = vsel %vm454, %v415, 0
      %v468 = vsel %vm454, %v416, 0
      %v471 = vsel %vm454, %v417, 0
      %v474 = vsel %vm454, %v418, 0
      %v477 = vsel %vm454, %v419, 0
      %v480 = vsel %vm454, %v420, 0
      %v483 = vsel %vm454, %v421, 0
      %v486 = vsel %vm454, %v422, 0
      %v489 = vsel %vm454, %v423, 0
      %v492 = vsel %vm454, %v424, 0
      %v495 = vsel %vm454, %v425, 0
      %v498 = vsel %vm454, %v426, 0
      %v501 = vsel %vm454, %v427, 0
      %v504 = vsel %vm454, %v428, 0
      %v507 = vsel %vm454, %v429, 0
      %v510 = vsel %vm454, %v430, 0
      %v513 = vsel %vm454, %v431, 0
      %v516 = vsel %vm454, %v432, 0
      %v519 = vsel %vm454, %v433, 0
      %v522 = vsel %vm454, %v434, 0
      %v525 = vsel %vm454, %v435, 0
      %v528 = vsel %vm454, %v436, 0
      %v531 = vsel %vm454, %v437, 0
      %v534 = vsel %vm454, %v438, 0
      %v537 = vsel %vm454, %v439, 0
      %v540 = vsel %vm454, %v440, 0
      %v543 = vsel %vm454, %v441, 0
      %v546 = vsel %vm454, %v442, 0
      %v549 = vsel %vm454, %v443, 0
      %v552 = vsel %vm454, %v444, 0
      %v555 = vsel %vm454, %v445, 0
      %v558 = vsel %vm454, %v446, 0
      %v561 = vsel %vm454, %v447, 0
      %v564 = vsel %vm454, %v448, 0
      %v567 = vsel %vm454, %v449, 0
      %v570 = vsel %vm454, %v450, 0
      %v573 = vsel %vm454, %v451, 0
      %v576 = vsel %vm454, %v452, 0
      %vm578 = vcmask 1042432
      %v580 = vsel %vm578, %v453, 0
      %582 = vmatprep.subr.mxu0 0.0
      %583 = vmatpush1.msra.mxu0 %v580
      %584 = vmatprep.subr.mxu0 0.0
      %585 = vmatpush1.msra.mxu0 0.0
      %586 = vmatprep.subr.mxu0 0.0
      %587 = vmatpush1.msra.mxu0 0.0
      %588 = vmatprep.subr.mxu0 0.0
      %589 = vmatpush1.msra.mxu0 0.0
      %590 = vmatprep.subr.mxu0 0.0
      %591 = vmatpush1.msra.mxu0 0.0
      %592 = vmatprep.subr.mxu0 0.0
      %593 = vmatpush1.msra.mxu0 0.0
      %594 = vmatprep.subr.mxu0 0.0
      %595 = vmatpush1.msra.mxu0 0.0
      %596 = vmatprep.subr.mxu0 0.0
      %597 = vmatpush1.msra.mxu0 0.0
      %598 = vmatprep.subr.mxu0 0.0
      %599 = vmatpush1.msra.mxu0 0.0
      %600 = vmatprep.subr.mxu0 0.0
      %601 = vmatpush1.msra.mxu0 0.0
      %602 = vmatprep.subr.mxu0 0.0
      %603 = vmatpush1.msra.mxu0 0.0
      %604 = vmatprep.subr.mxu0 0.0
      %605 = vmatpush1.msra.mxu0 0.0
      %606 = vmatprep.subr.mxu0 0.0
      %607 = vmatpush1.msra.mxu0 0.0
      %608 = vmatprep.subr.mxu0 0.0
      %609 = vmatpush1.msra.mxu0 0.0
      %610 = vmatprep.subr.mxu0 0.0
      %611 = vmatpush1.msra.mxu0 0.0
      %612 = vmatprep.subr.mxu0 0.0
      %613 = vmatpush1.msra.mxu0 0.0
      %614 = vmatprep.subr.mxu0 0.0
      %615 = vmatpush1.msra.mxu0 0.0
      %616 = vmatprep.subr.mxu0 0.0
      %617 = vmatpush1.msra.mxu0 0.0
      %618 = vmatprep.subr.mxu0 0.0
      %619 = vmatpush1.msra.mxu0 0.0
      %620 = vmatprep.subr.mxu0 0.0
      %621 = vmatpush1.msra.mxu0 0.0
      %622 = vmatprep.subr.mxu0 0.0
      %623 = vmatpush1.msra.mxu0 0.0
      %624 = vmatprep.subr.mxu0 0.0
      %625 = vmatpush1.msra.mxu0 0.0
      %626 = vmatprep.subr.mxu0 0.0
      %627 = vmatpush1.msra.mxu0 0.0
      %628 = vmatprep.subr.mxu0 0.0
      %629 = vmatpush1.msra.mxu0 0.0
      %630 = vmatprep.subr.mxu0 0.0
      %631 = vmatpush1.msra.mxu0 0.0
      %632 = vmatprep.subr.mxu0 0.0
      %633 = vmatpush1.msra.mxu0 0.0
      %634 = vmatprep.subr.mxu0 0.0
      %635 = vmatpush1.msra.mxu0 0.0
      %636 = vmatprep.subr.mxu0 0.0
      %637 = vmatpush1.msra.mxu0 0.0
      %638 = vmatprep.subr.mxu0 0.0
      %639 = vmatpush1.msra.mxu0 0.0
      %640 = vmatprep.subr.mxu0 0.0
      %641 = vmatpush1.msra.mxu0 0.0
      %642 = vmatprep.subr.mxu0 0.0
      %643 = vmatpush1.msra.mxu0 0.0
      %644 = vmatprep.subr.mxu0 0.0
      %645 = vmatpush1.msra.mxu0 0.0
      %646 = vmatprep.mubr.f32.mxu0 0.0
      %647 = vmatmul.mubr.f32.gmra.mrb[0].mxu0 %v456
      %v648 = vpop.f32.mrb[0].mxu0
      %v649 = vadd.f32 0.0, %v648
      %v650 = vpop.f32.mrb[0].mxu0
      %651 = vmatprep.mubr.f32.mxu0 0.0
      %652 = vmatmul.mubr.f32.gmra.mrb[0].mxu0 %v459
      %v653 = vpop.f32.mrb[0].mxu0
      %v654 = vadd.f32 0.0, %v653
      %v655 = vpop.f32.mrb[0].mxu0
      %656 = vmatprep.mubr.f32.mxu0 0.0
      %657 = vmatmul.mubr.f32.gmra.mrb[0].mxu0 %v462
      %v658 = vpop.f32.mrb[0].mxu0
      %v659 = vadd.f32 0.0, %v658
      %v660 = vpop.f32.mrb[0].mxu0
      %661 = vmatprep.mubr.f32.mxu0 0.0
      %662 = vmatmul.mubr.f32.gmra.mrb[0].mxu0 %v465
      %v663 = vpop.f32.mrb[0].mxu0
      %v664 = vadd.f32 0.0, %v663
      %v665 = vpop.f32.mrb[0].mxu0
      %666 = vmatprep.mubr.f32.mxu0 0.0
      %667 = vmatmul.mubr.f32.gmra.mrb[0].mxu0 %v468
      %v668 = vpop.f32.mrb[0].mxu0
      %v669 = vadd.f32 0.0, %v668
      %v670 = vpop.f32.mrb[0].mxu0
      %671 = vmatprep.mubr.f32.mxu0 0.0
      %672 = vmatmul.mubr.f32.gmra.mrb[0].mxu0 %v471
      %v673 = vpop.f32.mrb[0].mxu0
      %v674 = vadd.f32 0.0, %v673
      %v675 = vpop.f32.mrb[0].mxu0
      %676 = vmatprep.mubr.f32.mxu0 0.0
      %677 = vmatmul.mubr.f32.gmra.mrb[0].mxu0 %v474
      %v678 = vpop.f32.mrb[0].mxu0
      %v679 = vadd.f32 0.0, %v678
      %v680 = vpop.f32.mrb[0].mxu0
      %681 = vmatprep.mubr.f32.mxu0 0.0
      %682 = vmatmul.mubr.f32.gmra.mrb[0].mxu0 %v477
      %v683 = vpop.f32.mrb[0].mxu0
      %v684 = vadd.f32 0.0, %v683
      %v685 = vpop.f32.mrb[0].mxu0
      %686 = vmatprep.mubr.f32.mxu0 0.0
      %687 = vmatmul.mubr.f32.gmra.mrb[0].mxu0 %v480
      %v688 = vpop.f32.mrb[0].mxu0
      %v689 = vadd.f32 0.0, %v688
      %v690 = vpop.f32.mrb[0].mxu0
      %691 = vmatprep.mubr.f32.mxu0 0.0
      %692 = vmatmul.mubr.f32.gmra.mrb[0].mxu0 %v483
      %v693 = vpop.f32.mrb[0].mxu0
      %v694 = vadd.f32 0.0, %v693
      %v695 = vpop.f32.mrb[0].mxu0
      %696 = vmatprep.mubr.f32.mxu0 0.0
      %697 = vmatmul.mubr.f32.gmra.mrb[0].mxu0 %v486
      %v698 = vpop.f32.mrb[0].mxu0
      %v699 = vadd.f32 0.0, %v698
      %v700 = vpop.f32.mrb[0].mxu0
      %701 = vmatprep.mubr.f32.mxu0 0.0
      %702 = vmatmul.mubr.f32.gmra.mrb[0].mxu0 %v489
      %v703 = vpop.f32.mrb[0].mxu0
      %v704 = vadd.f32 0.0, %v703
      %v705 = vpop.f32.mrb[0].mxu0
      %706 = vmatprep.mubr.f32.mxu0 0.0
      %707 = vmatmul.mubr.f32.gmra.mrb[0].mxu0 %v492
      %v708 = vpop.f32.mrb[0].mxu0
      %v709 = vadd.f32 0.0, %v708
      %v710 = vpop.f32.mrb[0].mxu0
      %711 = vmatprep.mubr.f32.mxu0 0.0
      %712 = vmatmul.mubr.f32.gmra.mrb[0].mxu0 %v495
      %v713 = vpop.f32.mrb[0].mxu0
      %v714 = vadd.f32 0.0, %v713
      %v715 = vpop.f32.mrb[0].mxu0
      %716 = vmatprep.mubr.f32.mxu0 0.0
      %717 = vmatmul.mubr.f32.gmra.mrb[0].mxu0 %v498
      %v718 = vpop.f32.mrb[0].mxu0
      %v719 = vadd.f32 0.0, %v718
      %v720 = vpop.f32.mrb[0].mxu0
      %721 = vmatprep.mubr.f32.mxu0 0.0
      %722 = vmatmul.mubr.f32.gmra.mrb[0].mxu0 %v501
      %v723 = vpop.f32.mrb[0].mxu0
      %v724 = vadd.f32 0.0, %v723
      %v725 = vpop.f32.mrb[0].mxu0
      %726 = vmatprep.mubr.f32.mxu0 0.0
      %727 = vmatmul.mubr.f32.gmra.mrb[0].mxu0 %v504
      %v728 = vpop.f32.mrb[0].mxu0
      %v729 = vadd.f32 0.0, %v728
      %v730 = vpop.f32.mrb[0].mxu0
      %731 = vmatprep.mubr.f32.mxu0 0.0
      %732 = vmatmul.mubr.f32.gmra.mrb[0].mxu0 %v507
      %v733 = vpop.f32.mrb[0].mxu0
      %v734 = vadd.f32 0.0, %v733
      %v735 = vpop.f32.mrb[0].mxu0
      %736 = vmatprep.mubr.f32.mxu0 0.0
      %737 = vmatmul.mubr.f32.gmra.mrb[0].mxu0 %v510
      %v738 = vpop.f32.mrb[0].mxu0
      %v739 = vadd.f32 0.0, %v738
      %v740 = vpop.f32.mrb[0].mxu0
      %741 = vmatprep.mubr.f32.mxu0 0.0
      %742 = vmatmul.mubr.f32.gmra.mrb[0].mxu0 %v513
      %v743 = vpop.f32.mrb[0].mxu0
      %v744 = vadd.f32 0.0, %v743
      %v745 = vpop.f32.mrb[0].mxu0
      %746 = vmatprep.mubr.f32.mxu0 0.0
      %747 = vmatmul.mubr.f32.gmra.mrb[0].mxu0 %v516
      %v748 = vpop.f32.mrb[0].mxu0
      %v749 = vadd.f32 0.0, %v748
      %v750 = vpop.f32.mrb[0].mxu0
      %751 = vmatprep.mubr.f32.mxu0 0.0
      %752 = vmatmul.mubr.f32.gmra.mrb[0].mxu0 %v519
      %v753 = vpop.f32.mrb[0].mxu0
      %v754 = vadd.f32 0.0, %v753
      %v755 = vpop.f32.mrb[0].mxu0
      %756 = vmatprep.mubr.f32.mxu0 0.0
      %757 = vmatmul.mubr.f32.gmra.mrb[0].mxu0 %v522
      %v758 = vpop.f32.mrb[0].mxu0
      %v759 = vadd.f32 0.0, %v758
      %v760 = vpop.f32.mrb[0].mxu0
      %761 = vmatprep.mubr.f32.mxu0 0.0
      %762 = vmatmul.mubr.f32.gmra.mrb[0].mxu0 %v525
      %v763 = vpop.f32.mrb[0].mxu0
      %v764 = vadd.f32 0.0, %v763
      %v765 = vpop.f32.mrb[0].mxu0
      %766 = vmatprep.mubr.f32.mxu0 0.0
      %767 = vmatmul.mubr.f32.gmra.mrb[0].mxu0 %v528
      %v768 = vpop.f32.mrb[0].mxu0
      %v769 = vadd.f32 0.0, %v768
      %v770 = vpop.f32.mrb[0].mxu0
      %771 = vmatprep.mubr.f32.mxu0 0.0
      %772 = vmatmul.mubr.f32.gmra.mrb[0].mxu0 %v531
      %v773 = vpop.f32.mrb[0].mxu0
      %v774 = vadd.f32 0.0, %v773
      %v775 = vpop.f32.mrb[0].mxu0
      %776 = vmatprep.mubr.f32.mxu0 0.0
      %777 = vmatmul.mubr.f32.gmra.mrb[0].mxu0 %v534
      %v778 = vpop.f32.mrb[0].mxu0
      %v779 = vadd.f32 0.0, %v778
      %v780 = vpop.f32.mrb[0].mxu0
      %781 = vmatprep.mubr.f32.mxu0 0.0
      %782 = vmatmul.mubr.f32.gmra.mrb[0].mxu0 %v537
      %v783 = vpop.f32.mrb[0].mxu0
      %v784 = vadd.f32 0.0, %v783
      %v785 = vpop.f32.mrb[0].mxu0
      %786 = vmatprep.mubr.f32.mxu0 0.0
      %787 = vmatmul.mubr.f32.gmra.mrb[0].mxu0 %v540
      %v788 = vpop.f32.mrb[0].mxu0
      %v789 = vadd.f32 0.0, %v788
      %v790 = vpop.f32.mrb[0].mxu0
      %791 = vmatprep.mubr.f32.mxu0 0.0
      %792 = vmatmul.mubr.f32.gmra.mrb[0].mxu0 %v543
      %v793 = vpop.f32.mrb[0].mxu0
      %v794 = vadd.f32 0.0, %v793
      %v795 = vpop.f32.mrb[0].mxu0
      %796 = vmatprep.mubr.f32.mxu0 0.0
      %797 = vmatmul.mubr.f32.gmra.mrb[0].mxu0 %v546
      %v798 = vpop.f32.mrb[0].mxu0
      %v799 = vadd.f32 0.0, %v798
      %v800 = vpop.f32.mrb[0].mxu0
      %801 = vmatprep.mubr.f32.mxu0 0.0
      %802 = vmatmul.mubr.f32.gmra.mrb[0].mxu0 %v549
      %v803 = vpop.f32.mrb[0].mxu0
      %v804 = vadd.f32 0.0, %v803
      %v805 = vpop.f32.mrb[0].mxu0
      %806 = vmatprep.mubr.f32.mxu0 0.0
      %807 = vmatmul.mubr.f32.gmra.mrb[0].mxu0 %v552
      %v808 = vpop.f32.mrb[0].mxu0
      %v809 = vadd.f32 0.0, %v808
      %v810 = vpop.f32.mrb[0].mxu0
      %811 = vmatprep.mubr.f32.mxu0 0.0
      %812 = vmatmul.mubr.f32.gmra.mrb[0].mxu0 %v555
      %v813 = vpop.f32.mrb[0].mxu0
      %v814 = vadd.f32 0.0, %v813
      %v815 = vpop.f32.mrb[0].mxu0
      %816 = vmatprep.mubr.f32.mxu0 0.0
      %817 = vmatmul.mubr.f32.gmra.mrb[0].mxu0 %v558
      %v818 = vpop.f32.mrb[0].mxu0
      %v819 = vadd.f32 0.0, %v818
      %v820 = vpop.f32.mrb[0].mxu0
      %821 = vmatprep.mubr.f32.mxu0 0.0
      %822 = vmatmul.mubr.f32.gmra.mrb[0].mxu0 %v561
      %v823 = vpop.f32.mrb[0].mxu0
      %v824 = vadd.f32 0.0, %v823
      %v825 = vpop.f32.mrb[0].mxu0
      %826 = vmatprep.mubr.f32.mxu0 0.0
      %827 = vmatmul.mubr.f32.gmra.mrb[0].mxu0 %v564
      %v828 = vpop.f32.mrb[0].mxu0
      %v829 = vadd.f32 0.0, %v828
      %v830 = vpop.f32.mrb[0].mxu0
      %831 = vmatprep.mubr.f32.mxu0 0.0
      %832 = vmatmul.mubr.f32.gmra.mrb[0].mxu0 %v567
      %v833 = vpop.f32.mrb[0].mxu0
      %v834 = vadd.f32 0.0, %v833
      %v835 = vpop.f32.mrb[0].mxu0
      %836 = vmatprep.mubr.f32.mxu0 0.0
      %837 = vmatmul.mubr.f32.gmra.mrb[0].mxu0 %v570
      %v838 = vpop.f32.mrb[0].mxu0
      %v839 = vadd.f32 0.0, %v838
      %v840 = vpop.f32.mrb[0].mxu0
      %841 = vmatprep.mubr.f32.mxu0 0.0
      %842 = vmatmul.mubr.f32.gmra.mrb[0].mxu0 %v573
      %v843 = vpop.f32.mrb[0].mxu0
      %v844 = vadd.f32 0.0, %v843
      %v845 = vpop.f32.mrb[0].mxu0
      %846 = vmatprep.mubr.f32.mxu0 0.0
      %847 = vmatmul.mubr.f32.gmra.mrb[0].mxu0 %v576
      %v848 = vpop.f32.mrb[0].mxu0
      %v849 = vadd.f32 0.0, %v848
      %v850 = vpop.f32.mrb[0].mxu0
      %851 = vdwg.mxu0
      %852 = vst.msk [vmem:[#allocation2] sm:$0xff] %vm385, %v649
      %853 = vst.msk [vmem:[#allocation2 + $0x8] sm:$0xff] %vm385, %v654
      %854 = vst.msk [vmem:[#allocation2 + $0x10] sm:$0xff] %vm385, %v659
      %855 = vst.msk [vmem:[#allocation2 + $0x18] sm:$0xff] %vm385, %v664
      %856 = vst.msk [vmem:[#allocation2 + $0x20] sm:$0xff] %vm385, %v669
      %857 = vst.msk [vmem:[#allocation2 + $0x28] sm:$0xff] %vm385, %v674
      %858 = vst.msk [vmem:[#allocation2 + $0x30] sm:$0xff] %vm385, %v679
      %859 = vst.msk [vmem:[#allocation2 + $0x38] sm:$0xff] %vm385, %v684
      %860 = vst.msk [vmem:[#allocation2 + $0x40] sm:$0xff] %vm385, %v689
      %861 = vst.msk [vmem:[#allocation2 + $0x48] sm:$0xff] %vm385, %v694
      %862 = vst.msk [vmem:[#allocation2 + $0x50] sm:$0xff] %vm385, %v699
      %863 = vst.msk [vmem:[#allocation2 + $0x58] sm:$0xff] %vm385, %v704
      %864 = vst.msk [vmem:[#allocation2 + $0x60] sm:$0xff] %vm385, %v709
      %865 = vst.msk [vmem:[#allocation2 + $0x68] sm:$0xff] %vm385, %v714
      %866 = vst.msk [vmem:[#allocation2 + $0x70] sm:$0xff] %vm385, %v719
      %867 = vst.msk [vmem:[#allocation2 + $0x78] sm:$0xff] %vm385, %v724
      %868 = vst.msk [vmem:[#allocation2 + $0x80] sm:$0xff] %vm385, %v729
      %869 = vst.msk [vmem:[#allocation2 + $0x88] sm:$0xff] %vm385, %v734
      %870 = vst.msk [vmem:[#allocation2 + $0x90] sm:$0xff] %vm385, %v739
      %871 = vst.msk [vmem:[#allocation2 + $0x98] sm:$0xff] %vm385, %v744
      %872 = vst.msk [vmem:[#allocation2 + $0xa0] sm:$0xff] %vm385, %v749
      %873 = vst.msk [vmem:[#allocation2 + $0xa8] sm:$0xff] %vm385, %v754
      %874 = vst.msk [vmem:[#allocation2 + $0xb0] sm:$0xff] %vm385, %v759
      %875 = vst.msk [vmem:[#allocation2 + $0xb8] sm:$0xff] %vm385, %v764
      %876 = vst.msk [vmem:[#allocation2 + $0xc0] sm:$0xff] %vm385, %v769
      %877 = vst.msk [vmem:[#allocation2 + $0xc8] sm:$0xff] %vm385, %v774
      %878 = vst.msk [vmem:[#allocation2 + $0xd0] sm:$0xff] %vm385, %v779
      %879 = vst.msk [vmem:[#allocation2 + $0xd8] sm:$0xff] %vm385, %v784
      %880 = vst.msk [vmem:[#allocation2 + $0xe0] sm:$0xff] %vm385, %v789
      %881 = vst.msk [vmem:[#allocation2 + $0xe8] sm:$0xff] %vm385, %v794
      %882 = vst.msk [vmem:[#allocation2 + $0xf0] sm:$0xff] %vm385, %v799
      %883 = vst.msk [vmem:[#allocation2 + $0xf8] sm:$0xff] %vm385, %v804
      %884 = vst.msk [vmem:[#allocation2 + $0x100] sm:$0xff] %vm385, %v809
      %885 = vst.msk [vmem:[#allocation2 + $0x108] sm:$0xff] %vm385, %v814
      %886 = vst.msk [vmem:[#allocation2 + $0x110] sm:$0xff] %vm385, %v819
      %887 = vst.msk [vmem:[#allocation2 + $0x118] sm:$0xff] %vm385, %v824
      %888 = vst.msk [vmem:[#allocation2 + $0x120] sm:$0xff] %vm385, %v829
      %889 = vst.msk [vmem:[#allocation2 + $0x128] sm:$0xff] %vm385, %v834
      %890 = vst.msk [vmem:[#allocation2 + $0x130] sm:$0xff] %vm385, %v839
      %891 = vst.msk [vmem:[#allocation2 + $0x138] sm:$0xff] %vm385, %v844
      %vm892 = vcmask 257024
      %893 = vst.msk [vmem:[#allocation2 + $0x140] sm:$0xf] %vm892, %v849
      %v894 = vld [vmem:[%s381 + $0x1] sm:$0xff]
      %v895 = vld [vmem:[%s381 + $0x9] sm:$0xff]
      %v896 = vld [vmem:[%s381 + $0x11] sm:$0xff]
      %v897 = vld [vmem:[%s381 + $0x19] sm:$0xff]
      %v898 = vld [vmem:[%s381 + $0x21] sm:$0xff]
      %v899 = vld [vmem:[%s381 + $0x29] sm:$0xff]
      %v900 = vld [vmem:[%s381 + $0x31] sm:$0xff]
      %v901 = vld [vmem:[%s381 + $0x39] sm:$0xff]
      %v902 = vld [vmem:[%s381 + $0x41] sm:$0xff]
      %v903 = vld [vmem:[%s381 + $0x49] sm:$0xff]
      %v904 = vld [vmem:[%s381 + $0x51] sm:$0xff]
      %v905 = vld [vmem:[%s381 + $0x59] sm:$0xff]
      %v906 = vld [vmem:[%s381 + $0x61] sm:$0xff]
      %v907 = vld [vmem:[%s381 + $0x69] sm:$0xff]
      %v908 = vld [vmem:[%s381 + $0x71] sm:$0xff]
      %v909 = vld [vmem:[%s381 + $0x79] sm:$0xff]
      %v910 = vld [vmem:[%s381 + $0x81] sm:$0xff]
      %v911 = vld [vmem:[%s381 + $0x89] sm:$0xff]
      %v912 = vld [vmem:[%s381 + $0x91] sm:$0xff]
      %v913 = vld [vmem:[%s381 + $0x99] sm:$0xff]
      %v914 = vld [vmem:[%s381 + $0xa1] sm:$0xff]
      %v915 = vld [vmem:[%s381 + $0xa9] sm:$0xff]
      %v916 = vld [vmem:[%s381 + $0xb1] sm:$0xff]
      %v917 = vld [vmem:[%s381 + $0xb9] sm:$0xff]
      %v918 = vld [vmem:[%s381 + $0xc1] sm:$0xff]
      %v919 = vld [vmem:[%s381 + $0xc9] sm:$0xff]
      %v920 = vld [vmem:[%s381 + $0xd1] sm:$0xff]
      %v921 = vld [vmem:[%s381 + $0xd9] sm:$0xff]
      %v922 = vld [vmem:[%s381 + $0xe1] sm:$0xff]
      %v923 = vld [vmem:[%s381 + $0xe9] sm:$0xff]
      %v924 = vld [vmem:[%s381 + $0xf1] sm:$0xff]
      %v925 = vld [vmem:[%s381 + $0xf9] sm:$0xff]
      %v926 = vld [vmem:[%s381 + $0x101] sm:$0xff]
      %v927 = vld [vmem:[%s381 + $0x109] sm:$0xff]
      %v928 = vld [vmem:[%s381 + $0x111] sm:$0xff]
      %v929 = vld [vmem:[%s381 + $0x119] sm:$0xff]
      %v930 = vld [vmem:[%s381 + $0x121] sm:$0xff]
      %v931 = vld [vmem:[%s381 + $0x129] sm:$0xff]
      %v932 = vld [vmem:[%s381 + $0x131] sm:$0xff]
      %v933 = vld [vmem:[%s381 + $0x139] sm:$0xff]
      %v934 = vld [vmem:[%s381 + $0x141] sm:$0xf]
      %s935 = scalar_lea.vmem %s1, 4
      %v936 = vld [vmem:[%s935] sm:$0x7]
      %v938 = vsel %vm454, %v894, 0
      %v941 = vsel %vm454, %v895, 0
      %v944 = vsel %vm454, %v896, 0
      %v947 = vsel %vm454, %v897, 0
      %v950 = vsel %vm454, %v898, 0
      %v953 = vsel %vm454, %v899, 0
      %v956 = vsel %vm454, %v900, 0
      %v959 = vsel %vm454, %v901, 0
      %v962 = vsel %vm454, %v902, 0
      %v965 = vsel %vm454, %v903, 0
      %v968 = vsel %vm454, %v904, 0
      %v971 = vsel %vm454, %v905, 0
      %v974 = vsel %vm454, %v906, 0
      %v977 = vsel %vm454, %v907, 0
      %v980 = vsel %vm454, %v908, 0
      %v983 = vsel %vm454, %v909, 0
      %v986 = vsel %vm454, %v910, 0
      %v989 = vsel %vm454, %v911, 0
      %v992 = vsel %vm454, %v912, 0
      %v995 = vsel %vm454, %v913, 0
      %v998 = vsel %vm454, %v914, 0
      %v1001 = vsel %vm454, %v915, 0
      %v1004 = vsel %vm454, %v916, 0
      %v1007 = vsel %vm454, %v917, 0
      %v1010 = vsel %vm454, %v918, 0
      %v1013 = vsel %vm454, %v919, 0
      %v1016 = vsel %vm454, %v920, 0
      %v1019 = vsel %vm454, %v921, 0
      %v1022 = vsel %vm454, %v922, 0
      %v1025 = vsel %vm454, %v923, 0
      %v1028 = vsel %vm454, %v924, 0
      %v1031 = vsel %vm454, %v925, 0
      %v1034 = vsel %vm454, %v926, 0
      %v1037 = vsel %vm454, %v927, 0
      %v1040 = vsel %vm454, %v928, 0
      %v1043 = vsel %vm454, %v929, 0
      %v1046 = vsel %vm454, %v930, 0
      %v1049 = vsel %vm454, %v931, 0
      %v1052 = vsel %vm454, %v932, 0
      %v1055 = vsel %vm454, %v933, 0
      %v1058 = vsel %vm454, %v934, 0
      %v1061 = vsel %vm578, %v936, 0
      %1063 = vmatprep.subr.mxu0 0.0
      %1064 = vmatpush1.msra.mxu0 %v1061
      %1065 = vmatprep.subr.mxu0 0.0
      %1066 = vmatpush1.msra.mxu0 0.0
      %1067 = vmatprep.subr.mxu0 0.0
      %1068 = vmatpush1.msra.mxu0 0.0
      %1069 = vmatprep.subr.mxu0 0.0
      %1070 = vmatpush1.msra.mxu0 0.0
      %1071 = vmatprep.subr.mxu0 0.0
      %1072 = vmatpush1.msra.mxu0 0.0
      %1073 = vmatprep.subr.mxu0 0.0
      %1074 = vmatpush1.msra.mxu0 0.0
      %1075 = vmatprep.subr.mxu0 0.0
      %1076 = vmatpush1.msra.mxu0 0.0
      %1077 = vmatprep.subr.mxu0 0.0
      %1078 = vmatpush1.msra.mxu0 0.0
      %1079 = vmatprep.subr.mxu0 0.0
      %1080 = vmatpush1.msra.mxu0 0.0
      %1081 = vmatprep.subr.mxu0 0.0
      %1082 = vmatpush1.msra.mxu0 0.0
      %1083 = vmatprep.subr.mxu0 0.0
      %1084 = vmatpush1.msra.mxu0 0.0
      %1085 = vmatprep.subr.mxu0 0.0
      %1086 = vmatpush1.msra.mxu0 0.0
      %1087 = vmatprep.subr.mxu0 0.0
      %1088 = vmatpush1.msra.mxu0 0.0
      %1089 = vmatprep.subr.mxu0 0.0
      %1090 = vmatpush1.msra.mxu0 0.0
      %1091 = vmatprep.subr.mxu0 0.0
      %1092 = vmatpush1.msra.mxu0 0.0
      %1093 = vmatprep.subr.mxu0 0.0
      %1094 = vmatpush1.msra.mxu0 0.0
      %1095 = vmatprep.subr.mxu0 0.0
      %1096 = vmatpush1.msra.mxu0 0.0
      %1097 = vmatprep.subr.mxu0 0.0
      %1098 = vmatpush1.msra.mxu0 0.0
      %1099 = vmatprep.subr.mxu0 0.0
      %1100 = vmatpush1.msra.mxu0 0.0
      %1101 = vmatprep.subr.mxu0 0.0
      %1102 = vmatpush1.msra.mxu0 0.0
      %1103 = vmatprep.subr.mxu0 0.0
      %1104 = vmatpush1.msra.mxu0 0.0
      %1105 = vmatprep.subr.mxu0 0.0
      %1106 = vmatpush1.msra.mxu0 0.0
      %1107 = vmatprep.subr.mxu0 0.0
      %1108 = vmatpush1.msra.mxu0 0.0
      %1109 = vmatprep.subr.mxu0 0.0
      %1110 = vmatpush1.msra.mxu0 0.0
      %1111 = vmatprep.subr.mxu0 0.0
      %1112 = vmatpush1.msra.mxu0 0.0
      %1113 = vmatprep.subr.mxu0 0.0
      %1114 = vmatpush1.msra.mxu0 0.0
      %1115 = vmatprep.subr.mxu0 0.0
      %1116 = vmatpush1.msra.mxu0 0.0
      %1117 = vmatprep.subr.mxu0 0.0
      %1118 = vmatpush1.msra.mxu0 0.0
      %1119 = vmatprep.subr.mxu0 0.0
      %1120 = vmatpush1.msra.mxu0 0.0
      %1121 = vmatprep.subr.mxu0 0.0
      %1122 = vmatpush1.msra.mxu0 0.0
      %1123 = vmatprep.subr.mxu0 0.0
      %1124 = vmatpush1.msra.mxu0 0.0
      %1125 = vmatprep.subr.mxu0 0.0
      %1126 = vmatpush1.msra.mxu0 0.0
      %1127 = vmatprep.mubr.f32.mxu0 0.0
      %1128 = vmatmul.mubr.f32.gmra.mrb[0].mxu0 %v938
      %v1129 = vpop.f32.mrb[0].mxu0
      %v1130 = vadd.f32 0.0, %v1129
      %v1131 = vpop.f32.mrb[0].mxu0
      %1132 = vmatprep.mubr.f32.mxu0 0.0
      %1133 = vmatmul.mubr.f32.gmra.mrb[0].mxu0 %v941
      %v1134 = vpop.f32.mrb[0].mxu0
      %v1135 = vadd.f32 0.0, %v1134
      %v1136 = vpop.f32.mrb[0].mxu0
      %1137 = vmatprep.mubr.f32.mxu0 0.0
      %1138 = vmatmul.mubr.f32.gmra.mrb[0].mxu0 %v944
      %v1139 = vpop.f32.mrb[0].mxu0
      %v1140 = vadd.f32 0.0, %v1139
      %v1141 = vpop.f32.mrb[0].mxu0
      %1142 = vmatprep.mubr.f32.mxu0 0.0
      %1143 = vmatmul.mubr.f32.gmra.mrb[0].mxu0 %v947
      %v1144 = vpop.f32.mrb[0].mxu0
      %v1145 = vadd.f32 0.0, %v1144
      %v1146 = vpop.f32.mrb[0].mxu0
      %1147 = vmatprep.mubr.f32.mxu0 0.0
      %1148 = vmatmul.mubr.f32.gmra.mrb[0].mxu0 %v950
      %v1149 = vpop.f32.mrb[0].mxu0
      %v1150 = vadd.f32 0.0, %v1149
      %v1151 = vpop.f32.mrb[0].mxu0
      %1152 = vmatprep.mubr.f32.mxu0 0.0
      %1153 = vmatmul.mubr.f32.gmra.mrb[0].mxu0 %v953
      %v1154 = vpop.f32.mrb[0].mxu0
      %v1155 = vadd.f32 0.0, %v1154
      %v1156 = vpop.f32.mrb[0].mxu0
      %1157 = vmatprep.mubr.f32.mxu0 0.0
      %1158 = vmatmul.mubr.f32.gmra.mrb[0].mxu0 %v956
      %v1159 = vpop.f32.mrb[0].mxu0
      %v1160 = vadd.f32 0.0, %v1159
      %v1161 = vpop.f32.mrb[0].mxu0
      %1162 = vmatprep.mubr.f32.mxu0 0.0
      %1163 = vmatmul.mubr.f32.gmra.mrb[0].mxu0 %v959
      %v1164 = vpop.f32.mrb[0].mxu0
      %v1165 = vadd.f32 0.0, %v1164
      %v1166 = vpop.f32.mrb[0].mxu0
      %1167 = vmatprep.mubr.f32.mxu0 0.0
      %1168 = vmatmul.mubr.f32.gmra.mrb[0].mxu0 %v962
      %v1169 = vpop.f32.mrb[0].mxu0
      %v1170 = vadd.f32 0.0, %v1169
      %v1171 = vpop.f32.mrb[0].mxu0
      %1172 = vmatprep.mubr.f32.mxu0 0.0
      %1173 = vmatmul.mubr.f32.gmra.mrb[0].mxu0 %v965
      %v1174 = vpop.f32.mrb[0].mxu0
      %v1175 = vadd.f32 0.0, %v1174
      %v1176 = vpop.f32.mrb[0].mxu0
      %1177 = vmatprep.mubr.f32.mxu0 0.0
      %1178 = vmatmul.mubr.f32.gmra.mrb[0].mxu0 %v968
      %v1179 = vpop.f32.mrb[0].mxu0
      %v1180 = vadd.f32 0.0, %v1179
      %v1181 = vpop.f32.mrb[0].mxu0
      %1182 = vmatprep.mubr.f32.mxu0 0.0
      %1183 = vmatmul.mubr.f32.gmra.mrb[0].mxu0 %v971
      %v1184 = vpop.f32.mrb[0].mxu0
      %v1185 = vadd.f32 0.0, %v1184
      %v1186 = vpop.f32.mrb[0].mxu0
      %1187 = vmatprep.mubr.f32.mxu0 0.0
      %1188 = vmatmul.mubr.f32.gmra.mrb[0].mxu0 %v974
      %v1189 = vpop.f32.mrb[0].mxu0
      %v1190 = vadd.f32 0.0, %v1189
      %v1191 = vpop.f32.mrb[0].mxu0
      %1192 = vmatprep.mubr.f32.mxu0 0.0
      %1193 = vmatmul.mubr.f32.gmra.mrb[0].mxu0 %v977
      %v1194 = vpop.f32.mrb[0].mxu0
      %v1195 = vadd.f32 0.0, %v1194
      %v1196 = vpop.f32.mrb[0].mxu0
      %1197 = vmatprep.mubr.f32.mxu0 0.0
      %1198 = vmatmul.mubr.f32.gmra.mrb[0].mxu0 %v980
      %v1199 = vpop.f32.mrb[0].mxu0
      %v1200 = vadd.f32 0.0, %v1199
      %v1201 = vpop.f32.mrb[0].mxu0
      %1202 = vmatprep.mubr.f32.mxu0 0.0
      %1203 = vmatmul.mubr.f32.gmra.mrb[0].mxu0 %v983
      %v1204 = vpop.f32.mrb[0].mxu0
      %v1205 = vadd.f32 0.0, %v1204
      %v1206 = vpop.f32.mrb[0].mxu0
      %1207 = vmatprep.mubr.f32.mxu0 0.0
      %1208 = vmatmul.mubr.f32.gmra.mrb[0].mxu0 %v986
      %v1209 = vpop.f32.mrb[0].mxu0
      %v1210 = vadd.f32 0.0, %v1209
      %v1211 = vpop.f32.mrb[0].mxu0
      %1212 = vmatprep.mubr.f32.mxu0 0.0
      %1213 = vmatmul.mubr.f32.gmra.mrb[0].mxu0 %v989
      %v1214 = vpop.f32.mrb[0].mxu0
      %v1215 = vadd.f32 0.0, %v1214
      %v1216 = vpop.f32.mrb[0].mxu0
      %1217 = vmatprep.mubr.f32.mxu0 0.0
      %1218 = vmatmul.mubr.f32.gmra.mrb[0].mxu0 %v992
      %v1219 = vpop.f32.mrb[0].mxu0
      %v1220 = vadd.f32 0.0, %v1219
      %v1221 = vpop.f32.mrb[0].mxu0
      %1222 = vmatprep.mubr.f32.mxu0 0.0
      %1223 = vmatmul.mubr.f32.gmra.mrb[0].mxu0 %v995
      %v1224 = vpop.f32.mrb[0].mxu0
      %v1225 = vadd.f32 0.0, %v1224
      %v1226 = vpop.f32.mrb[0].mxu0
      %1227 = vmatprep.mubr.f32.mxu0 0.0
      %1228 = vmatmul.mubr.f32.gmra.mrb[0].mxu0 %v998
      %v1229 = vpop.f32.mrb[0].mxu0
      %v1230 = vadd.f32 0.0, %v1229
      %v1231 = vpop.f32.mrb[0].mxu0
      %1232 = vmatprep.mubr.f32.mxu0 0.0
      %1233 = vmatmul.mubr.f32.gmra.mrb[0].mxu0 %v1001
      %v1234 = vpop.f32.mrb[0].mxu0
      %v1235 = vadd.f32 0.0, %v1234
      %v1236 = vpop.f32.mrb[0].mxu0
      %1237 = vmatprep.mubr.f32.mxu0 0.0
      %1238 = vmatmul.mubr.f32.gmra.mrb[0].mxu0 %v1004
      %v1239 = vpop.f32.mrb[0].mxu0
      %v1240 = vadd.f32 0.0, %v1239
      %v1241 = vpop.f32.mrb[0].mxu0
      %1242 = vmatprep.mubr.f32.mxu0 0.0
      %1243 = vmatmul.mubr.f32.gmra.mrb[0].mxu0 %v1007
      %v1244 = vpop.f32.mrb[0].mxu0
      %v1245 = vadd.f32 0.0, %v1244
      %v1246 = vpop.f32.mrb[0].mxu0
      %1247 = vmatprep.mubr.f32.mxu0 0.0
      %1248 = vmatmul.mubr.f32.gmra.mrb[0].mxu0 %v1010
      %v1249 = vpop.f32.mrb[0].mxu0
      %v1250 = vadd.f32 0.0, %v1249
      %v1251 = vpop.f32.mrb[0].mxu0
      %1252 = vmatprep.mubr.f32.mxu0 0.0
      %1253 = vmatmul.mubr.f32.gmra.mrb[0].mxu0 %v1013
      %v1254 = vpop.f32.mrb[0].mxu0
      %v1255 = vadd.f32 0.0, %v1254
      %v1256 = vpop.f32.mrb[0].mxu0
      %1257 = vmatprep.mubr.f32.mxu0 0.0
      %1258 = vmatmul.mubr.f32.gmra.mrb[0].mxu0 %v1016
      %v1259 = vpop.f32.mrb[0].mxu0
      %v1260 = vadd.f32 0.0, %v1259
      %v1261 = vpop.f32.mrb[0].mxu0
      %1262 = vmatprep.mubr.f32.mxu0 0.0
      %1263 = vmatmul.mubr.f32.gmra.mrb[0].mxu0 %v1019
      %v1264 = vpop.f32.mrb[0].mxu0
      %v1265 = vadd.f32 0.0, %v1264
      %v1266 = vpop.f32.mrb[0].mxu0
      %1267 = vmatprep.mubr.f32.mxu0 0.0
      %1268 = vmatmul.mubr.f32.gmra.mrb[0].mxu0 %v1022
      %v1269 = vpop.f32.mrb[0].mxu0
      %v1270 = vadd.f32 0.0, %v1269
      %v1271 = vpop.f32.mrb[0].mxu0
      %1272 = vmatprep.mubr.f32.mxu0 0.0
      %1273 = vmatmul.mubr.f32.gmra.mrb[0].mxu0 %v1025
      %v1274 = vpop.f32.mrb[0].mxu0
      %v1275 = vadd.f32 0.0, %v1274
      %v1276 = vpop.f32.mrb[0].mxu0
      %1277 = vmatprep.mubr.f32.mxu0 0.0
      %1278 = vmatmul.mubr.f32.gmra.mrb[0].mxu0 %v1028
      %v1279 = vpop.f32.mrb[0].mxu0
      %v1280 = vadd.f32 0.0, %v1279
      %v1281 = vpop.f32.mrb[0].mxu0
      %1282 = vmatprep.mubr.f32.mxu0 0.0
      %1283 = vmatmul.mubr.f32.gmra.mrb[0].mxu0 %v1031
      %v1284 = vpop.f32.mrb[0].mxu0
      %v1285 = vadd.f32 0.0, %v1284
      %v1286 = vpop.f32.mrb[0].mxu0
      %1287 = vmatprep.mubr.f32.mxu0 0.0
      %1288 = vmatmul.mubr.f32.gmra.mrb[0].mxu0 %v1034
      %v1289 = vpop.f32.mrb[0].mxu0
      %v1290 = vadd.f32 0.0, %v1289
      %v1291 = vpop.f32.mrb[0].mxu0
      %1292 = vmatprep.mubr.f32.mxu0 0.0
      %1293 = vmatmul.mubr.f32.gmra.mrb[0].mxu0 %v1037
      %v1294 = vpop.f32.mrb[0].mxu0
      %v1295 = vadd.f32 0.0, %v1294
      %v1296 = vpop.f32.mrb[0].mxu0
      %1297 = vmatprep.mubr.f32.mxu0 0.0
      %1298 = vmatmul.mubr.f32.gmra.mrb[0].mxu0 %v1040
      %v1299 = vpop.f32.mrb[0].mxu0
      %v1300 = vadd.f32 0.0, %v1299
      %v1301 = vpop.f32.mrb[0].mxu0
      %1302 = vmatprep.mubr.f32.mxu0 0.0
      %1303 = vmatmul.mubr.f32.gmra.mrb[0].mxu0 %v1043
      %v1304 = vpop.f32.mrb[0].mxu0
      %v1305 = vadd.f32 0.0, %v1304
      %v1306 = vpop.f32.mrb[0].mxu0
      %1307 = vmatprep.mubr.f32.mxu0 0.0
      %1308 = vmatmul.mubr.f32.gmra.mrb[0].mxu0 %v1046
      %v1309 = vpop.f32.mrb[0].mxu0
      %v1310 = vadd.f32 0.0, %v1309
      %v1311 = vpop.f32.mrb[0].mxu0
      %1312 = vmatprep.mubr.f32.mxu0 0.0
      %1313 = vmatmul.mubr.f32.gmra.mrb[0].mxu0 %v1049
      %v1314 = vpop.f32.mrb[0].mxu0
      %v1315 = vadd.f32 0.0, %v1314
      %v1316 = vpop.f32.mrb[0].mxu0
      %1317 = vmatprep.mubr.f32.mxu0 0.0
      %1318 = vmatmul.mubr.f32.gmra.mrb[0].mxu0 %v1052
      %v1319 = vpop.f32.mrb[0].mxu0
      %v1320 = vadd.f32 0.0, %v1319
      %v1321 = vpop.f32.mrb[0].mxu0
      %1322 = vmatprep.mubr.f32.mxu0 0.0
      %1323 = vmatmul.mubr.f32.gmra.mrb[0].mxu0 %v1055
      %v1324 = vpop.f32.mrb[0].mxu0
      %v1325 = vadd.f32 0.0, %v1324
      %v1326 = vpop.f32.mrb[0].mxu0
      %1327 = vmatprep.mubr.f32.mxu0 0.0
      %1328 = vmatmul.mubr.f32.gmra.mrb[0].mxu0 %v1058
      %v1329 = vpop.f32.mrb[0].mxu0
      %v1330 = vadd.f32 0.0, %v1329
      %v1331 = vpop.f32.mrb[0].mxu0
      %1332 = vdwg.mxu0
      %v1333 = vld [vmem:[#allocation2] sm:$0xff]
      %v1334 = vld [vmem:[#allocation2 + $0x8] sm:$0xff]
      %v1335 = vld [vmem:[#allocation2 + $0x10] sm:$0xff]
      %v1336 = vld [vmem:[#allocation2 + $0x18] sm:$0xff]
      %v1337 = vld [vmem:[#allocation2 + $0x20] sm:$0xff]
      %v1338 = vld [vmem:[#allocation2 + $0x28] sm:$0xff]
      %v1339 = vld [vmem:[#allocation2 + $0x30] sm:$0xff]
      %v1340 = vld [vmem:[#allocation2 + $0x38] sm:$0xff]
      %v1341 = vld [vmem:[#allocation2 + $0x40] sm:$0xff]
      %v1342 = vld [vmem:[#allocation2 + $0x48] sm:$0xff]
      %v1343 = vld [vmem:[#allocation2 + $0x50] sm:$0xff]
      %v1344 = vld [vmem:[#allocation2 + $0x58] sm:$0xff]
      %v1345 = vld [vmem:[#allocation2 + $0x60] sm:$0xff]
      %v1346 = vld [vmem:[#allocation2 + $0x68] sm:$0xff]
      %v1347 = vld [vmem:[#allocation2 + $0x70] sm:$0xff]
      %v1348 = vld [vmem:[#allocation2 + $0x78] sm:$0xff]
      %v1349 = vld [vmem:[#allocation2 + $0x80] sm:$0xff]
      %v1350 = vld [vmem:[#allocation2 + $0x88] sm:$0xff]
      %v1351 = vld [vmem:[#allocation2 + $0x90] sm:$0xff]
      %v1352 = vld [vmem:[#allocation2 + $0x98] sm:$0xff]
      %v1353 = vld [vmem:[#allocation2 + $0xa0] sm:$0xff]
      %v1354 = vld [vmem:[#allocation2 + $0xa8] sm:$0xff]
      %v1355 = vld [vmem:[#allocation2 + $0xb0] sm:$0xff]
      %v1356 = vld [vmem:[#allocation2 + $0xb8] sm:$0xff]
      %v1357 = vld [vmem:[#allocation2 + $0xc0] sm:$0xff]
      %v1358 = vld [vmem:[#allocation2 + $0xc8] sm:$0xff]
      %v1359 = vld [vmem:[#allocation2 + $0xd0] sm:$0xff]
      %v1360 = vld [vmem:[#allocation2 + $0xd8] sm:$0xff]
      %v1361 = vld [vmem:[#allocation2 + $0xe0] sm:$0xff]
      %v1362 = vld [vmem:[#allocation2 + $0xe8] sm:$0xff]
      %v1363 = vld [vmem:[#allocation2 + $0xf0] sm:$0xff]
      %v1364 = vld [vmem:[#allocation2 + $0xf8] sm:$0xff]
      %v1365 = vld [vmem:[#allocation2 + $0x100] sm:$0xff]
      %v1366 = vld [vmem:[#allocation2 + $0x108] sm:$0xff]
      %v1367 = vld [vmem:[#allocation2 + $0x110] sm:$0xff]
      %v1368 = vld [vmem:[#allocation2 + $0x118] sm:$0xff]
      %v1369 = vld [vmem:[#allocation2 + $0x120] sm:$0xff]
      %v1370 = vld [vmem:[#allocation2 + $0x128] sm:$0xff]
      %v1371 = vld [vmem:[#allocation2 + $0x130] sm:$0xff]
      %v1372 = vld [vmem:[#allocation2 + $0x138] sm:$0xff]
      %v1373 = vld [vmem:[#allocation2 + $0x140] sm:$0xf]
      %v1374 = vadd.f32 %v1333, %v1130
      %v1375 = vadd.f32 %v1334, %v1135
      %v1376 = vadd.f32 %v1335, %v1140
      %v1377 = vadd.f32 %v1336, %v1145
      %v1378 = vadd.f32 %v1337, %v1150
      %v1379 = vadd.f32 %v1338, %v1155
      %v1380 = vadd.f32 %v1339, %v1160
      %v1381 = vadd.f32 %v1340, %v1165
      %v1382 = vadd.f32 %v1341, %v1170
      %v1383 = vadd.f32 %v1342, %v1175
      %v1384 = vadd.f32 %v1343, %v1180
      %v1385 = vadd.f32 %v1344, %v1185
      %v1386 = vadd.f32 %v1345, %v1190
      %v1387 = vadd.f32 %v1346, %v1195
      %v1388 = vadd.f32 %v1347, %v1200
      %v1389 = vadd.f32 %v1348, %v1205
      %v1390 = vadd.f32 %v1349, %v1210
      %v1391 = vadd.f32 %v1350, %v1215
      %v1392 = vadd.f32 %v1351, %v1220
      %v1393 = vadd.f32 %v1352, %v1225
      %v1394 = vadd.f32 %v1353, %v1230
      %v1395 = vadd.f32 %v1354, %v1235
      %v1396 = vadd.f32 %v1355, %v1240
      %v1397 = vadd.f32 %v1356, %v1245
      %v1398 = vadd.f32 %v1357, %v1250
      %v1399 = vadd.f32 %v1358, %v1255
      %v1400 = vadd.f32 %v1359, %v1260
      %v1401 = vadd.f32 %v1360, %v1265
      %v1402 = vadd.f32 %v1361, %v1270
      %v1403 = vadd.f32 %v1362, %v1275
      %v1404 = vadd.f32 %v1363, %v1280
      %v1405 = vadd.f32 %v1364, %v1285
      %v1406 = vadd.f32 %v1365, %v1290
      %v1407 = vadd.f32 %v1366, %v1295
      %v1408 = vadd.f32 %v1367, %v1300
      %v1409 = vadd.f32 %v1368, %v1305
      %v1410 = vadd.f32 %v1369, %v1310
      %v1411 = vadd.f32 %v1370, %v1315
      %v1412 = vadd.f32 %v1371, %v1320
      %v1413 = vadd.f32 %v1372, %v1325
      %v1414 = vadd.f32 %v1373, %v1330
      %1415 = vst.msk [vmem:[#allocation2] sm:$0xff] %vm385, %v1374
      %1416 = vst.msk [vmem:[#allocation2 + $0x8] sm:$0xff] %vm385, %v1375
      %1417 = vst.msk [vmem:[#allocation2 + $0x10] sm:$0xff] %vm385, %v1376
      %1418 = vst.msk [vmem:[#allocation2 + $0x18] sm:$0xff] %vm385, %v1377
      %1419 = vst.msk [vmem:[#allocation2 + $0x20] sm:$0xff] %vm385, %v1378
      %1420 = vst.msk [vmem:[#allocation2 + $0x28] sm:$0xff] %vm385, %v1379
      %1421 = vst.msk [vmem:[#allocation2 + $0x30] sm:$0xff] %vm385, %v1380
      %1422 = vst.msk [vmem:[#allocation2 + $0x38] sm:$0xff] %vm385, %v1381
      %1423 = vst.msk [vmem:[#allocation2 + $0x40] sm:$0xff] %vm385, %v1382
      %1424 = vst.msk [vmem:[#allocation2 + $0x48] sm:$0xff] %vm385, %v1383
      %1425 = vst.msk [vmem:[#allocation2 + $0x50] sm:$0xff] %vm385, %v1384
      %1426 = vst.msk [vmem:[#allocation2 + $0x58] sm:$0xff] %vm385, %v1385
      %1427 = vst.msk [vmem:[#allocation2 + $0x60] sm:$0xff] %vm385, %v1386
      %1428 = vst.msk [vmem:[#allocation2 + $0x68] sm:$0xff] %vm385, %v1387
      %1429 = vst.msk [vmem:[#allocation2 + $0x70] sm:$0xff] %vm385, %v1388
      %1430 = vst.msk [vmem:[#allocation2 + $0x78] sm:$0xff] %vm385, %v1389
      %1431 = vst.msk [vmem:[#allocation2 + $0x80] sm:$0xff] %vm385, %v1390
      %1432 = vst.msk [vmem:[#allocation2 + $0x88] sm:$0xff] %vm385, %v1391
      %1433 = vst.msk [vmem:[#allocation2 + $0x90] sm:$0xff] %vm385, %v1392
      %1434 = vst.msk [vmem:[#allocation2 + $0x98] sm:$0xff] %vm385, %v1393
      %1435 = vst.msk [vmem:[#allocation2 + $0xa0] sm:$0xff] %vm385, %v1394
      %1436 = vst.msk [vmem:[#allocation2 + $0xa8] sm:$0xff] %vm385, %v1395
      %1437 = vst.msk [vmem:[#allocation2 + $0xb0] sm:$0xff] %vm385, %v1396
      %1438 = vst.msk [vmem:[#allocation2 + $0xb8] sm:$0xff] %vm385, %v1397
      %1439 = vst.msk [vmem:[#allocation2 + $0xc0] sm:$0xff] %vm385, %v1398
      %1440 = vst.msk [vmem:[#allocation2 + $0xc8] sm:$0xff] %vm385, %v1399
      %1441 = vst.msk [vmem:[#allocation2 + $0xd0] sm:$0xff] %vm385, %v1400
      %1442 = vst.msk [vmem:[#allocation2 + $0xd8] sm:$0xff] %vm385, %v1401
      %1443 = vst.msk [vmem:[#allocation2 + $0xe0] sm:$0xff] %vm385, %v1402
      %1444 = vst.msk [vmem:[#allocation2 + $0xe8] sm:$0xff] %vm385, %v1403
      %1445 = vst.msk [vmem:[#allocation2 + $0xf0] sm:$0xff] %vm385, %v1404
      %1446 = vst.msk [vmem:[#allocation2 + $0xf8] sm:$0xff] %vm385, %v1405
      %1447 = vst.msk [vmem:[#allocation2 + $0x100] sm:$0xff] %vm385, %v1406
      %1448 = vst.msk [vmem:[#allocation2 + $0x108] sm:$0xff] %vm385, %v1407
      %1449 = vst.msk [vmem:[#allocation2 + $0x110] sm:$0xff] %vm385, %v1408
      %1450 = vst.msk [vmem:[#allocation2 + $0x118] sm:$0xff] %vm385, %v1409
      %1451 = vst.msk [vmem:[#allocation2 + $0x120] sm:$0xff] %vm385, %v1410
      %1452 = vst.msk [vmem:[#allocation2 + $0x128] sm:$0xff] %vm385, %v1411
      %1453 = vst.msk [vmem:[#allocation2 + $0x130] sm:$0xff] %vm385, %v1412
      %1454 = vst.msk [vmem:[#allocation2 + $0x138] sm:$0xff] %vm385, %v1413
      %1455 = vst.msk [vmem:[#allocation2 + $0x140] sm:$0xf] %vm892, %v1414
      %v1456 = vld [vmem:[%s381 + $0x2] sm:$0xff]
      %v1457 = vld [vmem:[%s381 + $0xa] sm:$0xff]
      %v1458 = vld [vmem:[%s381 + $0x12] sm:$0xff]
      %v1459 = vld [vmem:[%s381 + $0x1a] sm:$0xff]
      %v1460 = vld [vmem:[%s381 + $0x22] sm:$0xff]
      %v1461 = vld [vmem:[%s381 + $0x2a] sm:$0xff]
      %v1462 = vld [vmem:[%s381 + $0x32] sm:$0xff]
      %v1463 = vld [vmem:[%s381 + $0x3a] sm:$0xff]
      %v1464 = vld [vmem:[%s381 + $0x42] sm:$0xff]
      %v1465 = vld [vmem:[%s381 + $0x4a] sm:$0xff]
      %v1466 = vld [vmem:[%s381 + $0x52] sm:$0xff]
      %v1467 = vld [vmem:[%s381 + $0x5a] sm:$0xff]
      %v1468 = vld [vmem:[%s381 + $0x62] sm:$0xff]
      %v1469 = vld [vmem:[%s381 + $0x6a] sm:$0xff]
      %v1470 = vld [vmem:[%s381 + $0x72] sm:$0xff]
      %v1471 = vld [vmem:[%s381 + $0x7a] sm:$0xff]
      %v1472 = vld [vmem:[%s381 + $0x82] sm:$0xff]
      %v1473 = vld [vmem:[%s381 + $0x8a] sm:$0xff]
      %v1474 = vld [vmem:[%s381 + $0x92] sm:$0xff]
      %v1475 = vld [vmem:[%s381 + $0x9a] sm:$0xff]
      %v1476 = vld [vmem:[%s381 + $0xa2] sm:$0xff]
      %v1477 = vld [vmem:[%s381 + $0xaa] sm:$0xff]
      %v1478 = vld [vmem:[%s381 + $0xb2] sm:$0xff]
      %v1479 = vld [vmem:[%s381 + $0xba] sm:$0xff]
      %v1480 = vld [vmem:[%s381 + $0xc2] sm:$0xff]
      %v1481 = vld [vmem:[%s381 + $0xca] sm:$0xff]
      %v1482 = vld [vmem:[%s381 + $0xd2] sm:$0xff]
      %v1483 = vld [vmem:[%s381 + $0xda] sm:$0xff]
      %v1484 = vld [vmem:[%s381 + $0xe2] sm:$0xff]
      %v1485 = vld [vmem:[%s381 + $0xea] sm:$0xff]
      %v1486 = vld [vmem:[%s381 + $0xf2] sm:$0xff]
      %v1487 = vld [vmem:[%s381 + $0xfa] sm:$0xff]
      %v1488 = vld [vmem:[%s381 + $0x102] sm:$0xff]
      %v1489 = vld [vmem:[%s381 + $0x10a] sm:$0xff]
      %v1490 = vld [vmem:[%s381 + $0x112] sm:$0xff]
      %v1491 = vld [vmem:[%s381 + $0x11a] sm:$0xff]
      %v1492 = vld [vmem:[%s381 + $0x122] sm:$0xff]
      %v1493 = vld [vmem:[%s381 + $0x12a] sm:$0xff]
      %v1494 = vld [vmem:[%s381 + $0x132] sm:$0xff]
      %v1495 = vld [vmem:[%s381 + $0x13a] sm:$0xff]
      %v1496 = vld [vmem:[%s381 + $0x142] sm:$0xf]
      %s1497 = scalar_lea.vmem %s1, 8
      %v1498 = vld [vmem:[%s1497] sm:$0x7]
      %v1500 = vsel %vm454, %v1456, 0
      %v1503 = vsel %vm454, %v1457, 0
      %v1506 = vsel %vm454, %v1458, 0
      %v1509 = vsel %vm454, %v1459, 0
      %v1512 = vsel %vm454, %v1460, 0
      %v1515 = vsel %vm454, %v1461, 0
      %v1518 = vsel %vm454, %v1462, 0
      %v1521 = vsel %vm454, %v1463, 0
      %v1524 = vsel %vm454, %v1464, 0
      %v1527 = vsel %vm454, %v1465, 0
      %v1530 = vsel %vm454, %v1466, 0
      %v1533 = vsel %vm454, %v1467, 0
      %v1536 = vsel %vm454, %v1468, 0
      %v1539 = vsel %vm454, %v1469, 0
      %v1542 = vsel %vm454, %v1470, 0
      %v1545 = vsel %vm454, %v1471, 0
      %v1548 = vsel %vm454, %v1472, 0
      %v1551 = vsel %vm454, %v1473, 0
      %v1554 = vsel %vm454, %v1474, 0
      %v1557 = vsel %vm454, %v1475, 0
      %v1560 = vsel %vm454, %v1476, 0
      %v1563 = vsel %vm454, %v1477, 0
      %v1566 = vsel %vm454, %v1478, 0
      %v1569 = vsel %vm454, %v1479, 0
      %v1572 = vsel %vm454, %v1480, 0
      %v1575 = vsel %vm454, %v1481, 0
      %v1578 = vsel %vm454, %v1482, 0
      %v1581 = vsel %vm454, %v1483, 0
      %v1584 = vsel %vm454, %v1484, 0
      %v1587 = vsel %vm454, %v1485, 0
      %v1590 = vsel %vm454, %v1486, 0
      %v1593 = vsel %vm454, %v1487, 0
      %v1596 = vsel %vm454, %v1488, 0
      %v1599 = vsel %vm454, %v1489, 0
      %v1602 = vsel %vm454, %v1490, 0
      %v1605 = vsel %vm454, %v1491, 0
      %v1608 = vsel %vm454, %v1492, 0
      %v1611 = vsel %vm454, %v1493, 0
      %v1614 = vsel %vm454, %v1494, 0
      %v1617 = vsel %vm454, %v1495, 0
      %v1620 = vsel %vm454, %v1496, 0
      %v1623 = vsel %vm578, %v1498, 0
      %1625 = vmatprep.subr.mxu0 0.0
      %1626 = vmatpush1.msra.mxu0 %v1623
      %1627 = vmatprep.subr.mxu0 0.0
      %1628 = vmatpush1.msra.mxu0 0.0
      %1629 = vmatprep.subr.mxu0 0.0
      %1630 = vmatpush1.msra.mxu0 0.0
      %1631 = vmatprep.subr.mxu0 0.0
      %1632 = vmatpush1.msra.mxu0 0.0
      %1633 = vmatprep.subr.mxu0 0.0
      %1634 = vmatpush1.msra.mxu0 0.0
      %1635 = vmatprep.subr.mxu0 0.0
      %1636 = vmatpush1.msra.mxu0 0.0
      %1637 = vmatprep.subr.mxu0 0.0
      %1638 = vmatpush1.msra.mxu0 0.0
      %1639 = vmatprep.subr.mxu0 0.0
      %1640 = vmatpush1.msra.mxu0 0.0
      %1641 = vmatprep.subr.mxu0 0.0
      %1642 = vmatpush1.msra.mxu0 0.0
      %1643 = vmatprep.subr.mxu0 0.0
      %1644 = vmatpush1.msra.mxu0 0.0
      %1645 = vmatprep.subr.mxu0 0.0
      %1646 = vmatpush1.msra.mxu0 0.0
      %1647 = vmatprep.subr.mxu0 0.0
      %1648 = vmatpush1.msra.mxu0 0.0
      %1649 = vmatprep.subr.mxu0 0.0
      %1650 = vmatpush1.msra.mxu0 0.0
      %1651 = vmatprep.subr.mxu0 0.0
      %1652 = vmatpush1.msra.mxu0 0.0
      %1653 = vmatprep.subr.mxu0 0.0
      %1654 = vmatpush1.msra.mxu0 0.0
      %1655 = vmatprep.subr.mxu0 0.0
      %1656 = vmatpush1.msra.mxu0 0.0
      %1657 = vmatprep.subr.mxu0 0.0
      %1658 = vmatpush1.msra.mxu0 0.0
      %1659 = vmatprep.subr.mxu0 0.0
      %1660 = vmatpush1.msra.mxu0 0.0
      %1661 = vmatprep.subr.mxu0 0.0
      %1662 = vmatpush1.msra.mxu0 0.0
      %1663 = vmatprep.subr.mxu0 0.0
      %1664 = vmatpush1.msra.mxu0 0.0
      %1665 = vmatprep.subr.mxu0 0.0
      %1666 = vmatpush1.msra.mxu0 0.0
      %1667 = vmatprep.subr.mxu0 0.0
      %1668 = vmatpush1.msra.mxu0 0.0
      %1669 = vmatprep.subr.mxu0 0.0
      %1670 = vmatpush1.msra.mxu0 0.0
      %1671 = vmatprep.subr.mxu0 0.0
      %1672 = vmatpush1.msra.mxu0 0.0
      %1673 = vmatprep.subr.mxu0 0.0
      %1674 = vmatpush1.msra.mxu0 0.0
      %1675 = vmatprep.subr.mxu0 0.0
      %1676 = vmatpush1.msra.mxu0 0.0
      %1677 = vmatprep.subr.mxu0 0.0
      %1678 = vmatpush1.msra.mxu0 0.0
      %1679 = vmatprep.subr.mxu0 0.0
      %1680 = vmatpush1.msra.mxu0 0.0
      %1681 = vmatprep.subr.mxu0 0.0
      %1682 = vmatpush1.msra.mxu0 0.0
      %1683 = vmatprep.subr.mxu0 0.0
      %1684 = vmatpush1.msra.mxu0 0.0
      %1685 = vmatprep.subr.mxu0 0.0
      %1686 = vmatpush1.msra.mxu0 0.0
      %1687 = vmatprep.subr.mxu0 0.0
      %1688 = vmatpush1.msra.mxu0 0.0
      %1689 = vmatprep.mubr.f32.mxu0 0.0
      %1690 = vmatmul.mubr.f32.gmra.mrb[0].mxu0 %v1500
      %v1691 = vpop.f32.mrb[0].mxu0
      %v1692 = vadd.f32 0.0, %v1691
      %v1693 = vpop.f32.mrb[0].mxu0
      %1694 = vmatprep.mubr.f32.mxu0 0.0
      %1695 = vmatmul.mubr.f32.gmra.mrb[0].mxu0 %v1503
      %v1696 = vpop.f32.mrb[0].mxu0
      %v1697 = vadd.f32 0.0, %v1696
      %v1698 = vpop.f32.mrb[0].mxu0
      %1699 = vmatprep.mubr.f32.mxu0 0.0
      %1700 = vmatmul.mubr.f32.gmra.mrb[0].mxu0 %v1506
      %v1701 = vpop.f32.mrb[0].mxu0
      %v1702 = vadd.f32 0.0, %v1701
      %v1703 = vpop.f32.mrb[0].mxu0
      %1704 = vmatprep.mubr.f32.mxu0 0.0
      %1705 = vmatmul.mubr.f32.gmra.mrb[0].mxu0 %v1509
      %v1706 = vpop.f32.mrb[0].mxu0
      %v1707 = vadd.f32 0.0, %v1706
      %v1708 = vpop.f32.mrb[0].mxu0
      %1709 = vmatprep.mubr.f32.mxu0 0.0
      %1710 = vmatmul.mubr.f32.gmra.mrb[0].mxu0 %v1512
      %v1711 = vpop.f32.mrb[0].mxu0
      %v1712 = vadd.f32 0.0, %v1711
      %v1713 = vpop.f32.mrb[0].mxu0
      %1714 = vmatprep.mubr.f32.mxu0 0.0
      %1715 = vmatmul.mubr.f32.gmra.mrb[0].mxu0 %v1515
      %v1716 = vpop.f32.mrb[0].mxu0
      %v1717 = vadd.f32 0.0, %v1716
      %v1718 = vpop.f32.mrb[0].mxu0
      %1719 = vmatprep.mubr.f32.mxu0 0.0
      %1720 = vmatmul.mubr.f32.gmra.mrb[0].mxu0 %v1518
      %v1721 = vpop.f32.mrb[0].mxu0
      %v1722 = vadd.f32 0.0, %v1721
      %v1723 = vpop.f32.mrb[0].mxu0
      %1724 = vmatprep.mubr.f32.mxu0 0.0
      %1725 = vmatmul.mubr.f32.gmra.mrb[0].mxu0 %v1521
      %v1726 = vpop.f32.mrb[0].mxu0
      %v1727 = vadd.f32 0.0, %v1726
      %v1728 = vpop.f32.mrb[0].mxu0
      %1729 = vmatprep.mubr.f32.mxu0 0.0
      %1730 = vmatmul.mubr.f32.gmra.mrb[0].mxu0 %v1524
      %v1731 = vpop.f32.mrb[0].mxu0
      %v1732 = vadd.f32 0.0, %v1731
      %v1733 = vpop.f32.mrb[0].mxu0
      %1734 = vmatprep.mubr.f32.mxu0 0.0
      %1735 = vmatmul.mubr.f32.gmra.mrb[0].mxu0 %v1527
      %v1736 = vpop.f32.mrb[0].mxu0
      %v1737 = vadd.f32 0.0, %v1736
      %v1738 = vpop.f32.mrb[0].mxu0
      %1739 = vmatprep.mubr.f32.mxu0 0.0
      %1740 = vmatmul.mubr.f32.gmra.mrb[0].mxu0 %v1530
      %v1741 = vpop.f32.mrb[0].mxu0
      %v1742 = vadd.f32 0.0, %v1741
      %v1743 = vpop.f32.mrb[0].mxu0
      %1744 = vmatprep.mubr.f32.mxu0 0.0
      %1745 = vmatmul.mubr.f32.gmra.mrb[0].mxu0 %v1533
      %v1746 = vpop.f32.mrb[0].mxu0
      %v1747 = vadd.f32 0.0, %v1746
      %v1748 = vpop.f32.mrb[0].mxu0
      %1749 = vmatprep.mubr.f32.mxu0 0.0
      %1750 = vmatmul.mubr.f32.gmra.mrb[0].mxu0 %v1536
      %v1751 = vpop.f32.mrb[0].mxu0
      %v1752 = vadd.f32 0.0, %v1751
      %v1753 = vpop.f32.mrb[0].mxu0
      %1754 = vmatprep.mubr.f32.mxu0 0.0
      %1755 = vmatmul.mubr.f32.gmra.mrb[0].mxu0 %v1539
      %v1756 = vpop.f32.mrb[0].mxu0
      %v1757 = vadd.f32 0.0, %v1756
      %v1758 = vpop.f32.mrb[0].mxu0
      %1759 = vmatprep.mubr.f32.mxu0 0.0
      %1760 = vmatmul.mubr.f32.gmra.mrb[0].mxu0 %v1542
      %v1761 = vpop.f32.mrb[0].mxu0
      %v1762 = vadd.f32 0.0, %v1761
      %v1763 = vpop.f32.mrb[0].mxu0
      %1764 = vmatprep.mubr.f32.mxu0 0.0
      %1765 = vmatmul.mubr.f32.gmra.mrb[0].mxu0 %v1545
      %v1766 = vpop.f32.mrb[0].mxu0
      %v1767 = vadd.f32 0.0, %v1766
      %v1768 = vpop.f32.mrb[0].mxu0
      %1769 = vmatprep.mubr.f32.mxu0 0.0
      %1770 = vmatmul.mubr.f32.gmra.mrb[0].mxu0 %v1548
      %v1771 = vpop.f32.mrb[0].mxu0
      %v1772 = vadd.f32 0.0, %v1771
      %v1773 = vpop.f32.mrb[0].mxu0
      %1774 = vmatprep.mubr.f32.mxu0 0.0
      %1775 = vmatmul.mubr.f32.gmra.mrb[0].mxu0 %v1551
      %v1776 = vpop.f32.mrb[0].mxu0
      %v1777 = vadd.f32 0.0, %v1776
      %v1778 = vpop.f32.mrb[0].mxu0
      %1779 = vmatprep.mubr.f32.mxu0 0.0
      %1780 = vmatmul.mubr.f32.gmra.mrb[0].mxu0 %v1554
      %v1781 = vpop.f32.mrb[0].mxu0
      %v1782 = vadd.f32 0.0, %v1781
      %v1783 = vpop.f32.mrb[0].mxu0
      %1784 = vmatprep.mubr.f32.mxu0 0.0
      %1785 = vmatmul.mubr.f32.gmra.mrb[0].mxu0 %v1557
      %v1786 = vpop.f32.mrb[0].mxu0
      %v1787 = vadd.f32 0.0, %v1786
      %v1788 = vpop.f32.mrb[0].mxu0
      %1789 = vmatprep.mubr.f32.mxu0 0.0
      %1790 = vmatmul.mubr.f32.gmra.mrb[0].mxu0 %v1560
      %v1791 = vpop.f32.mrb[0].mxu0
      %v1792 = vadd.f32 0.0, %v1791
      %v1793 = vpop.f32.mrb[0].mxu0
      %1794 = vmatprep.mubr.f32.mxu0 0.0
      %1795 = vmatmul.mubr.f32.gmra.mrb[0].mxu0 %v1563
      %v1796 = vpop.f32.mrb[0].mxu0
      %v1797 = vadd.f32 0.0, %v1796
      %v1798 = vpop.f32.mrb[0].mxu0
      %1799 = vmatprep.mubr.f32.mxu0 0.0
      %1800 = vmatmul.mubr.f32.gmra.mrb[0].mxu0 %v1566
      %v1801 = vpop.f32.mrb[0].mxu0
      %v1802 = vadd.f32 0.0, %v1801
      %v1803 = vpop.f32.mrb[0].mxu0
      %1804 = vmatprep.mubr.f32.mxu0 0.0
      %1805 = vmatmul.mubr.f32.gmra.mrb[0].mxu0 %v1569
      %v1806 = vpop.f32.mrb[0].mxu0
      %v1807 = vadd.f32 0.0, %v1806
      %v1808 = vpop.f32.mrb[0].mxu0
      %1809 = vmatprep.mubr.f32.mxu0 0.0
      %1810 = vmatmul.mubr.f32.gmra.mrb[0].mxu0 %v1572
      %v1811 = vpop.f32.mrb[0].mxu0
      %v1812 = vadd.f32 0.0, %v1811
      %v1813 = vpop.f32.mrb[0].mxu0
      %1814 = vmatprep.mubr.f32.mxu0 0.0
      %1815 = vmatmul.mubr.f32.gmra.mrb[0].mxu0 %v1575
      %v1816 = vpop.f32.mrb[0].mxu0
      %v1817 = vadd.f32 0.0, %v1816
      %v1818 = vpop.f32.mrb[0].mxu0
      %1819 = vmatprep.mubr.f32.mxu0 0.0
      %1820 = vmatmul.mubr.f32.gmra.mrb[0].mxu0 %v1578
      %v1821 = vpop.f32.mrb[0].mxu0
      %v1822 = vadd.f32 0.0, %v1821
      %v1823 = vpop.f32.mrb[0].mxu0
      %1824 = vmatprep.mubr.f32.mxu0 0.0
      %1825 = vmatmul.mubr.f32.gmra.mrb[0].mxu0 %v1581
      %v1826 = vpop.f32.mrb[0].mxu0
      %v1827 = vadd.f32 0.0, %v1826
      %v1828 = vpop.f32.mrb[0].mxu0
      %1829 = vmatprep.mubr.f32.mxu0 0.0
      %1830 = vmatmul.mubr.f32.gmra.mrb[0].mxu0 %v1584
      %v1831 = vpop.f32.mrb[0].mxu0
      %v1832 = vadd.f32 0.0, %v1831
      %v1833 = vpop.f32.mrb[0].mxu0
      %1834 = vmatprep.mubr.f32.mxu0 0.0
      %1835 = vmatmul.mubr.f32.gmra.mrb[0].mxu0 %v1587
      %v1836 = vpop.f32.mrb[0].mxu0
      %v1837 = vadd.f32 0.0, %v1836
      %v1838 = vpop.f32.mrb[0].mxu0
      %1839 = vmatprep.mubr.f32.mxu0 0.0
      %1840 = vmatmul.mubr.f32.gmra.mrb[0].mxu0 %v1590
      %v1841 = vpop.f32.mrb[0].mxu0
      %v1842 = vadd.f32 0.0, %v1841
      %v1843 = vpop.f32.mrb[0].mxu0
      %1844 = vmatprep.mubr.f32.mxu0 0.0
      %1845 = vmatmul.mubr.f32.gmra.mrb[0].mxu0 %v1593
      %v1846 = vpop.f32.mrb[0].mxu0
      %v1847 = vadd.f32 0.0, %v1846
      %v1848 = vpop.f32.mrb[0].mxu0
      %1849 = vmatprep.mubr.f32.mxu0 0.0
      %1850 = vmatmul.mubr.f32.gmra.mrb[0].mxu0 %v1596
      %v1851 = vpop.f32.mrb[0].mxu0
      %v1852 = vadd.f32 0.0, %v1851
      %v1853 = vpop.f32.mrb[0].mxu0
      %1854 = vmatprep.mubr.f32.mxu0 0.0
      %1855 = vmatmul.mubr.f32.gmra.mrb[0].mxu0 %v1599
      %v1856 = vpop.f32.mrb[0].mxu0
      %v1857 = vadd.f32 0.0, %v1856
      %v1858 = vpop.f32.mrb[0].mxu0
      %1859 = vmatprep.mubr.f32.mxu0 0.0
      %1860 = vmatmul.mubr.f32.gmra.mrb[0].mxu0 %v1602
      %v1861 = vpop.f32.mrb[0].mxu0
      %v1862 = vadd.f32 0.0, %v1861
      %v1863 = vpop.f32.mrb[0].mxu0
      %1864 = vmatprep.mubr.f32.mxu0 0.0
      %1865 = vmatmul.mubr.f32.gmra.mrb[0].mxu0 %v1605
      %v1866 = vpop.f32.mrb[0].mxu0
      %v1867 = vadd.f32 0.0, %v1866
      %v1868 = vpop.f32.mrb[0].mxu0
      %1869 = vmatprep.mubr.f32.mxu0 0.0
      %1870 = vmatmul.mubr.f32.gmra.mrb[0].mxu0 %v1608
      %v1871 = vpop.f32.mrb[0].mxu0
      %v1872 = vadd.f32 0.0, %v1871
      %v1873 = vpop.f32.mrb[0].mxu0
      %1874 = vmatprep.mubr.f32.mxu0 0.0
      %1875 = vmatmul.mubr.f32.gmra.mrb[0].mxu0 %v1611
      %v1876 = vpop.f32.mrb[0].mxu0
      %v1877 = vadd.f32 0.0, %v1876
      %v1878 = vpop.f32.mrb[0].mxu0
      %1879 = vmatprep.mubr.f32.mxu0 0.0
      %1880 = vmatmul.mubr.f32.gmra.mrb[0].mxu0 %v1614
      %v1881 = vpop.f32.mrb[0].mxu0
      %v1882 = vadd.f32 0.0, %v1881
      %v1883 = vpop.f32.mrb[0].mxu0
      %1884 = vmatprep.mubr.f32.mxu0 0.0
      %1885 = vmatmul.mubr.f32.gmra.mrb[0].mxu0 %v1617
      %v1886 = vpop.f32.mrb[0].mxu0
      %v1887 = vadd.f32 0.0, %v1886
      %v1888 = vpop.f32.mrb[0].mxu0
      %1889 = vmatprep.mubr.f32.mxu0 0.0
      %1890 = vmatmul.mubr.f32.gmra.mrb[0].mxu0 %v1620
      %v1891 = vpop.f32.mrb[0].mxu0
      %v1892 = vadd.f32 0.0, %v1891
      %v1893 = vpop.f32.mrb[0].mxu0
      %1894 = vdwg.mxu0
      %v1895 = vld [vmem:[#allocation2] sm:$0xff]
      %v1896 = vld [vmem:[#allocation2 + $0x8] sm:$0xff]
      %v1897 = vld [vmem:[#allocation2 + $0x10] sm:$0xff]
      %v1898 = vld [vmem:[#allocation2 + $0x18] sm:$0xff]
      %v1899 = vld [vmem:[#allocation2 + $0x20] sm:$0xff]
      %v1900 = vld [vmem:[#allocation2 + $0x28] sm:$0xff]
      %v1901 = vld [vmem:[#allocation2 + $0x30] sm:$0xff]
      %v1902 = vld [vmem:[#allocation2 + $0x38] sm:$0xff]
      %v1903 = vld [vmem:[#allocation2 + $0x40] sm:$0xff]
      %v1904 = vld [vmem:[#allocation2 + $0x48] sm:$0xff]
      %v1905 = vld [vmem:[#allocation2 + $0x50] sm:$0xff]
      %v1906 = vld [vmem:[#allocation2 + $0x58] sm:$0xff]
      %v1907 = vld [vmem:[#allocation2 + $0x60] sm:$0xff]
      %v1908 = vld [vmem:[#allocation2 + $0x68] sm:$0xff]
      %v1909 = vld [vmem:[#allocation2 + $0x70] sm:$0xff]
      %v1910 = vld [vmem:[#allocation2 + $0x78] sm:$0xff]
      %v1911 = vld [vmem:[#allocation2 + $0x80] sm:$0xff]
      %v1912 = vld [vmem:[#allocation2 + $0x88] sm:$0xff]
      %v1913 = vld [vmem:[#allocation2 + $0x90] sm:$0xff]
      %v1914 = vld [vmem:[#allocation2 + $0x98] sm:$0xff]
      %v1915 = vld [vmem:[#allocation2 + $0xa0] sm:$0xff]
      %v1916 = vld [vmem:[#allocation2 + $0xa8] sm:$0xff]
      %v1917 = vld [vmem:[#allocation2 + $0xb0] sm:$0xff]
      %v1918 = vld [vmem:[#allocation2 + $0xb8] sm:$0xff]
      %v1919 = vld [vmem:[#allocation2 + $0xc0] sm:$0xff]
      %v1920 = vld [vmem:[#allocation2 + $0xc8] sm:$0xff]
      %v1921 = vld [vmem:[#allocation2 + $0xd0] sm:$0xff]
      %v1922 = vld [vmem:[#allocation2 + $0xd8] sm:$0xff]
      %v1923 = vld [vmem:[#allocation2 + $0xe0] sm:$0xff]
      %v1924 = vld [vmem:[#allocation2 + $0xe8] sm:$0xff]
      %v1925 = vld [vmem:[#allocation2 + $0xf0] sm:$0xff]
      %v1926 = vld [vmem:[#allocation2 + $0xf8] sm:$0xff]
      %v1927 = vld [vmem:[#allocation2 + $0x100] sm:$0xff]
      %v1928 = vld [vmem:[#allocation2 + $0x108] sm:$0xff]
      %v1929 = vld [vmem:[#allocation2 + $0x110] sm:$0xff]
      %v1930 = vld [vmem:[#allocation2 + $0x118] sm:$0xff]
      %v1931 = vld [vmem:[#allocation2 + $0x120] sm:$0xff]
      %v1932 = vld [vmem:[#allocation2 + $0x128] sm:$0xff]
      %v1933 = vld [vmem:[#allocation2 + $0x130] sm:$0xff]
      %v1934 = vld [vmem:[#allocation2 + $0x138] sm:$0xff]
      %v1935 = vld [vmem:[#allocation2 + $0x140] sm:$0xf]
      %v1936 = vadd.f32 %v1895, %v1692
      %v1937 = vadd.f32 %v1896, %v1697
      %v1938 = vadd.f32 %v1897, %v1702
      %v1939 = vadd.f32 %v1898, %v1707
      %v1940 = vadd.f32 %v1899, %v1712
      %v1941 = vadd.f32 %v1900, %v1717
      %v1942 = vadd.f32 %v1901, %v1722
      %v1943 = vadd.f32 %v1902, %v1727
      %v1944 = vadd.f32 %v1903, %v1732
      %v1945 = vadd.f32 %v1904, %v1737
      %v1946 = vadd.f32 %v1905, %v1742
      %v1947 = vadd.f32 %v1906, %v1747
      %v1948 = vadd.f32 %v1907, %v1752
      %v1949 = vadd.f32 %v1908, %v1757
      %v1950 = vadd.f32 %v1909, %v1762
      %v1951 = vadd.f32 %v1910, %v1767
      %v1952 = vadd.f32 %v1911, %v1772
      %v1953 = vadd.f32 %v1912, %v1777
      %v1954 = vadd.f32 %v1913, %v1782
      %v1955 = vadd.f32 %v1914, %v1787
      %v1956 = vadd.f32 %v1915, %v1792
      %v1957 = vadd.f32 %v1916, %v1797
      %v1958 = vadd.f32 %v1917, %v1802
      %v1959 = vadd.f32 %v1918, %v1807
      %v1960 = vadd.f32 %v1919, %v1812
      %v1961 = vadd.f32 %v1920, %v1817
      %v1962 = vadd.f32 %v1921, %v1822
      %v1963 = vadd.f32 %v1922, %v1827
      %v1964 = vadd.f32 %v1923, %v1832
      %v1965 = vadd.f32 %v1924, %v1837
      %v1966 = vadd.f32 %v1925, %v1842
      %v1967 = vadd.f32 %v1926, %v1847
      %v1968 = vadd.f32 %v1927, %v1852
      %v1969 = vadd.f32 %v1928, %v1857
      %v1970 = vadd.f32 %v1929, %v1862
      %v1971 = vadd.f32 %v1930, %v1867
      %v1972 = vadd.f32 %v1931, %v1872
      %v1973 = vadd.f32 %v1932, %v1877
      %v1974 = vadd.f32 %v1933, %v1882
      %v1975 = vadd.f32 %v1934, %v1887
      %v1976 = vadd.f32 %v1935, %v1892
      %1977 = vst.msk [vmem:[#allocation2] sm:$0xff] %vm385, %v1936
      %1978 = vst.msk [vmem:[#allocation2 + $0x8] sm:$0xff] %vm385, %v1937
      %1979 = vst.msk [vmem:[#allocation2 + $0x10] sm:$0xff] %vm385, %v1938
      %1980 = vst.msk [vmem:[#allocation2 + $0x18] sm:$0xff] %vm385, %v1939
      %1981 = vst.msk [vmem:[#allocation2 + $0x20] sm:$0xff] %vm385, %v1940
      %1982 = vst.msk [vmem:[#allocation2 + $0x28] sm:$0xff] %vm385, %v1941
      %1983 = vst.msk [vmem:[#allocation2 + $0x30] sm:$0xff] %vm385, %v1942
      %1984 = vst.msk [vmem:[#allocation2 + $0x38] sm:$0xff] %vm385, %v1943
      %1985 = vst.msk [vmem:[#allocation2 + $0x40] sm:$0xff] %vm385, %v1944
      %1986 = vst.msk [vmem:[#allocation2 + $0x48] sm:$0xff] %vm385, %v1945
      %1987 = vst.msk [vmem:[#allocation2 + $0x50] sm:$0xff] %vm385, %v1946
      %1988 = vst.msk [vmem:[#allocation2 + $0x58] sm:$0xff] %vm385, %v1947
      %1989 = vst.msk [vmem:[#allocation2 + $0x60] sm:$0xff] %vm385, %v1948
      %1990 = vst.msk [vmem:[#allocation2 + $0x68] sm:$0xff] %vm385, %v1949
      %1991 = vst.msk [vmem:[#allocation2 + $0x70] sm:$0xff] %vm385, %v1950
      %1992 = vst.msk [vmem:[#allocation2 + $0x78] sm:$0xff] %vm385, %v1951
      %1993 = vst.msk [vmem:[#allocation2 + $0x80] sm:$0xff] %vm385, %v1952
      %1994 = vst.msk [vmem:[#allocation2 + $0x88] sm:$0xff] %vm385, %v1953
      %1995 = vst.msk [vmem:[#allocation2 + $0x90] sm:$0xff] %vm385, %v1954
      %1996 = vst.msk [vmem:[#allocation2 + $0x98] sm:$0xff] %vm385, %v1955
      %1997 = vst.msk [vmem:[#allocation2 + $0xa0] sm:$0xff] %vm385, %v1956
      %1998 = vst.msk [vmem:[#allocation2 + $0xa8] sm:$0xff] %vm385, %v1957
      %1999 = vst.msk [vmem:[#allocation2 + $0xb0] sm:$0xff] %vm385, %v1958
      %2000 = vst.msk [vmem:[#allocation2 + $0xb8] sm:$0xff] %vm385, %v1959
      %2001 = vst.msk [vmem:[#allocation2 + $0xc0] sm:$0xff] %vm385, %v1960
      %2002 = vst.msk [vmem:[#allocation2 + $0xc8] sm:$0xff] %vm385, %v1961
      %2003 = vst.msk [vmem:[#allocation2 + $0xd0] sm:$0xff] %vm385, %v1962
      %2004 = vst.msk [vmem:[#allocation2 + $0xd8] sm:$0xff] %vm385, %v1963
      %2005 = vst.msk [vmem:[#allocation2 + $0xe0] sm:$0xff] %vm385, %v1964
      %2006 = vst.msk [vmem:[#allocation2 + $0xe8] sm:$0xff] %vm385, %v1965
      %2007 = vst.msk [vmem:[#allocation2 + $0xf0] sm:$0xff] %vm385, %v1966
      %2008 = vst.msk [vmem:[#allocation2 + $0xf8] sm:$0xff] %vm385, %v1967
      %2009 = vst.msk [vmem:[#allocation2 + $0x100] sm:$0xff] %vm385, %v1968
      %2010 = vst.msk [vmem:[#allocation2 + $0x108] sm:$0xff] %vm385, %v1969
      %2011 = vst.msk [vmem:[#allocation2 + $0x110] sm:$0xff] %vm385, %v1970
      %2012 = vst.msk [vmem:[#allocation2 + $0x118] sm:$0xff] %vm385, %v1971
      %2013 = vst.msk [vmem:[#allocation2 + $0x120] sm:$0xff] %vm385, %v1972
      %2014 = vst.msk [vmem:[#allocation2 + $0x128] sm:$0xff] %vm385, %v1973
      %2015 = vst.msk [vmem:[#allocation2 + $0x130] sm:$0xff] %vm385, %v1974
      %2016 = vst.msk [vmem:[#allocation2 + $0x138] sm:$0xff] %vm385, %v1975
      %2017 = vst.msk [vmem:[#allocation2 + $0x140] sm:$0xf] %vm892, %v1976
      %v2018 = vld [vmem:[%s381 + $0x12] sm:$0xff]
      %v2019 = vld [vmem:[%s381 + $0x1a] sm:$0xff]
      %v2020 = vld [vmem:[%s381 + $0x22] sm:$0xff]
      %v2021 = vld [vmem:[%s381 + $0x2a] sm:$0xff]
      %v2022 = vld [vmem:[%s381 + $0x32] sm:$0xff]
      %v2023 = vld [vmem:[%s381 + $0x3a] sm:$0xff]
      %v2024 = vld [vmem:[%s381 + $0x42] sm:$0xff]
      %v2025 = vld [vmem:[%s381 + $0x4a] sm:$0xff]
      %v2026 = vld [vmem:[%s381 + $0x52] sm:$0xff]
      %v2027 = vld [vmem:[%s381 + $0x5a] sm:$0xff]
      %v2028 = vld [vmem:[%s381 + $0x62] sm:$0xff]
      %v2029 = vld [vmem:[%s381 + $0x6a] sm:$0xff]
      %v2030 = vld [vmem:[%s381 + $0x72] sm:$0xff]
      %v2031 = vld [vmem:[%s381 + $0x7a] sm:$0xff]
      %v2032 = vld [vmem:[%s381 + $0x82] sm:$0xff]
      %v2033 = vld [vmem:[%s381 + $0x8a] sm:$0xff]
      %v2034 = vld [vmem:[%s381 + $0x92] sm:$0xff]
      %v2035 = vld [vmem:[%s381 + $0x9a] sm:$0xff]
      %v2036 = vld [vmem:[%s381 + $0xa2] sm:$0xff]
      %v2037 = vld [vmem:[%s381 + $0xaa] sm:$0xff]
      %v2038 = vld [vmem:[%s381 + $0xb2] sm:$0xff]
      %v2039 = vld [vmem:[%s381 + $0xba] sm:$0xff]
      %v2040 = vld [vmem:[%s381 + $0xc2] sm:$0xff]
      %v2041 = vld [vmem:[%s381 + $0xca] sm:$0xff]
      %v2042 = vld [vmem:[%s381 + $0xd2] sm:$0xff]
      %v2043 = vld [vmem:[%s381 + $0xda] sm:$0xff]
      %v2044 = vld [vmem:[%s381 + $0xe2] sm:$0xff]
      %v2045 = vld [vmem:[%s381 + $0xea] sm:$0xff]
      %v2046 = vld [vmem:[%s381 + $0xf2] sm:$0xff]
      %v2047 = vld [vmem:[%s381 + $0xfa] sm:$0xff]
      %v2048 = vld [vmem:[%s381 + $0x102] sm:$0xff]
      %v2049 = vld [vmem:[%s381 + $0x10a] sm:$0xff]
      %v2050 = vld [vmem:[%s381 + $0x112] sm:$0xff]
      %v2051 = vld [vmem:[%s381 + $0x11a] sm:$0xff]
      %v2052 = vld [vmem:[%s381 + $0x122] sm:$0xff]
      %v2053 = vld [vmem:[%s381 + $0x12a] sm:$0xff]
      %v2054 = vld [vmem:[%s381 + $0x132] sm:$0xff]
      %v2055 = vld [vmem:[%s381 + $0x13a] sm:$0xff]
      %v2056 = vld [vmem:[%s381 + $0x142] sm:$0xff]
      %v2057 = vld [vmem:[%s381 + $0x14a] sm:$0xff]
      %v2058 = vld [vmem:[%s381 + $0x152] sm:$0xf]
      %s2059 = scalar_lea.vmem %s1, 12
      %v2060 = vld [vmem:[%s2059] sm:$0x7]
      %v2062 = vsel %vm454, %v2018, 0
      %v2065 = vsel %vm454, %v2019, 0
      %v2068 = vsel %vm454, %v2020, 0
      %v2071 = vsel %vm454, %v2021, 0
      %v2074 = vsel %vm454, %v2022, 0
      %v2077 = vsel %vm454, %v2023, 0
      %v2080 = vsel %vm454, %v2024, 0
      %v2083 = vsel %vm454, %v2025, 0
      %v2086 = vsel %vm454, %v2026, 0
      %v2089 = vsel %vm454, %v2027, 0
      %v2092 = vsel %vm454, %v2028, 0
      %v2095 = vsel %vm454, %v2029, 0
      %v2098 = vsel %vm454, %v2030, 0
      %v2101 = vsel %vm454, %v2031, 0
      %v2104 = vsel %vm454, %v2032, 0
      %v2107 = vsel %vm454, %v2033, 0
      %v2110 = vsel %vm454, %v2034, 0
      %v2113 = vsel %vm454, %v2035, 0
      %v2116 = vsel %vm454, %v2036, 0
      %v2119 = vsel %vm454, %v2037, 0
      %v2122 = vsel %vm454, %v2038, 0
      %v2125 = vsel %vm454, %v2039, 0
      %v2128 = vsel %vm454, %v2040, 0
      %v2131 = vsel %vm454, %v2041, 0
      %v2134 = vsel %vm454, %v2042, 0
      %v2137 = vsel %vm454, %v2043, 0
      %v2140 = vsel %vm454, %v2044, 0
      %v2143 = vsel %vm454, %v2045, 0
      %v2146 = vsel %vm454, %v2046, 0
      %v2149 = vsel %vm454, %v2047, 0
      %v2152 = vsel %vm454, %v2048, 0
      %v2155 = vsel %vm454, %v2049, 0
      %v2158 = vsel %vm454, %v2050, 0
      %v2161 = vsel %vm454, %v2051, 0
      %v2164 = vsel %vm454, %v2052, 0
      %v2167 = vsel %vm454, %v2053, 0
      %v2170 = vsel %vm454, %v2054, 0
      %v2173 = vsel %vm454, %v2055, 0
      %v2176 = vsel %vm454, %v2056, 0
      %v2179 = vsel %vm454, %v2057, 0
      %v2182 = vsel %vm454, %v2058, 0
      %v2185 = vsel %vm578, %v2060, 0
      %2187 = vmatprep.subr.mxu0 0.0
      %2188 = vmatpush1.msra.mxu0 %v2185
      %2189 = vmatprep.subr.mxu0 0.0
      %2190 = vmatpush1.msra.mxu0 0.0
      %2191 = vmatprep.subr.mxu0 0.0
      %2192 = vmatpush1.msra.mxu0 0.0
      %2193 = vmatprep.subr.mxu0 0.0
      %2194 = vmatpush1.msra.mxu0 0.0
      %2195 = vmatprep.subr.mxu0 0.0
      %2196 = vmatpush1.msra.mxu0 0.0
      %2197 = vmatprep.subr.mxu0 0.0
      %2198 = vmatpush1.msra.mxu0 0.0
      %2199 = vmatprep.subr.mxu0 0.0
      %2200 = vmatpush1.msra.mxu0 0.0
      %2201 = vmatprep.subr.mxu0 0.0
      %2202 = vmatpush1.msra.mxu0 0.0
      %2203 = vmatprep.subr.mxu0 0.0
      %2204 = vmatpush1.msra.mxu0 0.0
      %2205 = vmatprep.subr.mxu0 0.0
      %2206 = vmatpush1.msra.mxu0 0.0
      %2207 = vmatprep.subr.mxu0 0.0
      %2208 = vmatpush1.msra.mxu0 0.0
      %2209 = vmatprep.subr.mxu0 0.0
      %2210 = vmatpush1.msra.mxu0 0.0
      %2211 = vmatprep.subr.mxu0 0.0
      %2212 = vmatpush1.msra.mxu0 0.0
      %2213 = vmatprep.subr.mxu0 0.0
      %2214 = vmatpush1.msra.mxu0 0.0
      %2215 = vmatprep.subr.mxu0 0.0
      %2216 = vmatpush1.msra.mxu0 0.0
      %2217 = vmatprep.subr.mxu0 0.0
      %2218 = vmatpush1.msra.mxu0 0.0
      %2219 = vmatprep.subr.mxu0 0.0
      %2220 = vmatpush1.msra.mxu0 0.0
      %2221 = vmatprep.subr.mxu0 0.0
      %2222 = vmatpush1.msra.mxu0 0.0
      %2223 = vmatprep.subr.mxu0 0.0
      %2224 = vmatpush1.msra.mxu0 0.0
      %2225 = vmatprep.subr.mxu0 0.0
      %2226 = vmatpush1.msra.mxu0 0.0
      %2227 = vmatprep.subr.mxu0 0.0
      %2228 = vmatpush1.msra.mxu0 0.0
      %2229 = vmatprep.subr.mxu0 0.0
      %2230 = vmatpush1.msra.mxu0 0.0
      %2231 = vmatprep.subr.mxu0 0.0
      %2232 = vmatpush1.msra.mxu0 0.0
      %2233 = vmatprep.subr.mxu0 0.0
      %2234 = vmatpush1.msra.mxu0 0.0
      %2235 = vmatprep.subr.mxu0 0.0
      %2236 = vmatpush1.msra.mxu0 0.0
      %2237 = vmatprep.subr.mxu0 0.0
      %2238 = vmatpush1.msra.mxu0 0.0
      %2239 = vmatprep.subr.mxu0 0.0
      %2240 = vmatpush1.msra.mxu0 0.0
      %2241 = vmatprep.subr.mxu0 0.0
      %2242 = vmatpush1.msra.mxu0 0.0
      %2243 = vmatprep.subr.mxu0 0.0
      %2244 = vmatpush1.msra.mxu0 0.0
      %2245 = vmatprep.subr.mxu0 0.0
      %2246 = vmatpush1.msra.mxu0 0.0
      %2247 = vmatprep.subr.mxu0 0.0
      %2248 = vmatpush1.msra.mxu0 0.0
      %2249 = vmatprep.subr.mxu0 0.0
      %2250 = vmatpush1.msra.mxu0 0.0
      %2251 = vmatprep.mubr.f32.mxu0 0.0
      %2252 = vmatmul.mubr.f32.gmra.mrb[0].mxu0 %v2062
      %v2253 = vpop.f32.mrb[0].mxu0
      %v2254 = vadd.f32 0.0, %v2253
      %v2255 = vpop.f32.mrb[0].mxu0
      %2256 = vmatprep.mubr.f32.mxu0 0.0
      %2257 = vmatmul.mubr.f32.gmra.mrb[0].mxu0 %v2065
      %v2258 = vpop.f32.mrb[0].mxu0
      %v2259 = vadd.f32 0.0, %v2258
      %v2260 = vpop.f32.mrb[0].mxu0
      %2261 = vmatprep.mubr.f32.mxu0 0.0
      %2262 = vmatmul.mubr.f32.gmra.mrb[0].mxu0 %v2068
      %v2263 = vpop.f32.mrb[0].mxu0
      %v2264 = vadd.f32 0.0, %v2263
      %v2265 = vpop.f32.mrb[0].mxu0
      %2266 = vmatprep.mubr.f32.mxu0 0.0
      %2267 = vmatmul.mubr.f32.gmra.mrb[0].mxu0 %v2071
      %v2268 = vpop.f32.mrb[0].mxu0
      %v2269 = vadd.f32 0.0, %v2268
      %v2270 = vpop.f32.mrb[0].mxu0
      %2271 = vmatprep.mubr.f32.mxu0 0.0
      %2272 = vmatmul.mubr.f32.gmra.mrb[0].mxu0 %v2074
      %v2273 = vpop.f32.mrb[0].mxu0
      %v2274 = vadd.f32 0.0, %v2273
      %v2275 = vpop.f32.mrb[0].mxu0
      %2276 = vmatprep.mubr.f32.mxu0 0.0
      %2277 = vmatmul.mubr.f32.gmra.mrb[0].mxu0 %v2077
      %v2278 = vpop.f32.mrb[0].mxu0
      %v2279 = vadd.f32 0.0, %v2278
      %v2280 = vpop.f32.mrb[0].mxu0
      %2281 = vmatprep.mubr.f32.mxu0 0.0
      %2282 = vmatmul.mubr.f32.gmra.mrb[0].mxu0 %v2080
      %v2283 = vpop.f32.mrb[0].mxu0
      %v2284 = vadd.f32 0.0, %v2283
      %v2285 = vpop.f32.mrb[0].mxu0
      %2286 = vmatprep.mubr.f32.mxu0 0.0
      %2287 = vmatmul.mubr.f32.gmra.mrb[0].mxu0 %v2083
      %v2288 = vpop.f32.mrb[0].mxu0
      %v2289 = vadd.f32 0.0, %v2288
      %v2290 = vpop.f32.mrb[0].mxu0
      %2291 = vmatprep.mubr.f32.mxu0 0.0
      %2292 = vmatmul.mubr.f32.gmra.mrb[0].mxu0 %v2086
      %v2293 = vpop.f32.mrb[0].mxu0
      %v2294 = vadd.f32 0.0, %v2293
      %v2295 = vpop.f32.mrb[0].mxu0
      %2296 = vmatprep.mubr.f32.mxu0 0.0
      %2297 = vmatmul.mubr.f32.gmra.mrb[0].mxu0 %v2089
      %v2298 = vpop.f32.mrb[0].mxu0
      %v2299 = vadd.f32 0.0, %v2298
      %v2300 = vpop.f32.mrb[0].mxu0
      %2301 = vmatprep.mubr.f32.mxu0 0.0
      %2302 = vmatmul.mubr.f32.gmra.mrb[0].mxu0 %v2092
      %v2303 = vpop.f32.mrb[0].mxu0
      %v2304 = vadd.f32 0.0, %v2303
      %v2305 = vpop.f32.mrb[0].mxu0
      %2306 = vmatprep.mubr.f32.mxu0 0.0
      %2307 = vmatmul.mubr.f32.gmra.mrb[0].mxu0 %v2095
      %v2308 = vpop.f32.mrb[0].mxu0
      %v2309 = vadd.f32 0.0, %v2308
      %v2310 = vpop.f32.mrb[0].mxu0
      %2311 = vmatprep.mubr.f32.mxu0 0.0
      %2312 = vmatmul.mubr.f32.gmra.mrb[0].mxu0 %v2098
      %v2313 = vpop.f32.mrb[0].mxu0
      %v2314 = vadd.f32 0.0, %v2313
      %v2315 = vpop.f32.mrb[0].mxu0
      %2316 = vmatprep.mubr.f32.mxu0 0.0
      %2317 = vmatmul.mubr.f32.gmra.mrb[0].mxu0 %v2101
      %v2318 = vpop.f32.mrb[0].mxu0
      %v2319 = vadd.f32 0.0, %v2318
      %v2320 = vpop.f32.mrb[0].mxu0
      %2321 = vmatprep.mubr.f32.mxu0 0.0
      %2322 = vmatmul.mubr.f32.gmra.mrb[0].mxu0 %v2104
      %v2323 = vpop.f32.mrb[0].mxu0
      %v2324 = vadd.f32 0.0, %v2323
      %v2325 = vpop.f32.mrb[0].mxu0
      %2326 = vmatprep.mubr.f32.mxu0 0.0
      %2327 = vmatmul.mubr.f32.gmra.mrb[0].mxu0 %v2107
      %v2328 = vpop.f32.mrb[0].mxu0
      %v2329 = vadd.f32 0.0, %v2328
      %v2330 = vpop.f32.mrb[0].mxu0
      %2331 = vmatprep.mubr.f32.mxu0 0.0
      %2332 = vmatmul.mubr.f32.gmra.mrb[0].mxu0 %v2110
      %v2333 = vpop.f32.mrb[0].mxu0
      %v2334 = vadd.f32 0.0, %v2333
      %v2335 = vpop.f32.mrb[0].mxu0
      %2336 = vmatprep.mubr.f32.mxu0 0.0
      %2337 = vmatmul.mubr.f32.gmra.mrb[0].mxu0 %v2113
      %v2338 = vpop.f32.mrb[0].mxu0
      %v2339 = vadd.f32 0.0, %v2338
      %v2340 = vpop.f32.mrb[0].mxu0
      %2341 = vmatprep.mubr.f32.mxu0 0.0
      %2342 = vmatmul.mubr.f32.gmra.mrb[0].mxu0 %v2116
      %v2343 = vpop.f32.mrb[0].mxu0
      %v2344 = vadd.f32 0.0, %v2343
      %v2345 = vpop.f32.mrb[0].mxu0
      %2346 = vmatprep.mubr.f32.mxu0 0.0
      %2347 = vmatmul.mubr.f32.gmra.mrb[0].mxu0 %v2119
      %v2348 = vpop.f32.mrb[0].mxu0
      %v2349 = vadd.f32 0.0, %v2348
      %v2350 = vpop.f32.mrb[0].mxu0
      %2351 = vmatprep.mubr.f32.mxu0 0.0
      %2352 = vmatmul.mubr.f32.gmra.mrb[0].mxu0 %v2122
      %v2353 = vpop.f32.mrb[0].mxu0
      %v2354 = vadd.f32 0.0, %v2353
      %v2355 = vpop.f32.mrb[0].mxu0
      %2356 = vmatprep.mubr.f32.mxu0 0.0
      %2357 = vmatmul.mubr.f32.gmra.mrb[0].mxu0 %v2125
      %v2358 = vpop.f32.mrb[0].mxu0
      %v2359 = vadd.f32 0.0, %v2358
      %v2360 = vpop.f32.mrb[0].mxu0
      %2361 = vmatprep.mubr.f32.mxu0 0.0
      %2362 = vmatmul.mubr.f32.gmra.mrb[0].mxu0 %v2128
      %v2363 = vpop.f32.mrb[0].mxu0
      %v2364 = vadd.f32 0.0, %v2363
      %v2365 = vpop.f32.mrb[0].mxu0
      %2366 = vmatprep.mubr.f32.mxu0 0.0
      %2367 = vmatmul.mubr.f32.gmra.mrb[0].mxu0 %v2131
      %v2368 = vpop.f32.mrb[0].mxu0
      %v2369 = vadd.f32 0.0, %v2368
      %v2370 = vpop.f32.mrb[0].mxu0
      %2371 = vmatprep.mubr.f32.mxu0 0.0
      %2372 = vmatmul.mubr.f32.gmra.mrb[0].mxu0 %v2134
      %v2373 = vpop.f32.mrb[0].mxu0
      %v2374 = vadd.f32 0.0, %v2373
      %v2375 = vpop.f32.mrb[0].mxu0
      %2376 = vmatprep.mubr.f32.mxu0 0.0
      %2377 = vmatmul.mubr.f32.gmra.mrb[0].mxu0 %v2137
      %v2378 = vpop.f32.mrb[0].mxu0
      %v2379 = vadd.f32 0.0, %v2378
      %v2380 = vpop.f32.mrb[0].mxu0
      %2381 = vmatprep.mubr.f32.mxu0 0.0
      %2382 = vmatmul.mubr.f32.gmra.mrb[0].mxu0 %v2140
      %v2383 = vpop.f32.mrb[0].mxu0
      %v2384 = vadd.f32 0.0, %v2383
      %v2385 = vpop.f32.mrb[0].mxu0
      %2386 = vmatprep.mubr.f32.mxu0 0.0
      %2387 = vmatmul.mubr.f32.gmra.mrb[0].mxu0 %v2143
      %v2388 = vpop.f32.mrb[0].mxu0
      %v2389 = vadd.f32 0.0, %v2388
      %v2390 = vpop.f32.mrb[0].mxu0
      %2391 = vmatprep.mubr.f32.mxu0 0.0
      %2392 = vmatmul.mubr.f32.gmra.mrb[0].mxu0 %v2146
      %v2393 = vpop.f32.mrb[0].mxu0
      %v2394 = vadd.f32 0.0, %v2393
      %v2395 = vpop.f32.mrb[0].mxu0
      %2396 = vmatprep.mubr.f32.mxu0 0.0
      %2397 = vmatmul.mubr.f32.gmra.mrb[0].mxu0 %v2149
      %v2398 = vpop.f32.mrb[0].mxu0
      %v2399 = vadd.f32 0.0, %v2398
      %v2400 = vpop.f32.mrb[0].mxu0
      %2401 = vmatprep.mubr.f32.mxu0 0.0
      %2402 = vmatmul.mubr.f32.gmra.mrb[0].mxu0 %v2152
      %v2403 = vpop.f32.mrb[0].mxu0
      %v2404 = vadd.f32 0.0, %v2403
      %v2405 = vpop.f32.mrb[0].mxu0
      %2406 = vmatprep.mubr.f32.mxu0 0.0
      %2407 = vmatmul.mubr.f32.gmra.mrb[0].mxu0 %v2155
      %v2408 = vpop.f32.mrb[0].mxu0
      %v2409 = vadd.f32 0.0, %v2408
      %v2410 = vpop.f32.mrb[0].mxu0
      %2411 = vmatprep.mubr.f32.mxu0 0.0
      %2412 = vmatmul.mubr.f32.gmra.mrb[0].mxu0 %v2158
      %v2413 = vpop.f32.mrb[0].mxu0
      %v2414 = vadd.f32 0.0, %v2413
      %v2415 = vpop.f32.mrb[0].mxu0
      %2416 = vmatprep.mubr.f32.mxu0 0.0
      %2417 = vmatmul.mubr.f32.gmra.mrb[0].mxu0 %v2161
      %v2418 = vpop.f32.mrb[0].mxu0
      %v2419 = vadd.f32 0.0, %v2418
      %v2420 = vpop.f32.mrb[0].mxu0
      %2421 = vmatprep.mubr.f32.mxu0 0.0
      %2422 = vmatmul.mubr.f32.gmra.mrb[0].mxu0 %v2164
      %v2423 = vpop.f32.mrb[0].mxu0
      %v2424 = vadd.f32 0.0, %v2423
      %v2425 = vpop.f32.mrb[0].mxu0
      %2426 = vmatprep.mubr.f32.mxu0 0.0
      %2427 = vmatmul.mubr.f32.gmra.mrb[0].mxu0 %v2167
      %v2428 = vpop.f32.mrb[0].mxu0
      %v2429 = vadd.f32 0.0, %v2428
      %v2430 = vpop.f32.mrb[0].mxu0
      %2431 = vmatprep.mubr.f32.mxu0 0.0
      %2432 = vmatmul.mubr.f32.gmra.mrb[0].mxu0 %v2170
      %v2433 = vpop.f32.mrb[0].mxu0
      %v2434 = vadd.f32 0.0, %v2433
      %v2435 = vpop.f32.mrb[0].mxu0
      %2436 = vmatprep.mubr.f32.mxu0 0.0
      %2437 = vmatmul.mubr.f32.gmra.mrb[0].mxu0 %v2173
      %v2438 = vpop.f32.mrb[0].mxu0
      %v2439 = vadd.f32 0.0, %v2438
      %v2440 = vpop.f32.mrb[0].mxu0
      %2441 = vmatprep.mubr.f32.mxu0 0.0
      %2442 = vmatmul.mubr.f32.gmra.mrb[0].mxu0 %v2176
      %v2443 = vpop.f32.mrb[0].mxu0
      %v2444 = vadd.f32 0.0, %v2443
      %v2445 = vpop.f32.mrb[0].mxu0
      %2446 = vmatprep.mubr.f32.mxu0 0.0
      %2447 = vmatmul.mubr.f32.gmra.mrb[0].mxu0 %v2179
      %v2448 = vpop.f32.mrb[0].mxu0
      %v2449 = vadd.f32 0.0, %v2448
      %v2450 = vpop.f32.mrb[0].mxu0
      %2451 = vmatprep.mubr.f32.mxu0 0.0
      %2452 = vmatmul.mubr.f32.gmra.mrb[0].mxu0 %v2182
      %v2453 = vpop.f32.mrb[0].mxu0
      %v2454 = vadd.f32 0.0, %v2453
      %v2455 = vpop.f32.mrb[0].mxu0
      %2456 = vdwg.mxu0
      %v2457 = vld [vmem:[#allocation2] sm:$0xff]
      %v2458 = vld [vmem:[#allocation2 + $0x8] sm:$0xff]
      %v2459 = vld [vmem:[#allocation2 + $0x10] sm:$0xff]
      %v2460 = vld [vmem:[#allocation2 + $0x18] sm:$0xff]
      %v2461 = vld [vmem:[#allocation2 + $0x20] sm:$0xff]
      %v2462 = vld [vmem:[#allocation2 + $0x28] sm:$0xff]
      %v2463 = vld [vmem:[#allocation2 + $0x30] sm:$0xff]
      %v2464 = vld [vmem:[#allocation2 + $0x38] sm:$0xff]
      %v2465 = vld [vmem:[#allocation2 + $0x40] sm:$0xff]
      %v2466 = vld [vmem:[#allocation2 + $0x48] sm:$0xff]
      %v2467 = vld [vmem:[#allocation2 + $0x50] sm:$0xff]
      %v2468 = vld [vmem:[#allocation2 + $0x58] sm:$0xff]
      %v2469 = vld [vmem:[#allocation2 + $0x60] sm:$0xff]
      %v2470 = vld [vmem:[#allocation2 + $0x68] sm:$0xff]
      %v2471 = vld [vmem:[#allocation2 + $0x70] sm:$0xff]
      %v2472 = vld [vmem:[#allocation2 + $0x78] sm:$0xff]
      %v2473 = vld [vmem:[#allocation2 + $0x80] sm:$0xff]
      %v2474 = vld [vmem:[#allocation2 + $0x88] sm:$0xff]
      %v2475 = vld [vmem:[#allocation2 + $0x90] sm:$0xff]
      %v2476 = vld [vmem:[#allocation2 + $0x98] sm:$0xff]
      %v2477 = vld [vmem:[#allocation2 + $0xa0] sm:$0xff]
      %v2478 = vld [vmem:[#allocation2 + $0xa8] sm:$0xff]
      %v2479 = vld [vmem:[#allocation2 + $0xb0] sm:$0xff]
      %v2480 = vld [vmem:[#allocation2 + $0xb8] sm:$0xff]
      %v2481 = vld [vmem:[#allocation2 + $0xc0] sm:$0xff]
      %v2482 = vld [vmem:[#allocation2 + $0xc8] sm:$0xff]
      %v2483 = vld [vmem:[#allocation2 + $0xd0] sm:$0xff]
      %v2484 = vld [vmem:[#allocation2 + $0xd8] sm:$0xff]
      %v2485 = vld [vmem:[#allocation2 + $0xe0] sm:$0xff]
      %v2486 = vld [vmem:[#allocation2 + $0xe8] sm:$0xff]
      %v2487 = vld [vmem:[#allocation2 + $0xf0] sm:$0xff]
      %v2488 = vld [vmem:[#allocation2 + $0xf8] sm:$0xff]
      %v2489 = vld [vmem:[#allocation2 + $0x100] sm:$0xff]
      %v2490 = vld [vmem:[#allocation2 + $0x108] sm:$0xff]
      %v2491 = vld [vmem:[#allocation2 + $0x110] sm:$0xff]
      %v2492 = vld [vmem:[#allocation2 + $0x118] sm:$0xff]
      %v2493 = vld [vmem:[#allocation2 + $0x120] sm:$0xff]
      %v2494 = vld [vmem:[#allocation2 + $0x128] sm:$0xff]
      %v2495 = vld [vmem:[#allocation2 + $0x130] sm:$0xff]
      %v2496 = vld [vmem:[#allocation2 + $0x138] sm:$0xff]
      %v2497 = vld [vmem:[#allocation2 + $0x140] sm:$0xf]
      %v2498 = vadd.f32 %v2457, %v2254
      %v2499 = vadd.f32 %v2458, %v2259
      %v2500 = vadd.f32 %v2459, %v2264
      %v2501 = vadd.f32 %v2460, %v2269
      %v2502 = vadd.f32 %v2461, %v2274
      %v2503 = vadd.f32 %v2462, %v2279
      %v2504 = vadd.f32 %v2463, %v2284
      %v2505 = vadd.f32 %v2464, %v2289
      %v2506 = vadd.f32 %v2465, %v2294
      %v2507 = vadd.f32 %v2466, %v2299
      %v2508 = vadd.f32 %v2467, %v2304
      %v2509 = vadd.f32 %v2468, %v2309
      %v2510 = vadd.f32 %v2469, %v2314
      %v2511 = vadd.f32 %v2470, %v2319
      %v2512 = vadd.f32 %v2471, %v2324
      %v2513 = vadd.f32 %v2472, %v2329
      %v2514 = vadd.f32 %v2473, %v2334
      %v2515 = vadd.f32 %v2474, %v2339
      %v2516 = vadd.f32 %v2475, %v2344
      %v2517 = vadd.f32 %v2476, %v2349
      %v2518 = vadd.f32 %v2477, %v2354
      %v2519 = vadd.f32 %v2478, %v2359
      %v2520 = vadd.f32 %v2479, %v2364
      %v2521 = vadd.f32 %v2480, %v2369
      %v2522 = vadd.f32 %v2481, %v2374
      %v2523 = vadd.f32 %v2482, %v2379
      %v2524 = vadd.f32 %v2483, %v2384
      %v2525 = vadd.f32 %v2484, %v2389
      %v2526 = vadd.f32 %v2485, %v2394
      %v2527 = vadd.f32 %v2486, %v2399
      %v2528 = vadd.f32 %v2487, %v2404
      %v2529 = vadd.f32 %v2488, %v2409
      %v2530 = vadd.f32 %v2489, %v2414
      %v2531 = vadd.f32 %v2490, %v2419
      %v2532 = vadd.f32 %v2491, %v2424
      %v2533 = vadd.f32 %v2492, %v2429
      %v2534 = vadd.f32 %v2493, %v2434
      %v2535 = vadd.f32 %v2494, %v2439
      %v2536 = vadd.f32 %v2495, %v2444
      %v2537 = vadd.f32 %v2496, %v2449
      %v2538 = vadd.f32 %v2497, %v2454
      %2539 = vst.msk [vmem:[#allocation2] sm:$0xff] %vm385, %v2498
      %2540 = vst.msk [vmem:[#allocation2 + $0x8] sm:$0xff] %vm385, %v2499
      %2541 = vst.msk [vmem:[#allocation2 + $0x10] sm:$0xff] %vm385, %v2500
      %2542 = vst.msk [vmem:[#allocation2 + $0x18] sm:$0xff] %vm385, %v2501
      %2543 = vst.msk [vmem:[#allocation2 + $0x20] sm:$0xff] %vm385, %v2502
      %2544 = vst.msk [vmem:[#allocation2 + $0x28] sm:$0xff] %vm385, %v2503
      %2545 = vst.msk [vmem:[#allocation2 + $0x30] sm:$0xff] %vm385, %v2504
      %2546 = vst.msk [vmem:[#allocation2 + $0x38] sm:$0xff] %vm385, %v2505
      %2547 = vst.msk [vmem:[#allocation2 + $0x40] sm:$0xff] %vm385, %v2506
      %2548 = vst.msk [vmem:[#allocation2 + $0x48] sm:$0xff] %vm385, %v2507
      %2549 = vst.msk [vmem:[#allocation2 + $0x50] sm:$0xff] %vm385, %v2508
      %2550 = vst.msk [vmem:[#allocation2 + $0x58] sm:$0xff] %vm385, %v2509
      %2551 = vst.msk [vmem:[#allocation2 + $0x60] sm:$0xff] %vm385, %v2510
      %2552 = vst.msk [vmem:[#allocation2 + $0x68] sm:$0xff] %vm385, %v2511
      %2553 = vst.msk [vmem:[#allocation2 + $0x70] sm:$0xff] %vm385, %v2512
      %2554 = vst.msk [vmem:[#allocation2 + $0x78] sm:$0xff] %vm385, %v2513
      %2555 = vst.msk [vmem:[#allocation2 + $0x80] sm:$0xff] %vm385, %v2514
      %2556 = vst.msk [vmem:[#allocation2 + $0x88] sm:$0xff] %vm385, %v2515
      %2557 = vst.msk [vmem:[#allocation2 + $0x90] sm:$0xff] %vm385, %v2516
      %2558 = vst.msk [vmem:[#allocation2 + $0x98] sm:$0xff] %vm385, %v2517
      %2559 = vst.msk [vmem:[#allocation2 + $0xa0] sm:$0xff] %vm385, %v2518
      %2560 = vst.msk [vmem:[#allocation2 + $0xa8] sm:$0xff] %vm385, %v2519
      %2561 = vst.msk [vmem:[#allocation2 + $0xb0] sm:$0xff] %vm385, %v2520
      %2562 = vst.msk [vmem:[#allocation2 + $0xb8] sm:$0xff] %vm385, %v2521
      %2563 = vst.msk [vmem:[#allocation2 + $0xc0] sm:$0xff] %vm385, %v2522
      %2564 = vst.msk [vmem:[#allocation2 + $0xc8] sm:$0xff] %vm385, %v2523
      %2565 = vst.msk [vmem:[#allocation2 + $0xd0] sm:$0xff] %vm385, %v2524
      %2566 = vst.msk [vmem:[#allocation2 + $0xd8] sm:$0xff] %vm385, %v2525
      %2567 = vst.msk [vmem:[#allocation2 + $0xe0] sm:$0xff] %vm385, %v2526
      %2568 = vst.msk [vmem:[#allocation2 + $0xe8] sm:$0xff] %vm385, %v2527
      %2569 = vst.msk [vmem:[#allocation2 + $0xf0] sm:$0xff] %vm385, %v2528
      %2570 = vst.msk [vmem:[#allocation2 + $0xf8] sm:$0xff] %vm385, %v2529
      %2571 = vst.msk [vmem:[#allocation2 + $0x100] sm:$0xff] %vm385, %v2530
      %2572 = vst.msk [vmem:[#allocation2 + $0x108] sm:$0xff] %vm385, %v2531
      %2573 = vst.msk [vmem:[#allocation2 + $0x110] sm:$0xff] %vm385, %v2532
      %2574 = vst.msk [vmem:[#allocation2 + $0x118] sm:$0xff] %vm385, %v2533
      %2575 = vst.msk [vmem:[#allocation2 + $0x120] sm:$0xff] %vm385, %v2534
      %2576 = vst.msk [vmem:[#allocation2 + $0x128] sm:$0xff] %vm385, %v2535
      %2577 = vst.msk [vmem:[#allocation2 + $0x130] sm:$0xff] %vm385, %v2536
      %2578 = vst.msk [vmem:[#allocation2 + $0x138] sm:$0xff] %vm385, %v2537
      %2579 = vst.msk [vmem:[#allocation2 + $0x140] sm:$0xf] %vm892, %v2538
      %v2580 = vld [vmem:[%s381 + $0x13] sm:$0xff]
      %v2581 = vld [vmem:[%s381 + $0x1b] sm:$0xff]
      %v2582 = vld [vmem:[%s381 + $0x23] sm:$0xff]
      %v2583 = vld [vmem:[%s381 + $0x2b] sm:$0xff]
      %v2584 = vld [vmem:[%s381 + $0x33] sm:$0xff]
      %v2585 = vld [vmem:[%s381 + $0x3b] sm:$0xff]
      %v2586 = vld [vmem:[%s381 + $0x43] sm:$0xff]
      %v2587 = vld [vmem:[%s381 + $0x4b] sm:$0xff]
      %v2588 = vld [vmem:[%s381 + $0x53] sm:$0xff]
      %v2589 = vld [vmem:[%s381 + $0x5b] sm:$0xff]
      %v2590 = vld [vmem:[%s381 + $0x63] sm:$0xff]
      %v2591 = vld [vmem:[%s381 + $0x6b] sm:$0xff]
      %v2592 = vld [vmem:[%s381 + $0x73] sm:$0xff]
      %v2593 = vld [vmem:[%s381 + $0x7b] sm:$0xff]
      %v2594 = vld [vmem:[%s381 + $0x83] sm:$0xff]
      %v2595 = vld [vmem:[%s381 + $0x8b] sm:$0xff]
      %v2596 = vld [vmem:[%s381 + $0x93] sm:$0xff]
      %v2597 = vld [vmem:[%s381 + $0x9b] sm:$0xff]
      %v2598 = vld [vmem:[%s381 + $0xa3] sm:$0xff]
      %v2599 = vld [vmem:[%s381 + $0xab] sm:$0xff]
      %v2600 = vld [vmem:[%s381 + $0xb3] sm:$0xff]
      %v2601 = vld [vmem:[%s381 + $0xbb] sm:$0xff]
      %v2602 = vld [vmem:[%s381 + $0xc3] sm:$0xff]
      %v2603 = vld [vmem:[%s381 + $0xcb] sm:$0xff]
      %v2604 = vld [vmem:[%s381 + $0xd3] sm:$0xff]
      %v2605 = vld [vmem:[%s381 + $0xdb] sm:$0xff]
      %v2606 = vld [vmem:[%s381 + $0xe3] sm:$0xff]
      %v2607 = vld [vmem:[%s381 + $0xeb] sm:$0xff]
      %v2608 = vld [vmem:[%s381 + $0xf3] sm:$0xff]
      %v2609 = vld [vmem:[%s381 + $0xfb] sm:$0xff]
      %v2610 = vld [vmem:[%s381 + $0x103] sm:$0xff]
      %v2611 = vld [vmem:[%s381 + $0x10b] sm:$0xff]
      %v2612 = vld [vmem:[%s381 + $0x113] sm:$0xff]
      %v2613 = vld [vmem:[%s381 + $0x11b] sm:$0xff]
      %v2614 = vld [vmem:[%s381 + $0x123] sm:$0xff]
      %v2615 = vld [vmem:[%s381 + $0x12b] sm:$0xff]
      %v2616 = vld [vmem:[%s381 + $0x133] sm:$0xff]
      %v2617 = vld [vmem:[%s381 + $0x13b] sm:$0xff]
      %v2618 = vld [vmem:[%s381 + $0x143] sm:$0xff]
      %v2619 = vld [vmem:[%s381 + $0x14b] sm:$0xff]
      %v2620 = vld [vmem:[%s381 + $0x153] sm:$0xf]
      %s2621 = scalar_lea.vmem %s1, 16
      %v2622 = vld [vmem:[%s2621] sm:$0x7]
      %v2624 = vsel %vm454, %v2580, 0
      %v2627 = vsel %vm454, %v2581, 0
      %v2630 = vsel %vm454, %v2582, 0
      %v2633 = vsel %vm454, %v2583, 0
      %v2636 = vsel %vm454, %v2584, 0
      %v2639 = vsel %vm454, %v2585, 0
      %v2642 = vsel %vm454, %v2586, 0
      %v2645 = vsel %vm454, %v2587, 0
      %v2648 = vsel %vm454, %v2588, 0
      %v2651 = vsel %vm454, %v2589, 0
      %v2654 = vsel %vm454, %v2590, 0
      %v2657 = vsel %vm454, %v2591, 0
      %v2660 = vsel %vm454, %v2592, 0
      %v2663 = vsel %vm454, %v2593, 0
      %v2666 = vsel %vm454, %v2594, 0
      %v2669 = vsel %vm454, %v2595, 0
      %v2672 = vsel %vm454, %v2596, 0
      %v2675 = vsel %vm454, %v2597, 0
      %v2678 = vsel %vm454, %v2598, 0
      %v2681 = vsel %vm454, %v2599, 0
      %v2684 = vsel %vm454, %v2600, 0
      %v2687 = vsel %vm454, %v2601, 0
      %v2690 = vsel %vm454, %v2602, 0
      %v2693 = vsel %vm454, %v2603, 0
      %v2696 = vsel %vm454, %v2604, 0
      %v2699 = vsel %vm454, %v2605, 0
      %v2702 = vsel %vm454, %v2606, 0
      %v2705 = vsel %vm454, %v2607, 0
      %v2708 = vsel %vm454, %v2608, 0
      %v2711 = vsel %vm454, %v2609, 0
      %v2714 = vsel %vm454, %v2610, 0
      %v2717 = vsel %vm454, %v2611, 0
      %v2720 = vsel %vm454, %v2612, 0
      %v2723 = vsel %vm454, %v2613, 0
      %v2726 = vsel %vm454, %v2614, 0
      %v2729 = vsel %vm454, %v2615, 0
      %v2732 = vsel %vm454, %v2616, 0
      %v2735 = vsel %vm454, %v2617, 0
      %v2738 = vsel %vm454, %v2618, 0
      %v2741 = vsel %vm454, %v2619, 0
      %v2744 = vsel %vm454, %v2620, 0
      %v2747 = vsel %vm578, %v2622, 0
      %2749 = vmatprep.subr.mxu0 0.0
      %2750 = vmatpush1.msra.mxu0 %v2747
      %2751 = vmatprep.subr.mxu0 0.0
      %2752 = vmatpush1.msra.mxu0 0.0
      %2753 = vmatprep.subr.mxu0 0.0
      %2754 = vmatpush1.msra.mxu0 0.0
      %2755 = vmatprep.subr.mxu0 0.0
      %2756 = vmatpush1.msra.mxu0 0.0
      %2757 = vmatprep.subr.mxu0 0.0
      %2758 = vmatpush1.msra.mxu0 0.0
      %2759 = vmatprep.subr.mxu0 0.0
      %2760 = vmatpush1.msra.mxu0 0.0
      %2761 = vmatprep.subr.mxu0 0.0
      %2762 = vmatpush1.msra.mxu0 0.0
      %2763 = vmatprep.subr.mxu0 0.0
      %2764 = vmatpush1.msra.mxu0 0.0
      %2765 = vmatprep.subr.mxu0 0.0
      %2766 = vmatpush1.msra.mxu0 0.0
      %2767 = vmatprep.subr.mxu0 0.0
      %2768 = vmatpush1.msra.mxu0 0.0
      %2769 = vmatprep.subr.mxu0 0.0
      %2770 = vmatpush1.msra.mxu0 0.0
      %2771 = vmatprep.subr.mxu0 0.0
      %2772 = vmatpush1.msra.mxu0 0.0
      %2773 = vmatprep.subr.mxu0 0.0
      %2774 = vmatpush1.msra.mxu0 0.0
      %2775 = vmatprep.subr.mxu0 0.0
      %2776 = vmatpush1.msra.mxu0 0.0
      %2777 = vmatprep.subr.mxu0 0.0
      %2778 = vmatpush1.msra.mxu0 0.0
      %2779 = vmatprep.subr.mxu0 0.0
      %2780 = vmatpush1.msra.mxu0 0.0
      %2781 = vmatprep.subr.mxu0 0.0
      %2782 = vmatpush1.msra.mxu0 0.0
      %2783 = vmatprep.subr.mxu0 0.0
      %2784 = vmatpush1.msra.mxu0 0.0
      %2785 = vmatprep.subr.mxu0 0.0
      %2786 = vmatpush1.msra.mxu0 0.0
      %2787 = vmatprep.subr.mxu0 0.0
      %2788 = vmatpush1.msra.mxu0 0.0
      %2789 = vmatprep.subr.mxu0 0.0
      %2790 = vmatpush1.msra.mxu0 0.0
      %2791 = vmatprep.subr.mxu0 0.0
      %2792 = vmatpush1.msra.mxu0 0.0
      %2793 = vmatprep.subr.mxu0 0.0
      %2794 = vmatpush1.msra.mxu0 0.0
      %2795 = vmatprep.subr.mxu0 0.0
      %2796 = vmatpush1.msra.mxu0 0.0
      %2797 = vmatprep.subr.mxu0 0.0
      %2798 = vmatpush1.msra.mxu0 0.0
      %2799 = vmatprep.subr.mxu0 0.0
      %2800 = vmatpush1.msra.mxu0 0.0
      %2801 = vmatprep.subr.mxu0 0.0
      %2802 = vmatpush1.msra.mxu0 0.0
      %2803 = vmatprep.subr.mxu0 0.0
      %2804 = vmatpush1.msra.mxu0 0.0
      %2805 = vmatprep.subr.mxu0 0.0
      %2806 = vmatpush1.msra.mxu0 0.0
      %2807 = vmatprep.subr.mxu0 0.0
      %2808 = vmatpush1.msra.mxu0 0.0
      %2809 = vmatprep.subr.mxu0 0.0
      %2810 = vmatpush1.msra.mxu0 0.0
      %2811 = vmatprep.subr.mxu0 0.0
      %2812 = vmatpush1.msra.mxu0 0.0
      %2813 = vmatprep.mubr.f32.mxu0 0.0
      %2814 = vmatmul.mubr.f32.gmra.mrb[0].mxu0 %v2624
      %v2815 = vpop.f32.mrb[0].mxu0
      %v2816 = vadd.f32 0.0, %v2815
      %v2817 = vpop.f32.mrb[0].mxu0
      %2818 = vmatprep.mubr.f32.mxu0 0.0
      %2819 = vmatmul.mubr.f32.gmra.mrb[0].mxu0 %v2627
      %v2820 = vpop.f32.mrb[0].mxu0
      %v2821 = vadd.f32 0.0, %v2820
      %v2822 = vpop.f32.mrb[0].mxu0
      %2823 = vmatprep.mubr.f32.mxu0 0.0
      %2824 = vmatmul.mubr.f32.gmra.mrb[0].mxu0 %v2630
      %v2825 = vpop.f32.mrb[0].mxu0
      %v2826 = vadd.f32 0.0, %v2825
      %v2827 = vpop.f32.mrb[0].mxu0
      %2828 = vmatprep.mubr.f32.mxu0 0.0
      %2829 = vmatmul.mubr.f32.gmra.mrb[0].mxu0 %v2633
      %v2830 = vpop.f32.mrb[0].mxu0
      %v2831 = vadd.f32 0.0, %v2830
      %v2832 = vpop.f32.mrb[0].mxu0
      %2833 = vmatprep.mubr.f32.mxu0 0.0
      %2834 = vmatmul.mubr.f32.gmra.mrb[0].mxu0 %v2636
      %v2835 = vpop.f32.mrb[0].mxu0
      %v2836 = vadd.f32 0.0, %v2835
      %v2837 = vpop.f32.mrb[0].mxu0
      %2838 = vmatprep.mubr.f32.mxu0 0.0
      %2839 = vmatmul.mubr.f32.gmra.mrb[0].mxu0 %v2639
      %v2840 = vpop.f32.mrb[0].mxu0
      %v2841 = vadd.f32 0.0, %v2840
      %v2842 = vpop.f32.mrb[0].mxu0
      %2843 = vmatprep.mubr.f32.mxu0 0.0
      %2844 = vmatmul.mubr.f32.gmra.mrb[0].mxu0 %v2642
      %v2845 = vpop.f32.mrb[0].mxu0
      %v2846 = vadd.f32 0.0, %v2845
      %v2847 = vpop.f32.mrb[0].mxu0
      %2848 = vmatprep.mubr.f32.mxu0 0.0
      %2849 = vmatmul.mubr.f32.gmra.mrb[0].mxu0 %v2645
      %v2850 = vpop.f32.mrb[0].mxu0
      %v2851 = vadd.f32 0.0, %v2850
      %v2852 = vpop.f32.mrb[0].mxu0
      %2853 = vmatprep.mubr.f32.mxu0 0.0
      %2854 = vmatmul.mubr.f32.gmra.mrb[0].mxu0 %v2648
      %v2855 = vpop.f32.mrb[0].mxu0
      %v2856 = vadd.f32 0.0, %v2855
      %v2857 = vpop.f32.mrb[0].mxu0
      %2858 = vmatprep.mubr.f32.mxu0 0.0
      %2859 = vmatmul.mubr.f32.gmra.mrb[0].mxu0 %v2651
      %v2860 = vpop.f32.mrb[0].mxu0
      %v2861 = vadd.f32 0.0, %v2860
      %v2862 = vpop.f32.mrb[0].mxu0
      %2863 = vmatprep.mubr.f32.mxu0 0.0
      %2864 = vmatmul.mubr.f32.gmra.mrb[0].mxu0 %v2654
      %v2865 = vpop.f32.mrb[0].mxu0
      %v2866 = vadd.f32 0.0, %v2865
      %v2867 = vpop.f32.mrb[0].mxu0
      %2868 = vmatprep.mubr.f32.mxu0 0.0
      %2869 = vmatmul.mubr.f32.gmra.mrb[0].mxu0 %v2657
      %v2870 = vpop.f32.mrb[0].mxu0
      %v2871 = vadd.f32 0.0, %v2870
      %v2872 = vpop.f32.mrb[0].mxu0
      %2873 = vmatprep.mubr.f32.mxu0 0.0
      %2874 = vmatmul.mubr.f32.gmra.mrb[0].mxu0 %v2660
      %v2875 = vpop.f32.mrb[0].mxu0
      %v2876 = vadd.f32 0.0, %v2875
      %v2877 = vpop.f32.mrb[0].mxu0
      %2878 = vmatprep.mubr.f32.mxu0 0.0
      %2879 = vmatmul.mubr.f32.gmra.mrb[0].mxu0 %v2663
      %v2880 = vpop.f32.mrb[0].mxu0
      %v2881 = vadd.f32 0.0, %v2880
      %v2882 = vpop.f32.mrb[0].mxu0
      %2883 = vmatprep.mubr.f32.mxu0 0.0
      %2884 = vmatmul.mubr.f32.gmra.mrb[0].mxu0 %v2666
      %v2885 = vpop.f32.mrb[0].mxu0
      %v2886 = vadd.f32 0.0, %v2885
      %v2887 = vpop.f32.mrb[0].mxu0
      %2888 = vmatprep.mubr.f32.mxu0 0.0
      %2889 = vmatmul.mubr.f32.gmra.mrb[0].mxu0 %v2669
      %v2890 = vpop.f32.mrb[0].mxu0
      %v2891 = vadd.f32 0.0, %v2890
      %v2892 = vpop.f32.mrb[0].mxu0
      %2893 = vmatprep.mubr.f32.mxu0 0.0
      %2894 = vmatmul.mubr.f32.gmra.mrb[0].mxu0 %v2672
      %v2895 = vpop.f32.mrb[0].mxu0
      %v2896 = vadd.f32 0.0, %v2895
      %v2897 = vpop.f32.mrb[0].mxu0
      %2898 = vmatprep.mubr.f32.mxu0 0.0
      %2899 = vmatmul.mubr.f32.gmra.mrb[0].mxu0 %v2675
      %v2900 = vpop.f32.mrb[0].mxu0
      %v2901 = vadd.f32 0.0, %v2900
      %v2902 = vpop.f32.mrb[0].mxu0
      %2903 = vmatprep.mubr.f32.mxu0 0.0
      %2904 = vmatmul.mubr.f32.gmra.mrb[0].mxu0 %v2678
      %v2905 = vpop.f32.mrb[0].mxu0
      %v2906 = vadd.f32 0.0, %v2905
      %v2907 = vpop.f32.mrb[0].mxu0
      %2908 = vmatprep.mubr.f32.mxu0 0.0
      %2909 = vmatmul.mubr.f32.gmra.mrb[0].mxu0 %v2681
      %v2910 = vpop.f32.mrb[0].mxu0
      %v2911 = vadd.f32 0.0, %v2910
      %v2912 = vpop.f32.mrb[0].mxu0
      %2913 = vmatprep.mubr.f32.mxu0 0.0
      %2914 = vmatmul.mubr.f32.gmra.mrb[0].mxu0 %v2684
      %v2915 = vpop.f32.mrb[0].mxu0
      %v2916 = vadd.f32 0.0, %v2915
      %v2917 = vpop.f32.mrb[0].mxu0
      %2918 = vmatprep.mubr.f32.mxu0 0.0
      %2919 = vmatmul.mubr.f32.gmra.mrb[0].mxu0 %v2687
      %v2920 = vpop.f32.mrb[0].mxu0
      %v2921 = vadd.f32 0.0, %v2920
      %v2922 = vpop.f32.mrb[0].mxu0
      %2923 = vmatprep.mubr.f32.mxu0 0.0
      %2924 = vmatmul.mubr.f32.gmra.mrb[0].mxu0 %v2690
      %v2925 = vpop.f32.mrb[0].mxu0
      %v2926 = vadd.f32 0.0, %v2925
      %v2927 = vpop.f32.mrb[0].mxu0
      %2928 = vmatprep.mubr.f32.mxu0 0.0
      %2929 = vmatmul.mubr.f32.gmra.mrb[0].mxu0 %v2693
      %v2930 = vpop.f32.mrb[0].mxu0
      %v2931 = vadd.f32 0.0, %v2930
      %v2932 = vpop.f32.mrb[0].mxu0
      %2933 = vmatprep.mubr.f32.mxu0 0.0
      %2934 = vmatmul.mubr.f32.gmra.mrb[0].mxu0 %v2696
      %v2935 = vpop.f32.mrb[0].mxu0
      %v2936 = vadd.f32 0.0, %v2935
      %v2937 = vpop.f32.mrb[0].mxu0
      %2938 = vmatprep.mubr.f32.mxu0 0.0
      %2939 = vmatmul.mubr.f32.gmra.mrb[0].mxu0 %v2699
      %v2940 = vpop.f32.mrb[0].mxu0
      %v2941 = vadd.f32 0.0, %v2940
      %v2942 = vpop.f32.mrb[0].mxu0
      %2943 = vmatprep.mubr.f32.mxu0 0.0
      %2944 = vmatmul.mubr.f32.gmra.mrb[0].mxu0 %v2702
      %v2945 = vpop.f32.mrb[0].mxu0
      %v2946 = vadd.f32 0.0, %v2945
      %v2947 = vpop.f32.mrb[0].mxu0
      %2948 = vmatprep.mubr.f32.mxu0 0.0
      %2949 = vmatmul.mubr.f32.gmra.mrb[0].mxu0 %v2705
      %v2950 = vpop.f32.mrb[0].mxu0
      %v2951 = vadd.f32 0.0, %v2950
      %v2952 = vpop.f32.mrb[0].mxu0
      %2953 = vmatprep.mubr.f32.mxu0 0.0
      %2954 = vmatmul.mubr.f32.gmra.mrb[0].mxu0 %v2708
      %v2955 = vpop.f32.mrb[0].mxu0
      %v2956 = vadd.f32 0.0, %v2955
      %v2957 = vpop.f32.mrb[0].mxu0
      %2958 = vmatprep.mubr.f32.mxu0 0.0
      %2959 = vmatmul.mubr.f32.gmra.mrb[0].mxu0 %v2711
      %v2960 = vpop.f32.mrb[0].mxu0
      %v2961 = vadd.f32 0.0, %v2960
      %v2962 = vpop.f32.mrb[0].mxu0
      %2963 = vmatprep.mubr.f32.mxu0 0.0
      %2964 = vmatmul.mubr.f32.gmra.mrb[0].mxu0 %v2714
      %v2965 = vpop.f32.mrb[0].mxu0
      %v2966 = vadd.f32 0.0, %v2965
      %v2967 = vpop.f32.mrb[0].mxu0
      %2968 = vmatprep.mubr.f32.mxu0 0.0
      %2969 = vmatmul.mubr.f32.gmra.mrb[0].mxu0 %v2717
      %v2970 = vpop.f32.mrb[0].mxu0
      %v2971 = vadd.f32 0.0, %v2970
      %v2972 = vpop.f32.mrb[0].mxu0
      %2973 = vmatprep.mubr.f32.mxu0 0.0
      %2974 = vmatmul.mubr.f32.gmra.mrb[0].mxu0 %v2720
      %v2975 = vpop.f32.mrb[0].mxu0
      %v2976 = vadd.f32 0.0, %v2975
      %v2977 = vpop.f32.mrb[0].mxu0
      %2978 = vmatprep.mubr.f32.mxu0 0.0
      %2979 = vmatmul.mubr.f32.gmra.mrb[0].mxu0 %v2723
      %v2980 = vpop.f32.mrb[0].mxu0
      %v2981 = vadd.f32 0.0, %v2980
      %v2982 = vpop.f32.mrb[0].mxu0
      %2983 = vmatprep.mubr.f32.mxu0 0.0
      %2984 = vmatmul.mubr.f32.gmra.mrb[0].mxu0 %v2726
      %v2985 = vpop.f32.mrb[0].mxu0
      %v2986 = vadd.f32 0.0, %v2985
      %v2987 = vpop.f32.mrb[0].mxu0
      %2988 = vmatprep.mubr.f32.mxu0 0.0
      %2989 = vmatmul.mubr.f32.gmra.mrb[0].mxu0 %v2729
      %v2990 = vpop.f32.mrb[0].mxu0
      %v2991 = vadd.f32 0.0, %v2990
      %v2992 = vpop.f32.mrb[0].mxu0
      %2993 = vmatprep.mubr.f32.mxu0 0.0
      %2994 = vmatmul.mubr.f32.gmra.mrb[0].mxu0 %v2732
      %v2995 = vpop.f32.mrb[0].mxu0
      %v2996 = vadd.f32 0.0, %v2995
      %v2997 = vpop.f32.mrb[0].mxu0
      %2998 = vmatprep.mubr.f32.mxu0 0.0
      %2999 = vmatmul.mubr.f32.gmra.mrb[0].mxu0 %v2735
      %v3000 = vpop.f32.mrb[0].mxu0
      %v3001 = vadd.f32 0.0, %v3000
      %v3002 = vpop.f32.mrb[0].mxu0
      %3003 = vmatprep.mubr.f32.mxu0 0.0
      %3004 = vmatmul.mubr.f32.gmra.mrb[0].mxu0 %v2738
      %v3005 = vpop.f32.mrb[0].mxu0
      %v3006 = vadd.f32 0.0, %v3005
      %v3007 = vpop.f32.mrb[0].mxu0
      %3008 = vmatprep.mubr.f32.mxu0 0.0
      %3009 = vmatmul.mubr.f32.gmra.mrb[0].mxu0 %v2741
      %v3010 = vpop.f32.mrb[0].mxu0
      %v3011 = vadd.f32 0.0, %v3010
      %v3012 = vpop.f32.mrb[0].mxu0
      %3013 = vmatprep.mubr.f32.mxu0 0.0
      %3014 = vmatmul.mubr.f32.gmra.mrb[0].mxu0 %v2744
      %v3015 = vpop.f32.mrb[0].mxu0
      %v3016 = vadd.f32 0.0, %v3015
      %v3017 = vpop.f32.mrb[0].mxu0
      %3018 = vdwg.mxu0
      %v3019 = vld [vmem:[#allocation2] sm:$0xff]
      %v3020 = vld [vmem:[#allocation2 + $0x8] sm:$0xff]
      %v3021 = vld [vmem:[#allocation2 + $0x10] sm:$0xff]
      %v3022 = vld [vmem:[#allocation2 + $0x18] sm:$0xff]
      %v3023 = vld [vmem:[#allocation2 + $0x20] sm:$0xff]
      %v3024 = vld [vmem:[#allocation2 + $0x28] sm:$0xff]
      %v3025 = vld [vmem:[#allocation2 + $0x30] sm:$0xff]
      %v3026 = vld [vmem:[#allocation2 + $0x38] sm:$0xff]
      %v3027 = vld [vmem:[#allocation2 + $0x40] sm:$0xff]
      %v3028 = vld [vmem:[#allocation2 + $0x48] sm:$0xff]
      %v3029 = vld [vmem:[#allocation2 + $0x50] sm:$0xff]
      %v3030 = vld [vmem:[#allocation2 + $0x58] sm:$0xff]
      %v3031 = vld [vmem:[#allocation2 + $0x60] sm:$0xff]
      %v3032 = vld [vmem:[#allocation2 + $0x68] sm:$0xff]
      %v3033 = vld [vmem:[#allocation2 + $0x70] sm:$0xff]
      %v3034 = vld [vmem:[#allocation2 + $0x78] sm:$0xff]
      %v3035 = vld [vmem:[#allocation2 + $0x80] sm:$0xff]
      %v3036 = vld [vmem:[#allocation2 + $0x88] sm:$0xff]
      %v3037 = vld [vmem:[#allocation2 + $0x90] sm:$0xff]
      %v3038 = vld [vmem:[#allocation2 + $0x98] sm:$0xff]
      %v3039 = vld [vmem:[#allocation2 + $0xa0] sm:$0xff]
      %v3040 = vld [vmem:[#allocation2 + $0xa8] sm:$0xff]
      %v3041 = vld [vmem:[#allocation2 + $0xb0] sm:$0xff]
      %v3042 = vld [vmem:[#allocation2 + $0xb8] sm:$0xff]
      %v3043 = vld [vmem:[#allocation2 + $0xc0] sm:$0xff]
      %v3044 = vld [vmem:[#allocation2 + $0xc8] sm:$0xff]
      %v3045 = vld [vmem:[#allocation2 + $0xd0] sm:$0xff]
      %v3046 = vld [vmem:[#allocation2 + $0xd8] sm:$0xff]
      %v3047 = vld [vmem:[#allocation2 + $0xe0] sm:$0xff]
      %v3048 = vld [vmem:[#allocation2 + $0xe8] sm:$0xff]
      %v3049 = vld [vmem:[#allocation2 + $0xf0] sm:$0xff]
      %v3050 = vld [vmem:[#allocation2 + $0xf8] sm:$0xff]
      %v3051 = vld [vmem:[#allocation2 + $0x100] sm:$0xff]
      %v3052 = vld [vmem:[#allocation2 + $0x108] sm:$0xff]
      %v3053 = vld [vmem:[#allocation2 + $0x110] sm:$0xff]
      %v3054 = vld [vmem:[#allocation2 + $0x118] sm:$0xff]
      %v3055 = vld [vmem:[#allocation2 + $0x120] sm:$0xff]
      %v3056 = vld [vmem:[#allocation2 + $0x128] sm:$0xff]
      %v3057 = vld [vmem:[#allocation2 + $0x130] sm:$0xff]
      %v3058 = vld [vmem:[#allocation2 + $0x138] sm:$0xff]
      %v3059 = vld [vmem:[#allocation2 + $0x140] sm:$0xf]
      %v3060 = vadd.f32 %v3019, %v2816
      %v3061 = vadd.f32 %v3020, %v2821
      %v3062 = vadd.f32 %v3021, %v2826
      %v3063 = vadd.f32 %v3022, %v2831
      %v3064 = vadd.f32 %v3023, %v2836
      %v3065 = vadd.f32 %v3024, %v2841
      %v3066 = vadd.f32 %v3025, %v2846
      %v3067 = vadd.f32 %v3026, %v2851
      %v3068 = vadd.f32 %v3027, %v2856
      %v3069 = vadd.f32 %v3028, %v2861
      %v3070 = vadd.f32 %v3029, %v2866
      %v3071 = vadd.f32 %v3030, %v2871
      %v3072 = vadd.f32 %v3031, %v2876
      %v3073 = vadd.f32 %v3032, %v2881
      %v3074 = vadd.f32 %v3033, %v2886
      %v3075 = vadd.f32 %v3034, %v2891
      %v3076 = vadd.f32 %v3035, %v2896
      %v3077 = vadd.f32 %v3036, %v2901
      %v3078 = vadd.f32 %v3037, %v2906
      %v3079 = vadd.f32 %v3038, %v2911
      %v3080 = vadd.f32 %v3039, %v2916
      %v3081 = vadd.f32 %v3040, %v2921
      %v3082 = vadd.f32 %v3041, %v2926
      %v3083 = vadd.f32 %v3042, %v2931
      %v3084 = vadd.f32 %v3043, %v2936
      %v3085 = vadd.f32 %v3044, %v2941
      %v3086 = vadd.f32 %v3045, %v2946
      %v3087 = vadd.f32 %v3046, %v2951
      %v3088 = vadd.f32 %v3047, %v2956
      %v3089 = vadd.f32 %v3048, %v2961
      %v3090 = vadd.f32 %v3049, %v2966
      %v3091 = vadd.f32 %v3050, %v2971
      %v3092 = vadd.f32 %v3051, %v2976
      %v3093 = vadd.f32 %v3052, %v2981
      %v3094 = vadd.f32 %v3053, %v2986
      %v3095 = vadd.f32 %v3054, %v2991
      %v3096 = vadd.f32 %v3055, %v2996
      %v3097 = vadd.f32 %v3056, %v3001
      %v3098 = vadd.f32 %v3057, %v3006
      %v3099 = vadd.f32 %v3058, %v3011
      %v3100 = vadd.f32 %v3059, %v3016
      %3101 = vst.msk [vmem:[#allocation2] sm:$0xff] %vm385, %v3060
      %3102 = vst.msk [vmem:[#allocation2 + $0x8] sm:$0xff] %vm385, %v3061
      %3103 = vst.msk [vmem:[#allocation2 + $0x10] sm:$0xff] %vm385, %v3062
      %3104 = vst.msk [vmem:[#allocation2 + $0x18] sm:$0xff] %vm385, %v3063
      %3105 = vst.msk [vmem:[#allocation2 + $0x20] sm:$0xff] %vm385, %v3064
      %3106 = vst.msk [vmem:[#allocation2 + $0x28] sm:$0xff] %vm385, %v3065
      %3107 = vst.msk [vmem:[#allocation2 + $0x30] sm:$0xff] %vm385, %v3066
      %3108 = vst.msk [vmem:[#allocation2 + $0x38] sm:$0xff] %vm385, %v3067
      %3109 = vst.msk [vmem:[#allocation2 + $0x40] sm:$0xff] %vm385, %v3068
      %3110 = vst.msk [vmem:[#allocation2 + $0x48] sm:$0xff] %vm385, %v3069
      %3111 = vst.msk [vmem:[#allocation2 + $0x50] sm:$0xff] %vm385, %v3070
      %3112 = vst.msk [vmem:[#allocation2 + $0x58] sm:$0xff] %vm385, %v3071
      %3113 = vst.msk [vmem:[#allocation2 + $0x60] sm:$0xff] %vm385, %v3072
      %3114 = vst.msk [vmem:[#allocation2 + $0x68] sm:$0xff] %vm385, %v3073
      %3115 = vst.msk [vmem:[#allocation2 + $0x70] sm:$0xff] %vm385, %v3074
      %3116 = vst.msk [vmem:[#allocation2 + $0x78] sm:$0xff] %vm385, %v3075
      %3117 = vst.msk [vmem:[#allocation2 + $0x80] sm:$0xff] %vm385, %v3076
      %3118 = vst.msk [vmem:[#allocation2 + $0x88] sm:$0xff] %vm385, %v3077
      %3119 = vst.msk [vmem:[#allocation2 + $0x90] sm:$0xff] %vm385, %v3078
      %3120 = vst.msk [vmem:[#allocation2 + $0x98] sm:$0xff] %vm385, %v3079
      %3121 = vst.msk [vmem:[#allocation2 + $0xa0] sm:$0xff] %vm385, %v3080
      %3122 = vst.msk [vmem:[#allocation2 + $0xa8] sm:$0xff] %vm385, %v3081
      %3123 = vst.msk [vmem:[#allocation2 + $0xb0] sm:$0xff] %vm385, %v3082
      %3124 = vst.msk [vmem:[#allocation2 + $0xb8] sm:$0xff] %vm385, %v3083
      %3125 = vst.msk [vmem:[#allocation2 + $0xc0] sm:$0xff] %vm385, %v3084
      %3126 = vst.msk [vmem:[#allocation2 + $0xc8] sm:$0xff] %vm385, %v3085
      %3127 = vst.msk [vmem:[#allocation2 + $0xd0] sm:$0xff] %vm385, %v3086
      %3128 = vst.msk [vmem:[#allocation2 + $0xd8] sm:$0xff] %vm385, %v3087
      %3129 = vst.msk [vmem:[#allocation2 + $0xe0] sm:$0xff] %vm385, %v3088
      %3130 = vst.msk [vmem:[#allocation2 + $0xe8] sm:$0xff] %vm385, %v3089
      %3131 = vst.msk [vmem:[#allocation2 + $0xf0] sm:$0xff] %vm385, %v3090
      %3132 = vst.msk [vmem:[#allocation2 + $0xf8] sm:$0xff] %vm385, %v3091
      %3133 = vst.msk [vmem:[#allocation2 + $0x100] sm:$0xff] %vm385, %v3092
      %3134 = vst.msk [vmem:[#allocation2 + $0x108] sm:$0xff] %vm385, %v3093
      %3135 = vst.msk [vmem:[#allocation2 + $0x110] sm:$0xff] %vm385, %v3094
      %3136 = vst.msk [vmem:[#allocation2 + $0x118] sm:$0xff] %vm385, %v3095
      %3137 = vst.msk [vmem:[#allocation2 + $0x120] sm:$0xff] %vm385, %v3096
      %3138 = vst.msk [vmem:[#allocation2 + $0x128] sm:$0xff] %vm385, %v3097
      %3139 = vst.msk [vmem:[#allocation2 + $0x130] sm:$0xff] %vm385, %v3098
      %3140 = vst.msk [vmem:[#allocation2 + $0x138] sm:$0xff] %vm385, %v3099
      %3141 = vst.msk [vmem:[#allocation2 + $0x140] sm:$0xf] %vm892, %v3100
      %v3142 = vld [vmem:[%s381 + $0x14] sm:$0xff]
      %v3143 = vld [vmem:[%s381 + $0x1c] sm:$0xff]
      %v3144 = vld [vmem:[%s381 + $0x24] sm:$0xff]
      %v3145 = vld [vmem:[%s381 + $0x2c] sm:$0xff]
      %v3146 = vld [vmem:[%s381 + $0x34] sm:$0xff]
      %v3147 = vld [vmem:[%s381 + $0x3c] sm:$0xff]
      %v3148 = vld [vmem:[%s381 + $0x44] sm:$0xff]
      %v3149 = vld [vmem:[%s381 + $0x4c] sm:$0xff]
      %v3150 = vld [vmem:[%s381 + $0x54] sm:$0xff]
      %v3151 = vld [vmem:[%s381 + $0x5c] sm:$0xff]
      %v3152 = vld [vmem:[%s381 + $0x64] sm:$0xff]
      %v3153 = vld [vmem:[%s381 + $0x6c] sm:$0xff]
      %v3154 = vld [vmem:[%s381 + $0x74] sm:$0xff]
      %v3155 = vld [vmem:[%s381 + $0x7c] sm:$0xff]
      %v3156 = vld [vmem:[%s381 + $0x84] sm:$0xff]
      %v3157 = vld [vmem:[%s381 + $0x8c] sm:$0xff]
      %v3158 = vld [vmem:[%s381 + $0x94] sm:$0xff]
      %v3159 = vld [vmem:[%s381 + $0x9c] sm:$0xff]
      %v3160 = vld [vmem:[%s381 + $0xa4] sm:$0xff]
      %v3161 = vld [vmem:[%s381 + $0xac] sm:$0xff]
      %v3162 = vld [vmem:[%s381 + $0xb4] sm:$0xff]
      %v3163 = vld [vmem:[%s381 + $0xbc] sm:$0xff]
      %v3164 = vld [vmem:[%s381 + $0xc4] sm:$0xff]
      %v3165 = vld [vmem:[%s381 + $0xcc] sm:$0xff]
      %v3166 = vld [vmem:[%s381 + $0xd4] sm:$0xff]
      %v3167 = vld [vmem:[%s381 + $0xdc] sm:$0xff]
      %v3168 = vld [vmem:[%s381 + $0xe4] sm:$0xff]
      %v3169 = vld [vmem:[%s381 + $0xec] sm:$0xff]
      %v3170 = vld [vmem:[%s381 + $0xf4] sm:$0xff]
      %v3171 = vld [vmem:[%s381 + $0xfc] sm:$0xff]
      %v3172 = vld [vmem:[%s381 + $0x104] sm:$0xff]
      %v3173 = vld [vmem:[%s381 + $0x10c] sm:$0xff]
      %v3174 = vld [vmem:[%s381 + $0x114] sm:$0xff]
      %v3175 = vld [vmem:[%s381 + $0x11c] sm:$0xff]
      %v3176 = vld [vmem:[%s381 + $0x124] sm:$0xff]
      %v3177 = vld [vmem:[%s381 + $0x12c] sm:$0xff]
      %v3178 = vld [vmem:[%s381 + $0x134] sm:$0xff]
      %v3179 = vld [vmem:[%s381 + $0x13c] sm:$0xff]
      %v3180 = vld [vmem:[%s381 + $0x144] sm:$0xff]
      %v3181 = vld [vmem:[%s381 + $0x14c] sm:$0xff]
      %v3182 = vld [vmem:[%s381 + $0x154] sm:$0xf]
      %s3183 = scalar_lea.vmem %s1, 20
      %v3184 = vld [vmem:[%s3183] sm:$0x7]
      %v3186 = vsel %vm454, %v3142, 0
      %v3189 = vsel %vm454, %v3143, 0
      %v3192 = vsel %vm454, %v3144, 0
      %v3195 = vsel %vm454, %v3145, 0
      %v3198 = vsel %vm454, %v3146, 0
      %v3201 = vsel %vm454, %v3147, 0
      %v3204 = vsel %vm454, %v3148, 0
      %v3207 = vsel %vm454, %v3149, 0
      %v3210 = vsel %vm454, %v3150, 0
      %v3213 = vsel %vm454, %v3151, 0
      %v3216 = vsel %vm454, %v3152, 0
      %v3219 = vsel %vm454, %v3153, 0
      %v3222 = vsel %vm454, %v3154, 0
      %v3225 = vsel %vm454, %v3155, 0
      %v3228 = vsel %vm454, %v3156, 0
      %v3231 = vsel %vm454, %v3157, 0
      %v3234 = vsel %vm454, %v3158, 0
      %v3237 = vsel %vm454, %v3159, 0
      %v3240 = vsel %vm454, %v3160, 0
      %v3243 = vsel %vm454, %v3161, 0
      %v3246 = vsel %vm454, %v3162, 0
      %v3249 = vsel %vm454, %v3163, 0
      %v3252 = vsel %vm454, %v3164, 0
      %v3255 = vsel %vm454, %v3165, 0
      %v3258 = vsel %vm454, %v3166, 0
      %v3261 = vsel %vm454, %v3167, 0
      %v3264 = vsel %vm454, %v3168, 0
      %v3267 = vsel %vm454, %v3169, 0
      %v3270 = vsel %vm454, %v3170, 0
      %v3273 = vsel %vm454, %v3171, 0
      %v3276 = vsel %vm454, %v3172, 0
      %v3279 = vsel %vm454, %v3173, 0
      %v3282 = vsel %vm454, %v3174, 0
      %v3285 = vsel %vm454, %v3175, 0
      %v3288 = vsel %vm454, %v3176, 0
      %v3291 = vsel %vm454, %v3177, 0
      %v3294 = vsel %vm454, %v3178, 0
      %v3297 = vsel %vm454, %v3179, 0
      %v3300 = vsel %vm454, %v3180, 0
      %v3303 = vsel %vm454, %v3181, 0
      %v3306 = vsel %vm454, %v3182, 0
      %v3309 = vsel %vm578, %v3184, 0
      %3311 = vmatprep.subr.mxu0 0.0
      %3312 = vmatpush1.msra.mxu0 %v3309
      %3313 = vmatprep.subr.mxu0 0.0
      %3314 = vmatpush1.msra.mxu0 0.0
      %3315 = vmatprep.subr.mxu0 0.0
      %3316 = vmatpush1.msra.mxu0 0.0
      %3317 = vmatprep.subr.mxu0 0.0
      %3318 = vmatpush1.msra.mxu0 0.0
      %3319 = vmatprep.subr.mxu0 0.0
      %3320 = vmatpush1.msra.mxu0 0.0
      %3321 = vmatprep.subr.mxu0 0.0
      %3322 = vmatpush1.msra.mxu0 0.0
      %3323 = vmatprep.subr.mxu0 0.0
      %3324 = vmatpush1.msra.mxu0 0.0
      %3325 = vmatprep.subr.mxu0 0.0
      %3326 = vmatpush1.msra.mxu0 0.0
      %3327 = vmatprep.subr.mxu0 0.0
      %3328 = vmatpush1.msra.mxu0 0.0
      %3329 = vmatprep.subr.mxu0 0.0
      %3330 = vmatpush1.msra.mxu0 0.0
      %3331 = vmatprep.subr.mxu0 0.0
      %3332 = vmatpush1.msra.mxu0 0.0
      %3333 = vmatprep.subr.mxu0 0.0
      %3334 = vmatpush1.msra.mxu0 0.0
      %3335 = vmatprep.subr.mxu0 0.0
      %3336 = vmatpush1.msra.mxu0 0.0
      %3337 = vmatprep.subr.mxu0 0.0
      %3338 = vmatpush1.msra.mxu0 0.0
      %3339 = vmatprep.subr.mxu0 0.0
      %3340 = vmatpush1.msra.mxu0 0.0
      %3341 = vmatprep.subr.mxu0 0.0
      %3342 = vmatpush1.msra.mxu0 0.0
      %3343 = vmatprep.subr.mxu0 0.0
      %3344 = vmatpush1.msra.mxu0 0.0
      %3345 = vmatprep.subr.mxu0 0.0
      %3346 = vmatpush1.msra.mxu0 0.0
      %3347 = vmatprep.subr.mxu0 0.0
      %3348 = vmatpush1.msra.mxu0 0.0
      %3349 = vmatprep.subr.mxu0 0.0
      %3350 = vmatpush1.msra.mxu0 0.0
      %3351 = vmatprep.subr.mxu0 0.0
      %3352 = vmatpush1.msra.mxu0 0.0
      %3353 = vmatprep.subr.mxu0 0.0
      %3354 = vmatpush1.msra.mxu0 0.0
      %3355 = vmatprep.subr.mxu0 0.0
      %3356 = vmatpush1.msra.mxu0 0.0
      %3357 = vmatprep.subr.mxu0 0.0
      %3358 = vmatpush1.msra.mxu0 0.0
      %3359 = vmatprep.subr.mxu0 0.0
      %3360 = vmatpush1.msra.mxu0 0.0
      %3361 = vmatprep.subr.mxu0 0.0
      %3362 = vmatpush1.msra.mxu0 0.0
      %3363 = vmatprep.subr.mxu0 0.0
      %3364 = vmatpush1.msra.mxu0 0.0
      %3365 = vmatprep.subr.mxu0 0.0
      %3366 = vmatpush1.msra.mxu0 0.0
      %3367 = vmatprep.subr.mxu0 0.0
      %3368 = vmatpush1.msra.mxu0 0.0
      %3369 = vmatprep.subr.mxu0 0.0
      %3370 = vmatpush1.msra.mxu0 0.0
      %3371 = vmatprep.subr.mxu0 0.0
      %3372 = vmatpush1.msra.mxu0 0.0
      %3373 = vmatprep.subr.mxu0 0.0
      %3374 = vmatpush1.msra.mxu0 0.0
      %3375 = vmatprep.mubr.f32.mxu0 0.0
      %3376 = vmatmul.mubr.f32.gmra.mrb[0].mxu0 %v3186
      %v3377 = vpop.f32.mrb[0].mxu0
      %v3378 = vadd.f32 0.0, %v3377
      %v3379 = vpop.f32.mrb[0].mxu0
      %3380 = vmatprep.mubr.f32.mxu0 0.0
      %3381 = vmatmul.mubr.f32.gmra.mrb[0].mxu0 %v3189
      %v3382 = vpop.f32.mrb[0].mxu0
      %v3383 = vadd.f32 0.0, %v3382
      %v3384 = vpop.f32.mrb[0].mxu0
      %3385 = vmatprep.mubr.f32.mxu0 0.0
      %3386 = vmatmul.mubr.f32.gmra.mrb[0].mxu0 %v3192
      %v3387 = vpop.f32.mrb[0].mxu0
      %v3388 = vadd.f32 0.0, %v3387
      %v3389 = vpop.f32.mrb[0].mxu0
      %3390 = vmatprep.mubr.f32.mxu0 0.0
      %3391 = vmatmul.mubr.f32.gmra.mrb[0].mxu0 %v3195
      %v3392 = vpop.f32.mrb[0].mxu0
      %v3393 = vadd.f32 0.0, %v3392
      %v3394 = vpop.f32.mrb[0].mxu0
      %3395 = vmatprep.mubr.f32.mxu0 0.0
      %3396 = vmatmul.mubr.f32.gmra.mrb[0].mxu0 %v3198
      %v3397 = vpop.f32.mrb[0].mxu0
      %v3398 = vadd.f32 0.0, %v3397
      %v3399 = vpop.f32.mrb[0].mxu0
      %3400 = vmatprep.mubr.f32.mxu0 0.0
      %3401 = vmatmul.mubr.f32.gmra.mrb[0].mxu0 %v3201
      %v3402 = vpop.f32.mrb[0].mxu0
      %v3403 = vadd.f32 0.0, %v3402
      %v3404 = vpop.f32.mrb[0].mxu0
      %3405 = vmatprep.mubr.f32.mxu0 0.0
      %3406 = vmatmul.mubr.f32.gmra.mrb[0].mxu0 %v3204
      %v3407 = vpop.f32.mrb[0].mxu0
      %v3408 = vadd.f32 0.0, %v3407
      %v3409 = vpop.f32.mrb[0].mxu0
      %3410 = vmatprep.mubr.f32.mxu0 0.0
      %3411 = vmatmul.mubr.f32.gmra.mrb[0].mxu0 %v3207
      %v3412 = vpop.f32.mrb[0].mxu0
      %v3413 = vadd.f32 0.0, %v3412
      %v3414 = vpop.f32.mrb[0].mxu0
      %3415 = vmatprep.mubr.f32.mxu0 0.0
      %3416 = vmatmul.mubr.f32.gmra.mrb[0].mxu0 %v3210
      %v3417 = vpop.f32.mrb[0].mxu0
      %v3418 = vadd.f32 0.0, %v3417
      %v3419 = vpop.f32.mrb[0].mxu0
      %3420 = vmatprep.mubr.f32.mxu0 0.0
      %3421 = vmatmul.mubr.f32.gmra.mrb[0].mxu0 %v3213
      %v3422 = vpop.f32.mrb[0].mxu0
      %v3423 = vadd.f32 0.0, %v3422
      %v3424 = vpop.f32.mrb[0].mxu0
      %3425 = vmatprep.mubr.f32.mxu0 0.0
      %3426 = vmatmul.mubr.f32.gmra.mrb[0].mxu0 %v3216
      %v3427 = vpop.f32.mrb[0].mxu0
      %v3428 = vadd.f32 0.0, %v3427
      %v3429 = vpop.f32.mrb[0].mxu0
      %3430 = vmatprep.mubr.f32.mxu0 0.0
      %3431 = vmatmul.mubr.f32.gmra.mrb[0].mxu0 %v3219
      %v3432 = vpop.f32.mrb[0].mxu0
      %v3433 = vadd.f32 0.0, %v3432
      %v3434 = vpop.f32.mrb[0].mxu0
      %3435 = vmatprep.mubr.f32.mxu0 0.0
      %3436 = vmatmul.mubr.f32.gmra.mrb[0].mxu0 %v3222
      %v3437 = vpop.f32.mrb[0].mxu0
      %v3438 = vadd.f32 0.0, %v3437
      %v3439 = vpop.f32.mrb[0].mxu0
      %3440 = vmatprep.mubr.f32.mxu0 0.0
      %3441 = vmatmul.mubr.f32.gmra.mrb[0].mxu0 %v3225
      %v3442 = vpop.f32.mrb[0].mxu0
      %v3443 = vadd.f32 0.0, %v3442
      %v3444 = vpop.f32.mrb[0].mxu0
      %3445 = vmatprep.mubr.f32.mxu0 0.0
      %3446 = vmatmul.mubr.f32.gmra.mrb[0].mxu0 %v3228
      %v3447 = vpop.f32.mrb[0].mxu0
      %v3448 = vadd.f32 0.0, %v3447
      %v3449 = vpop.f32.mrb[0].mxu0
      %3450 = vmatprep.mubr.f32.mxu0 0.0
      %3451 = vmatmul.mubr.f32.gmra.mrb[0].mxu0 %v3231
      %v3452 = vpop.f32.mrb[0].mxu0
      %v3453 = vadd.f32 0.0, %v3452
      %v3454 = vpop.f32.mrb[0].mxu0
      %3455 = vmatprep.mubr.f32.mxu0 0.0
      %3456 = vmatmul.mubr.f32.gmra.mrb[0].mxu0 %v3234
      %v3457 = vpop.f32.mrb[0].mxu0
      %v3458 = vadd.f32 0.0, %v3457
      %v3459 = vpop.f32.mrb[0].mxu0
      %3460 = vmatprep.mubr.f32.mxu0 0.0
      %3461 = vmatmul.mubr.f32.gmra.mrb[0].mxu0 %v3237
      %v3462 = vpop.f32.mrb[0].mxu0
      %v3463 = vadd.f32 0.0, %v3462
      %v3464 = vpop.f32.mrb[0].mxu0
      %3465 = vmatprep.mubr.f32.mxu0 0.0
      %3466 = vmatmul.mubr.f32.gmra.mrb[0].mxu0 %v3240
      %v3467 = vpop.f32.mrb[0].mxu0
      %v3468 = vadd.f32 0.0, %v3467
      %v3469 = vpop.f32.mrb[0].mxu0
      %3470 = vmatprep.mubr.f32.mxu0 0.0
      %3471 = vmatmul.mubr.f32.gmra.mrb[0].mxu0 %v3243
      %v3472 = vpop.f32.mrb[0].mxu0
      %v3473 = vadd.f32 0.0, %v3472
      %v3474 = vpop.f32.mrb[0].mxu0
      %3475 = vmatprep.mubr.f32.mxu0 0.0
      %3476 = vmatmul.mubr.f32.gmra.mrb[0].mxu0 %v3246
      %v3477 = vpop.f32.mrb[0].mxu0
      %v3478 = vadd.f32 0.0, %v3477
      %v3479 = vpop.f32.mrb[0].mxu0
      %3480 = vmatprep.mubr.f32.mxu0 0.0
      %3481 = vmatmul.mubr.f32.gmra.mrb[0].mxu0 %v3249
      %v3482 = vpop.f32.mrb[0].mxu0
      %v3483 = vadd.f32 0.0, %v3482
      %v3484 = vpop.f32.mrb[0].mxu0
      %3485 = vmatprep.mubr.f32.mxu0 0.0
      %3486 = vmatmul.mubr.f32.gmra.mrb[0].mxu0 %v3252
      %v3487 = vpop.f32.mrb[0].mxu0
      %v3488 = vadd.f32 0.0, %v3487
      %v3489 = vpop.f32.mrb[0].mxu0
      %3490 = vmatprep.mubr.f32.mxu0 0.0
      %3491 = vmatmul.mubr.f32.gmra.mrb[0].mxu0 %v3255
      %v3492 = vpop.f32.mrb[0].mxu0
      %v3493 = vadd.f32 0.0, %v3492
      %v3494 = vpop.f32.mrb[0].mxu0
      %3495 = vmatprep.mubr.f32.mxu0 0.0
      %3496 = vmatmul.mubr.f32.gmra.mrb[0].mxu0 %v3258
      %v3497 = vpop.f32.mrb[0].mxu0
      %v3498 = vadd.f32 0.0, %v3497
      %v3499 = vpop.f32.mrb[0].mxu0
      %3500 = vmatprep.mubr.f32.mxu0 0.0
      %3501 = vmatmul.mubr.f32.gmra.mrb[0].mxu0 %v3261
      %v3502 = vpop.f32.mrb[0].mxu0
      %v3503 = vadd.f32 0.0, %v3502
      %v3504 = vpop.f32.mrb[0].mxu0
      %3505 = vmatprep.mubr.f32.mxu0 0.0
      %3506 = vmatmul.mubr.f32.gmra.mrb[0].mxu0 %v3264
      %v3507 = vpop.f32.mrb[0].mxu0
      %v3508 = vadd.f32 0.0, %v3507
      %v3509 = vpop.f32.mrb[0].mxu0
      %3510 = vmatprep.mubr.f32.mxu0 0.0
      %3511 = vmatmul.mubr.f32.gmra.mrb[0].mxu0 %v3267
      %v3512 = vpop.f32.mrb[0].mxu0
      %v3513 = vadd.f32 0.0, %v3512
      %v3514 = vpop.f32.mrb[0].mxu0
      %3515 = vmatprep.mubr.f32.mxu0 0.0
      %3516 = vmatmul.mubr.f32.gmra.mrb[0].mxu0 %v3270
      %v3517 = vpop.f32.mrb[0].mxu0
      %v3518 = vadd.f32 0.0, %v3517
      %v3519 = vpop.f32.mrb[0].mxu0
      %3520 = vmatprep.mubr.f32.mxu0 0.0
      %3521 = vmatmul.mubr.f32.gmra.mrb[0].mxu0 %v3273
      %v3522 = vpop.f32.mrb[0].mxu0
      %v3523 = vadd.f32 0.0, %v3522
      %v3524 = vpop.f32.mrb[0].mxu0
      %3525 = vmatprep.mubr.f32.mxu0 0.0
      %3526 = vmatmul.mubr.f32.gmra.mrb[0].mxu0 %v3276
      %v3527 = vpop.f32.mrb[0].mxu0
      %v3528 = vadd.f32 0.0, %v3527
      %v3529 = vpop.f32.mrb[0].mxu0
      %3530 = vmatprep.mubr.f32.mxu0 0.0
      %3531 = vmatmul.mubr.f32.gmra.mrb[0].mxu0 %v3279
      %v3532 = vpop.f32.mrb[0].mxu0
      %v3533 = vadd.f32 0.0, %v3532
      %v3534 = vpop.f32.mrb[0].mxu0
      %3535 = vmatprep.mubr.f32.mxu0 0.0
      %3536 = vmatmul.mubr.f32.gmra.mrb[0].mxu0 %v3282
      %v3537 = vpop.f32.mrb[0].mxu0
      %v3538 = vadd.f32 0.0, %v3537
      %v3539 = vpop.f32.mrb[0].mxu0
      %3540 = vmatprep.mubr.f32.mxu0 0.0
      %3541 = vmatmul.mubr.f32.gmra.mrb[0].mxu0 %v3285
      %v3542 = vpop.f32.mrb[0].mxu0
      %v3543 = vadd.f32 0.0, %v3542
      %v3544 = vpop.f32.mrb[0].mxu0
      %3545 = vmatprep.mubr.f32.mxu0 0.0
      %3546 = vmatmul.mubr.f32.gmra.mrb[0].mxu0 %v3288
      %v3547 = vpop.f32.mrb[0].mxu0
      %v3548 = vadd.f32 0.0, %v3547
      %v3549 = vpop.f32.mrb[0].mxu0
      %3550 = vmatprep.mubr.f32.mxu0 0.0
      %3551 = vmatmul.mubr.f32.gmra.mrb[0].mxu0 %v3291
      %v3552 = vpop.f32.mrb[0].mxu0
      %v3553 = vadd.f32 0.0, %v3552
      %v3554 = vpop.f32.mrb[0].mxu0
      %3555 = vmatprep.mubr.f32.mxu0 0.0
      %3556 = vmatmul.mubr.f32.gmra.mrb[0].mxu0 %v3294
      %v3557 = vpop.f32.mrb[0].mxu0
      %v3558 = vadd.f32 0.0, %v3557
      %v3559 = vpop.f32.mrb[0].mxu0
      %3560 = vmatprep.mubr.f32.mxu0 0.0
      %3561 = vmatmul.mubr.f32.gmra.mrb[0].mxu0 %v3297
      %v3562 = vpop.f32.mrb[0].mxu0
      %v3563 = vadd.f32 0.0, %v3562
      %v3564 = vpop.f32.mrb[0].mxu0
      %3565 = vmatprep.mubr.f32.mxu0 0.0
      %3566 = vmatmul.mubr.f32.gmra.mrb[0].mxu0 %v3300
      %v3567 = vpop.f32.mrb[0].mxu0
      %v3568 = vadd.f32 0.0, %v3567
      %v3569 = vpop.f32.mrb[0].mxu0
      %3570 = vmatprep.mubr.f32.mxu0 0.0
      %3571 = vmatmul.mubr.f32.gmra.mrb[0].mxu0 %v3303
      %v3572 = vpop.f32.mrb[0].mxu0
      %v3573 = vadd.f32 0.0, %v3572
      %v3574 = vpop.f32.mrb[0].mxu0
      %3575 = vmatprep.mubr.f32.mxu0 0.0
      %3576 = vmatmul.mubr.f32.gmra.mrb[0].mxu0 %v3306
      %v3577 = vpop.f32.mrb[0].mxu0
      %v3578 = vadd.f32 0.0, %v3577
      %v3579 = vpop.f32.mrb[0].mxu0
      %3580 = vdwg.mxu0
      %v3581 = vld [vmem:[#allocation2] sm:$0xff]
      %v3582 = vld [vmem:[#allocation2 + $0x8] sm:$0xff]
      %v3583 = vld [vmem:[#allocation2 + $0x10] sm:$0xff]
      %v3584 = vld [vmem:[#allocation2 + $0x18] sm:$0xff]
      %v3585 = vld [vmem:[#allocation2 + $0x20] sm:$0xff]
      %v3586 = vld [vmem:[#allocation2 + $0x28] sm:$0xff]
      %v3587 = vld [vmem:[#allocation2 + $0x30] sm:$0xff]
      %v3588 = vld [vmem:[#allocation2 + $0x38] sm:$0xff]
      %v3589 = vld [vmem:[#allocation2 + $0x40] sm:$0xff]
      %v3590 = vld [vmem:[#allocation2 + $0x48] sm:$0xff]
      %v3591 = vld [vmem:[#allocation2 + $0x50] sm:$0xff]
      %v3592 = vld [vmem:[#allocation2 + $0x58] sm:$0xff]
      %v3593 = vld [vmem:[#allocation2 + $0x60] sm:$0xff]
      %v3594 = vld [vmem:[#allocation2 + $0x68] sm:$0xff]
      %v3595 = vld [vmem:[#allocation2 + $0x70] sm:$0xff]
      %v3596 = vld [vmem:[#allocation2 + $0x78] sm:$0xff]
      %v3597 = vld [vmem:[#allocation2 + $0x80] sm:$0xff]
      %v3598 = vld [vmem:[#allocation2 + $0x88] sm:$0xff]
      %v3599 = vld [vmem:[#allocation2 + $0x90] sm:$0xff]
      %v3600 = vld [vmem:[#allocation2 + $0x98] sm:$0xff]
      %v3601 = vld [vmem:[#allocation2 + $0xa0] sm:$0xff]
      %v3602 = vld [vmem:[#allocation2 + $0xa8] sm:$0xff]
      %v3603 = vld [vmem:[#allocation2 + $0xb0] sm:$0xff]
      %v3604 = vld [vmem:[#allocation2 + $0xb8] sm:$0xff]
      %v3605 = vld [vmem:[#allocation2 + $0xc0] sm:$0xff]
      %v3606 = vld [vmem:[#allocation2 + $0xc8] sm:$0xff]
      %v3607 = vld [vmem:[#allocation2 + $0xd0] sm:$0xff]
      %v3608 = vld [vmem:[#allocation2 + $0xd8] sm:$0xff]
      %v3609 = vld [vmem:[#allocation2 + $0xe0] sm:$0xff]
      %v3610 = vld [vmem:[#allocation2 + $0xe8] sm:$0xff]
      %v3611 = vld [vmem:[#allocation2 + $0xf0] sm:$0xff]
      %v3612 = vld [vmem:[#allocation2 + $0xf8] sm:$0xff]
      %v3613 = vld [vmem:[#allocation2 + $0x100] sm:$0xff]
      %v3614 = vld [vmem:[#allocation2 + $0x108] sm:$0xff]
      %v3615 = vld [vmem:[#allocation2 + $0x110] sm:$0xff]
      %v3616 = vld [vmem:[#allocation2 + $0x118] sm:$0xff]
      %v3617 = vld [vmem:[#allocation2 + $0x120] sm:$0xff]
      %v3618 = vld [vmem:[#allocation2 + $0x128] sm:$0xff]
      %v3619 = vld [vmem:[#allocation2 + $0x130] sm:$0xff]
      %v3620 = vld [vmem:[#allocation2 + $0x138] sm:$0xff]
      %v3621 = vld [vmem:[#allocation2 + $0x140] sm:$0xf]
      %v3622 = vadd.f32 %v3581, %v3378
      %v3623 = vadd.f32 %v3582, %v3383
      %v3624 = vadd.f32 %v3583, %v3388
      %v3625 = vadd.f32 %v3584, %v3393
      %v3626 = vadd.f32 %v3585, %v3398
      %v3627 = vadd.f32 %v3586, %v3403
      %v3628 = vadd.f32 %v3587, %v3408
      %v3629 = vadd.f32 %v3588, %v3413
      %v3630 = vadd.f32 %v3589, %v3418
      %v3631 = vadd.f32 %v3590, %v3423
      %v3632 = vadd.f32 %v3591, %v3428
      %v3633 = vadd.f32 %v3592, %v3433
      %v3634 = vadd.f32 %v3593, %v3438
      %v3635 = vadd.f32 %v3594, %v3443
      %v3636 = vadd.f32 %v3595, %v3448
      %v3637 = vadd.f32 %v3596, %v3453
      %v3638 = vadd.f32 %v3597, %v3458
      %v3639 = vadd.f32 %v3598, %v3463
      %v3640 = vadd.f32 %v3599, %v3468
      %v3641 = vadd.f32 %v3600, %v3473
      %v3642 = vadd.f32 %v3601, %v3478
      %v3643 = vadd.f32 %v3602, %v3483
      %v3644 = vadd.f32 %v3603, %v3488
      %v3645 = vadd.f32 %v3604, %v3493
      %v3646 = vadd.f32 %v3605, %v3498
      %v3647 = vadd.f32 %v3606, %v3503
      %v3648 = vadd.f32 %v3607, %v3508
      %v3649 = vadd.f32 %v3608, %v3513
      %v3650 = vadd.f32 %v3609, %v3518
      %v3651 = vadd.f32 %v3610, %v3523
      %v3652 = vadd.f32 %v3611, %v3528
      %v3653 = vadd.f32 %v3612, %v3533
      %v3654 = vadd.f32 %v3613, %v3538
      %v3655 = vadd.f32 %v3614, %v3543
      %v3656 = vadd.f32 %v3615, %v3548
      %v3657 = vadd.f32 %v3616, %v3553
      %v3658 = vadd.f32 %v3617, %v3558
      %v3659 = vadd.f32 %v3618, %v3563
      %v3660 = vadd.f32 %v3619, %v3568
      %v3661 = vadd.f32 %v3620, %v3573
      %v3662 = vadd.f32 %v3621, %v3578
      %3663 = vst.msk [vmem:[#allocation2] sm:$0xff] %vm385, %v3622
      %3664 = vst.msk [vmem:[#allocation2 + $0x8] sm:$0xff] %vm385, %v3623
      %3665 = vst.msk [vmem:[#allocation2 + $0x10] sm:$0xff] %vm385, %v3624
      %3666 = vst.msk [vmem:[#allocation2 + $0x18] sm:$0xff] %vm385, %v3625
      %3667 = vst.msk [vmem:[#allocation2 + $0x20] sm:$0xff] %vm385, %v3626
      %3668 = vst.msk [vmem:[#allocation2 + $0x28] sm:$0xff] %vm385, %v3627
      %3669 = vst.msk [vmem:[#allocation2 + $0x30] sm:$0xff] %vm385, %v3628
      %3670 = vst.msk [vmem:[#allocation2 + $0x38] sm:$0xff] %vm385, %v3629
      %3671 = vst.msk [vmem:[#allocation2 + $0x40] sm:$0xff] %vm385, %v3630
      %3672 = vst.msk [vmem:[#allocation2 + $0x48] sm:$0xff] %vm385, %v3631
      %3673 = vst.msk [vmem:[#allocation2 + $0x50] sm:$0xff] %vm385, %v3632
      %3674 = vst.msk [vmem:[#allocation2 + $0x58] sm:$0xff] %vm385, %v3633
      %3675 = vst.msk [vmem:[#allocation2 + $0x60] sm:$0xff] %vm385, %v3634
      %3676 = vst.msk [vmem:[#allocation2 + $0x68] sm:$0xff] %vm385, %v3635
      %3677 = vst.msk [vmem:[#allocation2 + $0x70] sm:$0xff] %vm385, %v3636
      %3678 = vst.msk [vmem:[#allocation2 + $0x78] sm:$0xff] %vm385, %v3637
      %3679 = vst.msk [vmem:[#allocation2 + $0x80] sm:$0xff] %vm385, %v3638
      %3680 = vst.msk [vmem:[#allocation2 + $0x88] sm:$0xff] %vm385, %v3639
      %3681 = vst.msk [vmem:[#allocation2 + $0x90] sm:$0xff] %vm385, %v3640
      %3682 = vst.msk [vmem:[#allocation2 + $0x98] sm:$0xff] %vm385, %v3641
      %3683 = vst.msk [vmem:[#allocation2 + $0xa0] sm:$0xff] %vm385, %v3642
      %3684 = vst.msk [vmem:[#allocation2 + $0xa8] sm:$0xff] %vm385, %v3643
      %3685 = vst.msk [vmem:[#allocation2 + $0xb0] sm:$0xff] %vm385, %v3644
      %3686 = vst.msk [vmem:[#allocation2 + $0xb8] sm:$0xff] %vm385, %v3645
      %3687 = vst.msk [vmem:[#allocation2 + $0xc0] sm:$0xff] %vm385, %v3646
      %3688 = vst.msk [vmem:[#allocation2 + $0xc8] sm:$0xff] %vm385, %v3647
      %3689 = vst.msk [vmem:[#allocation2 + $0xd0] sm:$0xff] %vm385, %v3648
      %3690 = vst.msk [vmem:[#allocation2 + $0xd8] sm:$0xff] %vm385, %v3649
      %3691 = vst.msk [vmem:[#allocation2 + $0xe0] sm:$0xff] %vm385, %v3650
      %3692 = vst.msk [vmem:[#allocation2 + $0xe8] sm:$0xff] %vm385, %v3651
      %3693 = vst.msk [vmem:[#allocation2 + $0xf0] sm:$0xff] %vm385, %v3652
      %3694 = vst.msk [vmem:[#allocation2 + $0xf8] sm:$0xff] %vm385, %v3653
      %3695 = vst.msk [vmem:[#allocation2 + $0x100] sm:$0xff] %vm385, %v3654
      %3696 = vst.msk [vmem:[#allocation2 + $0x108] sm:$0xff] %vm385, %v3655
      %3697 = vst.msk [vmem:[#allocation2 + $0x110] sm:$0xff] %vm385, %v3656
      %3698 = vst.msk [vmem:[#allocation2 + $0x118] sm:$0xff] %vm385, %v3657
      %3699 = vst.msk [vmem:[#allocation2 + $0x120] sm:$0xff] %vm385, %v3658
      %3700 = vst.msk [vmem:[#allocation2 + $0x128] sm:$0xff] %vm385, %v3659
      %3701 = vst.msk [vmem:[#allocation2 + $0x130] sm:$0xff] %vm385, %v3660
      %3702 = vst.msk [vmem:[#allocation2 + $0x138] sm:$0xff] %vm385, %v3661
      %3703 = vst.msk [vmem:[#allocation2 + $0x140] sm:$0xf] %vm892, %v3662
      %v3704 = vld [vmem:[%s381 + $0x24] sm:$0xff]
      %v3705 = vld [vmem:[%s381 + $0x2c] sm:$0xff]
      %v3706 = vld [vmem:[%s381 + $0x34] sm:$0xff]
      %v3707 = vld [vmem:[%s381 + $0x3c] sm:$0xff]
      %v3708 = vld [vmem:[%s381 + $0x44] sm:$0xff]
      %v3709 = vld [vmem:[%s381 + $0x4c] sm:$0xff]
      %v3710 = vld [vmem:[%s381 + $0x54] sm:$0xff]
      %v3711 = vld [vmem:[%s381 + $0x5c] sm:$0xff]
      %v3712 = vld [vmem:[%s381 + $0x64] sm:$0xff]
      %v3713 = vld [vmem:[%s381 + $0x6c] sm:$0xff]
      %v3714 = vld [vmem:[%s381 + $0x74] sm:$0xff]
      %v3715 = vld [vmem:[%s381 + $0x7c] sm:$0xff]
      %v3716 = vld [vmem:[%s381 + $0x84] sm:$0xff]
      %v3717 = vld [vmem:[%s381 + $0x8c] sm:$0xff]
      %v3718 = vld [vmem:[%s381 + $0x94] sm:$0xff]
      %v3719 = vld [vmem:[%s381 + $0x9c] sm:$0xff]
      %v3720 = vld [vmem:[%s381 + $0xa4] sm:$0xff]
      %v3721 = vld [vmem:[%s381 + $0xac] sm:$0xff]
      %v3722 = vld [vmem:[%s381 + $0xb4] sm:$0xff]
      %v3723 = vld [vmem:[%s381 + $0xbc] sm:$0xff]
      %v3724 = vld [vmem:[%s381 + $0xc4] sm:$0xff]
      %v3725 = vld [vmem:[%s381 + $0xcc] sm:$0xff]
      %v3726 = vld [vmem:[%s381 + $0xd4] sm:$0xff]
      %v3727 = vld [vmem:[%s381 + $0xdc] sm:$0xff]
      %v3728 = vld [vmem:[%s381 + $0xe4] sm:$0xff]
      %v3729 = vld [vmem:[%s381 + $0xec] sm:$0xff]
      %v3730 = vld [vmem:[%s381 + $0xf4] sm:$0xff]
      %v3731 = vld [vmem:[%s381 + $0xfc] sm:$0xff]
      %v3732 = vld [vmem:[%s381 + $0x104] sm:$0xff]
      %v3733 = vld [vmem:[%s381 + $0x10c] sm:$0xff]
      %v3734 = vld [vmem:[%s381 + $0x114] sm:$0xff]
      %v3735 = vld [vmem:[%s381 + $0x11c] sm:$0xff]
      %v3736 = vld [vmem:[%s381 + $0x124] sm:$0xff]
      %v3737 = vld [vmem:[%s381 + $0x12c] sm:$0xff]
      %v3738 = vld [vmem:[%s381 + $0x134] sm:$0xff]
      %v3739 = vld [vmem:[%s381 + $0x13c] sm:$0xff]
      %v3740 = vld [vmem:[%s381 + $0x144] sm:$0xff]
      %v3741 = vld [vmem:[%s381 + $0x14c] sm:$0xff]
      %v3742 = vld [vmem:[%s381 + $0x154] sm:$0xff]
      %v3743 = vld [vmem:[%s381 + $0x15c] sm:$0xff]
      %v3744 = vld [vmem:[%s381 + $0x164] sm:$0xf]
      %s3745 = scalar_lea.vmem %s1, 24
      %v3746 = vld [vmem:[%s3745] sm:$0x7]
      %v3748 = vsel %vm454, %v3704, 0
      %v3751 = vsel %vm454, %v3705, 0
      %v3754 = vsel %vm454, %v3706, 0
      %v3757 = vsel %vm454, %v3707, 0
      %v3760 = vsel %vm454, %v3708, 0
      %v3763 = vsel %vm454, %v3709, 0
      %v3766 = vsel %vm454, %v3710, 0
      %v3769 = vsel %vm454, %v3711, 0
      %v3772 = vsel %vm454, %v3712, 0
      %v3775 = vsel %vm454, %v3713, 0
      %v3778 = vsel %vm454, %v3714, 0
      %v3781 = vsel %vm454, %v3715, 0
      %v3784 = vsel %vm454, %v3716, 0
      %v3787 = vsel %vm454, %v3717, 0
      %v3790 = vsel %vm454, %v3718, 0
      %v3793 = vsel %vm454, %v3719, 0
      %v3796 = vsel %vm454, %v3720, 0
      %v3799 = vsel %vm454, %v3721, 0
      %v3802 = vsel %vm454, %v3722, 0
      %v3805 = vsel %vm454, %v3723, 0
      %v3808 = vsel %vm454, %v3724, 0
      %v3811 = vsel %vm454, %v3725, 0
      %v3814 = vsel %vm454, %v3726, 0
      %v3817 = vsel %vm454, %v3727, 0
      %v3820 = vsel %vm454, %v3728, 0
      %v3823 = vsel %vm454, %v3729, 0
      %v3826 = vsel %vm454, %v3730, 0
      %v3829 = vsel %vm454, %v3731, 0
      %v3832 = vsel %vm454, %v3732, 0
      %v3835 = vsel %vm454, %v3733, 0
      %v3838 = vsel %vm454, %v3734, 0
      %v3841 = vsel %vm454, %v3735, 0
      %v3844 = vsel %vm454, %v3736, 0
      %v3847 = vsel %vm454, %v3737, 0
      %v3850 = vsel %vm454, %v3738, 0
      %v3853 = vsel %vm454, %v3739, 0
      %v3856 = vsel %vm454, %v3740, 0
      %v3859 = vsel %vm454, %v3741, 0
      %v3862 = vsel %vm454, %v3742, 0
      %v3865 = vsel %vm454, %v3743, 0
      %v3868 = vsel %vm454, %v3744, 0
      %v3871 = vsel %vm578, %v3746, 0
      %3873 = vmatprep.subr.mxu0 0.0
      %3874 = vmatpush1.msra.mxu0 %v3871
      %3875 = vmatprep.subr.mxu0 0.0
      %3876 = vmatpush1.msra.mxu0 0.0
      %3877 = vmatprep.subr.mxu0 0.0
      %3878 = vmatpush1.msra.mxu0 0.0
      %3879 = vmatprep.subr.mxu0 0.0
      %3880 = vmatpush1.msra.mxu0 0.0
      %3881 = vmatprep.subr.mxu0 0.0
      %3882 = vmatpush1.msra.mxu0 0.0
      %3883 = vmatprep.subr.mxu0 0.0
      %3884 = vmatpush1.msra.mxu0 0.0
      %3885 = vmatprep.subr.mxu0 0.0
      %3886 = vmatpush1.msra.mxu0 0.0
      %3887 = vmatprep.subr.mxu0 0.0
      %3888 = vmatpush1.msra.mxu0 0.0
      %3889 = vmatprep.subr.mxu0 0.0
      %3890 = vmatpush1.msra.mxu0 0.0
      %3891 = vmatprep.subr.mxu0 0.0
      %3892 = vmatpush1.msra.mxu0 0.0
      %3893 = vmatprep.subr.mxu0 0.0
      %3894 = vmatpush1.msra.mxu0 0.0
      %3895 = vmatprep.subr.mxu0 0.0
      %3896 = vmatpush1.msra.mxu0 0.0
      %3897 = vmatprep.subr.mxu0 0.0
      %3898 = vmatpush1.msra.mxu0 0.0
      %3899 = vmatprep.subr.mxu0 0.0
      %3900 = vmatpush1.msra.mxu0 0.0
      %3901 = vmatprep.subr.mxu0 0.0
      %3902 = vmatpush1.msra.mxu0 0.0
      %3903 = vmatprep.subr.mxu0 0.0
      %3904 = vmatpush1.msra.mxu0 0.0
      %3905 = vmatprep.subr.mxu0 0.0
      %3906 = vmatpush1.msra.mxu0 0.0
      %3907 = vmatprep.subr.mxu0 0.0
      %3908 = vmatpush1.msra.mxu0 0.0
      %3909 = vmatprep.subr.mxu0 0.0
      %3910 = vmatpush1.msra.mxu0 0.0
      %3911 = vmatprep.subr.mxu0 0.0
      %3912 = vmatpush1.msra.mxu0 0.0
      %3913 = vmatprep.subr.mxu0 0.0
      %3914 = vmatpush1.msra.mxu0 0.0
      %3915 = vmatprep.subr.mxu0 0.0
      %3916 = vmatpush1.msra.mxu0 0.0
      %3917 = vmatprep.subr.mxu0 0.0
      %3918 = vmatpush1.msra.mxu0 0.0
      %3919 = vmatprep.subr.mxu0 0.0
      %3920 = vmatpush1.msra.mxu0 0.0
      %3921 = vmatprep.subr.mxu0 0.0
      %3922 = vmatpush1.msra.mxu0 0.0
      %3923 = vmatprep.subr.mxu0 0.0
      %3924 = vmatpush1.msra.mxu0 0.0
      %3925 = vmatprep.subr.mxu0 0.0
      %3926 = vmatpush1.msra.mxu0 0.0
      %3927 = vmatprep.subr.mxu0 0.0
      %3928 = vmatpush1.msra.mxu0 0.0
      %3929 = vmatprep.subr.mxu0 0.0
      %3930 = vmatpush1.msra.mxu0 0.0
      %3931 = vmatprep.subr.mxu0 0.0
      %3932 = vmatpush1.msra.mxu0 0.0
      %3933 = vmatprep.subr.mxu0 0.0
      %3934 = vmatpush1.msra.mxu0 0.0
      %3935 = vmatprep.subr.mxu0 0.0
      %3936 = vmatpush1.msra.mxu0 0.0
      %3937 = vmatprep.mubr.f32.mxu0 0.0
      %3938 = vmatmul.mubr.f32.gmra.mrb[0].mxu0 %v3748
      %v3939 = vpop.f32.mrb[0].mxu0
      %v3940 = vadd.f32 0.0, %v3939
      %v3941 = vpop.f32.mrb[0].mxu0
      %3942 = vmatprep.mubr.f32.mxu0 0.0
      %3943 = vmatmul.mubr.f32.gmra.mrb[0].mxu0 %v3751
      %v3944 = vpop.f32.mrb[0].mxu0
      %v3945 = vadd.f32 0.0, %v3944
      %v3946 = vpop.f32.mrb[0].mxu0
      %3947 = vmatprep.mubr.f32.mxu0 0.0
      %3948 = vmatmul.mubr.f32.gmra.mrb[0].mxu0 %v3754
      %v3949 = vpop.f32.mrb[0].mxu0
      %v3950 = vadd.f32 0.0, %v3949
      %v3951 = vpop.f32.mrb[0].mxu0
      %3952 = vmatprep.mubr.f32.mxu0 0.0
      %3953 = vmatmul.mubr.f32.gmra.mrb[0].mxu0 %v3757
      %v3954 = vpop.f32.mrb[0].mxu0
      %v3955 = vadd.f32 0.0, %v3954
      %v3956 = vpop.f32.mrb[0].mxu0
      %3957 = vmatprep.mubr.f32.mxu0 0.0
      %3958 = vmatmul.mubr.f32.gmra.mrb[0].mxu0 %v3760
      %v3959 = vpop.f32.mrb[0].mxu0
      %v3960 = vadd.f32 0.0, %v3959
      %v3961 = vpop.f32.mrb[0].mxu0
      %3962 = vmatprep.mubr.f32.mxu0 0.0
      %3963 = vmatmul.mubr.f32.gmra.mrb[0].mxu0 %v3763
      %v3964 = vpop.f32.mrb[0].mxu0
      %v3965 = vadd.f32 0.0, %v3964
      %v3966 = vpop.f32.mrb[0].mxu0
      %3967 = vmatprep.mubr.f32.mxu0 0.0
      %3968 = vmatmul.mubr.f32.gmra.mrb[0].mxu0 %v3766
      %v3969 = vpop.f32.mrb[0].mxu0
      %v3970 = vadd.f32 0.0, %v3969
      %v3971 = vpop.f32.mrb[0].mxu0
      %3972 = vmatprep.mubr.f32.mxu0 0.0
      %3973 = vmatmul.mubr.f32.gmra.mrb[0].mxu0 %v3769
      %v3974 = vpop.f32.mrb[0].mxu0
      %v3975 = vadd.f32 0.0, %v3974
      %v3976 = vpop.f32.mrb[0].mxu0
      %3977 = vmatprep.mubr.f32.mxu0 0.0
      %3978 = vmatmul.mubr.f32.gmra.mrb[0].mxu0 %v3772
      %v3979 = vpop.f32.mrb[0].mxu0
      %v3980 = vadd.f32 0.0, %v3979
      %v3981 = vpop.f32.mrb[0].mxu0
      %3982 = vmatprep.mubr.f32.mxu0 0.0
      %3983 = vmatmul.mubr.f32.gmra.mrb[0].mxu0 %v3775
      %v3984 = vpop.f32.mrb[0].mxu0
      %v3985 = vadd.f32 0.0, %v3984
      %v3986 = vpop.f32.mrb[0].mxu0
      %3987 = vmatprep.mubr.f32.mxu0 0.0
      %3988 = vmatmul.mubr.f32.gmra.mrb[0].mxu0 %v3778
      %v3989 = vpop.f32.mrb[0].mxu0
      %v3990 = vadd.f32 0.0, %v3989
      %v3991 = vpop.f32.mrb[0].mxu0
      %3992 = vmatprep.mubr.f32.mxu0 0.0
      %3993 = vmatmul.mubr.f32.gmra.mrb[0].mxu0 %v3781
      %v3994 = vpop.f32.mrb[0].mxu0
      %v3995 = vadd.f32 0.0, %v3994
      %v3996 = vpop.f32.mrb[0].mxu0
      %3997 = vmatprep.mubr.f32.mxu0 0.0
      %3998 = vmatmul.mubr.f32.gmra.mrb[0].mxu0 %v3784
      %v3999 = vpop.f32.mrb[0].mxu0
      %v4000 = vadd.f32 0.0, %v3999
      %v4001 = vpop.f32.mrb[0].mxu0
      %4002 = vmatprep.mubr.f32.mxu0 0.0
      %4003 = vmatmul.mubr.f32.gmra.mrb[0].mxu0 %v3787
      %v4004 = vpop.f32.mrb[0].mxu0
      %v4005 = vadd.f32 0.0, %v4004
      %v4006 = vpop.f32.mrb[0].mxu0
      %4007 = vmatprep.mubr.f32.mxu0 0.0
      %4008 = vmatmul.mubr.f32.gmra.mrb[0].mxu0 %v3790
      %v4009 = vpop.f32.mrb[0].mxu0
      %v4010 = vadd.f32 0.0, %v4009
      %v4011 = vpop.f32.mrb[0].mxu0
      %4012 = vmatprep.mubr.f32.mxu0 0.0
      %4013 = vmatmul.mubr.f32.gmra.mrb[0].mxu0 %v3793
      %v4014 = vpop.f32.mrb[0].mxu0
      %v4015 = vadd.f32 0.0, %v4014
      %v4016 = vpop.f32.mrb[0].mxu0
      %4017 = vmatprep.mubr.f32.mxu0 0.0
      %4018 = vmatmul.mubr.f32.gmra.mrb[0].mxu0 %v3796
      %v4019 = vpop.f32.mrb[0].mxu0
      %v4020 = vadd.f32 0.0, %v4019
      %v4021 = vpop.f32.mrb[0].mxu0
      %4022 = vmatprep.mubr.f32.mxu0 0.0
      %4023 = vmatmul.mubr.f32.gmra.mrb[0].mxu0 %v3799
      %v4024 = vpop.f32.mrb[0].mxu0
      %v4025 = vadd.f32 0.0, %v4024
      %v4026 = vpop.f32.mrb[0].mxu0
      %4027 = vmatprep.mubr.f32.mxu0 0.0
      %4028 = vmatmul.mubr.f32.gmra.mrb[0].mxu0 %v3802
      %v4029 = vpop.f32.mrb[0].mxu0
      %v4030 = vadd.f32 0.0, %v4029
      %v4031 = vpop.f32.mrb[0].mxu0
      %4032 = vmatprep.mubr.f32.mxu0 0.0
      %4033 = vmatmul.mubr.f32.gmra.mrb[0].mxu0 %v3805
      %v4034 = vpop.f32.mrb[0].mxu0
      %v4035 = vadd.f32 0.0, %v4034
      %v4036 = vpop.f32.mrb[0].mxu0
      %4037 = vmatprep.mubr.f32.mxu0 0.0
      %4038 = vmatmul.mubr.f32.gmra.mrb[0].mxu0 %v3808
      %v4039 = vpop.f32.mrb[0].mxu0
      %v4040 = vadd.f32 0.0, %v4039
      %v4041 = vpop.f32.mrb[0].mxu0
      %4042 = vmatprep.mubr.f32.mxu0 0.0
      %4043 = vmatmul.mubr.f32.gmra.mrb[0].mxu0 %v3811
      %v4044 = vpop.f32.mrb[0].mxu0
      %v4045 = vadd.f32 0.0, %v4044
      %v4046 = vpop.f32.mrb[0].mxu0
      %4047 = vmatprep.mubr.f32.mxu0 0.0
      %4048 = vmatmul.mubr.f32.gmra.mrb[0].mxu0 %v3814
      %v4049 = vpop.f32.mrb[0].mxu0
      %v4050 = vadd.f32 0.0, %v4049
      %v4051 = vpop.f32.mrb[0].mxu0
      %4052 = vmatprep.mubr.f32.mxu0 0.0
      %4053 = vmatmul.mubr.f32.gmra.mrb[0].mxu0 %v3817
      %v4054 = vpop.f32.mrb[0].mxu0
      %v4055 = vadd.f32 0.0, %v4054
      %v4056 = vpop.f32.mrb[0].mxu0
      %4057 = vmatprep.mubr.f32.mxu0 0.0
      %4058 = vmatmul.mubr.f32.gmra.mrb[0].mxu0 %v3820
      %v4059 = vpop.f32.mrb[0].mxu0
      %v4060 = vadd.f32 0.0, %v4059
      %v4061 = vpop.f32.mrb[0].mxu0
      %4062 = vmatprep.mubr.f32.mxu0 0.0
      %4063 = vmatmul.mubr.f32.gmra.mrb[0].mxu0 %v3823
      %v4064 = vpop.f32.mrb[0].mxu0
      %v4065 = vadd.f32 0.0, %v4064
      %v4066 = vpop.f32.mrb[0].mxu0
      %4067 = vmatprep.mubr.f32.mxu0 0.0
      %4068 = vmatmul.mubr.f32.gmra.mrb[0].mxu0 %v3826
      %v4069 = vpop.f32.mrb[0].mxu0
      %v4070 = vadd.f32 0.0, %v4069
      %v4071 = vpop.f32.mrb[0].mxu0
      %4072 = vmatprep.mubr.f32.mxu0 0.0
      %4073 = vmatmul.mubr.f32.gmra.mrb[0].mxu0 %v3829
      %v4074 = vpop.f32.mrb[0].mxu0
      %v4075 = vadd.f32 0.0, %v4074
      %v4076 = vpop.f32.mrb[0].mxu0
      %4077 = vmatprep.mubr.f32.mxu0 0.0
      %4078 = vmatmul.mubr.f32.gmra.mrb[0].mxu0 %v3832
      %v4079 = vpop.f32.mrb[0].mxu0
      %v4080 = vadd.f32 0.0, %v4079
      %v4081 = vpop.f32.mrb[0].mxu0
      %4082 = vmatprep.mubr.f32.mxu0 0.0
      %4083 = vmatmul.mubr.f32.gmra.mrb[0].mxu0 %v3835
      %v4084 = vpop.f32.mrb[0].mxu0
      %v4085 = vadd.f32 0.0, %v4084
      %v4086 = vpop.f32.mrb[0].mxu0
      %4087 = vmatprep.mubr.f32.mxu0 0.0
      %4088 = vmatmul.mubr.f32.gmra.mrb[0].mxu0 %v3838
      %v4089 = vpop.f32.mrb[0].mxu0
      %v4090 = vadd.f32 0.0, %v4089
      %v4091 = vpop.f32.mrb[0].mxu0
      %4092 = vmatprep.mubr.f32.mxu0 0.0
      %4093 = vmatmul.mubr.f32.gmra.mrb[0].mxu0 %v3841
      %v4094 = vpop.f32.mrb[0].mxu0
      %v4095 = vadd.f32 0.0, %v4094
      %v4096 = vpop.f32.mrb[0].mxu0
      %4097 = vmatprep.mubr.f32.mxu0 0.0
      %4098 = vmatmul.mubr.f32.gmra.mrb[0].mxu0 %v3844
      %v4099 = vpop.f32.mrb[0].mxu0
      %v4100 = vadd.f32 0.0, %v4099
      %v4101 = vpop.f32.mrb[0].mxu0
      %4102 = vmatprep.mubr.f32.mxu0 0.0
      %4103 = vmatmul.mubr.f32.gmra.mrb[0].mxu0 %v3847
      %v4104 = vpop.f32.mrb[0].mxu0
      %v4105 = vadd.f32 0.0, %v4104
      %v4106 = vpop.f32.mrb[0].mxu0
      %4107 = vmatprep.mubr.f32.mxu0 0.0
      %4108 = vmatmul.mubr.f32.gmra.mrb[0].mxu0 %v3850
      %v4109 = vpop.f32.mrb[0].mxu0
      %v4110 = vadd.f32 0.0, %v4109
      %v4111 = vpop.f32.mrb[0].mxu0
      %4112 = vmatprep.mubr.f32.mxu0 0.0
      %4113 = vmatmul.mubr.f32.gmra.mrb[0].mxu0 %v3853
      %v4114 = vpop.f32.mrb[0].mxu0
      %v4115 = vadd.f32 0.0, %v4114
      %v4116 = vpop.f32.mrb[0].mxu0
      %4117 = vmatprep.mubr.f32.mxu0 0.0
      %4118 = vmatmul.mubr.f32.gmra.mrb[0].mxu0 %v3856
      %v4119 = vpop.f32.mrb[0].mxu0
      %v4120 = vadd.f32 0.0, %v4119
      %v4121 = vpop.f32.mrb[0].mxu0
      %4122 = vmatprep.mubr.f32.mxu0 0.0
      %4123 = vmatmul.mubr.f32.gmra.mrb[0].mxu0 %v3859
      %v4124 = vpop.f32.mrb[0].mxu0
      %v4125 = vadd.f32 0.0, %v4124
      %v4126 = vpop.f32.mrb[0].mxu0
      %4127 = vmatprep.mubr.f32.mxu0 0.0
      %4128 = vmatmul.mubr.f32.gmra.mrb[0].mxu0 %v3862
      %v4129 = vpop.f32.mrb[0].mxu0
      %v4130 = vadd.f32 0.0, %v4129
      %v4131 = vpop.f32.mrb[0].mxu0
      %4132 = vmatprep.mubr.f32.mxu0 0.0
      %4133 = vmatmul.mubr.f32.gmra.mrb[0].mxu0 %v3865
      %v4134 = vpop.f32.mrb[0].mxu0
      %v4135 = vadd.f32 0.0, %v4134
      %v4136 = vpop.f32.mrb[0].mxu0
      %4137 = vmatprep.mubr.f32.mxu0 0.0
      %4138 = vmatmul.mubr.f32.gmra.mrb[0].mxu0 %v3868
      %v4139 = vpop.f32.mrb[0].mxu0
      %v4140 = vadd.f32 0.0, %v4139
      %v4141 = vpop.f32.mrb[0].mxu0
      %4142 = vdwg.mxu0
      %v4143 = vld [vmem:[#allocation2] sm:$0xff]
      %v4144 = vld [vmem:[#allocation2 + $0x8] sm:$0xff]
      %v4145 = vld [vmem:[#allocation2 + $0x10] sm:$0xff]
      %v4146 = vld [vmem:[#allocation2 + $0x18] sm:$0xff]
      %v4147 = vld [vmem:[#allocation2 + $0x20] sm:$0xff]
      %v4148 = vld [vmem:[#allocation2 + $0x28] sm:$0xff]
      %v4149 = vld [vmem:[#allocation2 + $0x30] sm:$0xff]
      %v4150 = vld [vmem:[#allocation2 + $0x38] sm:$0xff]
      %v4151 = vld [vmem:[#allocation2 + $0x40] sm:$0xff]
      %v4152 = vld [vmem:[#allocation2 + $0x48] sm:$0xff]
      %v4153 = vld [vmem:[#allocation2 + $0x50] sm:$0xff]
      %v4154 = vld [vmem:[#allocation2 + $0x58] sm:$0xff]
      %v4155 = vld [vmem:[#allocation2 + $0x60] sm:$0xff]
      %v4156 = vld [vmem:[#allocation2 + $0x68] sm:$0xff]
      %v4157 = vld [vmem:[#allocation2 + $0x70] sm:$0xff]
      %v4158 = vld [vmem:[#allocation2 + $0x78] sm:$0xff]
      %v4159 = vld [vmem:[#allocation2 + $0x80] sm:$0xff]
      %v4160 = vld [vmem:[#allocation2 + $0x88] sm:$0xff]
      %v4161 = vld [vmem:[#allocation2 + $0x90] sm:$0xff]
      %v4162 = vld [vmem:[#allocation2 + $0x98] sm:$0xff]
      %v4163 = vld [vmem:[#allocation2 + $0xa0] sm:$0xff]
      %v4164 = vld [vmem:[#allocation2 + $0xa8] sm:$0xff]
      %v4165 = vld [vmem:[#allocation2 + $0xb0] sm:$0xff]
      %v4166 = vld [vmem:[#allocation2 + $0xb8] sm:$0xff]
      %v4167 = vld [vmem:[#allocation2 + $0xc0] sm:$0xff]
      %v4168 = vld [vmem:[#allocation2 + $0xc8] sm:$0xff]
      %v4169 = vld [vmem:[#allocation2 + $0xd0] sm:$0xff]
      %v4170 = vld [vmem:[#allocation2 + $0xd8] sm:$0xff]
      %v4171 = vld [vmem:[#allocation2 + $0xe0] sm:$0xff]
      %v4172 = vld [vmem:[#allocation2 + $0xe8] sm:$0xff]
      %v4173 = vld [vmem:[#allocation2 + $0xf0] sm:$0xff]
      %v4174 = vld [vmem:[#allocation2 + $0xf8] sm:$0xff]
      %v4175 = vld [vmem:[#allocation2 + $0x100] sm:$0xff]
      %v4176 = vld [vmem:[#allocation2 + $0x108] sm:$0xff]
      %v4177 = vld [vmem:[#allocation2 + $0x110] sm:$0xff]
      %v4178 = vld [vmem:[#allocation2 + $0x118] sm:$0xff]
      %v4179 = vld [vmem:[#allocation2 + $0x120] sm:$0xff]
      %v4180 = vld [vmem:[#allocation2 + $0x128] sm:$0xff]
      %v4181 = vld [vmem:[#allocation2 + $0x130] sm:$0xff]
      %v4182 = vld [vmem:[#allocation2 + $0x138] sm:$0xff]
      %v4183 = vld [vmem:[#allocation2 + $0x140] sm:$0xf]
      %v4184 = vadd.f32 %v4143, %v3940
      %v4185 = vadd.f32 %v4144, %v3945
      %v4186 = vadd.f32 %v4145, %v3950
      %v4187 = vadd.f32 %v4146, %v3955
      %v4188 = vadd.f32 %v4147, %v3960
      %v4189 = vadd.f32 %v4148, %v3965
      %v4190 = vadd.f32 %v4149, %v3970
      %v4191 = vadd.f32 %v4150, %v3975
      %v4192 = vadd.f32 %v4151, %v3980
      %v4193 = vadd.f32 %v4152, %v3985
      %v4194 = vadd.f32 %v4153, %v3990
      %v4195 = vadd.f32 %v4154, %v3995
      %v4196 = vadd.f32 %v4155, %v4000
      %v4197 = vadd.f32 %v4156, %v4005
      %v4198 = vadd.f32 %v4157, %v4010
      %v4199 = vadd.f32 %v4158, %v4015
      %v4200 = vadd.f32 %v4159, %v4020
      %v4201 = vadd.f32 %v4160, %v4025
      %v4202 = vadd.f32 %v4161, %v4030
      %v4203 = vadd.f32 %v4162, %v4035
      %v4204 = vadd.f32 %v4163, %v4040
      %v4205 = vadd.f32 %v4164, %v4045
      %v4206 = vadd.f32 %v4165, %v4050
      %v4207 = vadd.f32 %v4166, %v4055
      %v4208 = vadd.f32 %v4167, %v4060
      %v4209 = vadd.f32 %v4168, %v4065
      %v4210 = vadd.f32 %v4169, %v4070
      %v4211 = vadd.f32 %v4170, %v4075
      %v4212 = vadd.f32 %v4171, %v4080
      %v4213 = vadd.f32 %v4172, %v4085
      %v4214 = vadd.f32 %v4173, %v4090
      %v4215 = vadd.f32 %v4174, %v4095
      %v4216 = vadd.f32 %v4175, %v4100
      %v4217 = vadd.f32 %v4176, %v4105
      %v4218 = vadd.f32 %v4177, %v4110
      %v4219 = vadd.f32 %v4178, %v4115
      %v4220 = vadd.f32 %v4179, %v4120
      %v4221 = vadd.f32 %v4180, %v4125
      %v4222 = vadd.f32 %v4181, %v4130
      %v4223 = vadd.f32 %v4182, %v4135
      %v4224 = vadd.f32 %v4183, %v4140
      %4225 = vst.msk [vmem:[#allocation2] sm:$0xff] %vm385, %v4184
      %4226 = vst.msk [vmem:[#allocation2 + $0x8] sm:$0xff] %vm385, %v4185
      %4227 = vst.msk [vmem:[#allocation2 + $0x10] sm:$0xff] %vm385, %v4186
      %4228 = vst.msk [vmem:[#allocation2 + $0x18] sm:$0xff] %vm385, %v4187
      %4229 = vst.msk [vmem:[#allocation2 + $0x20] sm:$0xff] %vm385, %v4188
      %4230 = vst.msk [vmem:[#allocation2 + $0x28] sm:$0xff] %vm385, %v4189
      %4231 = vst.msk [vmem:[#allocation2 + $0x30] sm:$0xff] %vm385, %v4190
      %4232 = vst.msk [vmem:[#allocation2 + $0x38] sm:$0xff] %vm385, %v4191
      %4233 = vst.msk [vmem:[#allocation2 + $0x40] sm:$0xff] %vm385, %v4192
      %4234 = vst.msk [vmem:[#allocation2 + $0x48] sm:$0xff] %vm385, %v4193
      %4235 = vst.msk [vmem:[#allocation2 + $0x50] sm:$0xff] %vm385, %v4194
      %4236 = vst.msk [vmem:[#allocation2 + $0x58] sm:$0xff] %vm385, %v4195
      %4237 = vst.msk [vmem:[#allocation2 + $0x60] sm:$0xff] %vm385, %v4196
      %4238 = vst.msk [vmem:[#allocation2 + $0x68] sm:$0xff] %vm385, %v4197
      %4239 = vst.msk [vmem:[#allocation2 + $0x70] sm:$0xff] %vm385, %v4198
      %4240 = vst.msk [vmem:[#allocation2 + $0x78] sm:$0xff] %vm385, %v4199
      %4241 = vst.msk [vmem:[#allocation2 + $0x80] sm:$0xff] %vm385, %v4200
      %4242 = vst.msk [vmem:[#allocation2 + $0x88] sm:$0xff] %vm385, %v4201
      %4243 = vst.msk [vmem:[#allocation2 + $0x90] sm:$0xff] %vm385, %v4202
      %4244 = vst.msk [vmem:[#allocation2 + $0x98] sm:$0xff] %vm385, %v4203
      %4245 = vst.msk [vmem:[#allocation2 + $0xa0] sm:$0xff] %vm385, %v4204
      %4246 = vst.msk [vmem:[#allocation2 + $0xa8] sm:$0xff] %vm385, %v4205
      %4247 = vst.msk [vmem:[#allocation2 + $0xb0] sm:$0xff] %vm385, %v4206
      %4248 = vst.msk [vmem:[#allocation2 + $0xb8] sm:$0xff] %vm385, %v4207
      %4249 = vst.msk [vmem:[#allocation2 + $0xc0] sm:$0xff] %vm385, %v4208
      %4250 = vst.msk [vmem:[#allocation2 + $0xc8] sm:$0xff] %vm385, %v4209
      %4251 = vst.msk [vmem:[#allocation2 + $0xd0] sm:$0xff] %vm385, %v4210
      %4252 = vst.msk [vmem:[#allocation2 + $0xd8] sm:$0xff] %vm385, %v4211
      %4253 = vst.msk [vmem:[#allocation2 + $0xe0] sm:$0xff] %vm385, %v4212
      %4254 = vst.msk [vmem:[#allocation2 + $0xe8] sm:$0xff] %vm385, %v4213
      %4255 = vst.msk [vmem:[#allocation2 + $0xf0] sm:$0xff] %vm385, %v4214
      %4256 = vst.msk [vmem:[#allocation2 + $0xf8] sm:$0xff] %vm385, %v4215
      %4257 = vst.msk [vmem:[#allocation2 + $0x100] sm:$0xff] %vm385, %v4216
      %4258 = vst.msk [vmem:[#allocation2 + $0x108] sm:$0xff] %vm385, %v4217
      %4259 = vst.msk [vmem:[#allocation2 + $0x110] sm:$0xff] %vm385, %v4218
      %4260 = vst.msk [vmem:[#allocation2 + $0x118] sm:$0xff] %vm385, %v4219
      %4261 = vst.msk [vmem:[#allocation2 + $0x120] sm:$0xff] %vm385, %v4220
      %4262 = vst.msk [vmem:[#allocation2 + $0x128] sm:$0xff] %vm385, %v4221
      %4263 = vst.msk [vmem:[#allocation2 + $0x130] sm:$0xff] %vm385, %v4222
      %4264 = vst.msk [vmem:[#allocation2 + $0x138] sm:$0xff] %vm385, %v4223
      %4265 = vst.msk [vmem:[#allocation2 + $0x140] sm:$0xf] %vm892, %v4224
      %v4266 = vld [vmem:[%s381 + $0x25] sm:$0xff]
      %v4267 = vld [vmem:[%s381 + $0x2d] sm:$0xff]
      %v4268 = vld [vmem:[%s381 + $0x35] sm:$0xff]
      %v4269 = vld [vmem:[%s381 + $0x3d] sm:$0xff]
      %v4270 = vld [vmem:[%s381 + $0x45] sm:$0xff]
      %v4271 = vld [vmem:[%s381 + $0x4d] sm:$0xff]
      %v4272 = vld [vmem:[%s381 + $0x55] sm:$0xff]
      %v4273 = vld [vmem:[%s381 + $0x5d] sm:$0xff]
      %v4274 = vld [vmem:[%s381 + $0x65] sm:$0xff]
      %v4275 = vld [vmem:[%s381 + $0x6d] sm:$0xff]
      %v4276 = vld [vmem:[%s381 + $0x75] sm:$0xff]
      %v4277 = vld [vmem:[%s381 + $0x7d] sm:$0xff]
      %v4278 = vld [vmem:[%s381 + $0x85] sm:$0xff]
      %v4279 = vld [vmem:[%s381 + $0x8d] sm:$0xff]
      %v4280 = vld [vmem:[%s381 + $0x95] sm:$0xff]
      %v4281 = vld [vmem:[%s381 + $0x9d] sm:$0xff]
      %v4282 = vld [vmem:[%s381 + $0xa5] sm:$0xff]
      %v4283 = vld [vmem:[%s381 + $0xad] sm:$0xff]
      %v4284 = vld [vmem:[%s381 + $0xb5] sm:$0xff]
      %v4285 = vld [vmem:[%s381 + $0xbd] sm:$0xff]
      %v4286 = vld [vmem:[%s381 + $0xc5] sm:$0xff]
      %v4287 = vld [vmem:[%s381 + $0xcd] sm:$0xff]
      %v4288 = vld [vmem:[%s381 + $0xd5] sm:$0xff]
      %v4289 = vld [vmem:[%s381 + $0xdd] sm:$0xff]
      %v4290 = vld [vmem:[%s381 + $0xe5] sm:$0xff]
      %v4291 = vld [vmem:[%s381 + $0xed] sm:$0xff]
      %v4292 = vld [vmem:[%s381 + $0xf5] sm:$0xff]
      %v4293 = vld [vmem:[%s381 + $0xfd] sm:$0xff]
      %v4294 = vld [vmem:[%s381 + $0x105] sm:$0xff]
      %v4295 = vld [vmem:[%s381 + $0x10d] sm:$0xff]
      %v4296 = vld [vmem:[%s381 + $0x115] sm:$0xff]
      %v4297 = vld [vmem:[%s381 + $0x11d] sm:$0xff]
      %v4298 = vld [vmem:[%s381 + $0x125] sm:$0xff]
      %v4299 = vld [vmem:[%s381 + $0x12d] sm:$0xff]
      %v4300 = vld [vmem:[%s381 + $0x135] sm:$0xff]
      %v4301 = vld [vmem:[%s381 + $0x13d] sm:$0xff]
      %v4302 = vld [vmem:[%s381 + $0x145] sm:$0xff]
      %v4303 = vld [vmem:[%s381 + $0x14d] sm:$0xff]
      %v4304 = vld [vmem:[%s381 + $0x155] sm:$0xff]
      %v4305 = vld [vmem:[%s381 + $0x15d] sm:$0xff]
      %v4306 = vld [vmem:[%s381 + $0x165] sm:$0xf]
      %s4307 = scalar_lea.vmem %s1, 28
      %v4308 = vld [vmem:[%s4307] sm:$0x7]
      %v4310 = vsel %vm454, %v4266, 0
      %v4313 = vsel %vm454, %v4267, 0
      %v4316 = vsel %vm454, %v4268, 0
      %v4319 = vsel %vm454, %v4269, 0
      %v4322 = vsel %vm454, %v4270, 0
      %v4325 = vsel %vm454, %v4271, 0
      %v4328 = vsel %vm454, %v4272, 0
      %v4331 = vsel %vm454, %v4273, 0
      %v4334 = vsel %vm454, %v4274, 0
      %v4337 = vsel %vm454, %v4275, 0
      %v4340 = vsel %vm454, %v4276, 0
      %v4343 = vsel %vm454, %v4277, 0
      %v4346 = vsel %vm454, %v4278, 0
      %v4349 = vsel %vm454, %v4279, 0
      %v4352 = vsel %vm454, %v4280, 0
      %v4355 = vsel %vm454, %v4281, 0
      %v4358 = vsel %vm454, %v4282, 0
      %v4361 = vsel %vm454, %v4283, 0
      %v4364 = vsel %vm454, %v4284, 0
      %v4367 = vsel %vm454, %v4285, 0
      %v4370 = vsel %vm454, %v4286, 0
      %v4373 = vsel %vm454, %v4287, 0
      %v4376 = vsel %vm454, %v4288, 0
      %v4379 = vsel %vm454, %v4289, 0
      %v4382 = vsel %vm454, %v4290, 0
      %v4385 = vsel %vm454, %v4291, 0
      %v4388 = vsel %vm454, %v4292, 0
      %v4391 = vsel %vm454, %v4293, 0
      %v4394 = vsel %vm454, %v4294, 0
      %v4397 = vsel %vm454, %v4295, 0
      %v4400 = vsel %vm454, %v4296, 0
      %v4403 = vsel %vm454, %v4297, 0
      %v4406 = vsel %vm454, %v4298, 0
      %v4409 = vsel %vm454, %v4299, 0
      %v4412 = vsel %vm454, %v4300, 0
      %v4415 = vsel %vm454, %v4301, 0
      %v4418 = vsel %vm454, %v4302, 0
      %v4421 = vsel %vm454, %v4303, 0
      %v4424 = vsel %vm454, %v4304, 0
      %v4427 = vsel %vm454, %v4305, 0
      %v4430 = vsel %vm454, %v4306, 0
      %v4433 = vsel %vm578, %v4308, 0
      %4435 = vmatprep.subr.mxu0 0.0
      %4436 = vmatpush1.msra.mxu0 %v4433
      %4437 = vmatprep.subr.mxu0 0.0
      %4438 = vmatpush1.msra.mxu0 0.0
      %4439 = vmatprep.subr.mxu0 0.0
      %4440 = vmatpush1.msra.mxu0 0.0
      %4441 = vmatprep.subr.mxu0 0.0
      %4442 = vmatpush1.msra.mxu0 0.0
      %4443 = vmatprep.subr.mxu0 0.0
      %4444 = vmatpush1.msra.mxu0 0.0
      %4445 = vmatprep.subr.mxu0 0.0
      %4446 = vmatpush1.msra.mxu0 0.0
      %4447 = vmatprep.subr.mxu0 0.0
      %4448 = vmatpush1.msra.mxu0 0.0
      %4449 = vmatprep.subr.mxu0 0.0
      %4450 = vmatpush1.msra.mxu0 0.0
      %4451 = vmatprep.subr.mxu0 0.0
      %4452 = vmatpush1.msra.mxu0 0.0
      %4453 = vmatprep.subr.mxu0 0.0
      %4454 = vmatpush1.msra.mxu0 0.0
      %4455 = vmatprep.subr.mxu0 0.0
      %4456 = vmatpush1.msra.mxu0 0.0
      %4457 = vmatprep.subr.mxu0 0.0
      %4458 = vmatpush1.msra.mxu0 0.0
      %4459 = vmatprep.subr.mxu0 0.0
      %4460 = vmatpush1.msra.mxu0 0.0
      %4461 = vmatprep.subr.mxu0 0.0
      %4462 = vmatpush1.msra.mxu0 0.0
      %4463 = vmatprep.subr.mxu0 0.0
      %4464 = vmatpush1.msra.mxu0 0.0
      %4465 = vmatprep.subr.mxu0 0.0
      %4466 = vmatpush1.msra.mxu0 0.0
      %4467 = vmatprep.subr.mxu0 0.0
      %4468 = vmatpush1.msra.mxu0 0.0
      %4469 = vmatprep.subr.mxu0 0.0
      %4470 = vmatpush1.msra.mxu0 0.0
      %4471 = vmatprep.subr.mxu0 0.0
      %4472 = vmatpush1.msra.mxu0 0.0
      %4473 = vmatprep.subr.mxu0 0.0
      %4474 = vmatpush1.msra.mxu0 0.0
      %4475 = vmatprep.subr.mxu0 0.0
      %4476 = vmatpush1.msra.mxu0 0.0
      %4477 = vmatprep.subr.mxu0 0.0
      %4478 = vmatpush1.msra.mxu0 0.0
      %4479 = vmatprep.subr.mxu0 0.0
      %4480 = vmatpush1.msra.mxu0 0.0
      %4481 = vmatprep.subr.mxu0 0.0
      %4482 = vmatpush1.msra.mxu0 0.0
      %4483 = vmatprep.subr.mxu0 0.0
      %4484 = vmatpush1.msra.mxu0 0.0
      %4485 = vmatprep.subr.mxu0 0.0
      %4486 = vmatpush1.msra.mxu0 0.0
      %4487 = vmatprep.subr.mxu0 0.0
      %4488 = vmatpush1.msra.mxu0 0.0
      %4489 = vmatprep.subr.mxu0 0.0
      %4490 = vmatpush1.msra.mxu0 0.0
      %4491 = vmatprep.subr.mxu0 0.0
      %4492 = vmatpush1.msra.mxu0 0.0
      %4493 = vmatprep.subr.mxu0 0.0
      %4494 = vmatpush1.msra.mxu0 0.0
      %4495 = vmatprep.subr.mxu0 0.0
      %4496 = vmatpush1.msra.mxu0 0.0
      %4497 = vmatprep.subr.mxu0 0.0
      %4498 = vmatpush1.msra.mxu0 0.0
      %4499 = vmatprep.mubr.f32.mxu0 0.0
      %4500 = vmatmul.mubr.f32.gmra.mrb[0].mxu0 %v4310
      %v4501 = vpop.f32.mrb[0].mxu0
      %v4502 = vadd.f32 0.0, %v4501
      %v4503 = vpop.f32.mrb[0].mxu0
      %4504 = vmatprep.mubr.f32.mxu0 0.0
      %4505 = vmatmul.mubr.f32.gmra.mrb[0].mxu0 %v4313
      %v4506 = vpop.f32.mrb[0].mxu0
      %v4507 = vadd.f32 0.0, %v4506
      %v4508 = vpop.f32.mrb[0].mxu0
      %4509 = vmatprep.mubr.f32.mxu0 0.0
      %4510 = vmatmul.mubr.f32.gmra.mrb[0].mxu0 %v4316
      %v4511 = vpop.f32.mrb[0].mxu0
      %v4512 = vadd.f32 0.0, %v4511
      %v4513 = vpop.f32.mrb[0].mxu0
      %4514 = vmatprep.mubr.f32.mxu0 0.0
      %4515 = vmatmul.mubr.f32.gmra.mrb[0].mxu0 %v4319
      %v4516 = vpop.f32.mrb[0].mxu0
      %v4517 = vadd.f32 0.0, %v4516
      %v4518 = vpop.f32.mrb[0].mxu0
      %4519 = vmatprep.mubr.f32.mxu0 0.0
      %4520 = vmatmul.mubr.f32.gmra.mrb[0].mxu0 %v4322
      %v4521 = vpop.f32.mrb[0].mxu0
      %v4522 = vadd.f32 0.0, %v4521
      %v4523 = vpop.f32.mrb[0].mxu0
      %4524 = vmatprep.mubr.f32.mxu0 0.0
      %4525 = vmatmul.mubr.f32.gmra.mrb[0].mxu0 %v4325
      %v4526 = vpop.f32.mrb[0].mxu0
      %v4527 = vadd.f32 0.0, %v4526
      %v4528 = vpop.f32.mrb[0].mxu0
      %4529 = vmatprep.mubr.f32.mxu0 0.0
      %4530 = vmatmul.mubr.f32.gmra.mrb[0].mxu0 %v4328
      %v4531 = vpop.f32.mrb[0].mxu0
      %v4532 = vadd.f32 0.0, %v4531
      %v4533 = vpop.f32.mrb[0].mxu0
      %4534 = vmatprep.mubr.f32.mxu0 0.0
      %4535 = vmatmul.mubr.f32.gmra.mrb[0].mxu0 %v4331
      %v4536 = vpop.f32.mrb[0].mxu0
      %v4537 = vadd.f32 0.0, %v4536
      %v4538 = vpop.f32.mrb[0].mxu0
      %4539 = vmatprep.mubr.f32.mxu0 0.0
      %4540 = vmatmul.mubr.f32.gmra.mrb[0].mxu0 %v4334
      %v4541 = vpop.f32.mrb[0].mxu0
      %v4542 = vadd.f32 0.0, %v4541
      %v4543 = vpop.f32.mrb[0].mxu0
      %4544 = vmatprep.mubr.f32.mxu0 0.0
      %4545 = vmatmul.mubr.f32.gmra.mrb[0].mxu0 %v4337
      %v4546 = vpop.f32.mrb[0].mxu0
      %v4547 = vadd.f32 0.0, %v4546
      %v4548 = vpop.f32.mrb[0].mxu0
      %4549 = vmatprep.mubr.f32.mxu0 0.0
      %4550 = vmatmul.mubr.f32.gmra.mrb[0].mxu0 %v4340
      %v4551 = vpop.f32.mrb[0].mxu0
      %v4552 = vadd.f32 0.0, %v4551
      %v4553 = vpop.f32.mrb[0].mxu0
      %4554 = vmatprep.mubr.f32.mxu0 0.0
      %4555 = vmatmul.mubr.f32.gmra.mrb[0].mxu0 %v4343
      %v4556 = vpop.f32.mrb[0].mxu0
      %v4557 = vadd.f32 0.0, %v4556
      %v4558 = vpop.f32.mrb[0].mxu0
      %4559 = vmatprep.mubr.f32.mxu0 0.0
      %4560 = vmatmul.mubr.f32.gmra.mrb[0].mxu0 %v4346
      %v4561 = vpop.f32.mrb[0].mxu0
      %v4562 = vadd.f32 0.0, %v4561
      %v4563 = vpop.f32.mrb[0].mxu0
      %4564 = vmatprep.mubr.f32.mxu0 0.0
      %4565 = vmatmul.mubr.f32.gmra.mrb[0].mxu0 %v4349
      %v4566 = vpop.f32.mrb[0].mxu0
      %v4567 = vadd.f32 0.0, %v4566
      %v4568 = vpop.f32.mrb[0].mxu0
      %4569 = vmatprep.mubr.f32.mxu0 0.0
      %4570 = vmatmul.mubr.f32.gmra.mrb[0].mxu0 %v4352
      %v4571 = vpop.f32.mrb[0].mxu0
      %v4572 = vadd.f32 0.0, %v4571
      %v4573 = vpop.f32.mrb[0].mxu0
      %4574 = vmatprep.mubr.f32.mxu0 0.0
      %4575 = vmatmul.mubr.f32.gmra.mrb[0].mxu0 %v4355
      %v4576 = vpop.f32.mrb[0].mxu0
      %v4577 = vadd.f32 0.0, %v4576
      %v4578 = vpop.f32.mrb[0].mxu0
      %4579 = vmatprep.mubr.f32.mxu0 0.0
      %4580 = vmatmul.mubr.f32.gmra.mrb[0].mxu0 %v4358
      %v4581 = vpop.f32.mrb[0].mxu0
      %v4582 = vadd.f32 0.0, %v4581
      %v4583 = vpop.f32.mrb[0].mxu0
      %4584 = vmatprep.mubr.f32.mxu0 0.0
      %4585 = vmatmul.mubr.f32.gmra.mrb[0].mxu0 %v4361
      %v4586 = vpop.f32.mrb[0].mxu0
      %v4587 = vadd.f32 0.0, %v4586
      %v4588 = vpop.f32.mrb[0].mxu0
      %4589 = vmatprep.mubr.f32.mxu0 0.0
      %4590 = vmatmul.mubr.f32.gmra.mrb[0].mxu0 %v4364
      %v4591 = vpop.f32.mrb[0].mxu0
      %v4592 = vadd.f32 0.0, %v4591
      %v4593 = vpop.f32.mrb[0].mxu0
      %4594 = vmatprep.mubr.f32.mxu0 0.0
      %4595 = vmatmul.mubr.f32.gmra.mrb[0].mxu0 %v4367
      %v4596 = vpop.f32.mrb[0].mxu0
      %v4597 = vadd.f32 0.0, %v4596
      %v4598 = vpop.f32.mrb[0].mxu0
      %4599 = vmatprep.mubr.f32.mxu0 0.0
      %4600 = vmatmul.mubr.f32.gmra.mrb[0].mxu0 %v4370
      %v4601 = vpop.f32.mrb[0].mxu0
      %v4602 = vadd.f32 0.0, %v4601
      %v4603 = vpop.f32.mrb[0].mxu0
      %4604 = vmatprep.mubr.f32.mxu0 0.0
      %4605 = vmatmul.mubr.f32.gmra.mrb[0].mxu0 %v4373
      %v4606 = vpop.f32.mrb[0].mxu0
      %v4607 = vadd.f32 0.0, %v4606
      %v4608 = vpop.f32.mrb[0].mxu0
      %4609 = vmatprep.mubr.f32.mxu0 0.0
      %4610 = vmatmul.mubr.f32.gmra.mrb[0].mxu0 %v4376
      %v4611 = vpop.f32.mrb[0].mxu0
      %v4612 = vadd.f32 0.0, %v4611
      %v4613 = vpop.f32.mrb[0].mxu0
      %4614 = vmatprep.mubr.f32.mxu0 0.0
      %4615 = vmatmul.mubr.f32.gmra.mrb[0].mxu0 %v4379
      %v4616 = vpop.f32.mrb[0].mxu0
      %v4617 = vadd.f32 0.0, %v4616
      %v4618 = vpop.f32.mrb[0].mxu0
      %4619 = vmatprep.mubr.f32.mxu0 0.0
      %4620 = vmatmul.mubr.f32.gmra.mrb[0].mxu0 %v4382
      %v4621 = vpop.f32.mrb[0].mxu0
      %v4622 = vadd.f32 0.0, %v4621
      %v4623 = vpop.f32.mrb[0].mxu0
      %4624 = vmatprep.mubr.f32.mxu0 0.0
      %4625 = vmatmul.mubr.f32.gmra.mrb[0].mxu0 %v4385
      %v4626 = vpop.f32.mrb[0].mxu0
      %v4627 = vadd.f32 0.0, %v4626
      %v4628 = vpop.f32.mrb[0].mxu0
      %4629 = vmatprep.mubr.f32.mxu0 0.0
      %4630 = vmatmul.mubr.f32.gmra.mrb[0].mxu0 %v4388
      %v4631 = vpop.f32.mrb[0].mxu0
      %v4632 = vadd.f32 0.0, %v4631
      %v4633 = vpop.f32.mrb[0].mxu0
      %4634 = vmatprep.mubr.f32.mxu0 0.0
      %4635 = vmatmul.mubr.f32.gmra.mrb[0].mxu0 %v4391
      %v4636 = vpop.f32.mrb[0].mxu0
      %v4637 = vadd.f32 0.0, %v4636
      %v4638 = vpop.f32.mrb[0].mxu0
      %4639 = vmatprep.mubr.f32.mxu0 0.0
      %4640 = vmatmul.mubr.f32.gmra.mrb[0].mxu0 %v4394
      %v4641 = vpop.f32.mrb[0].mxu0
      %v4642 = vadd.f32 0.0, %v4641
      %v4643 = vpop.f32.mrb[0].mxu0
      %4644 = vmatprep.mubr.f32.mxu0 0.0
      %4645 = vmatmul.mubr.f32.gmra.mrb[0].mxu0 %v4397
      %v4646 = vpop.f32.mrb[0].mxu0
      %v4647 = vadd.f32 0.0, %v4646
      %v4648 = vpop.f32.mrb[0].mxu0
      %4649 = vmatprep.mubr.f32.mxu0 0.0
      %4650 = vmatmul.mubr.f32.gmra.mrb[0].mxu0 %v4400
      %v4651 = vpop.f32.mrb[0].mxu0
      %v4652 = vadd.f32 0.0, %v4651
      %v4653 = vpop.f32.mrb[0].mxu0
      %4654 = vmatprep.mubr.f32.mxu0 0.0
      %4655 = vmatmul.mubr.f32.gmra.mrb[0].mxu0 %v4403
      %v4656 = vpop.f32.mrb[0].mxu0
      %v4657 = vadd.f32 0.0, %v4656
      %v4658 = vpop.f32.mrb[0].mxu0
      %4659 = vmatprep.mubr.f32.mxu0 0.0
      %4660 = vmatmul.mubr.f32.gmra.mrb[0].mxu0 %v4406
      %v4661 = vpop.f32.mrb[0].mxu0
      %v4662 = vadd.f32 0.0, %v4661
      %v4663 = vpop.f32.mrb[0].mxu0
      %4664 = vmatprep.mubr.f32.mxu0 0.0
      %4665 = vmatmul.mubr.f32.gmra.mrb[0].mxu0 %v4409
      %v4666 = vpop.f32.mrb[0].mxu0
      %v4667 = vadd.f32 0.0, %v4666
      %v4668 = vpop.f32.mrb[0].mxu0
      %4669 = vmatprep.mubr.f32.mxu0 0.0
      %4670 = vmatmul.mubr.f32.gmra.mrb[0].mxu0 %v4412
      %v4671 = vpop.f32.mrb[0].mxu0
      %v4672 = vadd.f32 0.0, %v4671
      %v4673 = vpop.f32.mrb[0].mxu0
      %4674 = vmatprep.mubr.f32.mxu0 0.0
      %4675 = vmatmul.mubr.f32.gmra.mrb[0].mxu0 %v4415
      %v4676 = vpop.f32.mrb[0].mxu0
      %v4677 = vadd.f32 0.0, %v4676
      %v4678 = vpop.f32.mrb[0].mxu0
      %4679 = vmatprep.mubr.f32.mxu0 0.0
      %4680 = vmatmul.mubr.f32.gmra.mrb[0].mxu0 %v4418
      %v4681 = vpop.f32.mrb[0].mxu0
      %v4682 = vadd.f32 0.0, %v4681
      %v4683 = vpop.f32.mrb[0].mxu0
      %4684 = vmatprep.mubr.f32.mxu0 0.0
      %4685 = vmatmul.mubr.f32.gmra.mrb[0].mxu0 %v4421
      %v4686 = vpop.f32.mrb[0].mxu0
      %v4687 = vadd.f32 0.0, %v4686
      %v4688 = vpop.f32.mrb[0].mxu0
      %4689 = vmatprep.mubr.f32.mxu0 0.0
      %4690 = vmatmul.mubr.f32.gmra.mrb[0].mxu0 %v4424
      %v4691 = vpop.f32.mrb[0].mxu0
      %v4692 = vadd.f32 0.0, %v4691
      %v4693 = vpop.f32.mrb[0].mxu0
      %4694 = vmatprep.mubr.f32.mxu0 0.0
      %4695 = vmatmul.mubr.f32.gmra.mrb[0].mxu0 %v4427
      %v4696 = vpop.f32.mrb[0].mxu0
      %v4697 = vadd.f32 0.0, %v4696
      %v4698 = vpop.f32.mrb[0].mxu0
      %4699 = vmatprep.mubr.f32.mxu0 0.0
      %4700 = vmatmul.mubr.f32.gmra.mrb[0].mxu0 %v4430
      %v4701 = vpop.f32.mrb[0].mxu0
      %v4702 = vadd.f32 0.0, %v4701
      %v4703 = vpop.f32.mrb[0].mxu0
      %4704 = vdwg.mxu0
      %v4705 = vld [vmem:[#allocation2] sm:$0xff]
      %v4706 = vld [vmem:[#allocation2 + $0x8] sm:$0xff]
      %v4707 = vld [vmem:[#allocation2 + $0x10] sm:$0xff]
      %v4708 = vld [vmem:[#allocation2 + $0x18] sm:$0xff]
      %v4709 = vld [vmem:[#allocation2 + $0x20] sm:$0xff]
      %v4710 = vld [vmem:[#allocation2 + $0x28] sm:$0xff]
      %v4711 = vld [vmem:[#allocation2 + $0x30] sm:$0xff]
      %v4712 = vld [vmem:[#allocation2 + $0x38] sm:$0xff]
      %v4713 = vld [vmem:[#allocation2 + $0x40] sm:$0xff]
      %v4714 = vld [vmem:[#allocation2 + $0x48] sm:$0xff]
      %v4715 = vld [vmem:[#allocation2 + $0x50] sm:$0xff]
      %v4716 = vld [vmem:[#allocation2 + $0x58] sm:$0xff]
      %v4717 = vld [vmem:[#allocation2 + $0x60] sm:$0xff]
      %v4718 = vld [vmem:[#allocation2 + $0x68] sm:$0xff]
      %v4719 = vld [vmem:[#allocation2 + $0x70] sm:$0xff]
      %v4720 = vld [vmem:[#allocation2 + $0x78] sm:$0xff]
      %v4721 = vld [vmem:[#allocation2 + $0x80] sm:$0xff]
      %v4722 = vld [vmem:[#allocation2 + $0x88] sm:$0xff]
      %v4723 = vld [vmem:[#allocation2 + $0x90] sm:$0xff]
      %v4724 = vld [vmem:[#allocation2 + $0x98] sm:$0xff]
      %v4725 = vld [vmem:[#allocation2 + $0xa0] sm:$0xff]
      %v4726 = vld [vmem:[#allocation2 + $0xa8] sm:$0xff]
      %v4727 = vld [vmem:[#allocation2 + $0xb0] sm:$0xff]
      %v4728 = vld [vmem:[#allocation2 + $0xb8] sm:$0xff]
      %v4729 = vld [vmem:[#allocation2 + $0xc0] sm:$0xff]
      %v4730 = vld [vmem:[#allocation2 + $0xc8] sm:$0xff]
      %v4731 = vld [vmem:[#allocation2 + $0xd0] sm:$0xff]
      %v4732 = vld [vmem:[#allocation2 + $0xd8] sm:$0xff]
      %v4733 = vld [vmem:[#allocation2 + $0xe0] sm:$0xff]
      %v4734 = vld [vmem:[#allocation2 + $0xe8] sm:$0xff]
      %v4735 = vld [vmem:[#allocation2 + $0xf0] sm:$0xff]
      %v4736 = vld [vmem:[#allocation2 + $0xf8] sm:$0xff]
      %v4737 = vld [vmem:[#allocation2 + $0x100] sm:$0xff]
      %v4738 = vld [vmem:[#allocation2 + $0x108] sm:$0xff]
      %v4739 = vld [vmem:[#allocation2 + $0x110] sm:$0xff]
      %v4740 = vld [vmem:[#allocation2 + $0x118] sm:$0xff]
      %v4741 = vld [vmem:[#allocation2 + $0x120] sm:$0xff]
      %v4742 = vld [vmem:[#allocation2 + $0x128] sm:$0xff]
      %v4743 = vld [vmem:[#allocation2 + $0x130] sm:$0xff]
      %v4744 = vld [vmem:[#allocation2 + $0x138] sm:$0xff]
      %v4745 = vld [vmem:[#allocation2 + $0x140] sm:$0xf]
      %v4746 = vadd.f32 %v4705, %v4502
      %v4747 = vadd.f32 %v4706, %v4507
      %v4748 = vadd.f32 %v4707, %v4512
      %v4749 = vadd.f32 %v4708, %v4517
      %v4750 = vadd.f32 %v4709, %v4522
      %v4751 = vadd.f32 %v4710, %v4527
      %v4752 = vadd.f32 %v4711, %v4532
      %v4753 = vadd.f32 %v4712, %v4537
      %v4754 = vadd.f32 %v4713, %v4542
      %v4755 = vadd.f32 %v4714, %v4547
      %v4756 = vadd.f32 %v4715, %v4552
      %v4757 = vadd.f32 %v4716, %v4557
      %v4758 = vadd.f32 %v4717, %v4562
      %v4759 = vadd.f32 %v4718, %v4567
      %v4760 = vadd.f32 %v4719, %v4572
      %v4761 = vadd.f32 %v4720, %v4577
      %v4762 = vadd.f32 %v4721, %v4582
      %v4763 = vadd.f32 %v4722, %v4587
      %v4764 = vadd.f32 %v4723, %v4592
      %v4765 = vadd.f32 %v4724, %v4597
      %v4766 = vadd.f32 %v4725, %v4602
      %v4767 = vadd.f32 %v4726, %v4607
      %v4768 = vadd.f32 %v4727, %v4612
      %v4769 = vadd.f32 %v4728, %v4617
      %v4770 = vadd.f32 %v4729, %v4622
      %v4771 = vadd.f32 %v4730, %v4627
      %v4772 = vadd.f32 %v4731, %v4632
      %v4773 = vadd.f32 %v4732, %v4637
      %v4774 = vadd.f32 %v4733, %v4642
      %v4775 = vadd.f32 %v4734, %v4647
      %v4776 = vadd.f32 %v4735, %v4652
      %v4777 = vadd.f32 %v4736, %v4657
      %v4778 = vadd.f32 %v4737, %v4662
      %v4779 = vadd.f32 %v4738, %v4667
      %v4780 = vadd.f32 %v4739, %v4672
      %v4781 = vadd.f32 %v4740, %v4677
      %v4782 = vadd.f32 %v4741, %v4682
      %v4783 = vadd.f32 %v4742, %v4687
      %v4784 = vadd.f32 %v4743, %v4692
      %v4785 = vadd.f32 %v4744, %v4697
      %v4786 = vadd.f32 %v4745, %v4702
      %4787 = vst.msk [vmem:[#allocation2] sm:$0xff] %vm385, %v4746
      %4788 = vst.msk [vmem:[#allocation2 + $0x8] sm:$0xff] %vm385, %v4747
      %4789 = vst.msk [vmem:[#allocation2 + $0x10] sm:$0xff] %vm385, %v4748
      %4790 = vst.msk [vmem:[#allocation2 + $0x18] sm:$0xff] %vm385, %v4749
      %4791 = vst.msk [vmem:[#allocation2 + $0x20] sm:$0xff] %vm385, %v4750
      %4792 = vst.msk [vmem:[#allocation2 + $0x28] sm:$0xff] %vm385, %v4751
      %4793 = vst.msk [vmem:[#allocation2 + $0x30] sm:$0xff] %vm385, %v4752
      %4794 = vst.msk [vmem:[#allocation2 + $0x38] sm:$0xff] %vm385, %v4753
      %4795 = vst.msk [vmem:[#allocation2 + $0x40] sm:$0xff] %vm385, %v4754
      %4796 = vst.msk [vmem:[#allocation2 + $0x48] sm:$0xff] %vm385, %v4755
      %4797 = vst.msk [vmem:[#allocation2 + $0x50] sm:$0xff] %vm385, %v4756
      %4798 = vst.msk [vmem:[#allocation2 + $0x58] sm:$0xff] %vm385, %v4757
      %4799 = vst.msk [vmem:[#allocation2 + $0x60] sm:$0xff] %vm385, %v4758
      %4800 = vst.msk [vmem:[#allocation2 + $0x68] sm:$0xff] %vm385, %v4759
      %4801 = vst.msk [vmem:[#allocation2 + $0x70] sm:$0xff] %vm385, %v4760
      %4802 = vst.msk [vmem:[#allocation2 + $0x78] sm:$0xff] %vm385, %v4761
      %4803 = vst.msk [vmem:[#allocation2 + $0x80] sm:$0xff] %vm385, %v4762
      %4804 = vst.msk [vmem:[#allocation2 + $0x88] sm:$0xff] %vm385, %v4763
      %4805 = vst.msk [vmem:[#allocation2 + $0x90] sm:$0xff] %vm385, %v4764
      %4806 = vst.msk [vmem:[#allocation2 + $0x98] sm:$0xff] %vm385, %v4765
      %4807 = vst.msk [vmem:[#allocation2 + $0xa0] sm:$0xff] %vm385, %v4766
      %4808 = vst.msk [vmem:[#allocation2 + $0xa8] sm:$0xff] %vm385, %v4767
      %4809 = vst.msk [vmem:[#allocation2 + $0xb0] sm:$0xff] %vm385, %v4768
      %4810 = vst.msk [vmem:[#allocation2 + $0xb8] sm:$0xff] %vm385, %v4769
      %4811 = vst.msk [vmem:[#allocation2 + $0xc0] sm:$0xff] %vm385, %v4770
      %4812 = vst.msk [vmem:[#allocation2 + $0xc8] sm:$0xff] %vm385, %v4771
      %4813 = vst.msk [vmem:[#allocation2 + $0xd0] sm:$0xff] %vm385, %v4772
      %4814 = vst.msk [vmem:[#allocation2 + $0xd8] sm:$0xff] %vm385, %v4773
      %4815 = vst.msk [vmem:[#allocation2 + $0xe0] sm:$0xff] %vm385, %v4774
      %4816 = vst.msk [vmem:[#allocation2 + $0xe8] sm:$0xff] %vm385, %v4775
      %4817 = vst.msk [vmem:[#allocation2 + $0xf0] sm:$0xff] %vm385, %v4776
      %4818 = vst.msk [vmem:[#allocation2 + $0xf8] sm:$0xff] %vm385, %v4777
      %4819 = vst.msk [vmem:[#allocation2 + $0x100] sm:$0xff] %vm385, %v4778
      %4820 = vst.msk [vmem:[#allocation2 + $0x108] sm:$0xff] %vm385, %v4779
      %4821 = vst.msk [vmem:[#allocation2 + $0x110] sm:$0xff] %vm385, %v4780
      %4822 = vst.msk [vmem:[#allocation2 + $0x118] sm:$0xff] %vm385, %v4781
      %4823 = vst.msk [vmem:[#allocation2 + $0x120] sm:$0xff] %vm385, %v4782
      %4824 = vst.msk [vmem:[#allocation2 + $0x128] sm:$0xff] %vm385, %v4783
      %4825 = vst.msk [vmem:[#allocation2 + $0x130] sm:$0xff] %vm385, %v4784
      %4826 = vst.msk [vmem:[#allocation2 + $0x138] sm:$0xff] %vm385, %v4785
      %4827 = vst.msk [vmem:[#allocation2 + $0x140] sm:$0xf] %vm892, %v4786
      %v4828 = vld [vmem:[%s381 + $0x26] sm:$0xff]
      %v4829 = vld [vmem:[%s381 + $0x2e] sm:$0xff]
      %v4830 = vld [vmem:[%s381 + $0x36] sm:$0xff]
      %v4831 = vld [vmem:[%s381 + $0x3e] sm:$0xff]
      %v4832 = vld [vmem:[%s381 + $0x46] sm:$0xff]
      %v4833 = vld [vmem:[%s381 + $0x4e] sm:$0xff]
      %v4834 = vld [vmem:[%s381 + $0x56] sm:$0xff]
      %v4835 = vld [vmem:[%s381 + $0x5e] sm:$0xff]
      %v4836 = vld [vmem:[%s381 + $0x66] sm:$0xff]
      %v4837 = vld [vmem:[%s381 + $0x6e] sm:$0xff]
      %v4838 = vld [vmem:[%s381 + $0x76] sm:$0xff]
      %v4839 = vld [vmem:[%s381 + $0x7e] sm:$0xff]
      %v4840 = vld [vmem:[%s381 + $0x86] sm:$0xff]
      %v4841 = vld [vmem:[%s381 + $0x8e] sm:$0xff]
      %v4842 = vld [vmem:[%s381 + $0x96] sm:$0xff]
      %v4843 = vld [vmem:[%s381 + $0x9e] sm:$0xff]
      %v4844 = vld [vmem:[%s381 + $0xa6] sm:$0xff]
      %v4845 = vld [vmem:[%s381 + $0xae] sm:$0xff]
      %v4846 = vld [vmem:[%s381 + $0xb6] sm:$0xff]
      %v4847 = vld [vmem:[%s381 + $0xbe] sm:$0xff]
      %v4848 = vld [vmem:[%s381 + $0xc6] sm:$0xff]
      %v4849 = vld [vmem:[%s381 + $0xce] sm:$0xff]
      %v4850 = vld [vmem:[%s381 + $0xd6] sm:$0xff]
      %v4851 = vld [vmem:[%s381 + $0xde] sm:$0xff]
      %v4852 = vld [vmem:[%s381 + $0xe6] sm:$0xff]
      %v4853 = vld [vmem:[%s381 + $0xee] sm:$0xff]
      %v4854 = vld [vmem:[%s381 + $0xf6] sm:$0xff]
      %v4855 = vld [vmem:[%s381 + $0xfe] sm:$0xff]
      %v4856 = vld [vmem:[%s381 + $0x106] sm:$0xff]
      %v4857 = vld [vmem:[%s381 + $0x10e] sm:$0xff]
      %v4858 = vld [vmem:[%s381 + $0x116] sm:$0xff]
      %v4859 = vld [vmem:[%s381 + $0x11e] sm:$0xff]
      %v4860 = vld [vmem:[%s381 + $0x126] sm:$0xff]
      %v4861 = vld [vmem:[%s381 + $0x12e] sm:$0xff]
      %v4862 = vld [vmem:[%s381 + $0x136] sm:$0xff]
      %v4863 = vld [vmem:[%s381 + $0x13e] sm:$0xff]
      %v4864 = vld [vmem:[%s381 + $0x146] sm:$0xff]
      %v4865 = vld [vmem:[%s381 + $0x14e] sm:$0xff]
      %v4866 = vld [vmem:[%s381 + $0x156] sm:$0xff]
      %v4867 = vld [vmem:[%s381 + $0x15e] sm:$0xff]
      %v4868 = vld [vmem:[%s381 + $0x166] sm:$0xf]
      %s4869 = scalar_lea.vmem %s1, 32
      %v4870 = vld [vmem:[%s4869] sm:$0x7]
      %v4872 = vsel %vm454, %v4828, 0
      %v4875 = vsel %vm454, %v4829, 0
      %v4878 = vsel %vm454, %v4830, 0
      %v4881 = vsel %vm454, %v4831, 0
      %v4884 = vsel %vm454, %v4832, 0
      %v4887 = vsel %vm454, %v4833, 0
      %v4890 = vsel %vm454, %v4834, 0
      %v4893 = vsel %vm454, %v4835, 0
      %v4896 = vsel %vm454, %v4836, 0
      %v4899 = vsel %vm454, %v4837, 0
      %v4902 = vsel %vm454, %v4838, 0
      %v4905 = vsel %vm454, %v4839, 0
      %v4908 = vsel %vm454, %v4840, 0
      %v4911 = vsel %vm454, %v4841, 0
      %v4914 = vsel %vm454, %v4842, 0
      %v4917 = vsel %vm454, %v4843, 0
      %v4920 = vsel %vm454, %v4844, 0
      %v4923 = vsel %vm454, %v4845, 0
      %v4926 = vsel %vm454, %v4846, 0
      %v4929 = vsel %vm454, %v4847, 0
      %v4932 = vsel %vm454, %v4848, 0
      %v4935 = vsel %vm454, %v4849, 0
      %v4938 = vsel %vm454, %v4850, 0
      %v4941 = vsel %vm454, %v4851, 0
      %v4944 = vsel %vm454, %v4852, 0
      %v4947 = vsel %vm454, %v4853, 0
      %v4950 = vsel %vm454, %v4854, 0
      %v4953 = vsel %vm454, %v4855, 0
      %v4956 = vsel %vm454, %v4856, 0
      %v4959 = vsel %vm454, %v4857, 0
      %v4962 = vsel %vm454, %v4858, 0
      %v4965 = vsel %vm454, %v4859, 0
      %v4968 = vsel %vm454, %v4860, 0
      %v4971 = vsel %vm454, %v4861, 0
      %v4974 = vsel %vm454, %v4862, 0
      %v4977 = vsel %vm454, %v4863, 0
      %v4980 = vsel %vm454, %v4864, 0
      %v4983 = vsel %vm454, %v4865, 0
      %v4986 = vsel %vm454, %v4866, 0
      %v4989 = vsel %vm454, %v4867, 0
      %v4992 = vsel %vm454, %v4868, 0
      %v4995 = vsel %vm578, %v4870, 0
      %4997 = vmatprep.subr.mxu0 0.0
      %4998 = vmatpush1.msra.mxu0 %v4995
      %4999 = vmatprep.subr.mxu0 0.0
      %5000 = vmatpush1.msra.mxu0 0.0
      %5001 = vmatprep.subr.mxu0 0.0
      %5002 = vmatpush1.msra.mxu0 0.0
      %5003 = vmatprep.subr.mxu0 0.0
      %5004 = vmatpush1.msra.mxu0 0.0
      %5005 = vmatprep.subr.mxu0 0.0
      %5006 = vmatpush1.msra.mxu0 0.0
      %5007 = vmatprep.subr.mxu0 0.0
      %5008 = vmatpush1.msra.mxu0 0.0
      %5009 = vmatprep.subr.mxu0 0.0
      %5010 = vmatpush1.msra.mxu0 0.0
      %5011 = vmatprep.subr.mxu0 0.0
      %5012 = vmatpush1.msra.mxu0 0.0
      %5013 = vmatprep.subr.mxu0 0.0
      %5014 = vmatpush1.msra.mxu0 0.0
      %5015 = vmatprep.subr.mxu0 0.0
      %5016 = vmatpush1.msra.mxu0 0.0
      %5017 = vmatprep.subr.mxu0 0.0
      %5018 = vmatpush1.msra.mxu0 0.0
      %5019 = vmatprep.subr.mxu0 0.0
      %5020 = vmatpush1.msra.mxu0 0.0
      %5021 = vmatprep.subr.mxu0 0.0
      %5022 = vmatpush1.msra.mxu0 0.0
      %5023 = vmatprep.subr.mxu0 0.0
      %5024 = vmatpush1.msra.mxu0 0.0
      %5025 = vmatprep.subr.mxu0 0.0
      %5026 = vmatpush1.msra.mxu0 0.0
      %5027 = vmatprep.subr.mxu0 0.0
      %5028 = vmatpush1.msra.mxu0 0.0
      %5029 = vmatprep.subr.mxu0 0.0
      %5030 = vmatpush1.msra.mxu0 0.0
      %5031 = vmatprep.subr.mxu0 0.0
      %5032 = vmatpush1.msra.mxu0 0.0
      %5033 = vmatprep.subr.mxu0 0.0
      %5034 = vmatpush1.msra.mxu0 0.0
      %5035 = vmatprep.subr.mxu0 0.0
      %5036 = vmatpush1.msra.mxu0 0.0
      %5037 = vmatprep.subr.mxu0 0.0
      %5038 = vmatpush1.msra.mxu0 0.0
      %5039 = vmatprep.subr.mxu0 0.0
      %5040 = vmatpush1.msra.mxu0 0.0
      %5041 = vmatprep.subr.mxu0 0.0
      %5042 = vmatpush1.msra.mxu0 0.0
      %5043 = vmatprep.subr.mxu0 0.0
      %5044 = vmatpush1.msra.mxu0 0.0
      %5045 = vmatprep.subr.mxu0 0.0
      %5046 = vmatpush1.msra.mxu0 0.0
      %5047 = vmatprep.subr.mxu0 0.0
      %5048 = vmatpush1.msra.mxu0 0.0
      %5049 = vmatprep.subr.mxu0 0.0
      %5050 = vmatpush1.msra.mxu0 0.0
      %5051 = vmatprep.subr.mxu0 0.0
      %5052 = vmatpush1.msra.mxu0 0.0
      %5053 = vmatprep.subr.mxu0 0.0
      %5054 = vmatpush1.msra.mxu0 0.0
      %5055 = vmatprep.subr.mxu0 0.0
      %5056 = vmatpush1.msra.mxu0 0.0
      %5057 = vmatprep.subr.mxu0 0.0
      %5058 = vmatpush1.msra.mxu0 0.0
      %5059 = vmatprep.subr.mxu0 0.0
      %5060 = vmatpush1.msra.mxu0 0.0
      %5061 = vmatprep.mubr.f32.mxu0 0.0
      %5062 = vmatmul.mubr.f32.gmra.mrb[0].mxu0 %v4872
      %v5063 = vpop.f32.mrb[0].mxu0
      %v5064 = vadd.f32 0.0, %v5063
      %v5065 = vpop.f32.mrb[0].mxu0
      %5066 = vmatprep.mubr.f32.mxu0 0.0
      %5067 = vmatmul.mubr.f32.gmra.mrb[0].mxu0 %v4875
      %v5068 = vpop.f32.mrb[0].mxu0
      %v5069 = vadd.f32 0.0, %v5068
      %v5070 = vpop.f32.mrb[0].mxu0
      %5071 = vmatprep.mubr.f32.mxu0 0.0
      %5072 = vmatmul.mubr.f32.gmra.mrb[0].mxu0 %v4878
      %v5073 = vpop.f32.mrb[0].mxu0
      %v5074 = vadd.f32 0.0, %v5073
      %v5075 = vpop.f32.mrb[0].mxu0
      %5076 = vmatprep.mubr.f32.mxu0 0.0
      %5077 = vmatmul.mubr.f32.gmra.mrb[0].mxu0 %v4881
      %v5078 = vpop.f32.mrb[0].mxu0
      %v5079 = vadd.f32 0.0, %v5078
      %v5080 = vpop.f32.mrb[0].mxu0
      %5081 = vmatprep.mubr.f32.mxu0 0.0
      %5082 = vmatmul.mubr.f32.gmra.mrb[0].mxu0 %v4884
      %v5083 = vpop.f32.mrb[0].mxu0
      %v5084 = vadd.f32 0.0, %v5083
      %v5085 = vpop.f32.mrb[0].mxu0
      %5086 = vmatprep.mubr.f32.mxu0 0.0
      %5087 = vmatmul.mubr.f32.gmra.mrb[0].mxu0 %v4887
      %v5088 = vpop.f32.mrb[0].mxu0
      %v5089 = vadd.f32 0.0, %v5088
      %v5090 = vpop.f32.mrb[0].mxu0
      %5091 = vmatprep.mubr.f32.mxu0 0.0
      %5092 = vmatmul.mubr.f32.gmra.mrb[0].mxu0 %v4890
      %v5093 = vpop.f32.mrb[0].mxu0
      %v5094 = vadd.f32 0.0, %v5093
      %v5095 = vpop.f32.mrb[0].mxu0
      %5096 = vmatprep.mubr.f32.mxu0 0.0
      %5097 = vmatmul.mubr.f32.gmra.mrb[0].mxu0 %v4893
      %v5098 = vpop.f32.mrb[0].mxu0
      %v5099 = vadd.f32 0.0, %v5098
      %v5100 = vpop.f32.mrb[0].mxu0
      %5101 = vmatprep.mubr.f32.mxu0 0.0
      %5102 = vmatmul.mubr.f32.gmra.mrb[0].mxu0 %v4896
      %v5103 = vpop.f32.mrb[0].mxu0
      %v5104 = vadd.f32 0.0, %v5103
      %v5105 = vpop.f32.mrb[0].mxu0
      %5106 = vmatprep.mubr.f32.mxu0 0.0
      %5107 = vmatmul.mubr.f32.gmra.mrb[0].mxu0 %v4899
      %v5108 = vpop.f32.mrb[0].mxu0
      %v5109 = vadd.f32 0.0, %v5108
      %v5110 = vpop.f32.mrb[0].mxu0
      %5111 = vmatprep.mubr.f32.mxu0 0.0
      %5112 = vmatmul.mubr.f32.gmra.mrb[0].mxu0 %v4902
      %v5113 = vpop.f32.mrb[0].mxu0
      %v5114 = vadd.f32 0.0, %v5113
      %v5115 = vpop.f32.mrb[0].mxu0
      %5116 = vmatprep.mubr.f32.mxu0 0.0
      %5117 = vmatmul.mubr.f32.gmra.mrb[0].mxu0 %v4905
      %v5118 = vpop.f32.mrb[0].mxu0
      %v5119 = vadd.f32 0.0, %v5118
      %v5120 = vpop.f32.mrb[0].mxu0
      %5121 = vmatprep.mubr.f32.mxu0 0.0
      %5122 = vmatmul.mubr.f32.gmra.mrb[0].mxu0 %v4908
      %v5123 = vpop.f32.mrb[0].mxu0
      %v5124 = vadd.f32 0.0, %v5123
      %v5125 = vpop.f32.mrb[0].mxu0
      %5126 = vmatprep.mubr.f32.mxu0 0.0
      %5127 = vmatmul.mubr.f32.gmra.mrb[0].mxu0 %v4911
      %v5128 = vpop.f32.mrb[0].mxu0
      %v5129 = vadd.f32 0.0, %v5128
      %v5130 = vpop.f32.mrb[0].mxu0
      %5131 = vmatprep.mubr.f32.mxu0 0.0
      %5132 = vmatmul.mubr.f32.gmra.mrb[0].mxu0 %v4914
      %v5133 = vpop.f32.mrb[0].mxu0
      %v5134 = vadd.f32 0.0, %v5133
      %v5135 = vpop.f32.mrb[0].mxu0
      %5136 = vmatprep.mubr.f32.mxu0 0.0
      %5137 = vmatmul.mubr.f32.gmra.mrb[0].mxu0 %v4917
      %v5138 = vpop.f32.mrb[0].mxu0
      %v5139 = vadd.f32 0.0, %v5138
      %v5140 = vpop.f32.mrb[0].mxu0
      %5141 = vmatprep.mubr.f32.mxu0 0.0
      %5142 = vmatmul.mubr.f32.gmra.mrb[0].mxu0 %v4920
      %v5143 = vpop.f32.mrb[0].mxu0
      %v5144 = vadd.f32 0.0, %v5143
      %v5145 = vpop.f32.mrb[0].mxu0
      %5146 = vmatprep.mubr.f32.mxu0 0.0
      %5147 = vmatmul.mubr.f32.gmra.mrb[0].mxu0 %v4923
      %v5148 = vpop.f32.mrb[0].mxu0
      %v5149 = vadd.f32 0.0, %v5148
      %v5150 = vpop.f32.mrb[0].mxu0
      %5151 = vmatprep.mubr.f32.mxu0 0.0
      %5152 = vmatmul.mubr.f32.gmra.mrb[0].mxu0 %v4926
      %v5153 = vpop.f32.mrb[0].mxu0
      %v5154 = vadd.f32 0.0, %v5153
      %v5155 = vpop.f32.mrb[0].mxu0
      %5156 = vmatprep.mubr.f32.mxu0 0.0
      %5157 = vmatmul.mubr.f32.gmra.mrb[0].mxu0 %v4929
      %v5158 = vpop.f32.mrb[0].mxu0
      %v5159 = vadd.f32 0.0, %v5158
      %v5160 = vpop.f32.mrb[0].mxu0
      %5161 = vmatprep.mubr.f32.mxu0 0.0
      %5162 = vmatmul.mubr.f32.gmra.mrb[0].mxu0 %v4932
      %v5163 = vpop.f32.mrb[0].mxu0
      %v5164 = vadd.f32 0.0, %v5163
      %v5165 = vpop.f32.mrb[0].mxu0
      %5166 = vmatprep.mubr.f32.mxu0 0.0
      %5167 = vmatmul.mubr.f32.gmra.mrb[0].mxu0 %v4935
      %v5168 = vpop.f32.mrb[0].mxu0
      %v5169 = vadd.f32 0.0, %v5168
      %v5170 = vpop.f32.mrb[0].mxu0
      %5171 = vmatprep.mubr.f32.mxu0 0.0
      %5172 = vmatmul.mubr.f32.gmra.mrb[0].mxu0 %v4938
      %v5173 = vpop.f32.mrb[0].mxu0
      %v5174 = vadd.f32 0.0, %v5173
      %v5175 = vpop.f32.mrb[0].mxu0
      %5176 = vmatprep.mubr.f32.mxu0 0.0
      %5177 = vmatmul.mubr.f32.gmra.mrb[0].mxu0 %v4941
      %v5178 = vpop.f32.mrb[0].mxu0
      %v5179 = vadd.f32 0.0, %v5178
      %v5180 = vpop.f32.mrb[0].mxu0
      %5181 = vmatprep.mubr.f32.mxu0 0.0
      %5182 = vmatmul.mubr.f32.gmra.mrb[0].mxu0 %v4944
      %v5183 = vpop.f32.mrb[0].mxu0
      %v5184 = vadd.f32 0.0, %v5183
      %v5185 = vpop.f32.mrb[0].mxu0
      %5186 = vmatprep.mubr.f32.mxu0 0.0
      %5187 = vmatmul.mubr.f32.gmra.mrb[0].mxu0 %v4947
      %v5188 = vpop.f32.mrb[0].mxu0
      %v5189 = vadd.f32 0.0, %v5188
      %v5190 = vpop.f32.mrb[0].mxu0
      %5191 = vmatprep.mubr.f32.mxu0 0.0
      %5192 = vmatmul.mubr.f32.gmra.mrb[0].mxu0 %v4950
      %v5193 = vpop.f32.mrb[0].mxu0
      %v5194 = vadd.f32 0.0, %v5193
      %v5195 = vpop.f32.mrb[0].mxu0
      %5196 = vmatprep.mubr.f32.mxu0 0.0
      %5197 = vmatmul.mubr.f32.gmra.mrb[0].mxu0 %v4953
      %v5198 = vpop.f32.mrb[0].mxu0
      %v5199 = vadd.f32 0.0, %v5198
      %v5200 = vpop.f32.mrb[0].mxu0
      %5201 = vmatprep.mubr.f32.mxu0 0.0
      %5202 = vmatmul.mubr.f32.gmra.mrb[0].mxu0 %v4956
      %v5203 = vpop.f32.mrb[0].mxu0
      %v5204 = vadd.f32 0.0, %v5203
      %v5205 = vpop.f32.mrb[0].mxu0
      %5206 = vmatprep.mubr.f32.mxu0 0.0
      %5207 = vmatmul.mubr.f32.gmra.mrb[0].mxu0 %v4959
      %v5208 = vpop.f32.mrb[0].mxu0
      %v5209 = vadd.f32 0.0, %v5208
      %v5210 = vpop.f32.mrb[0].mxu0
      %5211 = vmatprep.mubr.f32.mxu0 0.0
      %5212 = vmatmul.mubr.f32.gmra.mrb[0].mxu0 %v4962
      %v5213 = vpop.f32.mrb[0].mxu0
      %v5214 = vadd.f32 0.0, %v5213
      %v5215 = vpop.f32.mrb[0].mxu0
      %5216 = vmatprep.mubr.f32.mxu0 0.0
      %5217 = vmatmul.mubr.f32.gmra.mrb[0].mxu0 %v4965
      %v5218 = vpop.f32.mrb[0].mxu0
      %v5219 = vadd.f32 0.0, %v5218
      %v5220 = vpop.f32.mrb[0].mxu0
      %5221 = vmatprep.mubr.f32.mxu0 0.0
      %5222 = vmatmul.mubr.f32.gmra.mrb[0].mxu0 %v4968
      %v5223 = vpop.f32.mrb[0].mxu0
      %v5224 = vadd.f32 0.0, %v5223
      %v5225 = vpop.f32.mrb[0].mxu0
      %5226 = vmatprep.mubr.f32.mxu0 0.0
      %5227 = vmatmul.mubr.f32.gmra.mrb[0].mxu0 %v4971
      %v5228 = vpop.f32.mrb[0].mxu0
      %v5229 = vadd.f32 0.0, %v5228
      %v5230 = vpop.f32.mrb[0].mxu0
      %5231 = vmatprep.mubr.f32.mxu0 0.0
      %5232 = vmatmul.mubr.f32.gmra.mrb[0].mxu0 %v4974
      %v5233 = vpop.f32.mrb[0].mxu0
      %v5234 = vadd.f32 0.0, %v5233
      %v5235 = vpop.f32.mrb[0].mxu0
      %5236 = vmatprep.mubr.f32.mxu0 0.0
      %5237 = vmatmul.mubr.f32.gmra.mrb[0].mxu0 %v4977
      %v5238 = vpop.f32.mrb[0].mxu0
      %v5239 = vadd.f32 0.0, %v5238
      %v5240 = vpop.f32.mrb[0].mxu0
      %5241 = vmatprep.mubr.f32.mxu0 0.0
      %5242 = vmatmul.mubr.f32.gmra.mrb[0].mxu0 %v4980
      %v5243 = vpop.f32.mrb[0].mxu0
      %v5244 = vadd.f32 0.0, %v5243
      %v5245 = vpop.f32.mrb[0].mxu0
      %5246 = vmatprep.mubr.f32.mxu0 0.0
      %5247 = vmatmul.mubr.f32.gmra.mrb[0].mxu0 %v4983
      %v5248 = vpop.f32.mrb[0].mxu0
      %v5249 = vadd.f32 0.0, %v5248
      %v5250 = vpop.f32.mrb[0].mxu0
      %5251 = vmatprep.mubr.f32.mxu0 0.0
      %5252 = vmatmul.mubr.f32.gmra.mrb[0].mxu0 %v4986
      %v5253 = vpop.f32.mrb[0].mxu0
      %v5254 = vadd.f32 0.0, %v5253
      %v5255 = vpop.f32.mrb[0].mxu0
      %5256 = vmatprep.mubr.f32.mxu0 0.0
      %5257 = vmatmul.mubr.f32.gmra.mrb[0].mxu0 %v4989
      %v5258 = vpop.f32.mrb[0].mxu0
      %v5259 = vadd.f32 0.0, %v5258
      %v5260 = vpop.f32.mrb[0].mxu0
      %5261 = vmatprep.mubr.f32.mxu0 0.0
      %5262 = vmatmul.mubr.f32.gmra.mrb[0].mxu0 %v4992
      %v5263 = vpop.f32.mrb[0].mxu0
      %v5264 = vadd.f32 0.0, %v5263
      %v5265 = vpop.f32.mrb[0].mxu0
      %5266 = vdwg.mxu0
      %v5267 = vld [vmem:[#allocation2] sm:$0xff]
      %v5268 = vld [vmem:[#allocation2 + $0x8] sm:$0xff]
      %v5269 = vld [vmem:[#allocation2 + $0x10] sm:$0xff]
      %v5270 = vld [vmem:[#allocation2 + $0x18] sm:$0xff]
      %v5271 = vld [vmem:[#allocation2 + $0x20] sm:$0xff]
      %v5272 = vld [vmem:[#allocation2 + $0x28] sm:$0xff]
      %v5273 = vld [vmem:[#allocation2 + $0x30] sm:$0xff]
      %v5274 = vld [vmem:[#allocation2 + $0x38] sm:$0xff]
      %v5275 = vld [vmem:[#allocation2 + $0x40] sm:$0xff]
      %v5276 = vld [vmem:[#allocation2 + $0x48] sm:$0xff]
      %v5277 = vld [vmem:[#allocation2 + $0x50] sm:$0xff]
      %v5278 = vld [vmem:[#allocation2 + $0x58] sm:$0xff]
      %v5279 = vld [vmem:[#allocation2 + $0x60] sm:$0xff]
      %v5280 = vld [vmem:[#allocation2 + $0x68] sm:$0xff]
      %v5281 = vld [vmem:[#allocation2 + $0x70] sm:$0xff]
      %v5282 = vld [vmem:[#allocation2 + $0x78] sm:$0xff]
      %v5283 = vld [vmem:[#allocation2 + $0x80] sm:$0xff]
      %v5284 = vld [vmem:[#allocation2 + $0x88] sm:$0xff]
      %v5285 = vld [vmem:[#allocation2 + $0x90] sm:$0xff]
      %v5286 = vld [vmem:[#allocation2 + $0x98] sm:$0xff]
      %v5287 = vld [vmem:[#allocation2 + $0xa0] sm:$0xff]
      %v5288 = vld [vmem:[#allocation2 + $0xa8] sm:$0xff]
      %v5289 = vld [vmem:[#allocation2 + $0xb0] sm:$0xff]
      %v5290 = vld [vmem:[#allocation2 + $0xb8] sm:$0xff]
      %v5291 = vld [vmem:[#allocation2 + $0xc0] sm:$0xff]
      %v5292 = vld [vmem:[#allocation2 + $0xc8] sm:$0xff]
      %v5293 = vld [vmem:[#allocation2 + $0xd0] sm:$0xff]
      %v5294 = vld [vmem:[#allocation2 + $0xd8] sm:$0xff]
      %v5295 = vld [vmem:[#allocation2 + $0xe0] sm:$0xff]
      %v5296 = vld [vmem:[#allocation2 + $0xe8] sm:$0xff]
      %v5297 = vld [vmem:[#allocation2 + $0xf0] sm:$0xff]
      %v5298 = vld [vmem:[#allocation2 + $0xf8] sm:$0xff]
      %v5299 = vld [vmem:[#allocation2 + $0x100] sm:$0xff]
      %v5300 = vld [vmem:[#allocation2 + $0x108] sm:$0xff]
      %v5301 = vld [vmem:[#allocation2 + $0x110] sm:$0xff]
      %v5302 = vld [vmem:[#allocation2 + $0x118] sm:$0xff]
      %v5303 = vld [vmem:[#allocation2 + $0x120] sm:$0xff]
      %v5304 = vld [vmem:[#allocation2 + $0x128] sm:$0xff]
      %v5305 = vld [vmem:[#allocation2 + $0x130] sm:$0xff]
      %v5306 = vld [vmem:[#allocation2 + $0x138] sm:$0xff]
      %v5307 = vld [vmem:[#allocation2 + $0x140] sm:$0xf]
      %v5308 = vadd.f32 %v5267, %v5064
      %v5309 = vadd.f32 %v5268, %v5069
      %v5310 = vadd.f32 %v5269, %v5074
      %v5311 = vadd.f32 %v5270, %v5079
      %v5312 = vadd.f32 %v5271, %v5084
      %v5313 = vadd.f32 %v5272, %v5089
      %v5314 = vadd.f32 %v5273, %v5094
      %v5315 = vadd.f32 %v5274, %v5099
      %v5316 = vadd.f32 %v5275, %v5104
      %v5317 = vadd.f32 %v5276, %v5109
      %v5318 = vadd.f32 %v5277, %v5114
      %v5319 = vadd.f32 %v5278, %v5119
      %v5320 = vadd.f32 %v5279, %v5124
      %v5321 = vadd.f32 %v5280, %v5129
      %v5322 = vadd.f32 %v5281, %v5134
      %v5323 = vadd.f32 %v5282, %v5139
      %v5324 = vadd.f32 %v5283, %v5144
      %v5325 = vadd.f32 %v5284, %v5149
      %v5326 = vadd.f32 %v5285, %v5154
      %v5327 = vadd.f32 %v5286, %v5159
      %v5328 = vadd.f32 %v5287, %v5164
      %v5329 = vadd.f32 %v5288, %v5169
      %v5330 = vadd.f32 %v5289, %v5174
      %v5331 = vadd.f32 %v5290, %v5179
      %v5332 = vadd.f32 %v5291, %v5184
      %v5333 = vadd.f32 %v5292, %v5189
      %v5334 = vadd.f32 %v5293, %v5194
      %v5335 = vadd.f32 %v5294, %v5199
      %v5336 = vadd.f32 %v5295, %v5204
      %v5337 = vadd.f32 %v5296, %v5209
      %v5338 = vadd.f32 %v5297, %v5214
      %v5339 = vadd.f32 %v5298, %v5219
      %v5340 = vadd.f32 %v5299, %v5224
      %v5341 = vadd.f32 %v5300, %v5229
      %v5342 = vadd.f32 %v5301, %v5234
      %v5343 = vadd.f32 %v5302, %v5239
      %v5344 = vadd.f32 %v5303, %v5244
      %v5345 = vadd.f32 %v5304, %v5249
      %v5346 = vadd.f32 %v5305, %v5254
      %v5347 = vadd.f32 %v5306, %v5259
      %v5348 = vadd.f32 %v5307, %v5264
      %5349 = vst.msk [vmem:[#allocation2] sm:$0xff] %vm385, %v5308
      %5350 = vst.msk [vmem:[#allocation2 + $0x8] sm:$0xff] %vm385, %v5309
      %5351 = vst.msk [vmem:[#allocation2 + $0x10] sm:$0xff] %vm385, %v5310
      %5352 = vst.msk [vmem:[#allocation2 + $0x18] sm:$0xff] %vm385, %v5311
      %5353 = vst.msk [vmem:[#allocation2 + $0x20] sm:$0xff] %vm385, %v5312
      %5354 = vst.msk [vmem:[#allocation2 + $0x28] sm:$0xff] %vm385, %v5313
      %5355 = vst.msk [vmem:[#allocation2 + $0x30] sm:$0xff] %vm385, %v5314
      %5356 = vst.msk [vmem:[#allocation2 + $0x38] sm:$0xff] %vm385, %v5315
      %5357 = vst.msk [vmem:[#allocation2 + $0x40] sm:$0xff] %vm385, %v5316
      %5358 = vst.msk [vmem:[#allocation2 + $0x48] sm:$0xff] %vm385, %v5317
      %5359 = vst.msk [vmem:[#allocation2 + $0x50] sm:$0xff] %vm385, %v5318
      %5360 = vst.msk [vmem:[#allocation2 + $0x58] sm:$0xff] %vm385, %v5319
      %5361 = vst.msk [vmem:[#allocation2 + $0x60] sm:$0xff] %vm385, %v5320
      %5362 = vst.msk [vmem:[#allocation2 + $0x68] sm:$0xff] %vm385, %v5321
      %5363 = vst.msk [vmem:[#allocation2 + $0x70] sm:$0xff] %vm385, %v5322
      %5364 = vst.msk [vmem:[#allocation2 + $0x78] sm:$0xff] %vm385, %v5323
      %5365 = vst.msk [vmem:[#allocation2 + $0x80] sm:$0xff] %vm385, %v5324
      %5366 = vst.msk [vmem:[#allocation2 + $0x88] sm:$0xff] %vm385, %v5325
      %5367 = vst.msk [vmem:[#allocation2 + $0x90] sm:$0xff] %vm385, %v5326
      %5368 = vst.msk [vmem:[#allocation2 + $0x98] sm:$0xff] %vm385, %v5327
      %5369 = vst.msk [vmem:[#allocation2 + $0xa0] sm:$0xff] %vm385, %v5328
      %5370 = vst.msk [vmem:[#allocation2 + $0xa8] sm:$0xff] %vm385, %v5329
      %5371 = vst.msk [vmem:[#allocation2 + $0xb0] sm:$0xff] %vm385, %v5330
      %5372 = vst.msk [vmem:[#allocation2 + $0xb8] sm:$0xff] %vm385, %v5331
      %5373 = vst.msk [vmem:[#allocation2 + $0xc0] sm:$0xff] %vm385, %v5332
      %5374 = vst.msk [vmem:[#allocation2 + $0xc8] sm:$0xff] %vm385, %v5333
      %5375 = vst.msk [vmem:[#allocation2 + $0xd0] sm:$0xff] %vm385, %v5334
      %5376 = vst.msk [vmem:[#allocation2 + $0xd8] sm:$0xff] %vm385, %v5335
      %5377 = vst.msk [vmem:[#allocation2 + $0xe0] sm:$0xff] %vm385, %v5336
      %5378 = vst.msk [vmem:[#allocation2 + $0xe8] sm:$0xff] %vm385, %v5337
      %5379 = vst.msk [vmem:[#allocation2 + $0xf0] sm:$0xff] %vm385, %v5338
      %5380 = vst.msk [vmem:[#allocation2 + $0xf8] sm:$0xff] %vm385, %v5339
      %5381 = vst.msk [vmem:[#allocation2 + $0x100] sm:$0xff] %vm385, %v5340
      %5382 = vst.msk [vmem:[#allocation2 + $0x108] sm:$0xff] %vm385, %v5341
      %5383 = vst.msk [vmem:[#allocation2 + $0x110] sm:$0xff] %vm385, %v5342
      %5384 = vst.msk [vmem:[#allocation2 + $0x118] sm:$0xff] %vm385, %v5343
      %5385 = vst.msk [vmem:[#allocation2 + $0x120] sm:$0xff] %vm385, %v5344
      %5386 = vst.msk [vmem:[#allocation2 + $0x128] sm:$0xff] %vm385, %v5345
      %5387 = vst.msk [vmem:[#allocation2 + $0x130] sm:$0xff] %vm385, %v5346
      %5388 = vst.msk [vmem:[#allocation2 + $0x138] sm:$0xff] %vm385, %v5347
      %5389 = vst.msk [vmem:[#allocation2 + $0x140] sm:$0xf] %vm892, %v5348
      %v5390 = vld [vmem:[#allocation2] sm:$0xff]
      %v5391 = vld [vmem:[#allocation2 + $0x8] sm:$0xff]
      %v5392 = vld [vmem:[#allocation2 + $0x10] sm:$0xff]
      %v5393 = vld [vmem:[#allocation2 + $0x18] sm:$0xff]
      %v5394 = vld [vmem:[#allocation2 + $0x20] sm:$0xff]
      %v5395 = vld [vmem:[#allocation2 + $0x28] sm:$0xff]
      %v5396 = vld [vmem:[#allocation2 + $0x30] sm:$0xff]
      %v5397 = vld [vmem:[#allocation2 + $0x38] sm:$0xff]
      %v5398 = vld [vmem:[#allocation2 + $0x40] sm:$0xff]
      %v5399 = vld [vmem:[#allocation2 + $0x48] sm:$0xff]
      %v5400 = vld [vmem:[#allocation2 + $0x50] sm:$0xff]
      %v5401 = vld [vmem:[#allocation2 + $0x58] sm:$0xff]
      %v5402 = vld [vmem:[#allocation2 + $0x60] sm:$0xff]
      %v5403 = vld [vmem:[#allocation2 + $0x68] sm:$0xff]
      %v5404 = vld [vmem:[#allocation2 + $0x70] sm:$0xff]
      %v5405 = vld [vmem:[#allocation2 + $0x78] sm:$0xff]
      %v5406 = vld [vmem:[#allocation2 + $0x80] sm:$0xff]
      %v5407 = vld [vmem:[#allocation2 + $0x88] sm:$0xff]
      %v5408 = vld [vmem:[#allocation2 + $0x90] sm:$0xff]
      %v5409 = vld [vmem:[#allocation2 + $0x98] sm:$0xff]
      %v5410 = vld [vmem:[#allocation2 + $0xa0] sm:$0xff]
      %v5411 = vld [vmem:[#allocation2 + $0xa8] sm:$0xff]
      %v5412 = vld [vmem:[#allocation2 + $0xb0] sm:$0xff]
      %v5413 = vld [vmem:[#allocation2 + $0xb8] sm:$0xff]
      %v5414 = vld [vmem:[#allocation2 + $0xc0] sm:$0xff]
      %v5415 = vld [vmem:[#allocation2 + $0xc8] sm:$0xff]
      %v5416 = vld [vmem:[#allocation2 + $0xd0] sm:$0xff]
      %v5417 = vld [vmem:[#allocation2 + $0xd8] sm:$0xff]
      %v5418 = vld [vmem:[#allocation2 + $0xe0] sm:$0xff]
      %v5419 = vld [vmem:[#allocation2 + $0xe8] sm:$0xff]
      %v5420 = vld [vmem:[#allocation2 + $0xf0] sm:$0xff]
      %v5421 = vld [vmem:[#allocation2 + $0xf8] sm:$0xff]
      %v5422 = vld [vmem:[#allocation2 + $0x100] sm:$0xff]
      %v5423 = vld [vmem:[#allocation2 + $0x108] sm:$0xff]
      %v5424 = vld [vmem:[#allocation2 + $0x110] sm:$0xff]
      %v5425 = vld [vmem:[#allocation2 + $0x118] sm:$0xff]
      %v5426 = vld [vmem:[#allocation2 + $0x120] sm:$0xff]
      %v5427 = vld [vmem:[#allocation2 + $0x128] sm:$0xff]
      %v5428 = vld [vmem:[#allocation2 + $0x130] sm:$0xff]
      %v5429 = vld [vmem:[#allocation2 + $0x138] sm:$0xff]
      %v5430 = vld [vmem:[#allocation2 + $0x140] sm:$0xf]
      %v5431 = vld [vmem:[%s2] sm:$0x1]
      %v5433 = vlaneseq
      %v5434 = vshrl.u32 %v5433, 7
      %v5435 = vsub.s32 0, %v5434
      %v5436 = vrot.slane %v5431, %v5435
      %v5438 = vadd.f32 %v5390, %v5436
      %v5439 = vadd.f32 %v5391, %v5436
      %v5440 = vadd.f32 %v5392, %v5436
      %v5441 = vadd.f32 %v5393, %v5436
      %v5442 = vadd.f32 %v5394, %v5436
      %v5443 = vadd.f32 %v5395, %v5436
      %v5444 = vadd.f32 %v5396, %v5436
      %v5445 = vadd.f32 %v5397, %v5436
      %v5446 = vadd.f32 %v5398, %v5436
      %v5447 = vadd.f32 %v5399, %v5436
      %v5448 = vadd.f32 %v5400, %v5436
      %v5449 = vadd.f32 %v5401, %v5436
      %v5450 = vadd.f32 %v5402, %v5436
      %v5451 = vadd.f32 %v5403, %v5436
      %v5452 = vadd.f32 %v5404, %v5436
      %v5453 = vadd.f32 %v5405, %v5436
      %v5454 = vadd.f32 %v5406, %v5436
      %v5455 = vadd.f32 %v5407, %v5436
      %v5456 = vadd.f32 %v5408, %v5436
      %v5457 = vadd.f32 %v5409, %v5436
      %v5458 = vadd.f32 %v5410, %v5436
      %v5459 = vadd.f32 %v5411, %v5436
      %v5460 = vadd.f32 %v5412, %v5436
      %v5461 = vadd.f32 %v5413, %v5436
      %v5462 = vadd.f32 %v5414, %v5436
      %v5463 = vadd.f32 %v5415, %v5436
      %v5464 = vadd.f32 %v5416, %v5436
      %v5465 = vadd.f32 %v5417, %v5436
      %v5466 = vadd.f32 %v5418, %v5436
      %v5467 = vadd.f32 %v5419, %v5436
      %v5468 = vadd.f32 %v5420, %v5436
      %v5469 = vadd.f32 %v5421, %v5436
      %v5470 = vadd.f32 %v5422, %v5436
      %v5471 = vadd.f32 %v5423, %v5436
      %v5472 = vadd.f32 %v5424, %v5436
      %v5473 = vadd.f32 %v5425, %v5436
      %v5474 = vadd.f32 %v5426, %v5436
      %v5475 = vadd.f32 %v5427, %v5436
      %v5476 = vadd.f32 %v5428, %v5436
      %v5477 = vadd.f32 %v5429, %v5436
      %v5478 = vadd.f32 %v5430, %v5436
      %v5479 = vmax.f32 %v5438, 0.0
      %v5480 = vmax.f32 %v5439, 0.0
      %v5481 = vmax.f32 %v5440, 0.0
      %v5482 = vmax.f32 %v5441, 0.0
      %v5483 = vmax.f32 %v5442, 0.0
      %v5484 = vmax.f32 %v5443, 0.0
      %v5485 = vmax.f32 %v5444, 0.0
      %v5486 = vmax.f32 %v5445, 0.0
      %v5487 = vmax.f32 %v5446, 0.0
      %v5488 = vmax.f32 %v5447, 0.0
      %v5489 = vmax.f32 %v5448, 0.0
      %v5490 = vmax.f32 %v5449, 0.0
      %v5491 = vmax.f32 %v5450, 0.0
      %v5492 = vmax.f32 %v5451, 0.0
      %v5493 = vmax.f32 %v5452, 0.0
      %v5494 = vmax.f32 %v5453, 0.0
      %v5495 = vmax.f32 %v5454, 0.0
      %v5496 = vmax.f32 %v5455, 0.0
      %v5497 = vmax.f32 %v5456, 0.0
      %v5498 = vmax.f32 %v5457, 0.0
      %v5499 = vmax.f32 %v5458, 0.0
      %v5500 = vmax.f32 %v5459, 0.0
      %v5501 = vmax.f32 %v5460, 0.0
      %v5502 = vmax.f32 %v5461, 0.0
      %v5503 = vmax.f32 %v5462, 0.0
      %v5504 = vmax.f32 %v5463, 0.0
      %v5505 = vmax.f32 %v5464, 0.0
      %v5506 = vmax.f32 %v5465, 0.0
      %v5507 = vmax.f32 %v5466, 0.0
      %v5508 = vmax.f32 %v5467, 0.0
      %v5509 = vmax.f32 %v5468, 0.0
      %v5510 = vmax.f32 %v5469, 0.0
      %v5511 = vmax.f32 %v5470, 0.0
      %v5512 = vmax.f32 %v5471, 0.0
      %v5513 = vmax.f32 %v5472, 0.0
      %v5514 = vmax.f32 %v5473, 0.0
      %v5515 = vmax.f32 %v5474, 0.0
      %v5516 = vmax.f32 %v5475, 0.0
      %v5517 = vmax.f32 %v5476, 0.0
      %v5518 = vmax.f32 %v5477, 0.0
      %v5519 = vmax.f32 %v5478, 0.0
      %5520 = vst.msk [vmem:[#allocation2] sm:$0xff] %vm385, %v5479
      %5521 = vst.msk [vmem:[#allocation2 + $0x8] sm:$0xff] %vm385, %v5480
      %5522 = vst.msk [vmem:[#allocation2 + $0x10] sm:$0xff] %vm385, %v5481
      %5523 = vst.msk [vmem:[#allocation2 + $0x18] sm:$0xff] %vm385, %v5482
      %5524 = vst.msk [vmem:[#allocation2 + $0x20] sm:$0xff] %vm385, %v5483
      %5525 = vst.msk [vmem:[#allocation2 + $0x28] sm:$0xff] %vm385, %v5484
      %5526 = vst.msk [vmem:[#allocation2 + $0x30] sm:$0xff] %vm385, %v5485
      %5527 = vst.msk [vmem:[#allocation2 + $0x38] sm:$0xff] %vm385, %v5486
      %5528 = vst.msk [vmem:[#allocation2 + $0x40] sm:$0xff] %vm385, %v5487
      %5529 = vst.msk [vmem:[#allocation2 + $0x48] sm:$0xff] %vm385, %v5488
      %5530 = vst.msk [vmem:[#allocation2 + $0x50] sm:$0xff] %vm385, %v5489
      %5531 = vst.msk [vmem:[#allocation2 + $0x58] sm:$0xff] %vm385, %v5490
      %5532 = vst.msk [vmem:[#allocation2 + $0x60] sm:$0xff] %vm385, %v5491
      %5533 = vst.msk [vmem:[#allocation2 + $0x68] sm:$0xff] %vm385, %v5492
      %5534 = vst.msk [vmem:[#allocation2 + $0x70] sm:$0xff] %vm385, %v5493
      %5535 = vst.msk [vmem:[#allocation2 + $0x78] sm:$0xff] %vm385, %v5494
      %5536 = vst.msk [vmem:[#allocation2 + $0x80] sm:$0xff] %vm385, %v5495
      %5537 = vst.msk [vmem:[#allocation2 + $0x88] sm:$0xff] %vm385, %v5496
      %5538 = vst.msk [vmem:[#allocation2 + $0x90] sm:$0xff] %vm385, %v5497
      %5539 = vst.msk [vmem:[#allocation2 + $0x98] sm:$0xff] %vm385, %v5498
      %5540 = vst.msk [vmem:[#allocation2 + $0xa0] sm:$0xff] %vm385, %v5499
      %5541 = vst.msk [vmem:[#allocation2 + $0xa8] sm:$0xff] %vm385, %v5500
      %5542 = vst.msk [vmem:[#allocation2 + $0xb0] sm:$0xff] %vm385, %v5501
      %5543 = vst.msk [vmem:[#allocation2 + $0xb8] sm:$0xff] %vm385, %v5502
      %5544 = vst.msk [vmem:[#allocation2 + $0xc0] sm:$0xff] %vm385, %v5503
      %5545 = vst.msk [vmem:[#allocation2 + $0xc8] sm:$0xff] %vm385, %v5504
      %5546 = vst.msk [vmem:[#allocation2 + $0xd0] sm:$0xff] %vm385, %v5505
      %5547 = vst.msk [vmem:[#allocation2 + $0xd8] sm:$0xff] %vm385, %v5506
      %5548 = vst.msk [vmem:[#allocation2 + $0xe0] sm:$0xff] %vm385, %v5507
      %5549 = vst.msk [vmem:[#allocation2 + $0xe8] sm:$0xff] %vm385, %v5508
      %5550 = vst.msk [vmem:[#allocation2 + $0xf0] sm:$0xff] %vm385, %v5509
      %5551 = vst.msk [vmem:[#allocation2 + $0xf8] sm:$0xff] %vm385, %v5510
      %5552 = vst.msk [vmem:[#allocation2 + $0x100] sm:$0xff] %vm385, %v5511
      %5553 = vst.msk [vmem:[#allocation2 + $0x108] sm:$0xff] %vm385, %v5512
      %5554 = vst.msk [vmem:[#allocation2 + $0x110] sm:$0xff] %vm385, %v5513
      %5555 = vst.msk [vmem:[#allocation2 + $0x118] sm:$0xff] %vm385, %v5514
      %5556 = vst.msk [vmem:[#allocation2 + $0x120] sm:$0xff] %vm385, %v5515
      %5557 = vst.msk [vmem:[#allocation2 + $0x128] sm:$0xff] %vm385, %v5516
      %5558 = vst.msk [vmem:[#allocation2 + $0x130] sm:$0xff] %vm385, %v5517
      %5559 = vst.msk [vmem:[#allocation2 + $0x138] sm:$0xff] %vm385, %v5518
      %5560 = vst.msk [vmem:[#allocation2 + $0x140] sm:$0xf] %vm892, %v5519
      %v5561 = vld [vmem:[#allocation2] ss:$2 sm:$0xff]
      %s5562 = scalar_lea.vmem [#allocation2], 1
      %v5563 = vld [vmem:[%s5562] ss:$2 sm:$0xff]
      %v5564 = vmax.f32 %v5561, %v5563
      %s5565 = scalar_lea.vmem [#allocation2], 18
      %v5566 = vld [vmem:[%s5565] ss:$2 sm:$0xff]
      %s5567 = scalar_lea.vmem [#allocation2], 19
      %v5568 = vld [vmem:[%s5567] ss:$2 sm:$0xff]
      %v5569 = vmax.f32 %v5566, %v5568
      %v5570 = vmax.f32 %v5564, %v5569
      %5571 = vst.msk [vmem:[#allocation3 + $0xb] sm:$0xff] %vm385, %v5570
      %s5572 = scalar_lea.vmem [#allocation2], 36
      %v5573 = vld [vmem:[%s5572] ss:$2 sm:$0xff]
      %s5574 = scalar_lea.vmem [#allocation2], 37
      %v5575 = vld [vmem:[%s5574] ss:$2 sm:$0xff]
      %v5576 = vmax.f32 %v5573, %v5575
      %s5577 = scalar_lea.vmem [#allocation2], 54
      %v5578 = vld [vmem:[%s5577] ss:$2 sm:$0xff]
      %s5579 = scalar_lea.vmem [#allocation2], 55
      %v5580 = vld [vmem:[%s5579] ss:$2 sm:$0xff]
      %v5581 = vmax.f32 %v5578, %v5580
      %v5582 = vmax.f32 %v5576, %v5581
      %5583 = vst.msk [vmem:[#allocation3 + $0x15] sm:$0xff] %vm385, %v5582
      %s5584 = scalar_lea.vmem [#allocation2], 72
      %v5585 = vld [vmem:[%s5584] ss:$2 sm:$0xff]
      %s5586 = scalar_lea.vmem [#allocation2], 73
      %v5587 = vld [vmem:[%s5586] ss:$2 sm:$0xff]
      %v5588 = vmax.f32 %v5585, %v5587
      %s5589 = scalar_lea.vmem [#allocation2], 90
      %v5590 = vld [vmem:[%s5589] ss:$2 sm:$0xff]
      %s5591 = scalar_lea.vmem [#allocation2], 91
      %v5592 = vld [vmem:[%s5591] ss:$2 sm:$0xff]
      %v5593 = vmax.f32 %v5590, %v5592
      %v5594 = vmax.f32 %v5588, %v5593
      %5595 = vst.msk [vmem:[#allocation3 + $0x1f] sm:$0xff] %vm385, %v5594
      %s5596 = scalar_lea.vmem [#allocation2], 108
      %v5597 = vld [vmem:[%s5596] ss:$2 sm:$0xff]
      %s5598 = scalar_lea.vmem [#allocation2], 109
      %v5599 = vld [vmem:[%s5598] ss:$2 sm:$0xff]
      %v5600 = vmax.f32 %v5597, %v5599
      %s5601 = scalar_lea.vmem [#allocation2], 126
      %v5602 = vld [vmem:[%s5601] ss:$2 sm:$0xff]
      %s5603 = scalar_lea.vmem [#allocation2], 127
      %v5604 = vld [vmem:[%s5603] ss:$2 sm:$0xff]
      %v5605 = vmax.f32 %v5602, %v5604
      %v5606 = vmax.f32 %v5600, %v5605
      %5607 = vst.msk [vmem:[#allocation3 + $0x29] sm:$0xff] %vm385, %v5606
      %s5608 = scalar_lea.vmem [#allocation2], 144
      %v5609 = vld [vmem:[%s5608] ss:$2 sm:$0xff]
      %s5610 = scalar_lea.vmem [#allocation2], 145
      %v5611 = vld [vmem:[%s5610] ss:$2 sm:$0xff]
      %v5612 = vmax.f32 %v5609, %v5611
      %s5613 = scalar_lea.vmem [#allocation2], 162
      %v5614 = vld [vmem:[%s5613] ss:$2 sm:$0xff]
      %s5615 = scalar_lea.vmem [#allocation2], 163
      %v5616 = vld [vmem:[%s5615] ss:$2 sm:$0xff]
      %v5617 = vmax.f32 %v5614, %v5616
      %v5618 = vmax.f32 %v5612, %v5617
      %5619 = vst.msk [vmem:[#allocation3 + $0x33] sm:$0xff] %vm385, %v5618
      %s5620 = scalar_lea.vmem [#allocation2], 180
      %v5621 = vld [vmem:[%s5620] ss:$2 sm:$0xff]
      %s5622 = scalar_lea.vmem [#allocation2], 181
      %v5623 = vld [vmem:[%s5622] ss:$2 sm:$0xff]
      %v5624 = vmax.f32 %v5621, %v5623
      %s5625 = scalar_lea.vmem [#allocation2], 198
      %v5626 = vld [vmem:[%s5625] ss:$2 sm:$0xff]
      %s5627 = scalar_lea.vmem [#allocation2], 199
      %v5628 = vld [vmem:[%s5627] ss:$2 sm:$0xff]
      %v5629 = vmax.f32 %v5626, %v5628
      %v5630 = vmax.f32 %v5624, %v5629
      %5631 = vst.msk [vmem:[#allocation3 + $0x3d] sm:$0xff] %vm385, %v5630
      %s5632 = scalar_lea.vmem [#allocation2], 216
      %v5633 = vld [vmem:[%s5632] ss:$2 sm:$0xff]
      %s5634 = scalar_lea.vmem [#allocation2], 217
      %v5635 = vld [vmem:[%s5634] ss:$2 sm:$0xff]
      %v5636 = vmax.f32 %v5633, %v5635
      %s5637 = scalar_lea.vmem [#allocation2], 234
      %v5638 = vld [vmem:[%s5637] ss:$2 sm:$0xff]
      %s5639 = scalar_lea.vmem [#allocation2], 235
      %v5640 = vld [vmem:[%s5639] ss:$2 sm:$0xff]
      %v5641 = vmax.f32 %v5638, %v5640
      %v5642 = vmax.f32 %v5636, %v5641
      %5643 = vst.msk [vmem:[#allocation3 + $0x47] sm:$0xff] %vm385, %v5642
      %s5644 = scalar_lea.vmem [#allocation2], 252
      %v5645 = vld [vmem:[%s5644] ss:$2 sm:$0xff]
      %s5646 = scalar_lea.vmem [#allocation2], 253
      %v5647 = vld [vmem:[%s5646] ss:$2 sm:$0xff]
      %v5648 = vmax.f32 %v5645, %v5647
      %s5649 = scalar_lea.vmem [#allocation2], 270
      %v5650 = vld [vmem:[%s5649] ss:$2 sm:$0xff]
      %s5651 = scalar_lea.vmem [#allocation2], 271
      %v5652 = vld [vmem:[%s5651] ss:$2 sm:$0xff]
      %v5653 = vmax.f32 %v5650, %v5652
      %v5654 = vmax.f32 %v5648, %v5653
      %5655 = vst.msk [vmem:[#allocation3 + $0x51] sm:$0xff] %vm385, %v5654
      %v5656 = vld [vmem:[#allocation3] sm:$0xff]
      %v5657 = vld [vmem:[#allocation3 + $0x8] sm:$0xff]
      %v5658 = vld [vmem:[#allocation3 + $0x10] sm:$0xff]
      %v5659 = vld [vmem:[#allocation3 + $0x18] sm:$0xff]
      %v5660 = vld [vmem:[#allocation3 + $0x20] sm:$0xff]
      %v5661 = vld [vmem:[#allocation3 + $0x28] sm:$0xff]
      %v5662 = vld [vmem:[#allocation3 + $0x30] sm:$0xff]
      %v5663 = vld [vmem:[#allocation3 + $0x38] sm:$0xff]
      %v5664 = vld [vmem:[#allocation3 + $0x40] sm:$0xff]
      %v5665 = vld [vmem:[#allocation3 + $0x48] sm:$0xff]
      %v5666 = vld [vmem:[#allocation3 + $0x50] sm:$0xff]
      %v5667 = vld [vmem:[#allocation3 + $0x58] sm:$0xff]
      %v5668 = vld [vmem:[#allocation3 + $0x60] sm:$0xf]
      %v5669 = vld [vmem:[%s3] sm:$0xff]
      %v5670 = vld [vmem:[%s3 + $0x8] sm:$0xff]
      %v5671 = vld [vmem:[%s3 + $0x10] sm:$0xff]
      %v5672 = vld [vmem:[%s3 + $0x18] sm:$0xff]
      %v5674 = vsel %vm385, %v5656, 0
      %v5677 = vsel %vm385, %v5657, 0
      %v5680 = vsel %vm385, %v5658, 0
      %v5683 = vsel %vm385, %v5659, 0
      %v5686 = vsel %vm385, %v5660, 0
      %v5689 = vsel %vm385, %v5661, 0
      %v5692 = vsel %vm385, %v5662, 0
      %v5695 = vsel %vm385, %v5663, 0
      %v5698 = vsel %vm385, %v5664, 0
      %v5701 = vsel %vm385, %v5665, 0
      %v5704 = vsel %vm385, %v5666, 0
      %v5707 = vsel %vm385, %v5667, 0
      %v5710 = vsel %vm385, %v5668, 0
      %5712 = vmatprep.subr.mxu0 0.0
      %5713 = vmatpush1.msra.mxu0 %v5669
      %5714 = vmatprep.subr.mxu0 0.0
      %5715 = vmatpush1.msra.mxu0 %v5670
      %5716 = vmatprep.subr.mxu0 0.0
      %5717 = vmatpush1.msra.mxu0 %v5671
      %5718 = vmatprep.subr.mxu0 0.0
      %5719 = vmatpush1.msra.mxu0 %v5672
      %5720 = vmatprep.subr.mxu0 0.0
      %5721 = vmatpush1.msra.mxu0 0.0
      %5722 = vmatprep.subr.mxu0 0.0
      %5723 = vmatpush1.msra.mxu0 0.0
      %5724 = vmatprep.subr.mxu0 0.0
      %5725 = vmatpush1.msra.mxu0 0.0
      %5726 = vmatprep.subr.mxu0 0.0
      %5727 = vmatpush1.msra.mxu0 0.0
      %5728 = vmatprep.subr.mxu0 0.0
      %5729 = vmatpush1.msra.mxu0 0.0
      %5730 = vmatprep.subr.mxu0 0.0
      %5731 = vmatpush1.msra.mxu0 0.0
      %5732 = vmatprep.subr.mxu0 0.0
      %5733 = vmatpush1.msra.mxu0 0.0
      %5734 = vmatprep.subr.mxu0 0.0
      %5735 = vmatpush1.msra.mxu0 0.0
      %5736 = vmatprep.subr.mxu0 0.0
      %5737 = vmatpush1.msra.mxu0 0.0
      %5738 = vmatprep.subr.mxu0 0.0
      %5739 = vmatpush1.msra.mxu0 0.0
      %5740 = vmatprep.subr.mxu0 0.0
      %5741 = vmatpush1.msra.mxu0 0.0
      %5742 = vmatprep.subr.mxu0 0.0
      %5743 = vmatpush1.msra.mxu0 0.0
      %5744 = vmatprep.subr.mxu0 0.0
      %5745 = vmatpush1.msra.mxu0 0.0
      %5746 = vmatprep.subr.mxu0 0.0
      %5747 = vmatpush1.msra.mxu0 0.0
      %5748 = vmatprep.subr.mxu0 0.0
      %5749 = vmatpush1.msra.mxu0 0.0
      %5750 = vmatprep.subr.mxu0 0.0
      %5751 = vmatpush1.msra.mxu0 0.0
      %5752 = vmatprep.subr.mxu0 0.0
      %5753 = vmatpush1.msra.mxu0 0.0
      %5754 = vmatprep.subr.mxu0 0.0
      %5755 = vmatpush1.msra.mxu0 0.0
      %5756 = vmatprep.subr.mxu0 0.0
      %5757 = vmatpush1.msra.mxu0 0.0
      %5758 = vmatprep.subr.mxu0 0.0
      %5759 = vmatpush1.msra.mxu0 0.0
      %5760 = vmatprep.subr.mxu0 0.0
      %5761 = vmatpush1.msra.mxu0 0.0
      %5762 = vmatprep.subr.mxu0 0.0
      %5763 = vmatpush1.msra.mxu0 0.0
      %5764 = vmatprep.subr.mxu0 0.0
      %5765 = vmatpush1.msra.mxu0 0.0
      %5766 = vmatprep.subr.mxu0 0.0
      %5767 = vmatpush1.msra.mxu0 0.0
      %5768 = vmatprep.subr.mxu0 0.0
      %5769 = vmatpush1.msra.mxu0 0.0
      %5770 = vmatprep.subr.mxu0 0.0
      %5771 = vmatpush1.msra.mxu0 0.0
      %5772 = vmatprep.subr.mxu0 0.0
      %5773 = vmatpush1.msra.mxu0 0.0
      %5774 = vmatprep.subr.mxu0 0.0
      %5775 = vmatpush1.msra.mxu0 0.0
      %5776 = vmatprep.mubr.f32.mxu0 0.0
      %5777 = vmatmul.mubr.f32.gmra.mrb[0].mxu0 %v5674
      %v5778 = vpop.f32.mrb[0].mxu0
      %v5779 = vadd.f32 0.0, %v5778
      %v5780 = vpop.f32.mrb[0].mxu0
      %5781 = vmatprep.mubr.f32.mxu0 0.0
      %5782 = vmatmul.mubr.f32.gmra.mrb[0].mxu0 %v5677
      %v5783 = vpop.f32.mrb[0].mxu0
      %v5784 = vadd.f32 0.0, %v5783
      %v5785 = vpop.f32.mrb[0].mxu0
      %5786 = vmatprep.mubr.f32.mxu0 0.0
      %5787 = vmatmul.mubr.f32.gmra.mrb[0].mxu0 %v5680
      %v5788 = vpop.f32.mrb[0].mxu0
      %v5789 = vadd.f32 0.0, %v5788
      %v5790 = vpop.f32.mrb[0].mxu0
      %5791 = vmatprep.mubr.f32.mxu0 0.0
      %5792 = vmatmul.mubr.f32.gmra.mrb[0].mxu0 %v5683
      %v5793 = vpop.f32.mrb[0].mxu0
      %v5794 = vadd.f32 0.0, %v5793
      %v5795 = vpop.f32.mrb[0].mxu0
      %5796 = vmatprep.mubr.f32.mxu0 0.0
      %5797 = vmatmul.mubr.f32.gmra.mrb[0].mxu0 %v5686
      %v5798 = vpop.f32.mrb[0].mxu0
      %v5799 = vadd.f32 0.0, %v5798
      %v5800 = vpop.f32.mrb[0].mxu0
      %5801 = vmatprep.mubr.f32.mxu0 0.0
      %5802 = vmatmul.mubr.f32.gmra.mrb[0].mxu0 %v5689
      %v5803 = vpop.f32.mrb[0].mxu0
      %v5804 = vadd.f32 0.0, %v5803
      %v5805 = vpop.f32.mrb[0].mxu0
      %5806 = vmatprep.mubr.f32.mxu0 0.0
      %5807 = vmatmul.mubr.f32.gmra.mrb[0].mxu0 %v5692
      %v5808 = vpop.f32.mrb[0].mxu0
      %v5809 = vadd.f32 0.0, %v5808
      %v5810 = vpop.f32.mrb[0].mxu0
      %5811 = vmatprep.mubr.f32.mxu0 0.0
      %5812 = vmatmul.mubr.f32.gmra.mrb[0].mxu0 %v5695
      %v5813 = vpop.f32.mrb[0].mxu0
      %v5814 = vadd.f32 0.0, %v5813
      %v5815 = vpop.f32.mrb[0].mxu0
      %5816 = vmatprep.mubr.f32.mxu0 0.0
      %5817 = vmatmul.mubr.f32.gmra.mrb[0].mxu0 %v5698
      %v5818 = vpop.f32.mrb[0].mxu0
      %v5819 = vadd.f32 0.0, %v5818
      %v5820 = vpop.f32.mrb[0].mxu0
      %5821 = vmatprep.mubr.f32.mxu0 0.0
      %5822 = vmatmul.mubr.f32.gmra.mrb[0].mxu0 %v5701
      %v5823 = vpop.f32.mrb[0].mxu0
      %v5824 = vadd.f32 0.0, %v5823
      %v5825 = vpop.f32.mrb[0].mxu0
      %5826 = vmatprep.mubr.f32.mxu0 0.0
      %5827 = vmatmul.mubr.f32.gmra.mrb[0].mxu0 %v5704
      %v5828 = vpop.f32.mrb[0].mxu0
      %v5829 = vadd.f32 0.0, %v5828
      %v5830 = vpop.f32.mrb[0].mxu0
      %5831 = vmatprep.mubr.f32.mxu0 0.0
      %5832 = vmatmul.mubr.f32.gmra.mrb[0].mxu0 %v5707
      %v5833 = vpop.f32.mrb[0].mxu0
      %v5834 = vadd.f32 0.0, %v5833
      %v5835 = vpop.f32.mrb[0].mxu0
      %5836 = vmatprep.mubr.f32.mxu0 0.0
      %5837 = vmatmul.mubr.f32.gmra.mrb[0].mxu0 %v5710
      %v5838 = vpop.f32.mrb[0].mxu0
      %v5839 = vadd.f32 0.0, %v5838
      %v5840 = vpop.f32.mrb[0].mxu0
      %5841 = vdwg.mxu0
      %5842 = vst.msk [vmem:[#allocation4] sm:$0xff] %vm403, %v5779
      %5843 = vst.msk [vmem:[#allocation4 + $0x8] sm:$0xff] %vm403, %v5784
      %5844 = vst.msk [vmem:[#allocation4 + $0x10] sm:$0xff] %vm403, %v5789
      %5845 = vst.msk [vmem:[#allocation4 + $0x18] sm:$0xff] %vm403, %v5794
      %5846 = vst.msk [vmem:[#allocation4 + $0x20] sm:$0xff] %vm403, %v5799
      %5847 = vst.msk [vmem:[#allocation4 + $0x28] sm:$0xff] %vm403, %v5804
      %5848 = vst.msk [vmem:[#allocation4 + $0x30] sm:$0xff] %vm403, %v5809
      %5849 = vst.msk [vmem:[#allocation4 + $0x38] sm:$0xff] %vm403, %v5814
      %5850 = vst.msk [vmem:[#allocation4 + $0x40] sm:$0xff] %vm403, %v5819
      %5851 = vst.msk [vmem:[#allocation4 + $0x48] sm:$0xff] %vm403, %v5824
      %5852 = vst.msk [vmem:[#allocation4 + $0x50] sm:$0xff] %vm403, %v5829
      %5853 = vst.msk [vmem:[#allocation4 + $0x58] sm:$0xff] %vm403, %v5834
      %vm5854 = vcmask 519168
      %5855 = vst.msk [vmem:[#allocation4 + $0x60] sm:$0xf] %vm5854, %v5839
      %v5856 = vld [vmem:[#allocation3 + $0x1] sm:$0xff]
      %v5857 = vld [vmem:[#allocation3 + $0x9] sm:$0xff]
      %v5858 = vld [vmem:[#allocation3 + $0x11] sm:$0xff]
      %v5859 = vld [vmem:[#allocation3 + $0x19] sm:$0xff]
      %v5860 = vld [vmem:[#allocation3 + $0x21] sm:$0xff]
      %v5861 = vld [vmem:[#allocation3 + $0x29] sm:$0xff]
      %v5862 = vld [vmem:[#allocation3 + $0x31] sm:$0xff]
      %v5863 = vld [vmem:[#allocation3 + $0x39] sm:$0xff]
      %v5864 = vld [vmem:[#allocation3 + $0x41] sm:$0xff]
      %v5865 = vld [vmem:[#allocation3 + $0x49] sm:$0xff]
      %v5866 = vld [vmem:[#allocation3 + $0x51] sm:$0xff]
      %v5867 = vld [vmem:[#allocation3 + $0x59] sm:$0xff]
      %v5868 = vld [vmem:[#allocation3 + $0x61] sm:$0xf]
      %s5869 = scalar_lea.vmem %s3, 32
      %v5870 = vld [vmem:[%s5869] sm:$0xff]
      %v5871 = vld [vmem:[%s5869 + $0x8] sm:$0xff]
      %v5872 = vld [vmem:[%s5869 + $0x10] sm:$0xff]
      %v5873 = vld [vmem:[%s5869 + $0x18] sm:$0xff]
      %v5875 = vsel %vm385, %v5856, 0
      %v5878 = vsel %vm385, %v5857, 0
      %v5881 = vsel %vm385, %v5858, 0
      %v5884 = vsel %vm385, %v5859, 0
      %v5887 = vsel %vm385, %v5860, 0
      %v5890 = vsel %vm385, %v5861, 0
      %v5893 = vsel %vm385, %v5862, 0
      %v5896 = vsel %vm385, %v5863, 0
      %v5899 = vsel %vm385, %v5864, 0
      %v5902 = vsel %vm385, %v5865, 0
      %v5905 = vsel %vm385, %v5866, 0
      %v5908 = vsel %vm385, %v5867, 0
      %v5911 = vsel %vm385, %v5868, 0
      %5913 = vmatprep.subr.mxu0 0.0
      %5914 = vmatpush1.msra.mxu0 %v5870
      %5915 = vmatprep.subr.mxu0 0.0
      %5916 = vmatpush1.msra.mxu0 %v5871
      %5917 = vmatprep.subr.mxu0 0.0
      %5918 = vmatpush1.msra.mxu0 %v5872
      %5919 = vmatprep.subr.mxu0 0.0
      %5920 = vmatpush1.msra.mxu0 %v5873
      %5921 = vmatprep.subr.mxu0 0.0
      %5922 = vmatpush1.msra.mxu0 0.0
      %5923 = vmatprep.subr.mxu0 0.0
      %5924 = vmatpush1.msra.mxu0 0.0
      %5925 = vmatprep.subr.mxu0 0.0
      %5926 = vmatpush1.msra.mxu0 0.0
      %5927 = vmatprep.subr.mxu0 0.0
      %5928 = vmatpush1.msra.mxu0 0.0
      %5929 = vmatprep.subr.mxu0 0.0
      %5930 = vmatpush1.msra.mxu0 0.0
      %5931 = vmatprep.subr.mxu0 0.0
      %5932 = vmatpush1.msra.mxu0 0.0
      %5933 = vmatprep.subr.mxu0 0.0
      %5934 = vmatpush1.msra.mxu0 0.0
      %5935 = vmatprep.subr.mxu0 0.0
      %5936 = vmatpush1.msra.mxu0 0.0
      %5937 = vmatprep.subr.mxu0 0.0
      %5938 = vmatpush1.msra.mxu0 0.0
      %5939 = vmatprep.subr.mxu0 0.0
      %5940 = vmatpush1.msra.mxu0 0.0
      %5941 = vmatprep.subr.mxu0 0.0
      %5942 = vmatpush1.msra.mxu0 0.0
      %5943 = vmatprep.subr.mxu0 0.0
      %5944 = vmatpush1.msra.mxu0 0.0
      %5945 = vmatprep.subr.mxu0 0.0
      %5946 = vmatpush1.msra.mxu0 0.0
      %5947 = vmatprep.subr.mxu0 0.0
      %5948 = vmatpush1.msra.mxu0 0.0
      %5949 = vmatprep.subr.mxu0 0.0
      %5950 = vmatpush1.msra.mxu0 0.0
      %5951 = vmatprep.subr.mxu0 0.0
      %5952 = vmatpush1.msra.mxu0 0.0
      %5953 = vmatprep.subr.mxu0 0.0
      %5954 = vmatpush1.msra.mxu0 0.0
      %5955 = vmatprep.subr.mxu0 0.0
      %5956 = vmatpush1.msra.mxu0 0.0
      %5957 = vmatprep.subr.mxu0 0.0
      %5958 = vmatpush1.msra.mxu0 0.0
      %5959 = vmatprep.subr.mxu0 0.0
      %5960 = vmatpush1.msra.mxu0 0.0
      %5961 = vmatprep.subr.mxu0 0.0
      %5962 = vmatpush1.msra.mxu0 0.0
      %5963 = vmatprep.subr.mxu0 0.0
      %5964 = vmatpush1.msra.mxu0 0.0
      %5965 = vmatprep.subr.mxu0 0.0
      %5966 = vmatpush1.msra.mxu0 0.0
      %5967 = vmatprep.subr.mxu0 0.0
      %5968 = vmatpush1.msra.mxu0 0.0
      %5969 = vmatprep.subr.mxu0 0.0
      %5970 = vmatpush1.msra.mxu0 0.0
      %5971 = vmatprep.subr.mxu0 0.0
      %5972 = vmatpush1.msra.mxu0 0.0
      %5973 = vmatprep.subr.mxu0 0.0
      %5974 = vmatpush1.msra.mxu0 0.0
      %5975 = vmatprep.subr.mxu0 0.0
      %5976 = vmatpush1.msra.mxu0 0.0
      %5977 = vmatprep.mubr.f32.mxu0 0.0
      %5978 = vmatmul.mubr.f32.gmra.mrb[0].mxu0 %v5875
      %v5979 = vpop.f32.mrb[0].mxu0
      %v5980 = vadd.f32 0.0, %v5979
      %v5981 = vpop.f32.mrb[0].mxu0
      %5982 = vmatprep.mubr.f32.mxu0 0.0
      %5983 = vmatmul.mubr.f32.gmra.mrb[0].mxu0 %v5878
      %v5984 = vpop.f32.mrb[0].mxu0
      %v5985 = vadd.f32 0.0, %v5984
      %v5986 = vpop.f32.mrb[0].mxu0
      %5987 = vmatprep.mubr.f32.mxu0 0.0
      %5988 = vmatmul.mubr.f32.gmra.mrb[0].mxu0 %v5881
      %v5989 = vpop.f32.mrb[0].mxu0
      %v5990 = vadd.f32 0.0, %v5989
      %v5991 = vpop.f32.mrb[0].mxu0
      %5992 = vmatprep.mubr.f32.mxu0 0.0
      %5993 = vmatmul.mubr.f32.gmra.mrb[0].mxu0 %v5884
      %v5994 = vpop.f32.mrb[0].mxu0
      %v5995 = vadd.f32 0.0, %v5994
      %v5996 = vpop.f32.mrb[0].mxu0
      %5997 = vmatprep.mubr.f32.mxu0 0.0
      %5998 = vmatmul.mubr.f32.gmra.mrb[0].mxu0 %v5887
      %v5999 = vpop.f32.mrb[0].mxu0
      %v6000 = vadd.f32 0.0, %v5999
      %v6001 = vpop.f32.mrb[0].mxu0
      %6002 = vmatprep.mubr.f32.mxu0 0.0
      %6003 = vmatmul.mubr.f32.gmra.mrb[0].mxu0 %v5890
      %v6004 = vpop.f32.mrb[0].mxu0
      %v6005 = vadd.f32 0.0, %v6004
      %v6006 = vpop.f32.mrb[0].mxu0
      %6007 = vmatprep.mubr.f32.mxu0 0.0
      %6008 = vmatmul.mubr.f32.gmra.mrb[0].mxu0 %v5893
      %v6009 = vpop.f32.mrb[0].mxu0
      %v6010 = vadd.f32 0.0, %v6009
      %v6011 = vpop.f32.mrb[0].mxu0
      %6012 = vmatprep.mubr.f32.mxu0 0.0
      %6013 = vmatmul.mubr.f32.gmra.mrb[0].mxu0 %v5896
      %v6014 = vpop.f32.mrb[0].mxu0
      %v6015 = vadd.f32 0.0, %v6014
      %v6016 = vpop.f32.mrb[0].mxu0
      %6017 = vmatprep.mubr.f32.mxu0 0.0
      %6018 = vmatmul.mubr.f32.gmra.mrb[0].mxu0 %v5899
      %v6019 = vpop.f32.mrb[0].mxu0
      %v6020 = vadd.f32 0.0, %v6019
      %v6021 = vpop.f32.mrb[0].mxu0
      %6022 = vmatprep.mubr.f32.mxu0 0.0
      %6023 = vmatmul.mubr.f32.gmra.mrb[0].mxu0 %v5902
      %v6024 = vpop.f32.mrb[0].mxu0
      %v6025 = vadd.f32 0.0, %v6024
      %v6026 = vpop.f32.mrb[0].mxu0
      %6027 = vmatprep.mubr.f32.mxu0 0.0
      %6028 = vmatmul.mubr.f32.gmra.mrb[0].mxu0 %v5905
      %v6029 = vpop.f32.mrb[0].mxu0
      %v6030 = vadd.f32 0.0, %v6029
      %v6031 = vpop.f32.mrb[0].mxu0
      %6032 = vmatprep.mubr.f32.mxu0 0.0
      %6033 = vmatmul.mubr.f32.gmra.mrb[0].mxu0 %v5908
      %v6034 = vpop.f32.mrb[0].mxu0
      %v6035 = vadd.f32 0.0, %v6034
      %v6036 = vpop.f32.mrb[0].mxu0
      %6037 = vmatprep.mubr.f32.mxu0 0.0
      %6038 = vmatmul.mubr.f32.gmra.mrb[0].mxu0 %v5911
      %v6039 = vpop.f32.mrb[0].mxu0
      %v6040 = vadd.f32 0.0, %v6039
      %v6041 = vpop.f32.mrb[0].mxu0
      %6042 = vdwg.mxu0
      %v6043 = vld [vmem:[#allocation4] sm:$0xff]
      %v6044 = vld [vmem:[#allocation4 + $0x8] sm:$0xff]
      %v6045 = vld [vmem:[#allocation4 + $0x10] sm:$0xff]
      %v6046 = vld [vmem:[#allocation4 + $0x18] sm:$0xff]
      %v6047 = vld [vmem:[#allocation4 + $0x20] sm:$0xff]
      %v6048 = vld [vmem:[#allocation4 + $0x28] sm:$0xff]
      %v6049 = vld [vmem:[#allocation4 + $0x30] sm:$0xff]
      %v6050 = vld [vmem:[#allocation4 + $0x38] sm:$0xff]
      %v6051 = vld [vmem:[#allocation4 + $0x40] sm:$0xff]
      %v6052 = vld [vmem:[#allocation4 + $0x48] sm:$0xff]
      %v6053 = vld [vmem:[#allocation4 + $0x50] sm:$0xff]
      %v6054 = vld [vmem:[#allocation4 + $0x58] sm:$0xff]
      %v6055 = vld [vmem:[#allocation4 + $0x60] sm:$0xf]
      %v6056 = vadd.f32 %v6043, %v5980
      %v6057 = vadd.f32 %v6044, %v5985
      %v6058 = vadd.f32 %v6045, %v5990
      %v6059 = vadd.f32 %v6046, %v5995
      %v6060 = vadd.f32 %v6047, %v6000
      %v6061 = vadd.f32 %v6048, %v6005
      %v6062 = vadd.f32 %v6049, %v6010
      %v6063 = vadd.f32 %v6050, %v6015
      %v6064 = vadd.f32 %v6051, %v6020
      %v6065 = vadd.f32 %v6052, %v6025
      %v6066 = vadd.f32 %v6053, %v6030
      %v6067 = vadd.f32 %v6054, %v6035
      %v6068 = vadd.f32 %v6055, %v6040
      %6069 = vst.msk [vmem:[#allocation4] sm:$0xff] %vm403, %v6056
      %6070 = vst.msk [vmem:[#allocation4 + $0x8] sm:$0xff] %vm403, %v6057
      %6071 = vst.msk [vmem:[#allocation4 + $0x10] sm:$0xff] %vm403, %v6058
      %6072 = vst.msk [vmem:[#allocation4 + $0x18] sm:$0xff] %vm403, %v6059
      %6073 = vst.msk [vmem:[#allocation4 + $0x20] sm:$0xff] %vm403, %v6060
      %6074 = vst.msk [vmem:[#allocation4 + $0x28] sm:$0xff] %vm403, %v6061
      %6075 = vst.msk [vmem:[#allocation4 + $0x30] sm:$0xff] %vm403, %v6062
      %6076 = vst.msk [vmem:[#allocation4 + $0x38] sm:$0xff] %vm403, %v6063
      %6077 = vst.msk [vmem:[#allocation4 + $0x40] sm:$0xff] %vm403, %v6064
      %6078 = vst.msk [vmem:[#allocation4 + $0x48] sm:$0xff] %vm403, %v6065
      %6079 = vst.msk [vmem:[#allocation4 + $0x50] sm:$0xff] %vm403, %v6066
      %6080 = vst.msk [vmem:[#allocation4 + $0x58] sm:$0xff] %vm403, %v6067
      %6081 = vst.msk [vmem:[#allocation4 + $0x60] sm:$0xf] %vm5854, %v6068
      %v6082 = vld [vmem:[#allocation3 + $0x2] sm:$0xff]
      %v6083 = vld [vmem:[#allocation3 + $0xa] sm:$0xff]
      %v6084 = vld [vmem:[#allocation3 + $0x12] sm:$0xff]
      %v6085 = vld [vmem:[#allocation3 + $0x1a] sm:$0xff]
      %v6086 = vld [vmem:[#allocation3 + $0x22] sm:$0xff]
      %v6087 = vld [vmem:[#allocation3 + $0x2a] sm:$0xff]
      %v6088 = vld [vmem:[#allocation3 + $0x32] sm:$0xff]
      %v6089 = vld [vmem:[#allocation3 + $0x3a] sm:$0xff]
      %v6090 = vld [vmem:[#allocation3 + $0x42] sm:$0xff]
      %v6091 = vld [vmem:[#allocation3 + $0x4a] sm:$0xff]
      %v6092 = vld [vmem:[#allocation3 + $0x52] sm:$0xff]
      %v6093 = vld [vmem:[#allocation3 + $0x5a] sm:$0xff]
      %v6094 = vld [vmem:[#allocation3 + $0x62] sm:$0xf]
      %s6095 = scalar_lea.vmem %s3, 64
      %v6096 = vld [vmem:[%s6095] sm:$0xff]
      %v6097 = vld [vmem:[%s6095 + $0x8] sm:$0xff]
      %v6098 = vld [vmem:[%s6095 + $0x10] sm:$0xff]
      %v6099 = vld [vmem:[%s6095 + $0x18] sm:$0xff]
      %v6101 = vsel %vm385, %v6082, 0
      %v6104 = vsel %vm385, %v6083, 0
      %v6107 = vsel %vm385, %v6084, 0
      %v6110 = vsel %vm385, %v6085, 0
      %v6113 = vsel %vm385, %v6086, 0
      %v6116 = vsel %vm385, %v6087, 0
      %v6119 = vsel %vm385, %v6088, 0
      %v6122 = vsel %vm385, %v6089, 0
      %v6125 = vsel %vm385, %v6090, 0
      %v6128 = vsel %vm385, %v6091, 0
      %v6131 = vsel %vm385, %v6092, 0
      %v6134 = vsel %vm385, %v6093, 0
      %v6137 = vsel %vm385, %v6094, 0
      %6139 = vmatprep.subr.mxu0 0.0
      %6140 = vmatpush1.msra.mxu0 %v6096
      %6141 = vmatprep.subr.mxu0 0.0
      %6142 = vmatpush1.msra.mxu0 %v6097
      %6143 = vmatprep.subr.mxu0 0.0
      %6144 = vmatpush1.msra.mxu0 %v6098
      %6145 = vmatprep.subr.mxu0 0.0
      %6146 = vmatpush1.msra.mxu0 %v6099
      %6147 = vmatprep.subr.mxu0 0.0
      %6148 = vmatpush1.msra.mxu0 0.0
      %6149 = vmatprep.subr.mxu0 0.0
      %6150 = vmatpush1.msra.mxu0 0.0
      %6151 = vmatprep.subr.mxu0 0.0
      %6152 = vmatpush1.msra.mxu0 0.0
      %6153 = vmatprep.subr.mxu0 0.0
      %6154 = vmatpush1.msra.mxu0 0.0
      %6155 = vmatprep.subr.mxu0 0.0
      %6156 = vmatpush1.msra.mxu0 0.0
      %6157 = vmatprep.subr.mxu0 0.0
      %6158 = vmatpush1.msra.mxu0 0.0
      %6159 = vmatprep.subr.mxu0 0.0
      %6160 = vmatpush1.msra.mxu0 0.0
      %6161 = vmatprep.subr.mxu0 0.0
      %6162 = vmatpush1.msra.mxu0 0.0
      %6163 = vmatprep.subr.mxu0 0.0
      %6164 = vmatpush1.msra.mxu0 0.0
      %6165 = vmatprep.subr.mxu0 0.0
      %6166 = vmatpush1.msra.mxu0 0.0
      %6167 = vmatprep.subr.mxu0 0.0
      %6168 = vmatpush1.msra.mxu0 0.0
      %6169 = vmatprep.subr.mxu0 0.0
      %6170 = vmatpush1.msra.mxu0 0.0
      %6171 = vmatprep.subr.mxu0 0.0
      %6172 = vmatpush1.msra.mxu0 0.0
      %6173 = vmatprep.subr.mxu0 0.0
      %6174 = vmatpush1.msra.mxu0 0.0
      %6175 = vmatprep.subr.mxu0 0.0
      %6176 = vmatpush1.msra.mxu0 0.0
      %6177 = vmatprep.subr.mxu0 0.0
      %6178 = vmatpush1.msra.mxu0 0.0
      %6179 = vmatprep.subr.mxu0 0.0
      %6180 = vmatpush1.msra.mxu0 0.0
      %6181 = vmatprep.subr.mxu0 0.0
      %6182 = vmatpush1.msra.mxu0 0.0
      %6183 = vmatprep.subr.mxu0 0.0
      %6184 = vmatpush1.msra.mxu0 0.0
      %6185 = vmatprep.subr.mxu0 0.0
      %6186 = vmatpush1.msra.mxu0 0.0
      %6187 = vmatprep.subr.mxu0 0.0
      %6188 = vmatpush1.msra.mxu0 0.0
      %6189 = vmatprep.subr.mxu0 0.0
      %6190 = vmatpush1.msra.mxu0 0.0
      %6191 = vmatprep.subr.mxu0 0.0
      %6192 = vmatpush1.msra.mxu0 0.0
      %6193 = vmatprep.subr.mxu0 0.0
      %6194 = vmatpush1.msra.mxu0 0.0
      %6195 = vmatprep.subr.mxu0 0.0
      %6196 = vmatpush1.msra.mxu0 0.0
      %6197 = vmatprep.subr.mxu0 0.0
      %6198 = vmatpush1.msra.mxu0 0.0
      %6199 = vmatprep.subr.mxu0 0.0
      %6200 = vmatpush1.msra.mxu0 0.0
      %6201 = vmatprep.subr.mxu0 0.0
      %6202 = vmatpush1.msra.mxu0 0.0
      %6203 = vmatprep.mubr.f32.mxu0 0.0
      %6204 = vmatmul.mubr.f32.gmra.mrb[0].mxu0 %v6101
      %v6205 = vpop.f32.mrb[0].mxu0
      %v6206 = vadd.f32 0.0, %v6205
      %v6207 = vpop.f32.mrb[0].mxu0
      %6208 = vmatprep.mubr.f32.mxu0 0.0
      %6209 = vmatmul.mubr.f32.gmra.mrb[0].mxu0 %v6104
      %v6210 = vpop.f32.mrb[0].mxu0
      %v6211 = vadd.f32 0.0, %v6210
      %v6212 = vpop.f32.mrb[0].mxu0
      %6213 = vmatprep.mubr.f32.mxu0 0.0
      %6214 = vmatmul.mubr.f32.gmra.mrb[0].mxu0 %v6107
      %v6215 = vpop.f32.mrb[0].mxu0
      %v6216 = vadd.f32 0.0, %v6215
      %v6217 = vpop.f32.mrb[0].mxu0
      %6218 = vmatprep.mubr.f32.mxu0 0.0
      %6219 = vmatmul.mubr.f32.gmra.mrb[0].mxu0 %v6110
      %v6220 = vpop.f32.mrb[0].mxu0
      %v6221 = vadd.f32 0.0, %v6220
      %v6222 = vpop.f32.mrb[0].mxu0
      %6223 = vmatprep.mubr.f32.mxu0 0.0
      %6224 = vmatmul.mubr.f32.gmra.mrb[0].mxu0 %v6113
      %v6225 = vpop.f32.mrb[0].mxu0
      %v6226 = vadd.f32 0.0, %v6225
      %v6227 = vpop.f32.mrb[0].mxu0
      %6228 = vmatprep.mubr.f32.mxu0 0.0
      %6229 = vmatmul.mubr.f32.gmra.mrb[0].mxu0 %v6116
      %v6230 = vpop.f32.mrb[0].mxu0
      %v6231 = vadd.f32 0.0, %v6230
      %v6232 = vpop.f32.mrb[0].mxu0
      %6233 = vmatprep.mubr.f32.mxu0 0.0
      %6234 = vmatmul.mubr.f32.gmra.mrb[0].mxu0 %v6119
      %v6235 = vpop.f32.mrb[0].mxu0
      %v6236 = vadd.f32 0.0, %v6235
      %v6237 = vpop.f32.mrb[0].mxu0
      %6238 = vmatprep.mubr.f32.mxu0 0.0
      %6239 = vmatmul.mubr.f32.gmra.mrb[0].mxu0 %v6122
      %v6240 = vpop.f32.mrb[0].mxu0
      %v6241 = vadd.f32 0.0, %v6240
      %v6242 = vpop.f32.mrb[0].mxu0
      %6243 = vmatprep.mubr.f32.mxu0 0.0
      %6244 = vmatmul.mubr.f32.gmra.mrb[0].mxu0 %v6125
      %v6245 = vpop.f32.mrb[0].mxu0
      %v6246 = vadd.f32 0.0, %v6245
      %v6247 = vpop.f32.mrb[0].mxu0
      %6248 = vmatprep.mubr.f32.mxu0 0.0
      %6249 = vmatmul.mubr.f32.gmra.mrb[0].mxu0 %v6128
      %v6250 = vpop.f32.mrb[0].mxu0
      %v6251 = vadd.f32 0.0, %v6250
      %v6252 = vpop.f32.mrb[0].mxu0
      %6253 = vmatprep.mubr.f32.mxu0 0.0
      %6254 = vmatmul.mubr.f32.gmra.mrb[0].mxu0 %v6131
      %v6255 = vpop.f32.mrb[0].mxu0
      %v6256 = vadd.f32 0.0, %v6255
      %v6257 = vpop.f32.mrb[0].mxu0
      %6258 = vmatprep.mubr.f32.mxu0 0.0
      %6259 = vmatmul.mubr.f32.gmra.mrb[0].mxu0 %v6134
      %v6260 = vpop.f32.mrb[0].mxu0
      %v6261 = vadd.f32 0.0, %v6260
      %v6262 = vpop.f32.mrb[0].mxu0
      %6263 = vmatprep.mubr.f32.mxu0 0.0
      %6264 = vmatmul.mubr.f32.gmra.mrb[0].mxu0 %v6137
      %v6265 = vpop.f32.mrb[0].mxu0
      %v6266 = vadd.f32 0.0, %v6265
      %v6267 = vpop.f32.mrb[0].mxu0
      %6268 = vdwg.mxu0
      %v6269 = vld [vmem:[#allocation4] sm:$0xff]
      %v6270 = vld [vmem:[#allocation4 + $0x8] sm:$0xff]
      %v6271 = vld [vmem:[#allocation4 + $0x10] sm:$0xff]
      %v6272 = vld [vmem:[#allocation4 + $0x18] sm:$0xff]
      %v6273 = vld [vmem:[#allocation4 + $0x20] sm:$0xff]
      %v6274 = vld [vmem:[#allocation4 + $0x28] sm:$0xff]
      %v6275 = vld [vmem:[#allocation4 + $0x30] sm:$0xff]
      %v6276 = vld [vmem:[#allocation4 + $0x38] sm:$0xff]
      %v6277 = vld [vmem:[#allocation4 + $0x40] sm:$0xff]
      %v6278 = vld [vmem:[#allocation4 + $0x48] sm:$0xff]
      %v6279 = vld [vmem:[#allocation4 + $0x50] sm:$0xff]
      %v6280 = vld [vmem:[#allocation4 + $0x58] sm:$0xff]
      %v6281 = vld [vmem:[#allocation4 + $0x60] sm:$0xf]
      %v6282 = vadd.f32 %v6269, %v6206
      %v6283 = vadd.f32 %v6270, %v6211
      %v6284 = vadd.f32 %v6271, %v6216
      %v6285 = vadd.f32 %v6272, %v6221
      %v6286 = vadd.f32 %v6273, %v6226
      %v6287 = vadd.f32 %v6274, %v6231
      %v6288 = vadd.f32 %v6275, %v6236
      %v6289 = vadd.f32 %v6276, %v6241
      %v6290 = vadd.f32 %v6277, %v6246
      %v6291 = vadd.f32 %v6278, %v6251
      %v6292 = vadd.f32 %v6279, %v6256
      %v6293 = vadd.f32 %v6280, %v6261
      %v6294 = vadd.f32 %v6281, %v6266
      %6295 = vst.msk [vmem:[#allocation4] sm:$0xff] %vm403, %v6282
      %6296 = vst.msk [vmem:[#allocation4 + $0x8] sm:$0xff] %vm403, %v6283
      %6297 = vst.msk [vmem:[#allocation4 + $0x10] sm:$0xff] %vm403, %v6284
      %6298 = vst.msk [vmem:[#allocation4 + $0x18] sm:$0xff] %vm403, %v6285
      %6299 = vst.msk [vmem:[#allocation4 + $0x20] sm:$0xff] %vm403, %v6286
      %6300 = vst.msk [vmem:[#allocation4 + $0x28] sm:$0xff] %vm403, %v6287
      %6301 = vst.msk [vmem:[#allocation4 + $0x30] sm:$0xff] %vm403, %v6288
      %6302 = vst.msk [vmem:[#allocation4 + $0x38] sm:$0xff] %vm403, %v6289
      %6303 = vst.msk [vmem:[#allocation4 + $0x40] sm:$0xff] %vm403, %v6290
      %6304 = vst.msk [vmem:[#allocation4 + $0x48] sm:$0xff] %vm403, %v6291
      %6305 = vst.msk [vmem:[#allocation4 + $0x50] sm:$0xff] %vm403, %v6292
      %6306 = vst.msk [vmem:[#allocation4 + $0x58] sm:$0xff] %vm403, %v6293
      %6307 = vst.msk [vmem:[#allocation4 + $0x60] sm:$0xf] %vm5854, %v6294
      %v6308 = vld [vmem:[#allocation3 + $0xa] sm:$0xff]
      %v6309 = vld [vmem:[#allocation3 + $0x12] sm:$0xff]
      %v6310 = vld [vmem:[#allocation3 + $0x1a] sm:$0xff]
      %v6311 = vld [vmem:[#allocation3 + $0x22] sm:$0xff]
      %v6312 = vld [vmem:[#allocation3 + $0x2a] sm:$0xff]
      %v6313 = vld [vmem:[#allocation3 + $0x32] sm:$0xff]
      %v6314 = vld [vmem:[#allocation3 + $0x3a] sm:$0xff]
      %v6315 = vld [vmem:[#allocation3 + $0x42] sm:$0xff]
      %v6316 = vld [vmem:[#allocation3 + $0x4a] sm:$0xff]
      %v6317 = vld [vmem:[#allocation3 + $0x52] sm:$0xff]
      %v6318 = vld [vmem:[#allocation3 + $0x5a] sm:$0xff]
      %v6319 = vld [vmem:[#allocation3 + $0x62] sm:$0xff]
      %v6320 = vld [vmem:[#allocation3 + $0x6a] sm:$0xf]
      %s6321 = scalar_lea.vmem %s3, 96
      %v6322 = vld [vmem:[%s6321] sm:$0xff]
      %v6323 = vld [vmem:[%s6321 + $0x8] sm:$0xff]
      %v6324 = vld [vmem:[%s6321 + $0x10] sm:$0xff]
      %v6325 = vld [vmem:[%s6321 + $0x18] sm:$0xff]
      %v6327 = vsel %vm385, %v6308, 0
      %v6330 = vsel %vm385, %v6309, 0
      %v6333 = vsel %vm385, %v6310, 0
      %v6336 = vsel %vm385, %v6311, 0
      %v6339 = vsel %vm385, %v6312, 0
      %v6342 = vsel %vm385, %v6313, 0
      %v6345 = vsel %vm385, %v6314, 0
      %v6348 = vsel %vm385, %v6315, 0
      %v6351 = vsel %vm385, %v6316, 0
      %v6354 = vsel %vm385, %v6317, 0
      %v6357 = vsel %vm385, %v6318, 0
      %v6360 = vsel %vm385, %v6319, 0
      %v6363 = vsel %vm385, %v6320, 0
      %6365 = vmatprep.subr.mxu0 0.0
      %6366 = vmatpush1.msra.mxu0 %v6322
      %6367 = vmatprep.subr.mxu0 0.0
      %6368 = vmatpush1.msra.mxu0 %v6323
      %6369 = vmatprep.subr.mxu0 0.0
      %6370 = vmatpush1.msra.mxu0 %v6324
      %6371 = vmatprep.subr.mxu0 0.0
      %6372 = vmatpush1.msra.mxu0 %v6325
      %6373 = vmatprep.subr.mxu0 0.0
      %6374 = vmatpush1.msra.mxu0 0.0
      %6375 = vmatprep.subr.mxu0 0.0
      %6376 = vmatpush1.msra.mxu0 0.0
      %6377 = vmatprep.subr.mxu0 0.0
      %6378 = vmatpush1.msra.mxu0 0.0
      %6379 = vmatprep.subr.mxu0 0.0
      %6380 = vmatpush1.msra.mxu0 0.0
      %6381 = vmatprep.subr.mxu0 0.0
      %6382 = vmatpush1.msra.mxu0 0.0
      %6383 = vmatprep.subr.mxu0 0.0
      %6384 = vmatpush1.msra.mxu0 0.0
      %6385 = vmatprep.subr.mxu0 0.0
      %6386 = vmatpush1.msra.mxu0 0.0
      %6387 = vmatprep.subr.mxu0 0.0
      %6388 = vmatpush1.msra.mxu0 0.0
      %6389 = vmatprep.subr.mxu0 0.0
      %6390 = vmatpush1.msra.mxu0 0.0
      %6391 = vmatprep.subr.mxu0 0.0
      %6392 = vmatpush1.msra.mxu0 0.0
      %6393 = vmatprep.subr.mxu0 0.0
      %6394 = vmatpush1.msra.mxu0 0.0
      %6395 = vmatprep.subr.mxu0 0.0
      %6396 = vmatpush1.msra.mxu0 0.0
      %6397 = vmatprep.subr.mxu0 0.0
      %6398 = vmatpush1.msra.mxu0 0.0
      %6399 = vmatprep.subr.mxu0 0.0
      %6400 = vmatpush1.msra.mxu0 0.0
      %6401 = vmatprep.subr.mxu0 0.0
      %6402 = vmatpush1.msra.mxu0 0.0
      %6403 = vmatprep.subr.mxu0 0.0
      %6404 = vmatpush1.msra.mxu0 0.0
      %6405 = vmatprep.subr.mxu0 0.0
      %6406 = vmatpush1.msra.mxu0 0.0
      %6407 = vmatprep.subr.mxu0 0.0
      %6408 = vmatpush1.msra.mxu0 0.0
      %6409 = vmatprep.subr.mxu0 0.0
      %6410 = vmatpush1.msra.mxu0 0.0
      %6411 = vmatprep.subr.mxu0 0.0
      %6412 = vmatpush1.msra.mxu0 0.0
      %6413 = vmatprep.subr.mxu0 0.0
      %6414 = vmatpush1.msra.mxu0 0.0
      %6415 = vmatprep.subr.mxu0 0.0
      %6416 = vmatpush1.msra.mxu0 0.0
      %6417 = vmatprep.subr.mxu0 0.0
      %6418 = vmatpush1.msra.mxu0 0.0
      %6419 = vmatprep.subr.mxu0 0.0
      %6420 = vmatpush1.msra.mxu0 0.0
      %6421 = vmatprep.subr.mxu0 0.0
      %6422 = vmatpush1.msra.mxu0 0.0
      %6423 = vmatprep.subr.mxu0 0.0
      %6424 = vmatpush1.msra.mxu0 0.0
      %6425 = vmatprep.subr.mxu0 0.0
      %6426 = vmatpush1.msra.mxu0 0.0
      %6427 = vmatprep.subr.mxu0 0.0
      %6428 = vmatpush1.msra.mxu0 0.0
      %6429 = vmatprep.mubr.f32.mxu0 0.0
      %6430 = vmatmul.mubr.f32.gmra.mrb[0].mxu0 %v6327
      %v6431 = vpop.f32.mrb[0].mxu0
      %v6432 = vadd.f32 0.0, %v6431
      %v6433 = vpop.f32.mrb[0].mxu0
      %6434 = vmatprep.mubr.f32.mxu0 0.0
      %6435 = vmatmul.mubr.f32.gmra.mrb[0].mxu0 %v6330
      %v6436 = vpop.f32.mrb[0].mxu0
      %v6437 = vadd.f32 0.0, %v6436
      %v6438 = vpop.f32.mrb[0].mxu0
      %6439 = vmatprep.mubr.f32.mxu0 0.0
      %6440 = vmatmul.mubr.f32.gmra.mrb[0].mxu0 %v6333
      %v6441 = vpop.f32.mrb[0].mxu0
      %v6442 = vadd.f32 0.0, %v6441
      %v6443 = vpop.f32.mrb[0].mxu0
      %6444 = vmatprep.mubr.f32.mxu0 0.0
      %6445 = vmatmul.mubr.f32.gmra.mrb[0].mxu0 %v6336
      %v6446 = vpop.f32.mrb[0].mxu0
      %v6447 = vadd.f32 0.0, %v6446
      %v6448 = vpop.f32.mrb[0].mxu0
      %6449 = vmatprep.mubr.f32.mxu0 0.0
      %6450 = vmatmul.mubr.f32.gmra.mrb[0].mxu0 %v6339
      %v6451 = vpop.f32.mrb[0].mxu0
      %v6452 = vadd.f32 0.0, %v6451
      %v6453 = vpop.f32.mrb[0].mxu0
      %6454 = vmatprep.mubr.f32.mxu0 0.0
      %6455 = vmatmul.mubr.f32.gmra.mrb[0].mxu0 %v6342
      %v6456 = vpop.f32.mrb[0].mxu0
      %v6457 = vadd.f32 0.0, %v6456
      %v6458 = vpop.f32.mrb[0].mxu0
      %6459 = vmatprep.mubr.f32.mxu0 0.0
      %6460 = vmatmul.mubr.f32.gmra.mrb[0].mxu0 %v6345
      %v6461 = vpop.f32.mrb[0].mxu0
      %v6462 = vadd.f32 0.0, %v6461
      %v6463 = vpop.f32.mrb[0].mxu0
      %6464 = vmatprep.mubr.f32.mxu0 0.0
      %6465 = vmatmul.mubr.f32.gmra.mrb[0].mxu0 %v6348
      %v6466 = vpop.f32.mrb[0].mxu0
      %v6467 = vadd.f32 0.0, %v6466
      %v6468 = vpop.f32.mrb[0].mxu0
      %6469 = vmatprep.mubr.f32.mxu0 0.0
      %6470 = vmatmul.mubr.f32.gmra.mrb[0].mxu0 %v6351
      %v6471 = vpop.f32.mrb[0].mxu0
      %v6472 = vadd.f32 0.0, %v6471
      %v6473 = vpop.f32.mrb[0].mxu0
      %6474 = vmatprep.mubr.f32.mxu0 0.0
      %6475 = vmatmul.mubr.f32.gmra.mrb[0].mxu0 %v6354
      %v6476 = vpop.f32.mrb[0].mxu0
      %v6477 = vadd.f32 0.0, %v6476
      %v6478 = vpop.f32.mrb[0].mxu0
      %6479 = vmatprep.mubr.f32.mxu0 0.0
      %6480 = vmatmul.mubr.f32.gmra.mrb[0].mxu0 %v6357
      %v6481 = vpop.f32.mrb[0].mxu0
      %v6482 = vadd.f32 0.0, %v6481
      %v6483 = vpop.f32.mrb[0].mxu0
      %6484 = vmatprep.mubr.f32.mxu0 0.0
      %6485 = vmatmul.mubr.f32.gmra.mrb[0].mxu0 %v6360
      %v6486 = vpop.f32.mrb[0].mxu0
      %v6487 = vadd.f32 0.0, %v6486
      %v6488 = vpop.f32.mrb[0].mxu0
      %6489 = vmatprep.mubr.f32.mxu0 0.0
      %6490 = vmatmul.mubr.f32.gmra.mrb[0].mxu0 %v6363
      %v6491 = vpop.f32.mrb[0].mxu0
      %v6492 = vadd.f32 0.0, %v6491
      %v6493 = vpop.f32.mrb[0].mxu0
      %6494 = vdwg.mxu0
      %v6495 = vld [vmem:[#allocation4] sm:$0xff]
      %v6496 = vld [vmem:[#allocation4 + $0x8] sm:$0xff]
      %v6497 = vld [vmem:[#allocation4 + $0x10] sm:$0xff]
      %v6498 = vld [vmem:[#allocation4 + $0x18] sm:$0xff]
      %v6499 = vld [vmem:[#allocation4 + $0x20] sm:$0xff]
      %v6500 = vld [vmem:[#allocation4 + $0x28] sm:$0xff]
      %v6501 = vld [vmem:[#allocation4 + $0x30] sm:$0xff]
      %v6502 = vld [vmem:[#allocation4 + $0x38] sm:$0xff]
      %v6503 = vld [vmem:[#allocation4 + $0x40] sm:$0xff]
      %v6504 = vld [vmem:[#allocation4 + $0x48] sm:$0xff]
      %v6505 = vld [vmem:[#allocation4 + $0x50] sm:$0xff]
      %v6506 = vld [vmem:[#allocation4 + $0x58] sm:$0xff]
      %v6507 = vld [vmem:[#allocation4 + $0x60] sm:$0xf]
      %v6508 = vadd.f32 %v6495, %v6432
      %v6509 = vadd.f32 %v6496, %v6437
      %v6510 = vadd.f32 %v6497, %v6442
      %v6511 = vadd.f32 %v6498, %v6447
      %v6512 = vadd.f32 %v6499, %v6452
      %v6513 = vadd.f32 %v6500, %v6457
      %v6514 = vadd.f32 %v6501, %v6462
      %v6515 = vadd.f32 %v6502, %v6467
      %v6516 = vadd.f32 %v6503, %v6472
      %v6517 = vadd.f32 %v6504, %v6477
      %v6518 = vadd.f32 %v6505, %v6482
      %v6519 = vadd.f32 %v6506, %v6487
      %v6520 = vadd.f32 %v6507, %v6492
      %6521 = vst.msk [vmem:[#allocation4] sm:$0xff] %vm403, %v6508
      %6522 = vst.msk [vmem:[#allocation4 + $0x8] sm:$0xff] %vm403, %v6509
      %6523 = vst.msk [vmem:[#allocation4 + $0x10] sm:$0xff] %vm403, %v6510
      %6524 = vst.msk [vmem:[#allocation4 + $0x18] sm:$0xff] %vm403, %v6511
      %6525 = vst.msk [vmem:[#allocation4 + $0x20] sm:$0xff] %vm403, %v6512
      %6526 = vst.msk [vmem:[#allocation4 + $0x28] sm:$0xff] %vm403, %v6513
      %6527 = vst.msk [vmem:[#allocation4 + $0x30] sm:$0xff] %vm403, %v6514
      %6528 = vst.msk [vmem:[#allocation4 + $0x38] sm:$0xff] %vm403, %v6515
      %6529 = vst.msk [vmem:[#allocation4 + $0x40] sm:$0xff] %vm403, %v6516
      %6530 = vst.msk [vmem:[#allocation4 + $0x48] sm:$0xff] %vm403, %v6517
      %6531 = vst.msk [vmem:[#allocation4 + $0x50] sm:$0xff] %vm403, %v6518
      %6532 = vst.msk [vmem:[#allocation4 + $0x58] sm:$0xff] %vm403, %v6519
      %6533 = vst.msk [vmem:[#allocation4 + $0x60] sm:$0xf] %vm5854, %v6520
      %v6534 = vld [vmem:[#allocation3 + $0xb] sm:$0xff]
      %v6535 = vld [vmem:[#allocation3 + $0x13] sm:$0xff]
      %v6536 = vld [vmem:[#allocation3 + $0x1b] sm:$0xff]
      %v6537 = vld [vmem:[#allocation3 + $0x23] sm:$0xff]
      %v6538 = vld [vmem:[#allocation3 + $0x2b] sm:$0xff]
      %v6539 = vld [vmem:[#allocation3 + $0x33] sm:$0xff]
      %v6540 = vld [vmem:[#allocation3 + $0x3b] sm:$0xff]
      %v6541 = vld [vmem:[#allocation3 + $0x43] sm:$0xff]
      %v6542 = vld [vmem:[#allocation3 + $0x4b] sm:$0xff]
      %v6543 = vld [vmem:[#allocation3 + $0x53] sm:$0xff]
      %v6544 = vld [vmem:[#allocation3 + $0x5b] sm:$0xff]
      %v6545 = vld [vmem:[#allocation3 + $0x63] sm:$0xff]
      %v6546 = vld [vmem:[#allocation3 + $0x6b] sm:$0xf]
      %s6547 = scalar_lea.vmem %s3, 128
      %v6548 = vld [vmem:[%s6547] sm:$0xff]
      %v6549 = vld [vmem:[%s6547 + $0x8] sm:$0xff]
      %v6550 = vld [vmem:[%s6547 + $0x10] sm:$0xff]
      %v6551 = vld [vmem:[%s6547 + $0x18] sm:$0xff]
      %v6553 = vsel %vm385, %v6534, 0
      %v6556 = vsel %vm385, %v6535, 0
      %v6559 = vsel %vm385, %v6536, 0
      %v6562 = vsel %vm385, %v6537, 0
      %v6565 = vsel %vm385, %v6538, 0
      %v6568 = vsel %vm385, %v6539, 0
      %v6571 = vsel %vm385, %v6540, 0
      %v6574 = vsel %vm385, %v6541, 0
      %v6577 = vsel %vm385, %v6542, 0
      %v6580 = vsel %vm385, %v6543, 0
      %v6583 = vsel %vm385, %v6544, 0
      %v6586 = vsel %vm385, %v6545, 0
      %v6589 = vsel %vm385, %v6546, 0
      %6591 = vmatprep.subr.mxu0 0.0
      %6592 = vmatpush1.msra.mxu0 %v6548
      %6593 = vmatprep.subr.mxu0 0.0
      %6594 = vmatpush1.msra.mxu0 %v6549
      %6595 = vmatprep.subr.mxu0 0.0
      %6596 = vmatpush1.msra.mxu0 %v6550
      %6597 = vmatprep.subr.mxu0 0.0
      %6598 = vmatpush1.msra.mxu0 %v6551
      %6599 = vmatprep.subr.mxu0 0.0
      %6600 = vmatpush1.msra.mxu0 0.0
      %6601 = vmatprep.subr.mxu0 0.0
      %6602 = vmatpush1.msra.mxu0 0.0
      %6603 = vmatprep.subr.mxu0 0.0
      %6604 = vmatpush1.msra.mxu0 0.0
      %6605 = vmatprep.subr.mxu0 0.0
      %6606 = vmatpush1.msra.mxu0 0.0
      %6607 = vmatprep.subr.mxu0 0.0
      %6608 = vmatpush1.msra.mxu0 0.0
      %6609 = vmatprep.subr.mxu0 0.0
      %6610 = vmatpush1.msra.mxu0 0.0
      %6611 = vmatprep.subr.mxu0 0.0
      %6612 = vmatpush1.msra.mxu0 0.0
      %6613 = vmatprep.subr.mxu0 0.0
      %6614 = vmatpush1.msra.mxu0 0.0
      %6615 = vmatprep.subr.mxu0 0.0
      %6616 = vmatpush1.msra.mxu0 0.0
      %6617 = vmatprep.subr.mxu0 0.0
      %6618 = vmatpush1.msra.mxu0 0.0
      %6619 = vmatprep.subr.mxu0 0.0
      %6620 = vmatpush1.msra.mxu0 0.0
      %6621 = vmatprep.subr.mxu0 0.0
      %6622 = vmatpush1.msra.mxu0 0.0
      %6623 = vmatprep.subr.mxu0 0.0
      %6624 = vmatpush1.msra.mxu0 0.0
      %6625 = vmatprep.subr.mxu0 0.0
      %6626 = vmatpush1.msra.mxu0 0.0
      %6627 = vmatprep.subr.mxu0 0.0
      %6628 = vmatpush1.msra.mxu0 0.0
      %6629 = vmatprep.subr.mxu0 0.0
      %6630 = vmatpush1.msra.mxu0 0.0
      %6631 = vmatprep.subr.mxu0 0.0
      %6632 = vmatpush1.msra.mxu0 0.0
      %6633 = vmatprep.subr.mxu0 0.0
      %6634 = vmatpush1.msra.mxu0 0.0
      %6635 = vmatprep.subr.mxu0 0.0
      %6636 = vmatpush1.msra.mxu0 0.0
      %6637 = vmatprep.subr.mxu0 0.0
      %6638 = vmatpush1.msra.mxu0 0.0
      %6639 = vmatprep.subr.mxu0 0.0
      %6640 = vmatpush1.msra.mxu0 0.0
      %6641 = vmatprep.subr.mxu0 0.0
      %6642 = vmatpush1.msra.mxu0 0.0
      %6643 = vmatprep.subr.mxu0 0.0
      %6644 = vmatpush1.msra.mxu0 0.0
      %6645 = vmatprep.subr.mxu0 0.0
      %6646 = vmatpush1.msra.mxu0 0.0
      %6647 = vmatprep.subr.mxu0 0.0
      %6648 = vmatpush1.msra.mxu0 0.0
      %6649 = vmatprep.subr.mxu0 0.0
      %6650 = vmatpush1.msra.mxu0 0.0
      %6651 = vmatprep.subr.mxu0 0.0
      %6652 = vmatpush1.msra.mxu0 0.0
      %6653 = vmatprep.subr.mxu0 0.0
      %6654 = vmatpush1.msra.mxu0 0.0
      %6655 = vmatprep.mubr.f32.mxu0 0.0
      %6656 = vmatmul.mubr.f32.gmra.mrb[0].mxu0 %v6553
      %v6657 = vpop.f32.mrb[0].mxu0
      %v6658 = vadd.f32 0.0, %v6657
      %v6659 = vpop.f32.mrb[0].mxu0
      %6660 = vmatprep.mubr.f32.mxu0 0.0
      %6661 = vmatmul.mubr.f32.gmra.mrb[0].mxu0 %v6556
      %v6662 = vpop.f32.mrb[0].mxu0
      %v6663 = vadd.f32 0.0, %v6662
      %v6664 = vpop.f32.mrb[0].mxu0
      %6665 = vmatprep.mubr.f32.mxu0 0.0
      %6666 = vmatmul.mubr.f32.gmra.mrb[0].mxu0 %v6559
      %v6667 = vpop.f32.mrb[0].mxu0
      %v6668 = vadd.f32 0.0, %v6667
      %v6669 = vpop.f32.mrb[0].mxu0
      %6670 = vmatprep.mubr.f32.mxu0 0.0
      %6671 = vmatmul.mubr.f32.gmra.mrb[0].mxu0 %v6562
      %v6672 = vpop.f32.mrb[0].mxu0
      %v6673 = vadd.f32 0.0, %v6672
      %v6674 = vpop.f32.mrb[0].mxu0
      %6675 = vmatprep.mubr.f32.mxu0 0.0
      %6676 = vmatmul.mubr.f32.gmra.mrb[0].mxu0 %v6565
      %v6677 = vpop.f32.mrb[0].mxu0
      %v6678 = vadd.f32 0.0, %v6677
      %v6679 = vpop.f32.mrb[0].mxu0
      %6680 = vmatprep.mubr.f32.mxu0 0.0
      %6681 = vmatmul.mubr.f32.gmra.mrb[0].mxu0 %v6568
      %v6682 = vpop.f32.mrb[0].mxu0
      %v6683 = vadd.f32 0.0, %v6682
      %v6684 = vpop.f32.mrb[0].mxu0
      %6685 = vmatprep.mubr.f32.mxu0 0.0
      %6686 = vmatmul.mubr.f32.gmra.mrb[0].mxu0 %v6571
      %v6687 = vpop.f32.mrb[0].mxu0
      %v6688 = vadd.f32 0.0, %v6687
      %v6689 = vpop.f32.mrb[0].mxu0
      %6690 = vmatprep.mubr.f32.mxu0 0.0
      %6691 = vmatmul.mubr.f32.gmra.mrb[0].mxu0 %v6574
      %v6692 = vpop.f32.mrb[0].mxu0
      %v6693 = vadd.f32 0.0, %v6692
      %v6694 = vpop.f32.mrb[0].mxu0
      %6695 = vmatprep.mubr.f32.mxu0 0.0
      %6696 = vmatmul.mubr.f32.gmra.mrb[0].mxu0 %v6577
      %v6697 = vpop.f32.mrb[0].mxu0
      %v6698 = vadd.f32 0.0, %v6697
      %v6699 = vpop.f32.mrb[0].mxu0
      %6700 = vmatprep.mubr.f32.mxu0 0.0
      %6701 = vmatmul.mubr.f32.gmra.mrb[0].mxu0 %v6580
      %v6702 = vpop.f32.mrb[0].mxu0
      %v6703 = vadd.f32 0.0, %v6702
      %v6704 = vpop.f32.mrb[0].mxu0
      %6705 = vmatprep.mubr.f32.mxu0 0.0
      %6706 = vmatmul.mubr.f32.gmra.mrb[0].mxu0 %v6583
      %v6707 = vpop.f32.mrb[0].mxu0
      %v6708 = vadd.f32 0.0, %v6707
      %v6709 = vpop.f32.mrb[0].mxu0
      %6710 = vmatprep.mubr.f32.mxu0 0.0
      %6711 = vmatmul.mubr.f32.gmra.mrb[0].mxu0 %v6586
      %v6712 = vpop.f32.mrb[0].mxu0
      %v6713 = vadd.f32 0.0, %v6712
      %v6714 = vpop.f32.mrb[0].mxu0
      %6715 = vmatprep.mubr.f32.mxu0 0.0
      %6716 = vmatmul.mubr.f32.gmra.mrb[0].mxu0 %v6589
      %v6717 = vpop.f32.mrb[0].mxu0
      %v6718 = vadd.f32 0.0, %v6717
      %v6719 = vpop.f32.mrb[0].mxu0
      %6720 = vdwg.mxu0
      %v6721 = vld [vmem:[#allocation4] sm:$0xff]
      %v6722 = vld [vmem:[#allocation4 + $0x8] sm:$0xff]
      %v6723 = vld [vmem:[#allocation4 + $0x10] sm:$0xff]
      %v6724 = vld [vmem:[#allocation4 + $0x18] sm:$0xff]
      %v6725 = vld [vmem:[#allocation4 + $0x20] sm:$0xff]
      %v6726 = vld [vmem:[#allocation4 + $0x28] sm:$0xff]
      %v6727 = vld [vmem:[#allocation4 + $0x30] sm:$0xff]
      %v6728 = vld [vmem:[#allocation4 + $0x38] sm:$0xff]
      %v6729 = vld [vmem:[#allocation4 + $0x40] sm:$0xff]
      %v6730 = vld [vmem:[#allocation4 + $0x48] sm:$0xff]
      %v6731 = vld [vmem:[#allocation4 + $0x50] sm:$0xff]
      %v6732 = vld [vmem:[#allocation4 + $0x58] sm:$0xff]
      %v6733 = vld [vmem:[#allocation4 + $0x60] sm:$0xf]
      %v6734 = vadd.f32 %v6721, %v6658
      %v6735 = vadd.f32 %v6722, %v6663
      %v6736 = vadd.f32 %v6723, %v6668
      %v6737 = vadd.f32 %v6724, %v6673
      %v6738 = vadd.f32 %v6725, %v6678
      %v6739 = vadd.f32 %v6726, %v6683
      %v6740 = vadd.f32 %v6727, %v6688
      %v6741 = vadd.f32 %v6728, %v6693
      %v6742 = vadd.f32 %v6729, %v6698
      %v6743 = vadd.f32 %v6730, %v6703
      %v6744 = vadd.f32 %v6731, %v6708
      %v6745 = vadd.f32 %v6732, %v6713
      %v6746 = vadd.f32 %v6733, %v6718
      %6747 = vst.msk [vmem:[#allocation4] sm:$0xff] %vm403, %v6734
      %6748 = vst.msk [vmem:[#allocation4 + $0x8] sm:$0xff] %vm403, %v6735
      %6749 = vst.msk [vmem:[#allocation4 + $0x10] sm:$0xff] %vm403, %v6736
      %6750 = vst.msk [vmem:[#allocation4 + $0x18] sm:$0xff] %vm403, %v6737
      %6751 = vst.msk [vmem:[#allocation4 + $0x20] sm:$0xff] %vm403, %v6738
      %6752 = vst.msk [vmem:[#allocation4 + $0x28] sm:$0xff] %vm403, %v6739
      %6753 = vst.msk [vmem:[#allocation4 + $0x30] sm:$0xff] %vm403, %v6740
      %6754 = vst.msk [vmem:[#allocation4 + $0x38] sm:$0xff] %vm403, %v6741
      %6755 = vst.msk [vmem:[#allocation4 + $0x40] sm:$0xff] %vm403, %v6742
      %6756 = vst.msk [vmem:[#allocation4 + $0x48] sm:$0xff] %vm403, %v6743
      %6757 = vst.msk [vmem:[#allocation4 + $0x50] sm:$0xff] %vm403, %v6744
      %6758 = vst.msk [vmem:[#allocation4 + $0x58] sm:$0xff] %vm403, %v6745
      %6759 = vst.msk [vmem:[#allocation4 + $0x60] sm:$0xf] %vm5854, %v6746
      %v6760 = vld [vmem:[#allocation3 + $0xc] sm:$0xff]
      %v6761 = vld [vmem:[#allocation3 + $0x14] sm:$0xff]
      %v6762 = vld [vmem:[#allocation3 + $0x1c] sm:$0xff]
      %v6763 = vld [vmem:[#allocation3 + $0x24] sm:$0xff]
      %v6764 = vld [vmem:[#allocation3 + $0x2c] sm:$0xff]
      %v6765 = vld [vmem:[#allocation3 + $0x34] sm:$0xff]
      %v6766 = vld [vmem:[#allocation3 + $0x3c] sm:$0xff]
      %v6767 = vld [vmem:[#allocation3 + $0x44] sm:$0xff]
      %v6768 = vld [vmem:[#allocation3 + $0x4c] sm:$0xff]
      %v6769 = vld [vmem:[#allocation3 + $0x54] sm:$0xff]
      %v6770 = vld [vmem:[#allocation3 + $0x5c] sm:$0xff]
      %v6771 = vld [vmem:[#allocation3 + $0x64] sm:$0xff]
      %v6772 = vld [vmem:[#allocation3 + $0x6c] sm:$0xf]
      %s6773 = scalar_lea.vmem %s3, 160
      %v6774 = vld [vmem:[%s6773] sm:$0xff]
      %v6775 = vld [vmem:[%s6773 + $0x8] sm:$0xff]
      %v6776 = vld [vmem:[%s6773 + $0x10] sm:$0xff]
      %v6777 = vld [vmem:[%s6773 + $0x18] sm:$0xff]
      %v6779 = vsel %vm385, %v6760, 0
      %v6782 = vsel %vm385, %v6761, 0
      %v6785 = vsel %vm385, %v6762, 0
      %v6788 = vsel %vm385, %v6763, 0
      %v6791 = vsel %vm385, %v6764, 0
      %v6794 = vsel %vm385, %v6765, 0
      %v6797 = vsel %vm385, %v6766, 0
      %v6800 = vsel %vm385, %v6767, 0
      %v6803 = vsel %vm385, %v6768, 0
      %v6806 = vsel %vm385, %v6769, 0
      %v6809 = vsel %vm385, %v6770, 0
      %v6812 = vsel %vm385, %v6771, 0
      %v6815 = vsel %vm385, %v6772, 0
      %6817 = vmatprep.subr.mxu0 0.0
      %6818 = vmatpush1.msra.mxu0 %v6774
      %6819 = vmatprep.subr.mxu0 0.0
      %6820 = vmatpush1.msra.mxu0 %v6775
      %6821 = vmatprep.subr.mxu0 0.0
      %6822 = vmatpush1.msra.mxu0 %v6776
      %6823 = vmatprep.subr.mxu0 0.0
      %6824 = vmatpush1.msra.mxu0 %v6777
      %6825 = vmatprep.subr.mxu0 0.0
      %6826 = vmatpush1.msra.mxu0 0.0
      %6827 = vmatprep.subr.mxu0 0.0
      %6828 = vmatpush1.msra.mxu0 0.0
      %6829 = vmatprep.subr.mxu0 0.0
      %6830 = vmatpush1.msra.mxu0 0.0
      %6831 = vmatprep.subr.mxu0 0.0
      %6832 = vmatpush1.msra.mxu0 0.0
      %6833 = vmatprep.subr.mxu0 0.0
      %6834 = vmatpush1.msra.mxu0 0.0
      %6835 = vmatprep.subr.mxu0 0.0
      %6836 = vmatpush1.msra.mxu0 0.0
      %6837 = vmatprep.subr.mxu0 0.0
      %6838 = vmatpush1.msra.mxu0 0.0
      %6839 = vmatprep.subr.mxu0 0.0
      %6840 = vmatpush1.msra.mxu0 0.0
      %6841 = vmatprep.subr.mxu0 0.0
      %6842 = vmatpush1.msra.mxu0 0.0
      %6843 = vmatprep.subr.mxu0 0.0
      %6844 = vmatpush1.msra.mxu0 0.0
      %6845 = vmatprep.subr.mxu0 0.0
      %6846 = vmatpush1.msra.mxu0 0.0
      %6847 = vmatprep.subr.mxu0 0.0
      %6848 = vmatpush1.msra.mxu0 0.0
      %6849 = vmatprep.subr.mxu0 0.0
      %6850 = vmatpush1.msra.mxu0 0.0
      %6851 = vmatprep.subr.mxu0 0.0
      %6852 = vmatpush1.msra.mxu0 0.0
      %6853 = vmatprep.subr.mxu0 0.0
      %6854 = vmatpush1.msra.mxu0 0.0
      %6855 = vmatprep.subr.mxu0 0.0
      %6856 = vmatpush1.msra.mxu0 0.0
      %6857 = vmatprep.subr.mxu0 0.0
      %6858 = vmatpush1.msra.mxu0 0.0
      %6859 = vmatprep.subr.mxu0 0.0
      %6860 = vmatpush1.msra.mxu0 0.0
      %6861 = vmatprep.subr.mxu0 0.0
      %6862 = vmatpush1.msra.mxu0 0.0
      %6863 = vmatprep.subr.mxu0 0.0
      %6864 = vmatpush1.msra.mxu0 0.0
      %6865 = vmatprep.subr.mxu0 0.0
      %6866 = vmatpush1.msra.mxu0 0.0
      %6867 = vmatprep.subr.mxu0 0.0
      %6868 = vmatpush1.msra.mxu0 0.0
      %6869 = vmatprep.subr.mxu0 0.0
      %6870 = vmatpush1.msra.mxu0 0.0
      %6871 = vmatprep.subr.mxu0 0.0
      %6872 = vmatpush1.msra.mxu0 0.0
      %6873 = vmatprep.subr.mxu0 0.0
      %6874 = vmatpush1.msra.mxu0 0.0
      %6875 = vmatprep.subr.mxu0 0.0
      %6876 = vmatpush1.msra.mxu0 0.0
      %6877 = vmatprep.subr.mxu0 0.0
      %6878 = vmatpush1.msra.mxu0 0.0
      %6879 = vmatprep.subr.mxu0 0.0
      %6880 = vmatpush1.msra.mxu0 0.0
      %6881 = vmatprep.mubr.f32.mxu0 0.0
      %6882 = vmatmul.mubr.f32.gmra.mrb[0].mxu0 %v6779
      %v6883 = vpop.f32.mrb[0].mxu0
      %v6884 = vadd.f32 0.0, %v6883
      %v6885 = vpop.f32.mrb[0].mxu0
      %6886 = vmatprep.mubr.f32.mxu0 0.0
      %6887 = vmatmul.mubr.f32.gmra.mrb[0].mxu0 %v6782
      %v6888 = vpop.f32.mrb[0].mxu0
      %v6889 = vadd.f32 0.0, %v6888
      %v6890 = vpop.f32.mrb[0].mxu0
      %6891 = vmatprep.mubr.f32.mxu0 0.0
      %6892 = vmatmul.mubr.f32.gmra.mrb[0].mxu0 %v6785
      %v6893 = vpop.f32.mrb[0].mxu0
      %v6894 = vadd.f32 0.0, %v6893
      %v6895 = vpop.f32.mrb[0].mxu0
      %6896 = vmatprep.mubr.f32.mxu0 0.0
      %6897 = vmatmul.mubr.f32.gmra.mrb[0].mxu0 %v6788
      %v6898 = vpop.f32.mrb[0].mxu0
      %v6899 = vadd.f32 0.0, %v6898
      %v6900 = vpop.f32.mrb[0].mxu0
      %6901 = vmatprep.mubr.f32.mxu0 0.0
      %6902 = vmatmul.mubr.f32.gmra.mrb[0].mxu0 %v6791
      %v6903 = vpop.f32.mrb[0].mxu0
      %v6904 = vadd.f32 0.0, %v6903
      %v6905 = vpop.f32.mrb[0].mxu0
      %6906 = vmatprep.mubr.f32.mxu0 0.0
      %6907 = vmatmul.mubr.f32.gmra.mrb[0].mxu0 %v6794
      %v6908 = vpop.f32.mrb[0].mxu0
      %v6909 = vadd.f32 0.0, %v6908
      %v6910 = vpop.f32.mrb[0].mxu0
      %6911 = vmatprep.mubr.f32.mxu0 0.0
      %6912 = vmatmul.mubr.f32.gmra.mrb[0].mxu0 %v6797
      %v6913 = vpop.f32.mrb[0].mxu0
      %v6914 = vadd.f32 0.0, %v6913
      %v6915 = vpop.f32.mrb[0].mxu0
      %6916 = vmatprep.mubr.f32.mxu0 0.0
      %6917 = vmatmul.mubr.f32.gmra.mrb[0].mxu0 %v6800
      %v6918 = vpop.f32.mrb[0].mxu0
      %v6919 = vadd.f32 0.0, %v6918
      %v6920 = vpop.f32.mrb[0].mxu0
      %6921 = vmatprep.mubr.f32.mxu0 0.0
      %6922 = vmatmul.mubr.f32.gmra.mrb[0].mxu0 %v6803
      %v6923 = vpop.f32.mrb[0].mxu0
      %v6924 = vadd.f32 0.0, %v6923
      %v6925 = vpop.f32.mrb[0].mxu0
      %6926 = vmatprep.mubr.f32.mxu0 0.0
      %6927 = vmatmul.mubr.f32.gmra.mrb[0].mxu0 %v6806
      %v6928 = vpop.f32.mrb[0].mxu0
      %v6929 = vadd.f32 0.0, %v6928
      %v6930 = vpop.f32.mrb[0].mxu0
      %6931 = vmatprep.mubr.f32.mxu0 0.0
      %6932 = vmatmul.mubr.f32.gmra.mrb[0].mxu0 %v6809
      %v6933 = vpop.f32.mrb[0].mxu0
      %v6934 = vadd.f32 0.0, %v6933
      %v6935 = vpop.f32.mrb[0].mxu0
      %6936 = vmatprep.mubr.f32.mxu0 0.0
      %6937 = vmatmul.mubr.f32.gmra.mrb[0].mxu0 %v6812
      %v6938 = vpop.f32.mrb[0].mxu0
      %v6939 = vadd.f32 0.0, %v6938
      %v6940 = vpop.f32.mrb[0].mxu0
      %6941 = vmatprep.mubr.f32.mxu0 0.0
      %6942 = vmatmul.mubr.f32.gmra.mrb[0].mxu0 %v6815
      %v6943 = vpop.f32.mrb[0].mxu0
      %v6944 = vadd.f32 0.0, %v6943
      %v6945 = vpop.f32.mrb[0].mxu0
      %6946 = vdwg.mxu0
      %v6947 = vld [vmem:[#allocation4] sm:$0xff]
      %v6948 = vld [vmem:[#allocation4 + $0x8] sm:$0xff]
      %v6949 = vld [vmem:[#allocation4 + $0x10] sm:$0xff]
      %v6950 = vld [vmem:[#allocation4 + $0x18] sm:$0xff]
      %v6951 = vld [vmem:[#allocation4 + $0x20] sm:$0xff]
      %v6952 = vld [vmem:[#allocation4 + $0x28] sm:$0xff]
      %v6953 = vld [vmem:[#allocation4 + $0x30] sm:$0xff]
      %v6954 = vld [vmem:[#allocation4 + $0x38] sm:$0xff]
      %v6955 = vld [vmem:[#allocation4 + $0x40] sm:$0xff]
      %v6956 = vld [vmem:[#allocation4 + $0x48] sm:$0xff]
      %v6957 = vld [vmem:[#allocation4 + $0x50] sm:$0xff]
      %v6958 = vld [vmem:[#allocation4 + $0x58] sm:$0xff]
      %v6959 = vld [vmem:[#allocation4 + $0x60] sm:$0xf]
      %v6960 = vadd.f32 %v6947, %v6884
      %v6961 = vadd.f32 %v6948, %v6889
      %v6962 = vadd.f32 %v6949, %v6894
      %v6963 = vadd.f32 %v6950, %v6899
      %v6964 = vadd.f32 %v6951, %v6904
      %v6965 = vadd.f32 %v6952, %v6909
      %v6966 = vadd.f32 %v6953, %v6914
      %v6967 = vadd.f32 %v6954, %v6919
      %v6968 = vadd.f32 %v6955, %v6924
      %v6969 = vadd.f32 %v6956, %v6929
      %v6970 = vadd.f32 %v6957, %v6934
      %v6971 = vadd.f32 %v6958, %v6939
      %v6972 = vadd.f32 %v6959, %v6944
      %6973 = vst.msk [vmem:[#allocation4] sm:$0xff] %vm403, %v6960
      %6974 = vst.msk [vmem:[#allocation4 + $0x8] sm:$0xff] %vm403, %v6961
      %6975 = vst.msk [vmem:[#allocation4 + $0x10] sm:$0xff] %vm403, %v6962
      %6976 = vst.msk [vmem:[#allocation4 + $0x18] sm:$0xff] %vm403, %v6963
      %6977 = vst.msk [vmem:[#allocation4 + $0x20] sm:$0xff] %vm403, %v6964
      %6978 = vst.msk [vmem:[#allocation4 + $0x28] sm:$0xff] %vm403, %v6965
      %6979 = vst.msk [vmem:[#allocation4 + $0x30] sm:$0xff] %vm403, %v6966
      %6980 = vst.msk [vmem:[#allocation4 + $0x38] sm:$0xff] %vm403, %v6967
      %6981 = vst.msk [vmem:[#allocation4 + $0x40] sm:$0xff] %vm403, %v6968
      %6982 = vst.msk [vmem:[#allocation4 + $0x48] sm:$0xff] %vm403, %v6969
      %6983 = vst.msk [vmem:[#allocation4 + $0x50] sm:$0xff] %vm403, %v6970
      %6984 = vst.msk [vmem:[#allocation4 + $0x58] sm:$0xff] %vm403, %v6971
      %6985 = vst.msk [vmem:[#allocation4 + $0x60] sm:$0xf] %vm5854, %v6972
      %v6986 = vld [vmem:[#allocation3 + $0x14] sm:$0xff]
      %v6987 = vld [vmem:[#allocation3 + $0x1c] sm:$0xff]
      %v6988 = vld [vmem:[#allocation3 + $0x24] sm:$0xff]
      %v6989 = vld [vmem:[#allocation3 + $0x2c] sm:$0xff]
      %v6990 = vld [vmem:[#allocation3 + $0x34] sm:$0xff]
      %v6991 = vld [vmem:[#allocation3 + $0x3c] sm:$0xff]
      %v6992 = vld [vmem:[#allocation3 + $0x44] sm:$0xff]
      %v6993 = vld [vmem:[#allocation3 + $0x4c] sm:$0xff]
      %v6994 = vld [vmem:[#allocation3 + $0x54] sm:$0xff]
      %v6995 = vld [vmem:[#allocation3 + $0x5c] sm:$0xff]
      %v6996 = vld [vmem:[#allocation3 + $0x64] sm:$0xff]
      %v6997 = vld [vmem:[#allocation3 + $0x6c] sm:$0xff]
      %v6998 = vld [vmem:[#allocation3 + $0x74] sm:$0xf]
      %s6999 = scalar_lea.vmem %s3, 192
      %v7000 = vld [vmem:[%s6999] sm:$0xff]
      %v7001 = vld [vmem:[%s6999 + $0x8] sm:$0xff]
      %v7002 = vld [vmem:[%s6999 + $0x10] sm:$0xff]
      %v7003 = vld [vmem:[%s6999 + $0x18] sm:$0xff]
      %v7005 = vsel %vm385, %v6986, 0
      %v7008 = vsel %vm385, %v6987, 0
      %v7011 = vsel %vm385, %v6988, 0
      %v7014 = vsel %vm385, %v6989, 0
      %v7017 = vsel %vm385, %v6990, 0
      %v7020 = vsel %vm385, %v6991, 0
      %v7023 = vsel %vm385, %v6992, 0
      %v7026 = vsel %vm385, %v6993, 0
      %v7029 = vsel %vm385, %v6994, 0
      %v7032 = vsel %vm385, %v6995, 0
      %v7035 = vsel %vm385, %v6996, 0
      %v7038 = vsel %vm385, %v6997, 0
      %v7041 = vsel %vm385, %v6998, 0
      %7043 = vmatprep.subr.mxu0 0.0
      %7044 = vmatpush1.msra.mxu0 %v7000
      %7045 = vmatprep.subr.mxu0 0.0
      %7046 = vmatpush1.msra.mxu0 %v7001
      %7047 = vmatprep.subr.mxu0 0.0
      %7048 = vmatpush1.msra.mxu0 %v7002
      %7049 = vmatprep.subr.mxu0 0.0
      %7050 = vmatpush1.msra.mxu0 %v7003
      %7051 = vmatprep.subr.mxu0 0.0
      %7052 = vmatpush1.msra.mxu0 0.0
      %7053 = vmatprep.subr.mxu0 0.0
      %7054 = vmatpush1.msra.mxu0 0.0
      %7055 = vmatprep.subr.mxu0 0.0
      %7056 = vmatpush1.msra.mxu0 0.0
      %7057 = vmatprep.subr.mxu0 0.0
      %7058 = vmatpush1.msra.mxu0 0.0
      %7059 = vmatprep.subr.mxu0 0.0
      %7060 = vmatpush1.msra.mxu0 0.0
      %7061 = vmatprep.subr.mxu0 0.0
      %7062 = vmatpush1.msra.mxu0 0.0
      %7063 = vmatprep.subr.mxu0 0.0
      %7064 = vmatpush1.msra.mxu0 0.0
      %7065 = vmatprep.subr.mxu0 0.0
      %7066 = vmatpush1.msra.mxu0 0.0
      %7067 = vmatprep.subr.mxu0 0.0
      %7068 = vmatpush1.msra.mxu0 0.0
      %7069 = vmatprep.subr.mxu0 0.0
      %7070 = vmatpush1.msra.mxu0 0.0
      %7071 = vmatprep.subr.mxu0 0.0
      %7072 = vmatpush1.msra.mxu0 0.0
      %7073 = vmatprep.subr.mxu0 0.0
      %7074 = vmatpush1.msra.mxu0 0.0
      %7075 = vmatprep.subr.mxu0 0.0
      %7076 = vmatpush1.msra.mxu0 0.0
      %7077 = vmatprep.subr.mxu0 0.0
      %7078 = vmatpush1.msra.mxu0 0.0
      %7079 = vmatprep.subr.mxu0 0.0
      %7080 = vmatpush1.msra.mxu0 0.0
      %7081 = vmatprep.subr.mxu0 0.0
      %7082 = vmatpush1.msra.mxu0 0.0
      %7083 = vmatprep.subr.mxu0 0.0
      %7084 = vmatpush1.msra.mxu0 0.0
      %7085 = vmatprep.subr.mxu0 0.0
      %7086 = vmatpush1.msra.mxu0 0.0
      %7087 = vmatprep.subr.mxu0 0.0
      %7088 = vmatpush1.msra.mxu0 0.0
      %7089 = vmatprep.subr.mxu0 0.0
      %7090 = vmatpush1.msra.mxu0 0.0
      %7091 = vmatprep.subr.mxu0 0.0
      %7092 = vmatpush1.msra.mxu0 0.0
      %7093 = vmatprep.subr.mxu0 0.0
      %7094 = vmatpush1.msra.mxu0 0.0
      %7095 = vmatprep.subr.mxu0 0.0
      %7096 = vmatpush1.msra.mxu0 0.0
      %7097 = vmatprep.subr.mxu0 0.0
      %7098 = vmatpush1.msra.mxu0 0.0
      %7099 = vmatprep.subr.mxu0 0.0
      %7100 = vmatpush1.msra.mxu0 0.0
      %7101 = vmatprep.subr.mxu0 0.0
      %7102 = vmatpush1.msra.mxu0 0.0
      %7103 = vmatprep.subr.mxu0 0.0
      %7104 = vmatpush1.msra.mxu0 0.0
      %7105 = vmatprep.subr.mxu0 0.0
      %7106 = vmatpush1.msra.mxu0 0.0
      %7107 = vmatprep.mubr.f32.mxu0 0.0
      %7108 = vmatmul.mubr.f32.gmra.mrb[0].mxu0 %v7005
      %v7109 = vpop.f32.mrb[0].mxu0
      %v7110 = vadd.f32 0.0, %v7109
      %v7111 = vpop.f32.mrb[0].mxu0
      %7112 = vmatprep.mubr.f32.mxu0 0.0
      %7113 = vmatmul.mubr.f32.gmra.mrb[0].mxu0 %v7008
      %v7114 = vpop.f32.mrb[0].mxu0
      %v7115 = vadd.f32 0.0, %v7114
      %v7116 = vpop.f32.mrb[0].mxu0
      %7117 = vmatprep.mubr.f32.mxu0 0.0
      %7118 = vmatmul.mubr.f32.gmra.mrb[0].mxu0 %v7011
      %v7119 = vpop.f32.mrb[0].mxu0
      %v7120 = vadd.f32 0.0, %v7119
      %v7121 = vpop.f32.mrb[0].mxu0
      %7122 = vmatprep.mubr.f32.mxu0 0.0
      %7123 = vmatmul.mubr.f32.gmra.mrb[0].mxu0 %v7014
      %v7124 = vpop.f32.mrb[0].mxu0
      %v7125 = vadd.f32 0.0, %v7124
      %v7126 = vpop.f32.mrb[0].mxu0
      %7127 = vmatprep.mubr.f32.mxu0 0.0
      %7128 = vmatmul.mubr.f32.gmra.mrb[0].mxu0 %v7017
      %v7129 = vpop.f32.mrb[0].mxu0
      %v7130 = vadd.f32 0.0, %v7129
      %v7131 = vpop.f32.mrb[0].mxu0
      %7132 = vmatprep.mubr.f32.mxu0 0.0
      %7133 = vmatmul.mubr.f32.gmra.mrb[0].mxu0 %v7020
      %v7134 = vpop.f32.mrb[0].mxu0
      %v7135 = vadd.f32 0.0, %v7134
      %v7136 = vpop.f32.mrb[0].mxu0
      %7137 = vmatprep.mubr.f32.mxu0 0.0
      %7138 = vmatmul.mubr.f32.gmra.mrb[0].mxu0 %v7023
      %v7139 = vpop.f32.mrb[0].mxu0
      %v7140 = vadd.f32 0.0, %v7139
      %v7141 = vpop.f32.mrb[0].mxu0
      %7142 = vmatprep.mubr.f32.mxu0 0.0
      %7143 = vmatmul.mubr.f32.gmra.mrb[0].mxu0 %v7026
      %v7144 = vpop.f32.mrb[0].mxu0
      %v7145 = vadd.f32 0.0, %v7144
      %v7146 = vpop.f32.mrb[0].mxu0
      %7147 = vmatprep.mubr.f32.mxu0 0.0
      %7148 = vmatmul.mubr.f32.gmra.mrb[0].mxu0 %v7029
      %v7149 = vpop.f32.mrb[0].mxu0
      %v7150 = vadd.f32 0.0, %v7149
      %v7151 = vpop.f32.mrb[0].mxu0
      %7152 = vmatprep.mubr.f32.mxu0 0.0
      %7153 = vmatmul.mubr.f32.gmra.mrb[0].mxu0 %v7032
      %v7154 = vpop.f32.mrb[0].mxu0
      %v7155 = vadd.f32 0.0, %v7154
      %v7156 = vpop.f32.mrb[0].mxu0
      %7157 = vmatprep.mubr.f32.mxu0 0.0
      %7158 = vmatmul.mubr.f32.gmra.mrb[0].mxu0 %v7035
      %v7159 = vpop.f32.mrb[0].mxu0
      %v7160 = vadd.f32 0.0, %v7159
      %v7161 = vpop.f32.mrb[0].mxu0
      %7162 = vmatprep.mubr.f32.mxu0 0.0
      %7163 = vmatmul.mubr.f32.gmra.mrb[0].mxu0 %v7038
      %v7164 = vpop.f32.mrb[0].mxu0
      %v7165 = vadd.f32 0.0, %v7164
      %v7166 = vpop.f32.mrb[0].mxu0
      %7167 = vmatprep.mubr.f32.mxu0 0.0
      %7168 = vmatmul.mubr.f32.gmra.mrb[0].mxu0 %v7041
      %v7169 = vpop.f32.mrb[0].mxu0
      %v7170 = vadd.f32 0.0, %v7169
      %v7171 = vpop.f32.mrb[0].mxu0
      %7172 = vdwg.mxu0
      %v7173 = vld [vmem:[#allocation4] sm:$0xff]
      %v7174 = vld [vmem:[#allocation4 + $0x8] sm:$0xff]
      %v7175 = vld [vmem:[#allocation4 + $0x10] sm:$0xff]
      %v7176 = vld [vmem:[#allocation4 + $0x18] sm:$0xff]
      %v7177 = vld [vmem:[#allocation4 + $0x20] sm:$0xff]
      %v7178 = vld [vmem:[#allocation4 + $0x28] sm:$0xff]
      %v7179 = vld [vmem:[#allocation4 + $0x30] sm:$0xff]
      %v7180 = vld [vmem:[#allocation4 + $0x38] sm:$0xff]
      %v7181 = vld [vmem:[#allocation4 + $0x40] sm:$0xff]
      %v7182 = vld [vmem:[#allocation4 + $0x48] sm:$0xff]
      %v7183 = vld [vmem:[#allocation4 + $0x50] sm:$0xff]
      %v7184 = vld [vmem:[#allocation4 + $0x58] sm:$0xff]
      %v7185 = vld [vmem:[#allocation4 + $0x60] sm:$0xf]
      %v7186 = vadd.f32 %v7173, %v7110
      %v7187 = vadd.f32 %v7174, %v7115
      %v7188 = vadd.f32 %v7175, %v7120
      %v7189 = vadd.f32 %v7176, %v7125
      %v7190 = vadd.f32 %v7177, %v7130
      %v7191 = vadd.f32 %v7178, %v7135
      %v7192 = vadd.f32 %v7179, %v7140
      %v7193 = vadd.f32 %v7180, %v7145
      %v7194 = vadd.f32 %v7181, %v7150
      %v7195 = vadd.f32 %v7182, %v7155
      %v7196 = vadd.f32 %v7183, %v7160
      %v7197 = vadd.f32 %v7184, %v7165
      %v7198 = vadd.f32 %v7185, %v7170
      %7199 = vst.msk [vmem:[#allocation4] sm:$0xff] %vm403, %v7186
      %7200 = vst.msk [vmem:[#allocation4 + $0x8] sm:$0xff] %vm403, %v7187
      %7201 = vst.msk [vmem:[#allocation4 + $0x10] sm:$0xff] %vm403, %v7188
      %7202 = vst.msk [vmem:[#allocation4 + $0x18] sm:$0xff] %vm403, %v7189
      %7203 = vst.msk [vmem:[#allocation4 + $0x20] sm:$0xff] %vm403, %v7190
      %7204 = vst.msk [vmem:[#allocation4 + $0x28] sm:$0xff] %vm403, %v7191
      %7205 = vst.msk [vmem:[#allocation4 + $0x30] sm:$0xff] %vm403, %v7192
      %7206 = vst.msk [vmem:[#allocation4 + $0x38] sm:$0xff] %vm403, %v7193
      %7207 = vst.msk [vmem:[#allocation4 + $0x40] sm:$0xff] %vm403, %v7194
      %7208 = vst.msk [vmem:[#allocation4 + $0x48] sm:$0xff] %vm403, %v7195
      %7209 = vst.msk [vmem:[#allocation4 + $0x50] sm:$0xff] %vm403, %v7196
      %7210 = vst.msk [vmem:[#allocation4 + $0x58] sm:$0xff] %vm403, %v7197
      %7211 = vst.msk [vmem:[#allocation4 + $0x60] sm:$0xf] %vm5854, %v7198
      %v7212 = vld [vmem:[#allocation3 + $0x15] sm:$0xff]
      %v7213 = vld [vmem:[#allocation3 + $0x1d] sm:$0xff]
      %v7214 = vld [vmem:[#allocation3 + $0x25] sm:$0xff]
      %v7215 = vld [vmem:[#allocation3 + $0x2d] sm:$0xff]
      %v7216 = vld [vmem:[#allocation3 + $0x35] sm:$0xff]
      %v7217 = vld [vmem:[#allocation3 + $0x3d] sm:$0xff]
      %v7218 = vld [vmem:[#allocation3 + $0x45] sm:$0xff]
      %v7219 = vld [vmem:[#allocation3 + $0x4d] sm:$0xff]
      %v7220 = vld [vmem:[#allocation3 + $0x55] sm:$0xff]
      %v7221 = vld [vmem:[#allocation3 + $0x5d] sm:$0xff]
      %v7222 = vld [vmem:[#allocation3 + $0x65] sm:$0xff]
      %v7223 = vld [vmem:[#allocation3 + $0x6d] sm:$0xff]
      %v7224 = vld [vmem:[#allocation3 + $0x75] sm:$0xf]
      %s7225 = scalar_lea.vmem %s3, 224
      %v7226 = vld [vmem:[%s7225] sm:$0xff]
      %v7227 = vld [vmem:[%s7225 + $0x8] sm:$0xff]
      %v7228 = vld [vmem:[%s7225 + $0x10] sm:$0xff]
      %v7229 = vld [vmem:[%s7225 + $0x18] sm:$0xff]
      %v7231 = vsel %vm385, %v7212, 0
      %v7234 = vsel %vm385, %v7213, 0
      %v7237 = vsel %vm385, %v7214, 0
      %v7240 = vsel %vm385, %v7215, 0
      %v7243 = vsel %vm385, %v7216, 0
      %v7246 = vsel %vm385, %v7217, 0
      %v7249 = vsel %vm385, %v7218, 0
      %v7252 = vsel %vm385, %v7219, 0
      %v7255 = vsel %vm385, %v7220, 0
      %v7258 = vsel %vm385, %v7221, 0
      %v7261 = vsel %vm385, %v7222, 0
      %v7264 = vsel %vm385, %v7223, 0
      %v7267 = vsel %vm385, %v7224, 0
      %7269 = vmatprep.subr.mxu0 0.0
      %7270 = vmatpush1.msra.mxu0 %v7226
      %7271 = vmatprep.subr.mxu0 0.0
      %7272 = vmatpush1.msra.mxu0 %v7227
      %7273 = vmatprep.subr.mxu0 0.0
      %7274 = vmatpush1.msra.mxu0 %v7228
      %7275 = vmatprep.subr.mxu0 0.0
      %7276 = vmatpush1.msra.mxu0 %v7229
      %7277 = vmatprep.subr.mxu0 0.0
      %7278 = vmatpush1.msra.mxu0 0.0
      %7279 = vmatprep.subr.mxu0 0.0
      %7280 = vmatpush1.msra.mxu0 0.0
      %7281 = vmatprep.subr.mxu0 0.0
      %7282 = vmatpush1.msra.mxu0 0.0
      %7283 = vmatprep.subr.mxu0 0.0
      %7284 = vmatpush1.msra.mxu0 0.0
      %7285 = vmatprep.subr.mxu0 0.0
      %7286 = vmatpush1.msra.mxu0 0.0
      %7287 = vmatprep.subr.mxu0 0.0
      %7288 = vmatpush1.msra.mxu0 0.0
      %7289 = vmatprep.subr.mxu0 0.0
      %7290 = vmatpush1.msra.mxu0 0.0
      %7291 = vmatprep.subr.mxu0 0.0
      %7292 = vmatpush1.msra.mxu0 0.0
      %7293 = vmatprep.subr.mxu0 0.0
      %7294 = vmatpush1.msra.mxu0 0.0
      %7295 = vmatprep.subr.mxu0 0.0
      %7296 = vmatpush1.msra.mxu0 0.0
      %7297 = vmatprep.subr.mxu0 0.0
      %7298 = vmatpush1.msra.mxu0 0.0
      %7299 = vmatprep.subr.mxu0 0.0
      %7300 = vmatpush1.msra.mxu0 0.0
      %7301 = vmatprep.subr.mxu0 0.0
      %7302 = vmatpush1.msra.mxu0 0.0
      %7303 = vmatprep.subr.mxu0 0.0
      %7304 = vmatpush1.msra.mxu0 0.0
      %7305 = vmatprep.subr.mxu0 0.0
      %7306 = vmatpush1.msra.mxu0 0.0
      %7307 = vmatprep.subr.mxu0 0.0
      %7308 = vmatpush1.msra.mxu0 0.0
      %7309 = vmatprep.subr.mxu0 0.0
      %7310 = vmatpush1.msra.mxu0 0.0
      %7311 = vmatprep.subr.mxu0 0.0
      %7312 = vmatpush1.msra.mxu0 0.0
      %7313 = vmatprep.subr.mxu0 0.0
      %7314 = vmatpush1.msra.mxu0 0.0
      %7315 = vmatprep.subr.mxu0 0.0
      %7316 = vmatpush1.msra.mxu0 0.0
      %7317 = vmatprep.subr.mxu0 0.0
      %7318 = vmatpush1.msra.mxu0 0.0
      %7319 = vmatprep.subr.mxu0 0.0
      %7320 = vmatpush1.msra.mxu0 0.0
      %7321 = vmatprep.subr.mxu0 0.0
      %7322 = vmatpush1.msra.mxu0 0.0
      %7323 = vmatprep.subr.mxu0 0.0
      %7324 = vmatpush1.msra.mxu0 0.0
      %7325 = vmatprep.subr.mxu0 0.0
      %7326 = vmatpush1.msra.mxu0 0.0
      %7327 = vmatprep.subr.mxu0 0.0
      %7328 = vmatpush1.msra.mxu0 0.0
      %7329 = vmatprep.subr.mxu0 0.0
      %7330 = vmatpush1.msra.mxu0 0.0
      %7331 = vmatprep.subr.mxu0 0.0
      %7332 = vmatpush1.msra.mxu0 0.0
      %7333 = vmatprep.mubr.f32.mxu0 0.0
      %7334 = vmatmul.mubr.f32.gmra.mrb[0].mxu0 %v7231
      %v7335 = vpop.f32.mrb[0].mxu0
      %v7336 = vadd.f32 0.0, %v7335
      %v7337 = vpop.f32.mrb[0].mxu0
      %7338 = vmatprep.mubr.f32.mxu0 0.0
      %7339 = vmatmul.mubr.f32.gmra.mrb[0].mxu0 %v7234
      %v7340 = vpop.f32.mrb[0].mxu0
      %v7341 = vadd.f32 0.0, %v7340
      %v7342 = vpop.f32.mrb[0].mxu0
      %7343 = vmatprep.mubr.f32.mxu0 0.0
      %7344 = vmatmul.mubr.f32.gmra.mrb[0].mxu0 %v7237
      %v7345 = vpop.f32.mrb[0].mxu0
      %v7346 = vadd.f32 0.0, %v7345
      %v7347 = vpop.f32.mrb[0].mxu0
      %7348 = vmatprep.mubr.f32.mxu0 0.0
      %7349 = vmatmul.mubr.f32.gmra.mrb[0].mxu0 %v7240
      %v7350 = vpop.f32.mrb[0].mxu0
      %v7351 = vadd.f32 0.0, %v7350
      %v7352 = vpop.f32.mrb[0].mxu0
      %7353 = vmatprep.mubr.f32.mxu0 0.0
      %7354 = vmatmul.mubr.f32.gmra.mrb[0].mxu0 %v7243
      %v7355 = vpop.f32.mrb[0].mxu0
      %v7356 = vadd.f32 0.0, %v7355
      %v7357 = vpop.f32.mrb[0].mxu0
      %7358 = vmatprep.mubr.f32.mxu0 0.0
      %7359 = vmatmul.mubr.f32.gmra.mrb[0].mxu0 %v7246
      %v7360 = vpop.f32.mrb[0].mxu0
      %v7361 = vadd.f32 0.0, %v7360
      %v7362 = vpop.f32.mrb[0].mxu0
      %7363 = vmatprep.mubr.f32.mxu0 0.0
      %7364 = vmatmul.mubr.f32.gmra.mrb[0].mxu0 %v7249
      %v7365 = vpop.f32.mrb[0].mxu0
      %v7366 = vadd.f32 0.0, %v7365
      %v7367 = vpop.f32.mrb[0].mxu0
      %7368 = vmatprep.mubr.f32.mxu0 0.0
      %7369 = vmatmul.mubr.f32.gmra.mrb[0].mxu0 %v7252
      %v7370 = vpop.f32.mrb[0].mxu0
      %v7371 = vadd.f32 0.0, %v7370
      %v7372 = vpop.f32.mrb[0].mxu0
      %7373 = vmatprep.mubr.f32.mxu0 0.0
      %7374 = vmatmul.mubr.f32.gmra.mrb[0].mxu0 %v7255
      %v7375 = vpop.f32.mrb[0].mxu0
      %v7376 = vadd.f32 0.0, %v7375
      %v7377 = vpop.f32.mrb[0].mxu0
      %7378 = vmatprep.mubr.f32.mxu0 0.0
      %7379 = vmatmul.mubr.f32.gmra.mrb[0].mxu0 %v7258
      %v7380 = vpop.f32.mrb[0].mxu0
      %v7381 = vadd.f32 0.0, %v7380
      %v7382 = vpop.f32.mrb[0].mxu0
      %7383 = vmatprep.mubr.f32.mxu0 0.0
      %7384 = vmatmul.mubr.f32.gmra.mrb[0].mxu0 %v7261
      %v7385 = vpop.f32.mrb[0].mxu0
      %v7386 = vadd.f32 0.0, %v7385
      %v7387 = vpop.f32.mrb[0].mxu0
      %7388 = vmatprep.mubr.f32.mxu0 0.0
      %7389 = vmatmul.mubr.f32.gmra.mrb[0].mxu0 %v7264
      %v7390 = vpop.f32.mrb[0].mxu0
      %v7391 = vadd.f32 0.0, %v7390
      %v7392 = vpop.f32.mrb[0].mxu0
      %7393 = vmatprep.mubr.f32.mxu0 0.0
      %7394 = vmatmul.mubr.f32.gmra.mrb[0].mxu0 %v7267
      %v7395 = vpop.f32.mrb[0].mxu0
      %v7396 = vadd.f32 0.0, %v7395
      %v7397 = vpop.f32.mrb[0].mxu0
      %7398 = vdwg.mxu0
      %v7399 = vld [vmem:[#allocation4] sm:$0xff]
      %v7400 = vld [vmem:[#allocation4 + $0x8] sm:$0xff]
      %v7401 = vld [vmem:[#allocation4 + $0x10] sm:$0xff]
      %v7402 = vld [vmem:[#allocation4 + $0x18] sm:$0xff]
      %v7403 = vld [vmem:[#allocation4 + $0x20] sm:$0xff]
      %v7404 = vld [vmem:[#allocation4 + $0x28] sm:$0xff]
      %v7405 = vld [vmem:[#allocation4 + $0x30] sm:$0xff]
      %v7406 = vld [vmem:[#allocation4 + $0x38] sm:$0xff]
      %v7407 = vld [vmem:[#allocation4 + $0x40] sm:$0xff]
      %v7408 = vld [vmem:[#allocation4 + $0x48] sm:$0xff]
      %v7409 = vld [vmem:[#allocation4 + $0x50] sm:$0xff]
      %v7410 = vld [vmem:[#allocation4 + $0x58] sm:$0xff]
      %v7411 = vld [vmem:[#allocation4 + $0x60] sm:$0xf]
      %v7412 = vadd.f32 %v7399, %v7336
      %v7413 = vadd.f32 %v7400, %v7341
      %v7414 = vadd.f32 %v7401, %v7346
      %v7415 = vadd.f32 %v7402, %v7351
      %v7416 = vadd.f32 %v7403, %v7356
      %v7417 = vadd.f32 %v7404, %v7361
      %v7418 = vadd.f32 %v7405, %v7366
      %v7419 = vadd.f32 %v7406, %v7371
      %v7420 = vadd.f32 %v7407, %v7376
      %v7421 = vadd.f32 %v7408, %v7381
      %v7422 = vadd.f32 %v7409, %v7386
      %v7423 = vadd.f32 %v7410, %v7391
      %v7424 = vadd.f32 %v7411, %v7396
      %7425 = vst.msk [vmem:[#allocation4] sm:$0xff] %vm403, %v7412
      %7426 = vst.msk [vmem:[#allocation4 + $0x8] sm:$0xff] %vm403, %v7413
      %7427 = vst.msk [vmem:[#allocation4 + $0x10] sm:$0xff] %vm403, %v7414
      %7428 = vst.msk [vmem:[#allocation4 + $0x18] sm:$0xff] %vm403, %v7415
      %7429 = vst.msk [vmem:[#allocation4 + $0x20] sm:$0xff] %vm403, %v7416
      %7430 = vst.msk [vmem:[#allocation4 + $0x28] sm:$0xff] %vm403, %v7417
      %7431 = vst.msk [vmem:[#allocation4 + $0x30] sm:$0xff] %vm403, %v7418
      %7432 = vst.msk [vmem:[#allocation4 + $0x38] sm:$0xff] %vm403, %v7419
      %7433 = vst.msk [vmem:[#allocation4 + $0x40] sm:$0xff] %vm403, %v7420
      %7434 = vst.msk [vmem:[#allocation4 + $0x48] sm:$0xff] %vm403, %v7421
      %7435 = vst.msk [vmem:[#allocation4 + $0x50] sm:$0xff] %vm403, %v7422
      %7436 = vst.msk [vmem:[#allocation4 + $0x58] sm:$0xff] %vm403, %v7423
      %7437 = vst.msk [vmem:[#allocation4 + $0x60] sm:$0xf] %vm5854, %v7424
      %v7438 = vld [vmem:[#allocation3 + $0x16] sm:$0xff]
      %v7439 = vld [vmem:[#allocation3 + $0x1e] sm:$0xff]
      %v7440 = vld [vmem:[#allocation3 + $0x26] sm:$0xff]
      %v7441 = vld [vmem:[#allocation3 + $0x2e] sm:$0xff]
      %v7442 = vld [vmem:[#allocation3 + $0x36] sm:$0xff]
      %v7443 = vld [vmem:[#allocation3 + $0x3e] sm:$0xff]
      %v7444 = vld [vmem:[#allocation3 + $0x46] sm:$0xff]
      %v7445 = vld [vmem:[#allocation3 + $0x4e] sm:$0xff]
      %v7446 = vld [vmem:[#allocation3 + $0x56] sm:$0xff]
      %v7447 = vld [vmem:[#allocation3 + $0x5e] sm:$0xff]
      %v7448 = vld [vmem:[#allocation3 + $0x66] sm:$0xff]
      %v7449 = vld [vmem:[#allocation3 + $0x6e] sm:$0xff]
      %v7450 = vld [vmem:[#allocation3 + $0x76] sm:$0xf]
      %s7451 = scalar_lea.vmem %s3, 256
      %v7452 = vld [vmem:[%s7451] sm:$0xff]
      %v7453 = vld [vmem:[%s7451 + $0x8] sm:$0xff]
      %v7454 = vld [vmem:[%s7451 + $0x10] sm:$0xff]
      %v7455 = vld [vmem:[%s7451 + $0x18] sm:$0xff]
      %v7457 = vsel %vm385, %v7438, 0
      %v7460 = vsel %vm385, %v7439, 0
      %v7463 = vsel %vm385, %v7440, 0
      %v7466 = vsel %vm385, %v7441, 0
      %v7469 = vsel %vm385, %v7442, 0
      %v7472 = vsel %vm385, %v7443, 0
      %v7475 = vsel %vm385, %v7444, 0
      %v7478 = vsel %vm385, %v7445, 0
      %v7481 = vsel %vm385, %v7446, 0
      %v7484 = vsel %vm385, %v7447, 0
      %v7487 = vsel %vm385, %v7448, 0
      %v7490 = vsel %vm385, %v7449, 0
      %v7493 = vsel %vm385, %v7450, 0
      %7495 = vmatprep.subr.mxu0 0.0
      %7496 = vmatpush1.msra.mxu0 %v7452
      %7497 = vmatprep.subr.mxu0 0.0
      %7498 = vmatpush1.msra.mxu0 %v7453
      %7499 = vmatprep.subr.mxu0 0.0
      %7500 = vmatpush1.msra.mxu0 %v7454
      %7501 = vmatprep.subr.mxu0 0.0
      %7502 = vmatpush1.msra.mxu0 %v7455
      %7503 = vmatprep.subr.mxu0 0.0
      %7504 = vmatpush1.msra.mxu0 0.0
      %7505 = vmatprep.subr.mxu0 0.0
      %7506 = vmatpush1.msra.mxu0 0.0
      %7507 = vmatprep.subr.mxu0 0.0
      %7508 = vmatpush1.msra.mxu0 0.0
      %7509 = vmatprep.subr.mxu0 0.0
      %7510 = vmatpush1.msra.mxu0 0.0
      %7511 = vmatprep.subr.mxu0 0.0
      %7512 = vmatpush1.msra.mxu0 0.0
      %7513 = vmatprep.subr.mxu0 0.0
      %7514 = vmatpush1.msra.mxu0 0.0
      %7515 = vmatprep.subr.mxu0 0.0
      %7516 = vmatpush1.msra.mxu0 0.0
      %7517 = vmatprep.subr.mxu0 0.0
      %7518 = vmatpush1.msra.mxu0 0.0
      %7519 = vmatprep.subr.mxu0 0.0
      %7520 = vmatpush1.msra.mxu0 0.0
      %7521 = vmatprep.subr.mxu0 0.0
      %7522 = vmatpush1.msra.mxu0 0.0
      %7523 = vmatprep.subr.mxu0 0.0
      %7524 = vmatpush1.msra.mxu0 0.0
      %7525 = vmatprep.subr.mxu0 0.0
      %7526 = vmatpush1.msra.mxu0 0.0
      %7527 = vmatprep.subr.mxu0 0.0
      %7528 = vmatpush1.msra.mxu0 0.0
      %7529 = vmatprep.subr.mxu0 0.0
      %7530 = vmatpush1.msra.mxu0 0.0
      %7531 = vmatprep.subr.mxu0 0.0
      %7532 = vmatpush1.msra.mxu0 0.0
      %7533 = vmatprep.subr.mxu0 0.0
      %7534 = vmatpush1.msra.mxu0 0.0
      %7535 = vmatprep.subr.mxu0 0.0
      %7536 = vmatpush1.msra.mxu0 0.0
      %7537 = vmatprep.subr.mxu0 0.0
      %7538 = vmatpush1.msra.mxu0 0.0
      %7539 = vmatprep.subr.mxu0 0.0
      %7540 = vmatpush1.msra.mxu0 0.0
      %7541 = vmatprep.subr.mxu0 0.0
      %7542 = vmatpush1.msra.mxu0 0.0
      %7543 = vmatprep.subr.mxu0 0.0
      %7544 = vmatpush1.msra.mxu0 0.0
      %7545 = vmatprep.subr.mxu0 0.0
      %7546 = vmatpush1.msra.mxu0 0.0
      %7547 = vmatprep.subr.mxu0 0.0
      %7548 = vmatpush1.msra.mxu0 0.0
      %7549 = vmatprep.subr.mxu0 0.0
      %7550 = vmatpush1.msra.mxu0 0.0
      %7551 = vmatprep.subr.mxu0 0.0
      %7552 = vmatpush1.msra.mxu0 0.0
      %7553 = vmatprep.subr.mxu0 0.0
      %7554 = vmatpush1.msra.mxu0 0.0
      %7555 = vmatprep.subr.mxu0 0.0
      %7556 = vmatpush1.msra.mxu0 0.0
      %7557 = vmatprep.subr.mxu0 0.0
      %7558 = vmatpush1.msra.mxu0 0.0
      %7559 = vmatprep.mubr.f32.mxu0 0.0
      %7560 = vmatmul.mubr.f32.gmra.mrb[0].mxu0 %v7457
      %v7561 = vpop.f32.mrb[0].mxu0
      %v7562 = vadd.f32 0.0, %v7561
      %v7563 = vpop.f32.mrb[0].mxu0
      %7564 = vmatprep.mubr.f32.mxu0 0.0
      %7565 = vmatmul.mubr.f32.gmra.mrb[0].mxu0 %v7460
      %v7566 = vpop.f32.mrb[0].mxu0
      %v7567 = vadd.f32 0.0, %v7566
      %v7568 = vpop.f32.mrb[0].mxu0
      %7569 = vmatprep.mubr.f32.mxu0 0.0
      %7570 = vmatmul.mubr.f32.gmra.mrb[0].mxu0 %v7463
      %v7571 = vpop.f32.mrb[0].mxu0
      %v7572 = vadd.f32 0.0, %v7571
      %v7573 = vpop.f32.mrb[0].mxu0
      %7574 = vmatprep.mubr.f32.mxu0 0.0
      %7575 = vmatmul.mubr.f32.gmra.mrb[0].mxu0 %v7466
      %v7576 = vpop.f32.mrb[0].mxu0
      %v7577 = vadd.f32 0.0, %v7576
      %v7578 = vpop.f32.mrb[0].mxu0
      %7579 = vmatprep.mubr.f32.mxu0 0.0
      %7580 = vmatmul.mubr.f32.gmra.mrb[0].mxu0 %v7469
      %v7581 = vpop.f32.mrb[0].mxu0
      %v7582 = vadd.f32 0.0, %v7581
      %v7583 = vpop.f32.mrb[0].mxu0
      %7584 = vmatprep.mubr.f32.mxu0 0.0
      %7585 = vmatmul.mubr.f32.gmra.mrb[0].mxu0 %v7472
      %v7586 = vpop.f32.mrb[0].mxu0
      %v7587 = vadd.f32 0.0, %v7586
      %v7588 = vpop.f32.mrb[0].mxu0
      %7589 = vmatprep.mubr.f32.mxu0 0.0
      %7590 = vmatmul.mubr.f32.gmra.mrb[0].mxu0 %v7475
      %v7591 = vpop.f32.mrb[0].mxu0
      %v7592 = vadd.f32 0.0, %v7591
      %v7593 = vpop.f32.mrb[0].mxu0
      %7594 = vmatprep.mubr.f32.mxu0 0.0
      %7595 = vmatmul.mubr.f32.gmra.mrb[0].mxu0 %v7478
      %v7596 = vpop.f32.mrb[0].mxu0
      %v7597 = vadd.f32 0.0, %v7596
      %v7598 = vpop.f32.mrb[0].mxu0
      %7599 = vmatprep.mubr.f32.mxu0 0.0
      %7600 = vmatmul.mubr.f32.gmra.mrb[0].mxu0 %v7481
      %v7601 = vpop.f32.mrb[0].mxu0
      %v7602 = vadd.f32 0.0, %v7601
      %v7603 = vpop.f32.mrb[0].mxu0
      %7604 = vmatprep.mubr.f32.mxu0 0.0
      %7605 = vmatmul.mubr.f32.gmra.mrb[0].mxu0 %v7484
      %v7606 = vpop.f32.mrb[0].mxu0
      %v7607 = vadd.f32 0.0, %v7606
      %v7608 = vpop.f32.mrb[0].mxu0
      %7609 = vmatprep.mubr.f32.mxu0 0.0
      %7610 = vmatmul.mubr.f32.gmra.mrb[0].mxu0 %v7487
      %v7611 = vpop.f32.mrb[0].mxu0
      %v7612 = vadd.f32 0.0, %v7611
      %v7613 = vpop.f32.mrb[0].mxu0
      %7614 = vmatprep.mubr.f32.mxu0 0.0
      %7615 = vmatmul.mubr.f32.gmra.mrb[0].mxu0 %v7490
      %v7616 = vpop.f32.mrb[0].mxu0
      %v7617 = vadd.f32 0.0, %v7616
      %v7618 = vpop.f32.mrb[0].mxu0
      %7619 = vmatprep.mubr.f32.mxu0 0.0
      %7620 = vmatmul.mubr.f32.gmra.mrb[0].mxu0 %v7493
      %v7621 = vpop.f32.mrb[0].mxu0
      %v7622 = vadd.f32 0.0, %v7621
      %v7623 = vpop.f32.mrb[0].mxu0
      %7624 = vdwg.mxu0
      %v7625 = vld [vmem:[#allocation4] sm:$0xff]
      %v7626 = vld [vmem:[#allocation4 + $0x8] sm:$0xff]
      %v7627 = vld [vmem:[#allocation4 + $0x10] sm:$0xff]
      %v7628 = vld [vmem:[#allocation4 + $0x18] sm:$0xff]
      %v7629 = vld [vmem:[#allocation4 + $0x20] sm:$0xff]
      %v7630 = vld [vmem:[#allocation4 + $0x28] sm:$0xff]
      %v7631 = vld [vmem:[#allocation4 + $0x30] sm:$0xff]
      %v7632 = vld [vmem:[#allocation4 + $0x38] sm:$0xff]
      %v7633 = vld [vmem:[#allocation4 + $0x40] sm:$0xff]
      %v7634 = vld [vmem:[#allocation4 + $0x48] sm:$0xff]
      %v7635 = vld [vmem:[#allocation4 + $0x50] sm:$0xff]
      %v7636 = vld [vmem:[#allocation4 + $0x58] sm:$0xff]
      %v7637 = vld [vmem:[#allocation4 + $0x60] sm:$0xf]
      %v7638 = vadd.f32 %v7625, %v7562
      %v7639 = vadd.f32 %v7626, %v7567
      %v7640 = vadd.f32 %v7627, %v7572
      %v7641 = vadd.f32 %v7628, %v7577
      %v7642 = vadd.f32 %v7629, %v7582
      %v7643 = vadd.f32 %v7630, %v7587
      %v7644 = vadd.f32 %v7631, %v7592
      %v7645 = vadd.f32 %v7632, %v7597
      %v7646 = vadd.f32 %v7633, %v7602
      %v7647 = vadd.f32 %v7634, %v7607
      %v7648 = vadd.f32 %v7635, %v7612
      %v7649 = vadd.f32 %v7636, %v7617
      %v7650 = vadd.f32 %v7637, %v7622
      %7651 = vst.msk [vmem:[#allocation4] sm:$0xff] %vm403, %v7638
      %7652 = vst.msk [vmem:[#allocation4 + $0x8] sm:$0xff] %vm403, %v7639
      %7653 = vst.msk [vmem:[#allocation4 + $0x10] sm:$0xff] %vm403, %v7640
      %7654 = vst.msk [vmem:[#allocation4 + $0x18] sm:$0xff] %vm403, %v7641
      %7655 = vst.msk [vmem:[#allocation4 + $0x20] sm:$0xff] %vm403, %v7642
      %7656 = vst.msk [vmem:[#allocation4 + $0x28] sm:$0xff] %vm403, %v7643
      %7657 = vst.msk [vmem:[#allocation4 + $0x30] sm:$0xff] %vm403, %v7644
      %7658 = vst.msk [vmem:[#allocation4 + $0x38] sm:$0xff] %vm403, %v7645
      %7659 = vst.msk [vmem:[#allocation4 + $0x40] sm:$0xff] %vm403, %v7646
      %7660 = vst.msk [vmem:[#allocation4 + $0x48] sm:$0xff] %vm403, %v7647
      %7661 = vst.msk [vmem:[#allocation4 + $0x50] sm:$0xff] %vm403, %v7648
      %7662 = vst.msk [vmem:[#allocation4 + $0x58] sm:$0xff] %vm403, %v7649
      %7663 = vst.msk [vmem:[#allocation4 + $0x60] sm:$0xf] %vm5854, %v7650
      %v7664 = vld [vmem:[#allocation4] sm:$0xff]
      %v7665 = vld [vmem:[#allocation4 + $0x8] sm:$0xff]
      %v7666 = vld [vmem:[#allocation4 + $0x10] sm:$0xff]
      %v7667 = vld [vmem:[#allocation4 + $0x18] sm:$0xff]
      %v7668 = vld [vmem:[#allocation4 + $0x20] sm:$0xff]
      %v7669 = vld [vmem:[#allocation4 + $0x28] sm:$0xff]
      %v7670 = vld [vmem:[#allocation4 + $0x30] sm:$0xff]
      %v7671 = vld [vmem:[#allocation4 + $0x38] sm:$0xff]
      %v7672 = vld [vmem:[#allocation4 + $0x40] sm:$0xff]
      %v7673 = vld [vmem:[#allocation4 + $0x48] sm:$0xff]
      %v7674 = vld [vmem:[#allocation4 + $0x50] sm:$0xff]
      %v7675 = vld [vmem:[#allocation4 + $0x58] sm:$0xff]
      %v7676 = vld [vmem:[#allocation4 + $0x60] sm:$0xf]
      %v7677 = vld [vmem:[%s4] sm:$0x1]
      %v7679 = vlaneseq
      %v7680 = vshrl.u32 %v7679, 7
      %v7681 = vsub.s32 0, %v7680
      %v7682 = vrot.slane %v7677, %v7681
      %v7684 = vadd.f32 %v7664, %v7682
      %v7685 = vadd.f32 %v7665, %v7682
      %v7686 = vadd.f32 %v7666, %v7682
      %v7687 = vadd.f32 %v7667, %v7682
      %v7688 = vadd.f32 %v7668, %v7682
      %v7689 = vadd.f32 %v7669, %v7682
      %v7690 = vadd.f32 %v7670, %v7682
      %v7691 = vadd.f32 %v7671, %v7682
      %v7692 = vadd.f32 %v7672, %v7682
      %v7693 = vadd.f32 %v7673, %v7682
      %v7694 = vadd.f32 %v7674, %v7682
      %v7695 = vadd.f32 %v7675, %v7682
      %v7696 = vadd.f32 %v7676, %v7682
      %v7697 = vmax.f32 %v7684, 0.0
      %v7698 = vmax.f32 %v7685, 0.0
      %v7699 = vmax.f32 %v7686, 0.0
      %v7700 = vmax.f32 %v7687, 0.0
      %v7701 = vmax.f32 %v7688, 0.0
      %v7702 = vmax.f32 %v7689, 0.0
      %v7703 = vmax.f32 %v7690, 0.0
      %v7704 = vmax.f32 %v7691, 0.0
      %v7705 = vmax.f32 %v7692, 0.0
      %v7706 = vmax.f32 %v7693, 0.0
      %v7707 = vmax.f32 %v7694, 0.0
      %v7708 = vmax.f32 %v7695, 0.0
      %v7709 = vmax.f32 %v7696, 0.0
      %7710 = vst.msk [vmem:[#allocation4] sm:$0xff] %vm403, %v7697
      %7711 = vst.msk [vmem:[#allocation4 + $0x8] sm:$0xff] %vm403, %v7698
      %7712 = vst.msk [vmem:[#allocation4 + $0x10] sm:$0xff] %vm403, %v7699
      %7713 = vst.msk [vmem:[#allocation4 + $0x18] sm:$0xff] %vm403, %v7700
      %7714 = vst.msk [vmem:[#allocation4 + $0x20] sm:$0xff] %vm403, %v7701
      %7715 = vst.msk [vmem:[#allocation4 + $0x28] sm:$0xff] %vm403, %v7702
      %7716 = vst.msk [vmem:[#allocation4 + $0x30] sm:$0xff] %vm403, %v7703
      %7717 = vst.msk [vmem:[#allocation4 + $0x38] sm:$0xff] %vm403, %v7704
      %7718 = vst.msk [vmem:[#allocation4 + $0x40] sm:$0xff] %vm403, %v7705
      %7719 = vst.msk [vmem:[#allocation4 + $0x48] sm:$0xff] %vm403, %v7706
      %7720 = vst.msk [vmem:[#allocation4 + $0x50] sm:$0xff] %vm403, %v7707
      %7721 = vst.msk [vmem:[#allocation4 + $0x58] sm:$0xff] %vm403, %v7708
      %7722 = vst.msk [vmem:[#allocation4 + $0x60] sm:$0xf] %vm5854, %v7709
      %v7723 = vld [vmem:[#allocation4] ss:$2 sm:$0xf]
      %s7724 = scalar_lea.vmem [#allocation4], 1
      %v7725 = vld [vmem:[%s7724] ss:$2 sm:$0xf]
      %v7726 = vmax.f32 %v7723, %v7725
      %s7727 = scalar_lea.vmem [#allocation4], 10
      %v7728 = vld [vmem:[%s7727] ss:$2 sm:$0xf]
      %s7729 = scalar_lea.vmem [#allocation4], 11
      %v7730 = vld [vmem:[%s7729] ss:$2 sm:$0xf]
      %v7731 = vmax.f32 %v7728, %v7730
      %v7732 = vmax.f32 %v7726, %v7731
      %7733 = vst.msk [vmem:[#allocation5 + $0x7] sm:$0xf] %vm5854, %v7732
      %s7734 = scalar_lea.vmem [#allocation4], 20
      %v7735 = vld [vmem:[%s7734] ss:$2 sm:$0xf]
      %s7736 = scalar_lea.vmem [#allocation4], 21
      %v7737 = vld [vmem:[%s7736] ss:$2 sm:$0xf]
      %v7738 = vmax.f32 %v7735, %v7737
      %s7739 = scalar_lea.vmem [#allocation4], 30
      %v7740 = vld [vmem:[%s7739] ss:$2 sm:$0xf]
      %s7741 = scalar_lea.vmem [#allocation4], 31
      %v7742 = vld [vmem:[%s7741] ss:$2 sm:$0xf]
      %v7743 = vmax.f32 %v7740, %v7742
      %v7744 = vmax.f32 %v7738, %v7743
      %7745 = vst.msk [vmem:[#allocation5 + $0xd] sm:$0xf] %vm5854, %v7744
      %s7746 = scalar_lea.vmem [#allocation4], 40
      %v7747 = vld [vmem:[%s7746] ss:$2 sm:$0xf]
      %s7748 = scalar_lea.vmem [#allocation4], 41
      %v7749 = vld [vmem:[%s7748] ss:$2 sm:$0xf]
      %v7750 = vmax.f32 %v7747, %v7749
      %s7751 = scalar_lea.vmem [#allocation4], 50
      %v7752 = vld [vmem:[%s7751] ss:$2 sm:$0xf]
      %s7753 = scalar_lea.vmem [#allocation4], 51
      %v7754 = vld [vmem:[%s7753] ss:$2 sm:$0xf]
      %v7755 = vmax.f32 %v7752, %v7754
      %v7756 = vmax.f32 %v7750, %v7755
      %7757 = vst.msk [vmem:[#allocation5 + $0x13] sm:$0xf] %vm5854, %v7756
      %s7758 = scalar_lea.vmem [#allocation4], 60
      %v7759 = vld [vmem:[%s7758] ss:$2 sm:$0xf]
      %s7760 = scalar_lea.vmem [#allocation4], 61
      %v7761 = vld [vmem:[%s7760] ss:$2 sm:$0xf]
      %v7762 = vmax.f32 %v7759, %v7761
      %s7763 = scalar_lea.vmem [#allocation4], 70
      %v7764 = vld [vmem:[%s7763] ss:$2 sm:$0xf]
      %s7765 = scalar_lea.vmem [#allocation4], 71
      %v7766 = vld [vmem:[%s7765] ss:$2 sm:$0xf]
      %v7767 = vmax.f32 %v7764, %v7766
      %v7768 = vmax.f32 %v7762, %v7767
      %7769 = vst.msk [vmem:[#allocation5 + $0x19] sm:$0xf] %vm5854, %v7768
      %v7770 = vld [vmem:[#allocation5] sm:$0xff]
      %v7771 = vld [vmem:[#allocation5 + $0x8] sm:$0xff]
      %v7772 = vld [vmem:[#allocation5 + $0x10] sm:$0xff]
      %v7773 = vld [vmem:[#allocation5 + $0x18] sm:$0xff]
      %v7774 = vld [vmem:[#allocation5 + $0x20] sm:$0xf]
      %v7775 = vld [vmem:[%s5] sm:$0xff]
      %v7776 = vld [vmem:[%s5 + $0x8] sm:$0xff]
      %v7777 = vld [vmem:[%s5 + $0x10] sm:$0xff]
      %v7778 = vld [vmem:[%s5 + $0x18] sm:$0xff]
      %v7779 = vld [vmem:[%s5 + $0x20] sm:$0xff]
      %v7780 = vld [vmem:[%s5 + $0x28] sm:$0xff]
      %v7781 = vld [vmem:[%s5 + $0x30] sm:$0xff]
      %v7782 = vld [vmem:[%s5 + $0x38] sm:$0xff]
      %v7784 = vsel %vm403, %v7770, 0
      %v7787 = vsel %vm403, %v7771, 0
      %v7790 = vsel %vm403, %v7772, 0
      %v7793 = vsel %vm403, %v7773, 0
      %v7796 = vsel %vm403, %v7774, 0
      %7798 = vmatprep.subr.mxu0 0.0
      %7799 = vmatpush1.msra.mxu0 %v7775
      %7800 = vmatprep.subr.mxu0 0.0
      %7801 = vmatpush1.msra.mxu0 %v7776
      %7802 = vmatprep.subr.mxu0 0.0
      %7803 = vmatpush1.msra.mxu0 %v7777
      %7804 = vmatprep.subr.mxu0 0.0
      %7805 = vmatpush1.msra.mxu0 %v7778
      %7806 = vmatprep.subr.mxu0 0.0
      %7807 = vmatpush1.msra.mxu0 %v7779
      %7808 = vmatprep.subr.mxu0 0.0
      %7809 = vmatpush1.msra.mxu0 %v7780
      %7810 = vmatprep.subr.mxu0 0.0
      %7811 = vmatpush1.msra.mxu0 %v7781
      %7812 = vmatprep.subr.mxu0 0.0
      %7813 = vmatpush1.msra.mxu0 %v7782
      %7814 = vmatprep.subr.mxu0 0.0
      %7815 = vmatpush1.msra.mxu0 0.0
      %7816 = vmatprep.subr.mxu0 0.0
      %7817 = vmatpush1.msra.mxu0 0.0
      %7818 = vmatprep.subr.mxu0 0.0
      %7819 = vmatpush1.msra.mxu0 0.0
      %7820 = vmatprep.subr.mxu0 0.0
      %7821 = vmatpush1.msra.mxu0 0.0
      %7822 = vmatprep.subr.mxu0 0.0
      %7823 = vmatpush1.msra.mxu0 0.0
      %7824 = vmatprep.subr.mxu0 0.0
      %7825 = vmatpush1.msra.mxu0 0.0
      %7826 = vmatprep.subr.mxu0 0.0
      %7827 = vmatpush1.msra.mxu0 0.0
      %7828 = vmatprep.subr.mxu0 0.0
      %7829 = vmatpush1.msra.mxu0 0.0
      %7830 = vmatprep.subr.mxu0 0.0
      %7831 = vmatpush1.msra.mxu0 0.0
      %7832 = vmatprep.subr.mxu0 0.0
      %7833 = vmatpush1.msra.mxu0 0.0
      %7834 = vmatprep.subr.mxu0 0.0
      %7835 = vmatpush1.msra.mxu0 0.0
      %7836 = vmatprep.subr.mxu0 0.0
      %7837 = vmatpush1.msra.mxu0 0.0
      %7838 = vmatprep.subr.mxu0 0.0
      %7839 = vmatpush1.msra.mxu0 0.0
      %7840 = vmatprep.subr.mxu0 0.0
      %7841 = vmatpush1.msra.mxu0 0.0
      %7842 = vmatprep.subr.mxu0 0.0
      %7843 = vmatpush1.msra.mxu0 0.0
      %7844 = vmatprep.subr.mxu0 0.0
      %7845 = vmatpush1.msra.mxu0 0.0
      %7846 = vmatprep.subr.mxu0 0.0
      %7847 = vmatpush1.msra.mxu0 0.0
      %7848 = vmatprep.subr.mxu0 0.0
      %7849 = vmatpush1.msra.mxu0 0.0
      %7850 = vmatprep.subr.mxu0 0.0
      %7851 = vmatpush1.msra.mxu0 0.0
      %7852 = vmatprep.subr.mxu0 0.0
      %7853 = vmatpush1.msra.mxu0 0.0
      %7854 = vmatprep.subr.mxu0 0.0
      %7855 = vmatpush1.msra.mxu0 0.0
      %7856 = vmatprep.subr.mxu0 0.0
      %7857 = vmatpush1.msra.mxu0 0.0
      %7858 = vmatprep.subr.mxu0 0.0
      %7859 = vmatpush1.msra.mxu0 0.0
      %7860 = vmatprep.subr.mxu0 0.0
      %7861 = vmatpush1.msra.mxu0 0.0
      %7862 = vmatprep.mubr.f32.mxu0 0.0
      %7863 = vmatmul.mubr.f32.gmra.mrb[0].mxu0 %v7784
      %v7864 = vpop.f32.mrb[0].mxu0
      %v7865 = vadd.f32 0.0, %v7864
      %v7866 = vpop.f32.mrb[0].mxu0
      %7867 = vmatprep.mubr.f32.mxu0 0.0
      %7868 = vmatmul.mubr.f32.gmra.mrb[0].mxu0 %v7787
      %v7869 = vpop.f32.mrb[0].mxu0
      %v7870 = vadd.f32 0.0, %v7869
      %v7871 = vpop.f32.mrb[0].mxu0
      %7872 = vmatprep.mubr.f32.mxu0 0.0
      %7873 = vmatmul.mubr.f32.gmra.mrb[0].mxu0 %v7790
      %v7874 = vpop.f32.mrb[0].mxu0
      %v7875 = vadd.f32 0.0, %v7874
      %v7876 = vpop.f32.mrb[0].mxu0
      %7877 = vmatprep.mubr.f32.mxu0 0.0
      %7878 = vmatmul.mubr.f32.gmra.mrb[0].mxu0 %v7793
      %v7879 = vpop.f32.mrb[0].mxu0
      %v7880 = vadd.f32 0.0, %v7879
      %v7881 = vpop.f32.mrb[0].mxu0
      %7882 = vmatprep.mubr.f32.mxu0 0.0
      %7883 = vmatmul.mubr.f32.gmra.mrb[0].mxu0 %v7796
      %v7884 = vpop.f32.mrb[0].mxu0
      %v7885 = vadd.f32 0.0, %v7884
      %v7886 = vpop.f32.mrb[0].mxu0
      %7887 = vdwg.mxu0
      %7888 = vst [vmem:[#allocation6] sm:$0xff] %v7865
      %7889 = vst [vmem:[#allocation6 + $0x8] sm:$0xff] %v7870
      %7890 = vst [vmem:[#allocation6 + $0x10] sm:$0xff] %v7875
      %7891 = vst [vmem:[#allocation6 + $0x18] sm:$0xff] %v7880
      %7892 = vst [vmem:[#allocation6 + $0x20] sm:$0xf] %v7885
      %v7893 = vld [vmem:[#allocation5 + $0x1] sm:$0xff]
      %v7894 = vld [vmem:[#allocation5 + $0x9] sm:$0xff]
      %v7895 = vld [vmem:[#allocation5 + $0x11] sm:$0xff]
      %v7896 = vld [vmem:[#allocation5 + $0x19] sm:$0xff]
      %v7897 = vld [vmem:[#allocation5 + $0x21] sm:$0xf]
      %s7898 = scalar_lea.vmem %s5, 64
      %v7899 = vld [vmem:[%s7898] sm:$0xff]
      %v7900 = vld [vmem:[%s7898 + $0x8] sm:$0xff]
      %v7901 = vld [vmem:[%s7898 + $0x10] sm:$0xff]
      %v7902 = vld [vmem:[%s7898 + $0x18] sm:$0xff]
      %v7903 = vld [vmem:[%s7898 + $0x20] sm:$0xff]
      %v7904 = vld [vmem:[%s7898 + $0x28] sm:$0xff]
      %v7905 = vld [vmem:[%s7898 + $0x30] sm:$0xff]
      %v7906 = vld [vmem:[%s7898 + $0x38] sm:$0xff]
      %v7908 = vsel %vm403, %v7893, 0
      %v7911 = vsel %vm403, %v7894, 0
      %v7914 = vsel %vm403, %v7895, 0
      %v7917 = vsel %vm403, %v7896, 0
      %v7920 = vsel %vm403, %v7897, 0
      %7922 = vmatprep.subr.mxu0 0.0
      %7923 = vmatpush1.msra.mxu0 %v7899
      %7924 = vmatprep.subr.mxu0 0.0
      %7925 = vmatpush1.msra.mxu0 %v7900
      %7926 = vmatprep.subr.mxu0 0.0
      %7927 = vmatpush1.msra.mxu0 %v7901
      %7928 = vmatprep.subr.mxu0 0.0
      %7929 = vmatpush1.msra.mxu0 %v7902
      %7930 = vmatprep.subr.mxu0 0.0
      %7931 = vmatpush1.msra.mxu0 %v7903
      %7932 = vmatprep.subr.mxu0 0.0
      %7933 = vmatpush1.msra.mxu0 %v7904
      %7934 = vmatprep.subr.mxu0 0.0
      %7935 = vmatpush1.msra.mxu0 %v7905
      %7936 = vmatprep.subr.mxu0 0.0
      %7937 = vmatpush1.msra.mxu0 %v7906
      %7938 = vmatprep.subr.mxu0 0.0
      %7939 = vmatpush1.msra.mxu0 0.0
      %7940 = vmatprep.subr.mxu0 0.0
      %7941 = vmatpush1.msra.mxu0 0.0
      %7942 = vmatprep.subr.mxu0 0.0
      %7943 = vmatpush1.msra.mxu0 0.0
      %7944 = vmatprep.subr.mxu0 0.0
      %7945 = vmatpush1.msra.mxu0 0.0
      %7946 = vmatprep.subr.mxu0 0.0
      %7947 = vmatpush1.msra.mxu0 0.0
      %7948 = vmatprep.subr.mxu0 0.0
      %7949 = vmatpush1.msra.mxu0 0.0
      %7950 = vmatprep.subr.mxu0 0.0
      %7951 = vmatpush1.msra.mxu0 0.0
      %7952 = vmatprep.subr.mxu0 0.0
      %7953 = vmatpush1.msra.mxu0 0.0
      %7954 = vmatprep.subr.mxu0 0.0
      %7955 = vmatpush1.msra.mxu0 0.0
      %7956 = vmatprep.subr.mxu0 0.0
      %7957 = vmatpush1.msra.mxu0 0.0
      %7958 = vmatprep.subr.mxu0 0.0
      %7959 = vmatpush1.msra.mxu0 0.0
      %7960 = vmatprep.subr.mxu0 0.0
      %7961 = vmatpush1.msra.mxu0 0.0
      %7962 = vmatprep.subr.mxu0 0.0
      %7963 = vmatpush1.msra.mxu0 0.0
      %7964 = vmatprep.subr.mxu0 0.0
      %7965 = vmatpush1.msra.mxu0 0.0
      %7966 = vmatprep.subr.mxu0 0.0
      %7967 = vmatpush1.msra.mxu0 0.0
      %7968 = vmatprep.subr.mxu0 0.0
      %7969 = vmatpush1.msra.mxu0 0.0
      %7970 = vmatprep.subr.mxu0 0.0
      %7971 = vmatpush1.msra.mxu0 0.0
      %7972 = vmatprep.subr.mxu0 0.0
      %7973 = vmatpush1.msra.mxu0 0.0
      %7974 = vmatprep.subr.mxu0 0.0
      %7975 = vmatpush1.msra.mxu0 0.0
      %7976 = vmatprep.subr.mxu0 0.0
      %7977 = vmatpush1.msra.mxu0 0.0
      %7978 = vmatprep.subr.mxu0 0.0
      %7979 = vmatpush1.msra.mxu0 0.0
      %7980 = vmatprep.subr.mxu0 0.0
      %7981 = vmatpush1.msra.mxu0 0.0
      %7982 = vmatprep.subr.mxu0 0.0
      %7983 = vmatpush1.msra.mxu0 0.0
      %7984 = vmatprep.subr.mxu0 0.0
      %7985 = vmatpush1.msra.mxu0 0.0
      %7986 = vmatprep.mubr.f32.mxu0 0.0
      %7987 = vmatmul.mubr.f32.gmra.mrb[0].mxu0 %v7908
      %v7988 = vpop.f32.mrb[0].mxu0
      %v7989 = vadd.f32 0.0, %v7988
      %v7990 = vpop.f32.mrb[0].mxu0
      %7991 = vmatprep.mubr.f32.mxu0 0.0
      %7992 = vmatmul.mubr.f32.gmra.mrb[0].mxu0 %v7911
      %v7993 = vpop.f32.mrb[0].mxu0
      %v7994 = vadd.f32 0.0, %v7993
      %v7995 = vpop.f32.mrb[0].mxu0
      %7996 = vmatprep.mubr.f32.mxu0 0.0
      %7997 = vmatmul.mubr.f32.gmra.mrb[0].mxu0 %v7914
      %v7998 = vpop.f32.mrb[0].mxu0
      %v7999 = vadd.f32 0.0, %v7998
      %v8000 = vpop.f32.mrb[0].mxu0
      %8001 = vmatprep.mubr.f32.mxu0 0.0
      %8002 = vmatmul.mubr.f32.gmra.mrb[0].mxu0 %v7917
      %v8003 = vpop.f32.mrb[0].mxu0
      %v8004 = vadd.f32 0.0, %v8003
      %v8005 = vpop.f32.mrb[0].mxu0
      %8006 = vmatprep.mubr.f32.mxu0 0.0
      %8007 = vmatmul.mubr.f32.gmra.mrb[0].mxu0 %v7920
      %v8008 = vpop.f32.mrb[0].mxu0
      %v8009 = vadd.f32 0.0, %v8008
      %v8010 = vpop.f32.mrb[0].mxu0
      %8011 = vdwg.mxu0
      %v8012 = vld [vmem:[#allocation6] sm:$0xff]
      %v8013 = vld [vmem:[#allocation6 + $0x8] sm:$0xff]
      %v8014 = vld [vmem:[#allocation6 + $0x10] sm:$0xff]
      %v8015 = vld [vmem:[#allocation6 + $0x18] sm:$0xff]
      %v8016 = vld [vmem:[#allocation6 + $0x20] sm:$0xf]
      %v8017 = vadd.f32 %v8012, %v7989
      %v8018 = vadd.f32 %v8013, %v7994
      %v8019 = vadd.f32 %v8014, %v7999
      %v8020 = vadd.f32 %v8015, %v8004
      %v8021 = vadd.f32 %v8016, %v8009
      %8022 = vst [vmem:[#allocation6] sm:$0xff] %v8017
      %8023 = vst [vmem:[#allocation6 + $0x8] sm:$0xff] %v8018
      %8024 = vst [vmem:[#allocation6 + $0x10] sm:$0xff] %v8019
      %8025 = vst [vmem:[#allocation6 + $0x18] sm:$0xff] %v8020
      %8026 = vst [vmem:[#allocation6 + $0x20] sm:$0xf] %v8021
      %v8027 = vld [vmem:[#allocation5 + $0x2] sm:$0xff]
      %v8028 = vld [vmem:[#allocation5 + $0xa] sm:$0xff]
      %v8029 = vld [vmem:[#allocation5 + $0x12] sm:$0xff]
      %v8030 = vld [vmem:[#allocation5 + $0x1a] sm:$0xff]
      %v8031 = vld [vmem:[#allocation5 + $0x22] sm:$0xf]
      %s8032 = scalar_lea.vmem %s5, 128
      %v8033 = vld [vmem:[%s8032] sm:$0xff]
      %v8034 = vld [vmem:[%s8032 + $0x8] sm:$0xff]
      %v8035 = vld [vmem:[%s8032 + $0x10] sm:$0xff]
      %v8036 = vld [vmem:[%s8032 + $0x18] sm:$0xff]
      %v8037 = vld [vmem:[%s8032 + $0x20] sm:$0xff]
      %v8038 = vld [vmem:[%s8032 + $0x28] sm:$0xff]
      %v8039 = vld [vmem:[%s8032 + $0x30] sm:$0xff]
      %v8040 = vld [vmem:[%s8032 + $0x38] sm:$0xff]
      %v8042 = vsel %vm403, %v8027, 0
      %v8045 = vsel %vm403, %v8028, 0
      %v8048 = vsel %vm403, %v8029, 0
      %v8051 = vsel %vm403, %v8030, 0
      %v8054 = vsel %vm403, %v8031, 0
      %8056 = vmatprep.subr.mxu0 0.0
      %8057 = vmatpush1.msra.mxu0 %v8033
      %8058 = vmatprep.subr.mxu0 0.0
      %8059 = vmatpush1.msra.mxu0 %v8034
      %8060 = vmatprep.subr.mxu0 0.0
      %8061 = vmatpush1.msra.mxu0 %v8035
      %8062 = vmatprep.subr.mxu0 0.0
      %8063 = vmatpush1.msra.mxu0 %v8036
      %8064 = vmatprep.subr.mxu0 0.0
      %8065 = vmatpush1.msra.mxu0 %v8037
      %8066 = vmatprep.subr.mxu0 0.0
      %8067 = vmatpush1.msra.mxu0 %v8038
      %8068 = vmatprep.subr.mxu0 0.0
      %8069 = vmatpush1.msra.mxu0 %v8039
      %8070 = vmatprep.subr.mxu0 0.0
      %8071 = vmatpush1.msra.mxu0 %v8040
      %8072 = vmatprep.subr.mxu0 0.0
      %8073 = vmatpush1.msra.mxu0 0.0
      %8074 = vmatprep.subr.mxu0 0.0
      %8075 = vmatpush1.msra.mxu0 0.0
      %8076 = vmatprep.subr.mxu0 0.0
      %8077 = vmatpush1.msra.mxu0 0.0
      %8078 = vmatprep.subr.mxu0 0.0
      %8079 = vmatpush1.msra.mxu0 0.0
      %8080 = vmatprep.subr.mxu0 0.0
      %8081 = vmatpush1.msra.mxu0 0.0
      %8082 = vmatprep.subr.mxu0 0.0
      %8083 = vmatpush1.msra.mxu0 0.0
      %8084 = vmatprep.subr.mxu0 0.0
      %8085 = vmatpush1.msra.mxu0 0.0
      %8086 = vmatprep.subr.mxu0 0.0
      %8087 = vmatpush1.msra.mxu0 0.0
      %8088 = vmatprep.subr.mxu0 0.0
      %8089 = vmatpush1.msra.mxu0 0.0
      %8090 = vmatprep.subr.mxu0 0.0
      %8091 = vmatpush1.msra.mxu0 0.0
      %8092 = vmatprep.subr.mxu0 0.0
      %8093 = vmatpush1.msra.mxu0 0.0
      %8094 = vmatprep.subr.mxu0 0.0
      %8095 = vmatpush1.msra.mxu0 0.0
      %8096 = vmatprep.subr.mxu0 0.0
      %8097 = vmatpush1.msra.mxu0 0.0
      %8098 = vmatprep.subr.mxu0 0.0
      %8099 = vmatpush1.msra.mxu0 0.0
      %8100 = vmatprep.subr.mxu0 0.0
      %8101 = vmatpush1.msra.mxu0 0.0
      %8102 = vmatprep.subr.mxu0 0.0
      %8103 = vmatpush1.msra.mxu0 0.0
      %8104 = vmatprep.subr.mxu0 0.0
      %8105 = vmatpush1.msra.mxu0 0.0
      %8106 = vmatprep.subr.mxu0 0.0
      %8107 = vmatpush1.msra.mxu0 0.0
      %8108 = vmatprep.subr.mxu0 0.0
      %8109 = vmatpush1.msra.mxu0 0.0
      %8110 = vmatprep.subr.mxu0 0.0
      %8111 = vmatpush1.msra.mxu0 0.0
      %8112 = vmatprep.subr.mxu0 0.0
      %8113 = vmatpush1.msra.mxu0 0.0
      %8114 = vmatprep.subr.mxu0 0.0
      %8115 = vmatpush1.msra.mxu0 0.0
      %8116 = vmatprep.subr.mxu0 0.0
      %8117 = vmatpush1.msra.mxu0 0.0
      %8118 = vmatprep.subr.mxu0 0.0
      %8119 = vmatpush1.msra.mxu0 0.0
      %8120 = vmatprep.mubr.f32.mxu0 0.0
      %8121 = vmatmul.mubr.f32.gmra.mrb[0].mxu0 %v8042
      %v8122 = vpop.f32.mrb[0].mxu0
      %v8123 = vadd.f32 0.0, %v8122
      %v8124 = vpop.f32.mrb[0].mxu0
      %8125 = vmatprep.mubr.f32.mxu0 0.0
      %8126 = vmatmul.mubr.f32.gmra.mrb[0].mxu0 %v8045
      %v8127 = vpop.f32.mrb[0].mxu0
      %v8128 = vadd.f32 0.0, %v8127
      %v8129 = vpop.f32.mrb[0].mxu0
      %8130 = vmatprep.mubr.f32.mxu0 0.0
      %8131 = vmatmul.mubr.f32.gmra.mrb[0].mxu0 %v8048
      %v8132 = vpop.f32.mrb[0].mxu0
      %v8133 = vadd.f32 0.0, %v8132
      %v8134 = vpop.f32.mrb[0].mxu0
      %8135 = vmatprep.mubr.f32.mxu0 0.0
      %8136 = vmatmul.mubr.f32.gmra.mrb[0].mxu0 %v8051
      %v8137 = vpop.f32.mrb[0].mxu0
      %v8138 = vadd.f32 0.0, %v8137
      %v8139 = vpop.f32.mrb[0].mxu0
      %8140 = vmatprep.mubr.f32.mxu0 0.0
      %8141 = vmatmul.mubr.f32.gmra.mrb[0].mxu0 %v8054
      %v8142 = vpop.f32.mrb[0].mxu0
      %v8143 = vadd.f32 0.0, %v8142
      %v8144 = vpop.f32.mrb[0].mxu0
      %8145 = vdwg.mxu0
      %v8146 = vld [vmem:[#allocation6] sm:$0xff]
      %v8147 = vld [vmem:[#allocation6 + $0x8] sm:$0xff]
      %v8148 = vld [vmem:[#allocation6 + $0x10] sm:$0xff]
      %v8149 = vld [vmem:[#allocation6 + $0x18] sm:$0xff]
      %v8150 = vld [vmem:[#allocation6 + $0x20] sm:$0xf]
      %v8151 = vadd.f32 %v8146, %v8123
      %v8152 = vadd.f32 %v8147, %v8128
      %v8153 = vadd.f32 %v8148, %v8133
      %v8154 = vadd.f32 %v8149, %v8138
      %v8155 = vadd.f32 %v8150, %v8143
      %8156 = vst [vmem:[#allocation6] sm:$0xff] %v8151
      %8157 = vst [vmem:[#allocation6 + $0x8] sm:$0xff] %v8152
      %8158 = vst [vmem:[#allocation6 + $0x10] sm:$0xff] %v8153
      %8159 = vst [vmem:[#allocation6 + $0x18] sm:$0xff] %v8154
      %8160 = vst [vmem:[#allocation6 + $0x20] sm:$0xf] %v8155
      %v8161 = vld [vmem:[#allocation5 + $0x6] sm:$0xff]
      %v8162 = vld [vmem:[#allocation5 + $0xe] sm:$0xff]
      %v8163 = vld [vmem:[#allocation5 + $0x16] sm:$0xff]
      %v8164 = vld [vmem:[#allocation5 + $0x1e] sm:$0xff]
      %v8165 = vld [vmem:[#allocation5 + $0x26] sm:$0xf]
      %s8166 = scalar_lea.vmem %s5, 192
      %v8167 = vld [vmem:[%s8166] sm:$0xff]
      %v8168 = vld [vmem:[%s8166 + $0x8] sm:$0xff]
      %v8169 = vld [vmem:[%s8166 + $0x10] sm:$0xff]
      %v8170 = vld [vmem:[%s8166 + $0x18] sm:$0xff]
      %v8171 = vld [vmem:[%s8166 + $0x20] sm:$0xff]
      %v8172 = vld [vmem:[%s8166 + $0x28] sm:$0xff]
      %v8173 = vld [vmem:[%s8166 + $0x30] sm:$0xff]
      %v8174 = vld [vmem:[%s8166 + $0x38] sm:$0xff]
      %v8176 = vsel %vm403, %v8161, 0
      %v8179 = vsel %vm403, %v8162, 0
      %v8182 = vsel %vm403, %v8163, 0
      %v8185 = vsel %vm403, %v8164, 0
      %v8188 = vsel %vm403, %v8165, 0
      %8190 = vmatprep.subr.mxu0 0.0
      %8191 = vmatpush1.msra.mxu0 %v8167
      %8192 = vmatprep.subr.mxu0 0.0
      %8193 = vmatpush1.msra.mxu0 %v8168
      %8194 = vmatprep.subr.mxu0 0.0
      %8195 = vmatpush1.msra.mxu0 %v8169
      %8196 = vmatprep.subr.mxu0 0.0
      %8197 = vmatpush1.msra.mxu0 %v8170
      %8198 = vmatprep.subr.mxu0 0.0
      %8199 = vmatpush1.msra.mxu0 %v8171
      %8200 = vmatprep.subr.mxu0 0.0
      %8201 = vmatpush1.msra.mxu0 %v8172
      %8202 = vmatprep.subr.mxu0 0.0
      %8203 = vmatpush1.msra.mxu0 %v8173
      %8204 = vmatprep.subr.mxu0 0.0
      %8205 = vmatpush1.msra.mxu0 %v8174
      %8206 = vmatprep.subr.mxu0 0.0
      %8207 = vmatpush1.msra.mxu0 0.0
      %8208 = vmatprep.subr.mxu0 0.0
      %8209 = vmatpush1.msra.mxu0 0.0
      %8210 = vmatprep.subr.mxu0 0.0
      %8211 = vmatpush1.msra.mxu0 0.0
      %8212 = vmatprep.subr.mxu0 0.0
      %8213 = vmatpush1.msra.mxu0 0.0
      %8214 = vmatprep.subr.mxu0 0.0
      %8215 = vmatpush1.msra.mxu0 0.0
      %8216 = vmatprep.subr.mxu0 0.0
      %8217 = vmatpush1.msra.mxu0 0.0
      %8218 = vmatprep.subr.mxu0 0.0
      %8219 = vmatpush1.msra.mxu0 0.0
      %8220 = vmatprep.subr.mxu0 0.0
      %8221 = vmatpush1.msra.mxu0 0.0
      %8222 = vmatprep.subr.mxu0 0.0
      %8223 = vmatpush1.msra.mxu0 0.0
      %8224 = vmatprep.subr.mxu0 0.0
      %8225 = vmatpush1.msra.mxu0 0.0
      %8226 = vmatprep.subr.mxu0 0.0
      %8227 = vmatpush1.msra.mxu0 0.0
      %8228 = vmatprep.subr.mxu0 0.0
      %8229 = vmatpush1.msra.mxu0 0.0
      %8230 = vmatprep.subr.mxu0 0.0
      %8231 = vmatpush1.msra.mxu0 0.0
      %8232 = vmatprep.subr.mxu0 0.0
      %8233 = vmatpush1.msra.mxu0 0.0
      %8234 = vmatprep.subr.mxu0 0.0
      %8235 = vmatpush1.msra.mxu0 0.0
      %8236 = vmatprep.subr.mxu0 0.0
      %8237 = vmatpush1.msra.mxu0 0.0
      %8238 = vmatprep.subr.mxu0 0.0
      %8239 = vmatpush1.msra.mxu0 0.0
      %8240 = vmatprep.subr.mxu0 0.0
      %8241 = vmatpush1.msra.mxu0 0.0
      %8242 = vmatprep.subr.mxu0 0.0
      %8243 = vmatpush1.msra.mxu0 0.0
      %8244 = vmatprep.subr.mxu0 0.0
      %8245 = vmatpush1.msra.mxu0 0.0
      %8246 = vmatprep.subr.mxu0 0.0
      %8247 = vmatpush1.msra.mxu0 0.0
      %8248 = vmatprep.subr.mxu0 0.0
      %8249 = vmatpush1.msra.mxu0 0.0
      %8250 = vmatprep.subr.mxu0 0.0
      %8251 = vmatpush1.msra.mxu0 0.0
      %8252 = vmatprep.subr.mxu0 0.0
      %8253 = vmatpush1.msra.mxu0 0.0
      %8254 = vmatprep.mubr.f32.mxu0 0.0
      %8255 = vmatmul.mubr.f32.gmra.mrb[0].mxu0 %v8176
      %v8256 = vpop.f32.mrb[0].mxu0
      %v8257 = vadd.f32 0.0, %v8256
      %v8258 = vpop.f32.mrb[0].mxu0
      %8259 = vmatprep.mubr.f32.mxu0 0.0
      %8260 = vmatmul.mubr.f32.gmra.mrb[0].mxu0 %v8179
      %v8261 = vpop.f32.mrb[0].mxu0
      %v8262 = vadd.f32 0.0, %v8261
      %v8263 = vpop.f32.mrb[0].mxu0
      %8264 = vmatprep.mubr.f32.mxu0 0.0
      %8265 = vmatmul.mubr.f32.gmra.mrb[0].mxu0 %v8182
      %v8266 = vpop.f32.mrb[0].mxu0
      %v8267 = vadd.f32 0.0, %v8266
      %v8268 = vpop.f32.mrb[0].mxu0
      %8269 = vmatprep.mubr.f32.mxu0 0.0
      %8270 = vmatmul.mubr.f32.gmra.mrb[0].mxu0 %v8185
      %v8271 = vpop.f32.mrb[0].mxu0
      %v8272 = vadd.f32 0.0, %v8271
      %v8273 = vpop.f32.mrb[0].mxu0
      %8274 = vmatprep.mubr.f32.mxu0 0.0
      %8275 = vmatmul.mubr.f32.gmra.mrb[0].mxu0 %v8188
      %v8276 = vpop.f32.mrb[0].mxu0
      %v8277 = vadd.f32 0.0, %v8276
      %v8278 = vpop.f32.mrb[0].mxu0
      %8279 = vdwg.mxu0
      %v8280 = vld [vmem:[#allocation6] sm:$0xff]
      %v8281 = vld [vmem:[#allocation6 + $0x8] sm:$0xff]
      %v8282 = vld [vmem:[#allocation6 + $0x10] sm:$0xff]
      %v8283 = vld [vmem:[#allocation6 + $0x18] sm:$0xff]
      %v8284 = vld [vmem:[#allocation6 + $0x20] sm:$0xf]
      %v8285 = vadd.f32 %v8280, %v8257
      %v8286 = vadd.f32 %v8281, %v8262
      %v8287 = vadd.f32 %v8282, %v8267
      %v8288 = vadd.f32 %v8283, %v8272
      %v8289 = vadd.f32 %v8284, %v8277
      %8290 = vst [vmem:[#allocation6] sm:$0xff] %v8285
      %8291 = vst [vmem:[#allocation6 + $0x8] sm:$0xff] %v8286
      %8292 = vst [vmem:[#allocation6 + $0x10] sm:$0xff] %v8287
      %8293 = vst [vmem:[#allocation6 + $0x18] sm:$0xff] %v8288
      %8294 = vst [vmem:[#allocation6 + $0x20] sm:$0xf] %v8289
      %v8295 = vld [vmem:[#allocation5 + $0x7] sm:$0xff]
      %v8296 = vld [vmem:[#allocation5 + $0xf] sm:$0xff]
      %v8297 = vld [vmem:[#allocation5 + $0x17] sm:$0xff]
      %v8298 = vld [vmem:[#allocation5 + $0x1f] sm:$0xff]
      %v8299 = vld [vmem:[#allocation5 + $0x27] sm:$0xf]
      %s8300 = scalar_lea.vmem %s5, 256
      %v8301 = vld [vmem:[%s8300] sm:$0xff]
      %v8302 = vld [vmem:[%s8300 + $0x8] sm:$0xff]
      %v8303 = vld [vmem:[%s8300 + $0x10] sm:$0xff]
      %v8304 = vld [vmem:[%s8300 + $0x18] sm:$0xff]
      %v8305 = vld [vmem:[%s8300 + $0x20] sm:$0xff]
      %v8306 = vld [vmem:[%s8300 + $0x28] sm:$0xff]
      %v8307 = vld [vmem:[%s8300 + $0x30] sm:$0xff]
      %v8308 = vld [vmem:[%s8300 + $0x38] sm:$0xff]
      %v8310 = vsel %vm403, %v8295, 0
      %v8313 = vsel %vm403, %v8296, 0
      %v8316 = vsel %vm403, %v8297, 0
      %v8319 = vsel %vm403, %v8298, 0
      %v8322 = vsel %vm403, %v8299, 0
      %8324 = vmatprep.subr.mxu0 0.0
      %8325 = vmatpush1.msra.mxu0 %v8301
      %8326 = vmatprep.subr.mxu0 0.0
      %8327 = vmatpush1.msra.mxu0 %v8302
      %8328 = vmatprep.subr.mxu0 0.0
      %8329 = vmatpush1.msra.mxu0 %v8303
      %8330 = vmatprep.subr.mxu0 0.0
      %8331 = vmatpush1.msra.mxu0 %v8304
      %8332 = vmatprep.subr.mxu0 0.0
      %8333 = vmatpush1.msra.mxu0 %v8305
      %8334 = vmatprep.subr.mxu0 0.0
      %8335 = vmatpush1.msra.mxu0 %v8306
      %8336 = vmatprep.subr.mxu0 0.0
      %8337 = vmatpush1.msra.mxu0 %v8307
      %8338 = vmatprep.subr.mxu0 0.0
      %8339 = vmatpush1.msra.mxu0 %v8308
      %8340 = vmatprep.subr.mxu0 0.0
      %8341 = vmatpush1.msra.mxu0 0.0
      %8342 = vmatprep.subr.mxu0 0.0
      %8343 = vmatpush1.msra.mxu0 0.0
      %8344 = vmatprep.subr.mxu0 0.0
      %8345 = vmatpush1.msra.mxu0 0.0
      %8346 = vmatprep.subr.mxu0 0.0
      %8347 = vmatpush1.msra.mxu0 0.0
      %8348 = vmatprep.subr.mxu0 0.0
      %8349 = vmatpush1.msra.mxu0 0.0
      %8350 = vmatprep.subr.mxu0 0.0
      %8351 = vmatpush1.msra.mxu0 0.0
      %8352 = vmatprep.subr.mxu0 0.0
      %8353 = vmatpush1.msra.mxu0 0.0
      %8354 = vmatprep.subr.mxu0 0.0
      %8355 = vmatpush1.msra.mxu0 0.0
      %8356 = vmatprep.subr.mxu0 0.0
      %8357 = vmatpush1.msra.mxu0 0.0
      %8358 = vmatprep.subr.mxu0 0.0
      %8359 = vmatpush1.msra.mxu0 0.0
      %8360 = vmatprep.subr.mxu0 0.0
      %8361 = vmatpush1.msra.mxu0 0.0
      %8362 = vmatprep.subr.mxu0 0.0
      %8363 = vmatpush1.msra.mxu0 0.0
      %8364 = vmatprep.subr.mxu0 0.0
      %8365 = vmatpush1.msra.mxu0 0.0
      %8366 = vmatprep.subr.mxu0 0.0
      %8367 = vmatpush1.msra.mxu0 0.0
      %8368 = vmatprep.subr.mxu0 0.0
      %8369 = vmatpush1.msra.mxu0 0.0
      %8370 = vmatprep.subr.mxu0 0.0
      %8371 = vmatpush1.msra.mxu0 0.0
      %8372 = vmatprep.subr.mxu0 0.0
      %8373 = vmatpush1.msra.mxu0 0.0
      %8374 = vmatprep.subr.mxu0 0.0
      %8375 = vmatpush1.msra.mxu0 0.0
      %8376 = vmatprep.subr.mxu0 0.0
      %8377 = vmatpush1.msra.mxu0 0.0
      %8378 = vmatprep.subr.mxu0 0.0
      %8379 = vmatpush1.msra.mxu0 0.0
      %8380 = vmatprep.subr.mxu0 0.0
      %8381 = vmatpush1.msra.mxu0 0.0
      %8382 = vmatprep.subr.mxu0 0.0
      %8383 = vmatpush1.msra.mxu0 0.0
      %8384 = vmatprep.subr.mxu0 0.0
      %8385 = vmatpush1.msra.mxu0 0.0
      %8386 = vmatprep.subr.mxu0 0.0
      %8387 = vmatpush1.msra.mxu0 0.0
      %8388 = vmatprep.mubr.f32.mxu0 0.0
      %8389 = vmatmul.mubr.f32.gmra.mrb[0].mxu0 %v8310
      %v8390 = vpop.f32.mrb[0].mxu0
      %v8391 = vadd.f32 0.0, %v8390
      %v8392 = vpop.f32.mrb[0].mxu0
      %8393 = vmatprep.mubr.f32.mxu0 0.0
      %8394 = vmatmul.mubr.f32.gmra.mrb[0].mxu0 %v8313
      %v8395 = vpop.f32.mrb[0].mxu0
      %v8396 = vadd.f32 0.0, %v8395
      %v8397 = vpop.f32.mrb[0].mxu0
      %8398 = vmatprep.mubr.f32.mxu0 0.0
      %8399 = vmatmul.mubr.f32.gmra.mrb[0].mxu0 %v8316
      %v8400 = vpop.f32.mrb[0].mxu0
      %v8401 = vadd.f32 0.0, %v8400
      %v8402 = vpop.f32.mrb[0].mxu0
      %8403 = vmatprep.mubr.f32.mxu0 0.0
      %8404 = vmatmul.mubr.f32.gmra.mrb[0].mxu0 %v8319
      %v8405 = vpop.f32.mrb[0].mxu0
      %v8406 = vadd.f32 0.0, %v8405
      %v8407 = vpop.f32.mrb[0].mxu0
      %8408 = vmatprep.mubr.f32.mxu0 0.0
      %8409 = vmatmul.mubr.f32.gmra.mrb[0].mxu0 %v8322
      %v8410 = vpop.f32.mrb[0].mxu0
      %v8411 = vadd.f32 0.0, %v8410
      %v8412 = vpop.f32.mrb[0].mxu0
      %8413 = vdwg.mxu0
      %v8414 = vld [vmem:[#allocation6] sm:$0xff]
      %v8415 = vld [vmem:[#allocation6 + $0x8] sm:$0xff]
      %v8416 = vld [vmem:[#allocation6 + $0x10] sm:$0xff]
      %v8417 = vld [vmem:[#allocation6 + $0x18] sm:$0xff]
      %v8418 = vld [vmem:[#allocation6 + $0x20] sm:$0xf]
      %v8419 = vadd.f32 %v8414, %v8391
      %v8420 = vadd.f32 %v8415, %v8396
      %v8421 = vadd.f32 %v8416, %v8401
      %v8422 = vadd.f32 %v8417, %v8406
      %v8423 = vadd.f32 %v8418, %v8411
      %8424 = vst [vmem:[#allocation6] sm:$0xff] %v8419
      %8425 = vst [vmem:[#allocation6 + $0x8] sm:$0xff] %v8420
      %8426 = vst [vmem:[#allocation6 + $0x10] sm:$0xff] %v8421
      %8427 = vst [vmem:[#allocation6 + $0x18] sm:$0xff] %v8422
      %8428 = vst [vmem:[#allocation6 + $0x20] sm:$0xf] %v8423
      %v8429 = vld [vmem:[#allocation5 + $0x8] sm:$0xff]
      %v8430 = vld [vmem:[#allocation5 + $0x10] sm:$0xff]
      %v8431 = vld [vmem:[#allocation5 + $0x18] sm:$0xff]
      %v8432 = vld [vmem:[#allocation5 + $0x20] sm:$0xff]
      %v8433 = vld [vmem:[#allocation5 + $0x28] sm:$0xf]
      %s8434 = scalar_lea.vmem %s5, 320
      %v8435 = vld [vmem:[%s8434] sm:$0xff]
      %v8436 = vld [vmem:[%s8434 + $0x8] sm:$0xff]
      %v8437 = vld [vmem:[%s8434 + $0x10] sm:$0xff]
      %v8438 = vld [vmem:[%s8434 + $0x18] sm:$0xff]
      %v8439 = vld [vmem:[%s8434 + $0x20] sm:$0xff]
      %v8440 = vld [vmem:[%s8434 + $0x28] sm:$0xff]
      %v8441 = vld [vmem:[%s8434 + $0x30] sm:$0xff]
      %v8442 = vld [vmem:[%s8434 + $0x38] sm:$0xff]
      %v8444 = vsel %vm403, %v8429, 0
      %v8447 = vsel %vm403, %v8430, 0
      %v8450 = vsel %vm403, %v8431, 0
      %v8453 = vsel %vm403, %v8432, 0
      %v8456 = vsel %vm403, %v8433, 0
      %8458 = vmatprep.subr.mxu0 0.0
      %8459 = vmatpush1.msra.mxu0 %v8435
      %8460 = vmatprep.subr.mxu0 0.0
      %8461 = vmatpush1.msra.mxu0 %v8436
      %8462 = vmatprep.subr.mxu0 0.0
      %8463 = vmatpush1.msra.mxu0 %v8437
      %8464 = vmatprep.subr.mxu0 0.0
      %8465 = vmatpush1.msra.mxu0 %v8438
      %8466 = vmatprep.subr.mxu0 0.0
      %8467 = vmatpush1.msra.mxu0 %v8439
      %8468 = vmatprep.subr.mxu0 0.0
      %8469 = vmatpush1.msra.mxu0 %v8440
      %8470 = vmatprep.subr.mxu0 0.0
      %8471 = vmatpush1.msra.mxu0 %v8441
      %8472 = vmatprep.subr.mxu0 0.0
      %8473 = vmatpush1.msra.mxu0 %v8442
      %8474 = vmatprep.subr.mxu0 0.0
      %8475 = vmatpush1.msra.mxu0 0.0
      %8476 = vmatprep.subr.mxu0 0.0
      %8477 = vmatpush1.msra.mxu0 0.0
      %8478 = vmatprep.subr.mxu0 0.0
      %8479 = vmatpush1.msra.mxu0 0.0
      %8480 = vmatprep.subr.mxu0 0.0
      %8481 = vmatpush1.msra.mxu0 0.0
      %8482 = vmatprep.subr.mxu0 0.0
      %8483 = vmatpush1.msra.mxu0 0.0
      %8484 = vmatprep.subr.mxu0 0.0
      %8485 = vmatpush1.msra.mxu0 0.0
      %8486 = vmatprep.subr.mxu0 0.0
      %8487 = vmatpush1.msra.mxu0 0.0
      %8488 = vmatprep.subr.mxu0 0.0
      %8489 = vmatpush1.msra.mxu0 0.0
      %8490 = vmatprep.subr.mxu0 0.0
      %8491 = vmatpush1.msra.mxu0 0.0
      %8492 = vmatprep.subr.mxu0 0.0
      %8493 = vmatpush1.msra.mxu0 0.0
      %8494 = vmatprep.subr.mxu0 0.0
      %8495 = vmatpush1.msra.mxu0 0.0
      %8496 = vmatprep.subr.mxu0 0.0
      %8497 = vmatpush1.msra.mxu0 0.0
      %8498 = vmatprep.subr.mxu0 0.0
      %8499 = vmatpush1.msra.mxu0 0.0
      %8500 = vmatprep.subr.mxu0 0.0
      %8501 = vmatpush1.msra.mxu0 0.0
      %8502 = vmatprep.subr.mxu0 0.0
      %8503 = vmatpush1.msra.mxu0 0.0
      %8504 = vmatprep.subr.mxu0 0.0
      %8505 = vmatpush1.msra.mxu0 0.0
      %8506 = vmatprep.subr.mxu0 0.0
      %8507 = vmatpush1.msra.mxu0 0.0
      %8508 = vmatprep.subr.mxu0 0.0
      %8509 = vmatpush1.msra.mxu0 0.0
      %8510 = vmatprep.subr.mxu0 0.0
      %8511 = vmatpush1.msra.mxu0 0.0
      %8512 = vmatprep.subr.mxu0 0.0
      %8513 = vmatpush1.msra.mxu0 0.0
      %8514 = vmatprep.subr.mxu0 0.0
      %8515 = vmatpush1.msra.mxu0 0.0
      %8516 = vmatprep.subr.mxu0 0.0
      %8517 = vmatpush1.msra.mxu0 0.0
      %8518 = vmatprep.subr.mxu0 0.0
      %8519 = vmatpush1.msra.mxu0 0.0
      %8520 = vmatprep.subr.mxu0 0.0
      %8521 = vmatpush1.msra.mxu0 0.0
      %8522 = vmatprep.mubr.f32.mxu0 0.0
      %8523 = vmatmul.mubr.f32.gmra.mrb[0].mxu0 %v8444
      %v8524 = vpop.f32.mrb[0].mxu0
      %v8525 = vadd.f32 0.0, %v8524
      %v8526 = vpop.f32.mrb[0].mxu0
      %8527 = vmatprep.mubr.f32.mxu0 0.0
      %8528 = vmatmul.mubr.f32.gmra.mrb[0].mxu0 %v8447
      %v8529 = vpop.f32.mrb[0].mxu0
      %v8530 = vadd.f32 0.0, %v8529
      %v8531 = vpop.f32.mrb[0].mxu0
      %8532 = vmatprep.mubr.f32.mxu0 0.0
      %8533 = vmatmul.mubr.f32.gmra.mrb[0].mxu0 %v8450
      %v8534 = vpop.f32.mrb[0].mxu0
      %v8535 = vadd.f32 0.0, %v8534
      %v8536 = vpop.f32.mrb[0].mxu0
      %8537 = vmatprep.mubr.f32.mxu0 0.0
      %8538 = vmatmul.mubr.f32.gmra.mrb[0].mxu0 %v8453
      %v8539 = vpop.f32.mrb[0].mxu0
      %v8540 = vadd.f32 0.0, %v8539
      %v8541 = vpop.f32.mrb[0].mxu0
      %8542 = vmatprep.mubr.f32.mxu0 0.0
      %8543 = vmatmul.mubr.f32.gmra.mrb[0].mxu0 %v8456
      %v8544 = vpop.f32.mrb[0].mxu0
      %v8545 = vadd.f32 0.0, %v8544
      %v8546 = vpop.f32.mrb[0].mxu0
      %8547 = vdwg.mxu0
      %v8548 = vld [vmem:[#allocation6] sm:$0xff]
      %v8549 = vld [vmem:[#allocation6 + $0x8] sm:$0xff]
      %v8550 = vld [vmem:[#allocation6 + $0x10] sm:$0xff]
      %v8551 = vld [vmem:[#allocation6 + $0x18] sm:$0xff]
      %v8552 = vld [vmem:[#allocation6 + $0x20] sm:$0xf]
      %v8553 = vadd.f32 %v8548, %v8525
      %v8554 = vadd.f32 %v8549, %v8530
      %v8555 = vadd.f32 %v8550, %v8535
      %v8556 = vadd.f32 %v8551, %v8540
      %v8557 = vadd.f32 %v8552, %v8545
      %8558 = vst [vmem:[#allocation6] sm:$0xff] %v8553
      %8559 = vst [vmem:[#allocation6 + $0x8] sm:$0xff] %v8554
      %8560 = vst [vmem:[#allocation6 + $0x10] sm:$0xff] %v8555
      %8561 = vst [vmem:[#allocation6 + $0x18] sm:$0xff] %v8556
      %8562 = vst [vmem:[#allocation6 + $0x20] sm:$0xf] %v8557
      %v8563 = vld [vmem:[#allocation5 + $0xc] sm:$0xff]
      %v8564 = vld [vmem:[#allocation5 + $0x14] sm:$0xff]
      %v8565 = vld [vmem:[#allocation5 + $0x1c] sm:$0xff]
      %v8566 = vld [vmem:[#allocation5 + $0x24] sm:$0xff]
      %v8567 = vld [vmem:[#allocation5 + $0x2c] sm:$0xf]
      %s8568 = scalar_lea.vmem %s5, 384
      %v8569 = vld [vmem:[%s8568] sm:$0xff]
      %v8570 = vld [vmem:[%s8568 + $0x8] sm:$0xff]
      %v8571 = vld [vmem:[%s8568 + $0x10] sm:$0xff]
      %v8572 = vld [vmem:[%s8568 + $0x18] sm:$0xff]
      %v8573 = vld [vmem:[%s8568 + $0x20] sm:$0xff]
      %v8574 = vld [vmem:[%s8568 + $0x28] sm:$0xff]
      %v8575 = vld [vmem:[%s8568 + $0x30] sm:$0xff]
      %v8576 = vld [vmem:[%s8568 + $0x38] sm:$0xff]
      %v8578 = vsel %vm403, %v8563, 0
      %v8581 = vsel %vm403, %v8564, 0
      %v8584 = vsel %vm403, %v8565, 0
      %v8587 = vsel %vm403, %v8566, 0
      %v8590 = vsel %vm403, %v8567, 0
      %8592 = vmatprep.subr.mxu0 0.0
      %8593 = vmatpush1.msra.mxu0 %v8569
      %8594 = vmatprep.subr.mxu0 0.0
      %8595 = vmatpush1.msra.mxu0 %v8570
      %8596 = vmatprep.subr.mxu0 0.0
      %8597 = vmatpush1.msra.mxu0 %v8571
      %8598 = vmatprep.subr.mxu0 0.0
      %8599 = vmatpush1.msra.mxu0 %v8572
      %8600 = vmatprep.subr.mxu0 0.0
      %8601 = vmatpush1.msra.mxu0 %v8573
      %8602 = vmatprep.subr.mxu0 0.0
      %8603 = vmatpush1.msra.mxu0 %v8574
      %8604 = vmatprep.subr.mxu0 0.0
      %8605 = vmatpush1.msra.mxu0 %v8575
      %8606 = vmatprep.subr.mxu0 0.0
      %8607 = vmatpush1.msra.mxu0 %v8576
      %8608 = vmatprep.subr.mxu0 0.0
      %8609 = vmatpush1.msra.mxu0 0.0
      %8610 = vmatprep.subr.mxu0 0.0
      %8611 = vmatpush1.msra.mxu0 0.0
      %8612 = vmatprep.subr.mxu0 0.0
      %8613 = vmatpush1.msra.mxu0 0.0
      %8614 = vmatprep.subr.mxu0 0.0
      %8615 = vmatpush1.msra.mxu0 0.0
      %8616 = vmatprep.subr.mxu0 0.0
      %8617 = vmatpush1.msra.mxu0 0.0
      %8618 = vmatprep.subr.mxu0 0.0
      %8619 = vmatpush1.msra.mxu0 0.0
      %8620 = vmatprep.subr.mxu0 0.0
      %8621 = vmatpush1.msra.mxu0 0.0
      %8622 = vmatprep.subr.mxu0 0.0
      %8623 = vmatpush1.msra.mxu0 0.0
      %8624 = vmatprep.subr.mxu0 0.0
      %8625 = vmatpush1.msra.mxu0 0.0
      %8626 = vmatprep.subr.mxu0 0.0
      %8627 = vmatpush1.msra.mxu0 0.0
      %8628 = vmatprep.subr.mxu0 0.0
      %8629 = vmatpush1.msra.mxu0 0.0
      %8630 = vmatprep.subr.mxu0 0.0
      %8631 = vmatpush1.msra.mxu0 0.0
      %8632 = vmatprep.subr.mxu0 0.0
      %8633 = vmatpush1.msra.mxu0 0.0
      %8634 = vmatprep.subr.mxu0 0.0
      %8635 = vmatpush1.msra.mxu0 0.0
      %8636 = vmatprep.subr.mxu0 0.0
      %8637 = vmatpush1.msra.mxu0 0.0
      %8638 = vmatprep.subr.mxu0 0.0
      %8639 = vmatpush1.msra.mxu0 0.0
      %8640 = vmatprep.subr.mxu0 0.0
      %8641 = vmatpush1.msra.mxu0 0.0
      %8642 = vmatprep.subr.mxu0 0.0
      %8643 = vmatpush1.msra.mxu0 0.0
      %8644 = vmatprep.subr.mxu0 0.0
      %8645 = vmatpush1.msra.mxu0 0.0
      %8646 = vmatprep.subr.mxu0 0.0
      %8647 = vmatpush1.msra.mxu0 0.0
      %8648 = vmatprep.subr.mxu0 0.0
      %8649 = vmatpush1.msra.mxu0 0.0
      %8650 = vmatprep.subr.mxu0 0.0
      %8651 = vmatpush1.msra.mxu0 0.0
      %8652 = vmatprep.subr.mxu0 0.0
      %8653 = vmatpush1.msra.mxu0 0.0
      %8654 = vmatprep.subr.mxu0 0.0
      %8655 = vmatpush1.msra.mxu0 0.0
      %8656 = vmatprep.mubr.f32.mxu0 0.0
      %8657 = vmatmul.mubr.f32.gmra.mrb[0].mxu0 %v8578
      %v8658 = vpop.f32.mrb[0].mxu0
      %v8659 = vadd.f32 0.0, %v8658
      %v8660 = vpop.f32.mrb[0].mxu0
      %8661 = vmatprep.mubr.f32.mxu0 0.0
      %8662 = vmatmul.mubr.f32.gmra.mrb[0].mxu0 %v8581
      %v8663 = vpop.f32.mrb[0].mxu0
      %v8664 = vadd.f32 0.0, %v8663
      %v8665 = vpop.f32.mrb[0].mxu0
      %8666 = vmatprep.mubr.f32.mxu0 0.0
      %8667 = vmatmul.mubr.f32.gmra.mrb[0].mxu0 %v8584
      %v8668 = vpop.f32.mrb[0].mxu0
      %v8669 = vadd.f32 0.0, %v8668
      %v8670 = vpop.f32.mrb[0].mxu0
      %8671 = vmatprep.mubr.f32.mxu0 0.0
      %8672 = vmatmul.mubr.f32.gmra.mrb[0].mxu0 %v8587
      %v8673 = vpop.f32.mrb[0].mxu0
      %v8674 = vadd.f32 0.0, %v8673
      %v8675 = vpop.f32.mrb[0].mxu0
      %8676 = vmatprep.mubr.f32.mxu0 0.0
      %8677 = vmatmul.mubr.f32.gmra.mrb[0].mxu0 %v8590
      %v8678 = vpop.f32.mrb[0].mxu0
      %v8679 = vadd.f32 0.0, %v8678
      %v8680 = vpop.f32.mrb[0].mxu0
      %8681 = vdwg.mxu0
      %v8682 = vld [vmem:[#allocation6] sm:$0xff]
      %v8683 = vld [vmem:[#allocation6 + $0x8] sm:$0xff]
      %v8684 = vld [vmem:[#allocation6 + $0x10] sm:$0xff]
      %v8685 = vld [vmem:[#allocation6 + $0x18] sm:$0xff]
      %v8686 = vld [vmem:[#allocation6 + $0x20] sm:$0xf]
      %v8687 = vadd.f32 %v8682, %v8659
      %v8688 = vadd.f32 %v8683, %v8664
      %v8689 = vadd.f32 %v8684, %v8669
      %v8690 = vadd.f32 %v8685, %v8674
      %v8691 = vadd.f32 %v8686, %v8679
      %8692 = vst [vmem:[#allocation6] sm:$0xff] %v8687
      %8693 = vst [vmem:[#allocation6 + $0x8] sm:$0xff] %v8688
      %8694 = vst [vmem:[#allocation6 + $0x10] sm:$0xff] %v8689
      %8695 = vst [vmem:[#allocation6 + $0x18] sm:$0xff] %v8690
      %8696 = vst [vmem:[#allocation6 + $0x20] sm:$0xf] %v8691
      %v8697 = vld [vmem:[#allocation5 + $0xd] sm:$0xff]
      %v8698 = vld [vmem:[#allocation5 + $0x15] sm:$0xff]
      %v8699 = vld [vmem:[#allocation5 + $0x1d] sm:$0xff]
      %v8700 = vld [vmem:[#allocation5 + $0x25] sm:$0xff]
      %v8701 = vld [vmem:[#allocation5 + $0x2d] sm:$0xf]
      %s8702 = scalar_lea.vmem %s5, 448
      %v8703 = vld [vmem:[%s8702] sm:$0xff]
      %v8704 = vld [vmem:[%s8702 + $0x8] sm:$0xff]
      %v8705 = vld [vmem:[%s8702 + $0x10] sm:$0xff]
      %v8706 = vld [vmem:[%s8702 + $0x18] sm:$0xff]
      %v8707 = vld [vmem:[%s8702 + $0x20] sm:$0xff]
      %v8708 = vld [vmem:[%s8702 + $0x28] sm:$0xff]
      %v8709 = vld [vmem:[%s8702 + $0x30] sm:$0xff]
      %v8710 = vld [vmem:[%s8702 + $0x38] sm:$0xff]
      %v8712 = vsel %vm403, %v8697, 0
      %v8715 = vsel %vm403, %v8698, 0
      %v8718 = vsel %vm403, %v8699, 0
      %v8721 = vsel %vm403, %v8700, 0
      %v8724 = vsel %vm403, %v8701, 0
      %8726 = vmatprep.subr.mxu0 0.0
      %8727 = vmatpush1.msra.mxu0 %v8703
      %8728 = vmatprep.subr.mxu0 0.0
      %8729 = vmatpush1.msra.mxu0 %v8704
      %8730 = vmatprep.subr.mxu0 0.0
      %8731 = vmatpush1.msra.mxu0 %v8705
      %8732 = vmatprep.subr.mxu0 0.0
      %8733 = vmatpush1.msra.mxu0 %v8706
      %8734 = vmatprep.subr.mxu0 0.0
      %8735 = vmatpush1.msra.mxu0 %v8707
      %8736 = vmatprep.subr.mxu0 0.0
      %8737 = vmatpush1.msra.mxu0 %v8708
      %8738 = vmatprep.subr.mxu0 0.0
      %8739 = vmatpush1.msra.mxu0 %v8709
      %8740 = vmatprep.subr.mxu0 0.0
      %8741 = vmatpush1.msra.mxu0 %v8710
      %8742 = vmatprep.subr.mxu0 0.0
      %8743 = vmatpush1.msra.mxu0 0.0
      %8744 = vmatprep.subr.mxu0 0.0
      %8745 = vmatpush1.msra.mxu0 0.0
      %8746 = vmatprep.subr.mxu0 0.0
      %8747 = vmatpush1.msra.mxu0 0.0
      %8748 = vmatprep.subr.mxu0 0.0
      %8749 = vmatpush1.msra.mxu0 0.0
      %8750 = vmatprep.subr.mxu0 0.0
      %8751 = vmatpush1.msra.mxu0 0.0
      %8752 = vmatprep.subr.mxu0 0.0
      %8753 = vmatpush1.msra.mxu0 0.0
      %8754 = vmatprep.subr.mxu0 0.0
      %8755 = vmatpush1.msra.mxu0 0.0
      %8756 = vmatprep.subr.mxu0 0.0
      %8757 = vmatpush1.msra.mxu0 0.0
      %8758 = vmatprep.subr.mxu0 0.0
      %8759 = vmatpush1.msra.mxu0 0.0
      %8760 = vmatprep.subr.mxu0 0.0
      %8761 = vmatpush1.msra.mxu0 0.0
      %8762 = vmatprep.subr.mxu0 0.0
      %8763 = vmatpush1.msra.mxu0 0.0
      %8764 = vmatprep.subr.mxu0 0.0
      %8765 = vmatpush1.msra.mxu0 0.0
      %8766 = vmatprep.subr.mxu0 0.0
      %8767 = vmatpush1.msra.mxu0 0.0
      %8768 = vmatprep.subr.mxu0 0.0
      %8769 = vmatpush1.msra.mxu0 0.0
      %8770 = vmatprep.subr.mxu0 0.0
      %8771 = vmatpush1.msra.mxu0 0.0
      %8772 = vmatprep.subr.mxu0 0.0
      %8773 = vmatpush1.msra.mxu0 0.0
      %8774 = vmatprep.subr.mxu0 0.0
      %8775 = vmatpush1.msra.mxu0 0.0
      %8776 = vmatprep.subr.mxu0 0.0
      %8777 = vmatpush1.msra.mxu0 0.0
      %8778 = vmatprep.subr.mxu0 0.0
      %8779 = vmatpush1.msra.mxu0 0.0
      %8780 = vmatprep.subr.mxu0 0.0
      %8781 = vmatpush1.msra.mxu0 0.0
      %8782 = vmatprep.subr.mxu0 0.0
      %8783 = vmatpush1.msra.mxu0 0.0
      %8784 = vmatprep.subr.mxu0 0.0
      %8785 = vmatpush1.msra.mxu0 0.0
      %8786 = vmatprep.subr.mxu0 0.0
      %8787 = vmatpush1.msra.mxu0 0.0
      %8788 = vmatprep.subr.mxu0 0.0
      %8789 = vmatpush1.msra.mxu0 0.0
      %8790 = vmatprep.mubr.f32.mxu0 0.0
      %8791 = vmatmul.mubr.f32.gmra.mrb[0].mxu0 %v8712
      %v8792 = vpop.f32.mrb[0].mxu0
      %v8793 = vadd.f32 0.0, %v8792
      %v8794 = vpop.f32.mrb[0].mxu0
      %8795 = vmatprep.mubr.f32.mxu0 0.0
      %8796 = vmatmul.mubr.f32.gmra.mrb[0].mxu0 %v8715
      %v8797 = vpop.f32.mrb[0].mxu0
      %v8798 = vadd.f32 0.0, %v8797
      %v8799 = vpop.f32.mrb[0].mxu0
      %8800 = vmatprep.mubr.f32.mxu0 0.0
      %8801 = vmatmul.mubr.f32.gmra.mrb[0].mxu0 %v8718
      %v8802 = vpop.f32.mrb[0].mxu0
      %v8803 = vadd.f32 0.0, %v8802
      %v8804 = vpop.f32.mrb[0].mxu0
      %8805 = vmatprep.mubr.f32.mxu0 0.0
      %8806 = vmatmul.mubr.f32.gmra.mrb[0].mxu0 %v8721
      %v8807 = vpop.f32.mrb[0].mxu0
      %v8808 = vadd.f32 0.0, %v8807
      %v8809 = vpop.f32.mrb[0].mxu0
      %8810 = vmatprep.mubr.f32.mxu0 0.0
      %8811 = vmatmul.mubr.f32.gmra.mrb[0].mxu0 %v8724
      %v8812 = vpop.f32.mrb[0].mxu0
      %v8813 = vadd.f32 0.0, %v8812
      %v8814 = vpop.f32.mrb[0].mxu0
      %8815 = vdwg.mxu0
      %v8816 = vld [vmem:[#allocation6] sm:$0xff]
      %v8817 = vld [vmem:[#allocation6 + $0x8] sm:$0xff]
      %v8818 = vld [vmem:[#allocation6 + $0x10] sm:$0xff]
      %v8819 = vld [vmem:[#allocation6 + $0x18] sm:$0xff]
      %v8820 = vld [vmem:[#allocation6 + $0x20] sm:$0xf]
      %v8821 = vadd.f32 %v8816, %v8793
      %v8822 = vadd.f32 %v8817, %v8798
      %v8823 = vadd.f32 %v8818, %v8803
      %v8824 = vadd.f32 %v8819, %v8808
      %v8825 = vadd.f32 %v8820, %v8813
      %8826 = vst [vmem:[#allocation6] sm:$0xff] %v8821
      %8827 = vst [vmem:[#allocation6 + $0x8] sm:$0xff] %v8822
      %8828 = vst [vmem:[#allocation6 + $0x10] sm:$0xff] %v8823
      %8829 = vst [vmem:[#allocation6 + $0x18] sm:$0xff] %v8824
      %8830 = vst [vmem:[#allocation6 + $0x20] sm:$0xf] %v8825
      %v8831 = vld [vmem:[#allocation5 + $0xe] sm:$0xff]
      %v8832 = vld [vmem:[#allocation5 + $0x16] sm:$0xff]
      %v8833 = vld [vmem:[#allocation5 + $0x1e] sm:$0xff]
      %v8834 = vld [vmem:[#allocation5 + $0x26] sm:$0xff]
      %v8835 = vld [vmem:[#allocation5 + $0x2e] sm:$0xf]
      %s8836 = scalar_lea.vmem %s5, 512
      %v8837 = vld [vmem:[%s8836] sm:$0xff]
      %v8838 = vld [vmem:[%s8836 + $0x8] sm:$0xff]
      %v8839 = vld [vmem:[%s8836 + $0x10] sm:$0xff]
      %v8840 = vld [vmem:[%s8836 + $0x18] sm:$0xff]
      %v8841 = vld [vmem:[%s8836 + $0x20] sm:$0xff]
      %v8842 = vld [vmem:[%s8836 + $0x28] sm:$0xff]
      %v8843 = vld [vmem:[%s8836 + $0x30] sm:$0xff]
      %v8844 = vld [vmem:[%s8836 + $0x38] sm:$0xff]
      %v8846 = vsel %vm403, %v8831, 0
      %v8849 = vsel %vm403, %v8832, 0
      %v8852 = vsel %vm403, %v8833, 0
      %v8855 = vsel %vm403, %v8834, 0
      %v8858 = vsel %vm403, %v8835, 0
      %8860 = vmatprep.subr.mxu0 0.0
      %8861 = vmatpush1.msra.mxu0 %v8837
      %8862 = vmatprep.subr.mxu0 0.0
      %8863 = vmatpush1.msra.mxu0 %v8838
      %8864 = vmatprep.subr.mxu0 0.0
      %8865 = vmatpush1.msra.mxu0 %v8839
      %8866 = vmatprep.subr.mxu0 0.0
      %8867 = vmatpush1.msra.mxu0 %v8840
      %8868 = vmatprep.subr.mxu0 0.0
      %8869 = vmatpush1.msra.mxu0 %v8841
      %8870 = vmatprep.subr.mxu0 0.0
      %8871 = vmatpush1.msra.mxu0 %v8842
      %8872 = vmatprep.subr.mxu0 0.0
      %8873 = vmatpush1.msra.mxu0 %v8843
      %8874 = vmatprep.subr.mxu0 0.0
      %8875 = vmatpush1.msra.mxu0 %v8844
      %8876 = vmatprep.subr.mxu0 0.0
      %8877 = vmatpush1.msra.mxu0 0.0
      %8878 = vmatprep.subr.mxu0 0.0
      %8879 = vmatpush1.msra.mxu0 0.0
      %8880 = vmatprep.subr.mxu0 0.0
      %8881 = vmatpush1.msra.mxu0 0.0
      %8882 = vmatprep.subr.mxu0 0.0
      %8883 = vmatpush1.msra.mxu0 0.0
      %8884 = vmatprep.subr.mxu0 0.0
      %8885 = vmatpush1.msra.mxu0 0.0
      %8886 = vmatprep.subr.mxu0 0.0
      %8887 = vmatpush1.msra.mxu0 0.0
      %8888 = vmatprep.subr.mxu0 0.0
      %8889 = vmatpush1.msra.mxu0 0.0
      %8890 = vmatprep.subr.mxu0 0.0
      %8891 = vmatpush1.msra.mxu0 0.0
      %8892 = vmatprep.subr.mxu0 0.0
      %8893 = vmatpush1.msra.mxu0 0.0
      %8894 = vmatprep.subr.mxu0 0.0
      %8895 = vmatpush1.msra.mxu0 0.0
      %8896 = vmatprep.subr.mxu0 0.0
      %8897 = vmatpush1.msra.mxu0 0.0
      %8898 = vmatprep.subr.mxu0 0.0
      %8899 = vmatpush1.msra.mxu0 0.0
      %8900 = vmatprep.subr.mxu0 0.0
      %8901 = vmatpush1.msra.mxu0 0.0
      %8902 = vmatprep.subr.mxu0 0.0
      %8903 = vmatpush1.msra.mxu0 0.0
      %8904 = vmatprep.subr.mxu0 0.0
      %8905 = vmatpush1.msra.mxu0 0.0
      %8906 = vmatprep.subr.mxu0 0.0
      %8907 = vmatpush1.msra.mxu0 0.0
      %8908 = vmatprep.subr.mxu0 0.0
      %8909 = vmatpush1.msra.mxu0 0.0
      %8910 = vmatprep.subr.mxu0 0.0
      %8911 = vmatpush1.msra.mxu0 0.0
      %8912 = vmatprep.subr.mxu0 0.0
      %8913 = vmatpush1.msra.mxu0 0.0
      %8914 = vmatprep.subr.mxu0 0.0
      %8915 = vmatpush1.msra.mxu0 0.0
      %8916 = vmatprep.subr.mxu0 0.0
      %8917 = vmatpush1.msra.mxu0 0.0
      %8918 = vmatprep.subr.mxu0 0.0
      %8919 = vmatpush1.msra.mxu0 0.0
      %8920 = vmatprep.subr.mxu0 0.0
      %8921 = vmatpush1.msra.mxu0 0.0
      %8922 = vmatprep.subr.mxu0 0.0
      %8923 = vmatpush1.msra.mxu0 0.0
      %8924 = vmatprep.mubr.f32.mxu0 0.0
      %8925 = vmatmul.mubr.f32.gmra.mrb[0].mxu0 %v8846
      %v8926 = vpop.f32.mrb[0].mxu0
      %v8927 = vadd.f32 0.0, %v8926
      %v8928 = vpop.f32.mrb[0].mxu0
      %8929 = vmatprep.mubr.f32.mxu0 0.0
      %8930 = vmatmul.mubr.f32.gmra.mrb[0].mxu0 %v8849
      %v8931 = vpop.f32.mrb[0].mxu0
      %v8932 = vadd.f32 0.0, %v8931
      %v8933 = vpop.f32.mrb[0].mxu0
      %8934 = vmatprep.mubr.f32.mxu0 0.0
      %8935 = vmatmul.mubr.f32.gmra.mrb[0].mxu0 %v8852
      %v8936 = vpop.f32.mrb[0].mxu0
      %v8937 = vadd.f32 0.0, %v8936
      %v8938 = vpop.f32.mrb[0].mxu0
      %8939 = vmatprep.mubr.f32.mxu0 0.0
      %8940 = vmatmul.mubr.f32.gmra.mrb[0].mxu0 %v8855
      %v8941 = vpop.f32.mrb[0].mxu0
      %v8942 = vadd.f32 0.0, %v8941
      %v8943 = vpop.f32.mrb[0].mxu0
      %8944 = vmatprep.mubr.f32.mxu0 0.0
      %8945 = vmatmul.mubr.f32.gmra.mrb[0].mxu0 %v8858
      %v8946 = vpop.f32.mrb[0].mxu0
      %v8947 = vadd.f32 0.0, %v8946
      %v8948 = vpop.f32.mrb[0].mxu0
      %8949 = vdwg.mxu0
      %v8950 = vld [vmem:[#allocation6] sm:$0xff]
      %v8951 = vld [vmem:[#allocation6 + $0x8] sm:$0xff]
      %v8952 = vld [vmem:[#allocation6 + $0x10] sm:$0xff]
      %v8953 = vld [vmem:[#allocation6 + $0x18] sm:$0xff]
      %v8954 = vld [vmem:[#allocation6 + $0x20] sm:$0xf]
      %v8955 = vadd.f32 %v8950, %v8927
      %v8956 = vadd.f32 %v8951, %v8932
      %v8957 = vadd.f32 %v8952, %v8937
      %v8958 = vadd.f32 %v8953, %v8942
      %v8959 = vadd.f32 %v8954, %v8947
      %8960 = vst [vmem:[#allocation6] sm:$0xff] %v8955
      %8961 = vst [vmem:[#allocation6 + $0x8] sm:$0xff] %v8956
      %8962 = vst [vmem:[#allocation6 + $0x10] sm:$0xff] %v8957
      %8963 = vst [vmem:[#allocation6 + $0x18] sm:$0xff] %v8958
      %8964 = vst [vmem:[#allocation6 + $0x20] sm:$0xf] %v8959
      %v8965 = vld [vmem:[#allocation6] sm:$0xff]
      %v8966 = vld [vmem:[#allocation6 + $0x8] sm:$0xff]
      %v8967 = vld [vmem:[#allocation6 + $0x10] sm:$0xff]
      %v8968 = vld [vmem:[#allocation6 + $0x18] sm:$0xff]
      %v8969 = vld [vmem:[#allocation6 + $0x20] sm:$0xf]
      %v8970 = vld [vmem:[%s6] sm:$0x1]
      %v8972 = vlaneseq
      %v8973 = vshrl.u32 %v8972, 7
      %v8974 = vsub.s32 0, %v8973
      %v8975 = vrot.slane %v8970, %v8974
      %v8977 = vadd.f32 %v8965, %v8975
      %v8978 = vadd.f32 %v8966, %v8975
      %v8979 = vadd.f32 %v8967, %v8975
      %v8980 = vadd.f32 %v8968, %v8975
      %v8981 = vadd.f32 %v8969, %v8975
      %v8982 = vmax.f32 %v8977, 0.0
      %v8983 = vmax.f32 %v8978, 0.0
      %v8984 = vmax.f32 %v8979, 0.0
      %v8985 = vmax.f32 %v8980, 0.0
      %v8986 = vmax.f32 %v8981, 0.0
      %8987 = vst [vmem:[#allocation6] sm:$0xff] %v8982
      %8988 = vst [vmem:[#allocation6 + $0x8] sm:$0xff] %v8983
      %8989 = vst [vmem:[#allocation6 + $0x10] sm:$0xff] %v8984
      %8990 = vst [vmem:[#allocation6 + $0x18] sm:$0xff] %v8985
      %8991 = vst [vmem:[#allocation6 + $0x20] sm:$0xf] %v8986
      %v8992 = vld [vmem:[#allocation6] ss:$2 sm:$0x3]
      %s8993 = scalar_lea.vmem [#allocation6], 1
      %v8994 = vld [vmem:[%s8993] ss:$2 sm:$0x3]
      %v8995 = vmax.f32 %v8992, %v8994
      %s8996 = scalar_lea.vmem [#allocation6], 6
      %v8997 = vld [vmem:[%s8996] ss:$2 sm:$0x3]
      %s8998 = scalar_lea.vmem [#allocation6], 7
      %v8999 = vld [vmem:[%s8998] ss:$2 sm:$0x3]
      %v9000 = vmax.f32 %v8997, %v8999
      %v9001 = vmax.f32 %v8995, %v9000
      %v9002 = vld [vmem:[%s7] sm:$0xff]
      %v9003 = vld [vmem:[%s7 + $0x8] sm:$0xff]
      %v9004 = vld [vmem:[%s7 + $0x10] sm:$0xff]
      %v9005 = vld [vmem:[%s7 + $0x18] sm:$0xff]
      %v9006 = vld [vmem:[%s7 + $0x20] sm:$0xff]
      %v9007 = vld [vmem:[%s7 + $0x28] sm:$0xff]
      %v9008 = vld [vmem:[%s7 + $0x30] sm:$0xff]
      %v9009 = vld [vmem:[%s7 + $0x38] sm:$0xff]
      %v9010 = vld [vmem:[%s7 + $0x40] sm:$0xff]
      %v9011 = vld [vmem:[%s7 + $0x48] sm:$0xff]
      %v9012 = vld [vmem:[%s7 + $0x50] sm:$0xff]
      %v9013 = vld [vmem:[%s7 + $0x58] sm:$0xff]
      %v9014 = vld [vmem:[%s7 + $0x60] sm:$0xff]
      %v9015 = vld [vmem:[%s7 + $0x68] sm:$0xff]
      %v9016 = vld [vmem:[%s7 + $0x70] sm:$0xff]
      %v9017 = vld [vmem:[%s7 + $0x78] sm:$0xff]
      %s9018 = scalar_lea.vmem %s7, 128
      %v9019 = vld [vmem:[%s9018] sm:$0xff]
      %v9020 = vld [vmem:[%s9018 + $0x8] sm:$0xff]
      %v9021 = vld [vmem:[%s9018 + $0x10] sm:$0xff]
      %v9022 = vld [vmem:[%s9018 + $0x18] sm:$0xff]
      %v9023 = vld [vmem:[%s9018 + $0x20] sm:$0xff]
      %v9024 = vld [vmem:[%s9018 + $0x28] sm:$0xff]
      %v9025 = vld [vmem:[%s9018 + $0x30] sm:$0xff]
      %v9026 = vld [vmem:[%s9018 + $0x38] sm:$0xff]
      %v9027 = vld [vmem:[%s9018 + $0x40] sm:$0xff]
      %v9028 = vld [vmem:[%s9018 + $0x48] sm:$0xff]
      %v9029 = vld [vmem:[%s9018 + $0x50] sm:$0xff]
      %v9030 = vld [vmem:[%s9018 + $0x58] sm:$0xff]
      %v9031 = vld [vmem:[%s9018 + $0x60] sm:$0xff]
      %v9032 = vld [vmem:[%s9018 + $0x68] sm:$0xff]
      %v9033 = vld [vmem:[%s9018 + $0x70] sm:$0xff]
      %v9034 = vld [vmem:[%s9018 + $0x78] sm:$0xff]
      %v9036 = vrot.slane %v9001, 1
      %9038 = vmatprep.subr.mxu0 0.0
      %9039 = vmatpush1.msra.mxu0 %v9019
      %9040 = vmatprep.subr.mxu0 0.0
      %9041 = vmatpush1.msra.mxu0 %v9020
      %9042 = vmatprep.subr.mxu0 0.0
      %9043 = vmatpush1.msra.mxu0 %v9021
      %9044 = vmatprep.subr.mxu0 0.0
      %9045 = vmatpush1.msra.mxu0 %v9022
      %9046 = vmatprep.subr.mxu0 0.0
      %9047 = vmatpush1.msra.mxu0 %v9023
      %9048 = vmatprep.subr.mxu0 0.0
      %9049 = vmatpush1.msra.mxu0 %v9024
      %9050 = vmatprep.subr.mxu0 0.0
      %9051 = vmatpush1.msra.mxu0 %v9025
      %9052 = vmatprep.subr.mxu0 0.0
      %9053 = vmatpush1.msra.mxu0 %v9026
      %9054 = vmatprep.subr.mxu0 0.0
      %9055 = vmatpush1.msra.mxu0 %v9027
      %9056 = vmatprep.subr.mxu0 0.0
      %9057 = vmatpush1.msra.mxu0 %v9028
      %9058 = vmatprep.subr.mxu0 0.0
      %9059 = vmatpush1.msra.mxu0 %v9029
      %9060 = vmatprep.subr.mxu0 0.0
      %9061 = vmatpush1.msra.mxu0 %v9030
      %9062 = vmatprep.subr.mxu0 0.0
      %9063 = vmatpush1.msra.mxu0 %v9031
      %9064 = vmatprep.subr.mxu0 0.0
      %9065 = vmatpush1.msra.mxu0 %v9032
      %9066 = vmatprep.subr.mxu0 0.0
      %9067 = vmatpush1.msra.mxu0 %v9033
      %9068 = vmatprep.subr.mxu0 0.0
      %9069 = vmatpush1.msra.mxu0 %v9034
      %9070 = vmatprep.subr.mxu0 0.0
      %9071 = vmatpush1.msra.mxu0 0.0
      %9072 = vmatprep.subr.mxu0 0.0
      %9073 = vmatpush1.msra.mxu0 0.0
      %9074 = vmatprep.subr.mxu0 0.0
      %9075 = vmatpush1.msra.mxu0 0.0
      %9076 = vmatprep.subr.mxu0 0.0
      %9077 = vmatpush1.msra.mxu0 0.0
      %9078 = vmatprep.subr.mxu0 0.0
      %9079 = vmatpush1.msra.mxu0 0.0
      %9080 = vmatprep.subr.mxu0 0.0
      %9081 = vmatpush1.msra.mxu0 0.0
      %9082 = vmatprep.subr.mxu0 0.0
      %9083 = vmatpush1.msra.mxu0 0.0
      %9084 = vmatprep.subr.mxu0 0.0
      %9085 = vmatpush1.msra.mxu0 0.0
      %9086 = vmatprep.subr.mxu0 0.0
      %9087 = vmatpush1.msra.mxu0 0.0
      %9088 = vmatprep.subr.mxu0 0.0
      %9089 = vmatpush1.msra.mxu0 0.0
      %9090 = vmatprep.subr.mxu0 0.0
      %9091 = vmatpush1.msra.mxu0 0.0
      %9092 = vmatprep.subr.mxu0 0.0
      %9093 = vmatpush1.msra.mxu0 0.0
      %9094 = vmatprep.subr.mxu0 0.0
      %9095 = vmatpush1.msra.mxu0 0.0
      %9096 = vmatprep.subr.mxu0 0.0
      %9097 = vmatpush1.msra.mxu0 0.0
      %9098 = vmatprep.subr.mxu0 0.0
      %9099 = vmatpush1.msra.mxu0 0.0
      %9100 = vmatprep.subr.mxu0 0.0
      %9101 = vmatpush1.msra.mxu0 0.0
      %9102 = vmatprep.mubr.f32.mxu0 0.0
      %9103 = vmatmul.mubr.f32.gmra.mrb[0].mxu0 %v9036
      %v9104 = vpop.f32.mrb[0].mxu0
      %v9105 = vadd.f32 0.0, %v9104
      %v9106 = vpop.f32.mrb[0].mxu0
      %9107 = vdwg.mxu0
      %9108 = vmatprep.subr.mxu0 0.0
      %9109 = vmatpush1.msra.mxu0 %v9002
      %9110 = vmatprep.subr.mxu0 0.0
      %9111 = vmatpush1.msra.mxu0 %v9003
      %9112 = vmatprep.subr.mxu0 0.0
      %9113 = vmatpush1.msra.mxu0 %v9004
      %9114 = vmatprep.subr.mxu0 0.0
      %9115 = vmatpush1.msra.mxu0 %v9005
      %9116 = vmatprep.subr.mxu0 0.0
      %9117 = vmatpush1.msra.mxu0 %v9006
      %9118 = vmatprep.subr.mxu0 0.0
      %9119 = vmatpush1.msra.mxu0 %v9007
      %9120 = vmatprep.subr.mxu0 0.0
      %9121 = vmatpush1.msra.mxu0 %v9008
      %9122 = vmatprep.subr.mxu0 0.0
      %9123 = vmatpush1.msra.mxu0 %v9009
      %9124 = vmatprep.subr.mxu0 0.0
      %9125 = vmatpush1.msra.mxu0 %v9010
      %9126 = vmatprep.subr.mxu0 0.0
      %9127 = vmatpush1.msra.mxu0 %v9011
      %9128 = vmatprep.subr.mxu0 0.0
      %9129 = vmatpush1.msra.mxu0 %v9012
      %9130 = vmatprep.subr.mxu0 0.0
      %9131 = vmatpush1.msra.mxu0 %v9013
      %9132 = vmatprep.subr.mxu0 0.0
      %9133 = vmatpush1.msra.mxu0 %v9014
      %9134 = vmatprep.subr.mxu0 0.0
      %9135 = vmatpush1.msra.mxu0 %v9015
      %9136 = vmatprep.subr.mxu0 0.0
      %9137 = vmatpush1.msra.mxu0 %v9016
      %9138 = vmatprep.subr.mxu0 0.0
      %9139 = vmatpush1.msra.mxu0 %v9017
      %9140 = vmatprep.subr.mxu0 0.0
      %9141 = vmatpush1.msra.mxu0 0.0
      %9142 = vmatprep.subr.mxu0 0.0
      %9143 = vmatpush1.msra.mxu0 0.0
      %9144 = vmatprep.subr.mxu0 0.0
      %9145 = vmatpush1.msra.mxu0 0.0
      %9146 = vmatprep.subr.mxu0 0.0
      %9147 = vmatpush1.msra.mxu0 0.0
      %9148 = vmatprep.subr.mxu0 0.0
      %9149 = vmatpush1.msra.mxu0 0.0
      %9150 = vmatprep.subr.mxu0 0.0
      %9151 = vmatpush1.msra.mxu0 0.0
      %9152 = vmatprep.subr.mxu0 0.0
      %9153 = vmatpush1.msra.mxu0 0.0
      %9154 = vmatprep.subr.mxu0 0.0
      %9155 = vmatpush1.msra.mxu0 0.0
      %9156 = vmatprep.subr.mxu0 0.0
      %9157 = vmatpush1.msra.mxu0 0.0
      %9158 = vmatprep.subr.mxu0 0.0
      %9159 = vmatpush1.msra.mxu0 0.0
      %9160 = vmatprep.subr.mxu0 0.0
      %9161 = vmatpush1.msra.mxu0 0.0
      %9162 = vmatprep.subr.mxu0 0.0
      %9163 = vmatpush1.msra.mxu0 0.0
      %9164 = vmatprep.subr.mxu0 0.0
      %9165 = vmatpush1.msra.mxu0 0.0
      %9166 = vmatprep.subr.mxu0 0.0
      %9167 = vmatpush1.msra.mxu0 0.0
      %9168 = vmatprep.subr.mxu0 0.0
      %9169 = vmatpush1.msra.mxu0 0.0
      %9170 = vmatprep.subr.mxu0 0.0
      %9171 = vmatpush1.msra.mxu0 0.0
      %9172 = vmatprep.mubr.f32.mxu0 0.0
      %9173 = vmatmul.mubr.f32.gmra.mrb[0].mxu0 %v9001
      %v9174 = vpop.f32.mrb[0].mxu0
      %v9175 = vadd.f32 %v9105, %v9174
      %v9176 = vpop.f32.mrb[0].mxu0
      %9177 = vdwg.mxu0
      %s9178 = scalar_lea.vmem [#allocation6], 12
      %v9179 = vld [vmem:[%s9178] ss:$2 sm:$0x3]
      %s9180 = scalar_lea.vmem [#allocation6], 13
      %v9181 = vld [vmem:[%s9180] ss:$2 sm:$0x3]
      %v9182 = vmax.f32 %v9179, %v9181
      %s9183 = scalar_lea.vmem [#allocation6], 18
      %v9184 = vld [vmem:[%s9183] ss:$2 sm:$0x3]
      %s9185 = scalar_lea.vmem [#allocation6], 19
      %v9186 = vld [vmem:[%s9185] ss:$2 sm:$0x3]
      %v9187 = vmax.f32 %v9184, %v9186
      %v9188 = vmax.f32 %v9182, %v9187
      %s9189 = scalar_lea.vmem %s7, 256
      %v9190 = vld [vmem:[%s9189] sm:$0xff]
      %v9191 = vld [vmem:[%s9189 + $0x8] sm:$0xff]
      %v9192 = vld [vmem:[%s9189 + $0x10] sm:$0xff]
      %v9193 = vld [vmem:[%s9189 + $0x18] sm:$0xff]
      %v9194 = vld [vmem:[%s9189 + $0x20] sm:$0xff]
      %v9195 = vld [vmem:[%s9189 + $0x28] sm:$0xff]
      %v9196 = vld [vmem:[%s9189 + $0x30] sm:$0xff]
      %v9197 = vld [vmem:[%s9189 + $0x38] sm:$0xff]
      %v9198 = vld [vmem:[%s9189 + $0x40] sm:$0xff]
      %v9199 = vld [vmem:[%s9189 + $0x48] sm:$0xff]
      %v9200 = vld [vmem:[%s9189 + $0x50] sm:$0xff]
      %v9201 = vld [vmem:[%s9189 + $0x58] sm:$0xff]
      %v9202 = vld [vmem:[%s9189 + $0x60] sm:$0xff]
      %v9203 = vld [vmem:[%s9189 + $0x68] sm:$0xff]
      %v9204 = vld [vmem:[%s9189 + $0x70] sm:$0xff]
      %v9205 = vld [vmem:[%s9189 + $0x78] sm:$0xff]
      %9206 = vmatprep.subr.mxu0 0.0
      %9207 = vmatpush1.msra.mxu0 %v9190
      %9208 = vmatprep.subr.mxu0 0.0
      %9209 = vmatpush1.msra.mxu0 %v9191
      %9210 = vmatprep.subr.mxu0 0.0
      %9211 = vmatpush1.msra.mxu0 %v9192
      %9212 = vmatprep.subr.mxu0 0.0
      %9213 = vmatpush1.msra.mxu0 %v9193
      %9214 = vmatprep.subr.mxu0 0.0
      %9215 = vmatpush1.msra.mxu0 %v9194
      %9216 = vmatprep.subr.mxu0 0.0
      %9217 = vmatpush1.msra.mxu0 %v9195
      %9218 = vmatprep.subr.mxu0 0.0
      %9219 = vmatpush1.msra.mxu0 %v9196
      %9220 = vmatprep.subr.mxu0 0.0
      %9221 = vmatpush1.msra.mxu0 %v9197
      %9222 = vmatprep.subr.mxu0 0.0
      %9223 = vmatpush1.msra.mxu0 %v9198
      %9224 = vmatprep.subr.mxu0 0.0
      %9225 = vmatpush1.msra.mxu0 %v9199
      %9226 = vmatprep.subr.mxu0 0.0
      %9227 = vmatpush1.msra.mxu0 %v9200
      %9228 = vmatprep.subr.mxu0 0.0
      %9229 = vmatpush1.msra.mxu0 %v9201
      %9230 = vmatprep.subr.mxu0 0.0
      %9231 = vmatpush1.msra.mxu0 %v9202
      %9232 = vmatprep.subr.mxu0 0.0
      %9233 = vmatpush1.msra.mxu0 %v9203
      %9234 = vmatprep.subr.mxu0 0.0
      %9235 = vmatpush1.msra.mxu0 %v9204
      %9236 = vmatprep.subr.mxu0 0.0
      %9237 = vmatpush1.msra.mxu0 %v9205
      %9238 = vmatprep.subr.mxu0 0.0
      %9239 = vmatpush1.msra.mxu0 0.0
      %9240 = vmatprep.subr.mxu0 0.0
      %9241 = vmatpush1.msra.mxu0 0.0
      %9242 = vmatprep.subr.mxu0 0.0
      %9243 = vmatpush1.msra.mxu0 0.0
      %9244 = vmatprep.subr.mxu0 0.0
      %9245 = vmatpush1.msra.mxu0 0.0
      %9246 = vmatprep.subr.mxu0 0.0
      %9247 = vmatpush1.msra.mxu0 0.0
      %9248 = vmatprep.subr.mxu0 0.0
      %9249 = vmatpush1.msra.mxu0 0.0
      %9250 = vmatprep.subr.mxu0 0.0
      %9251 = vmatpush1.msra.mxu0 0.0
      %9252 = vmatprep.subr.mxu0 0.0
      %9253 = vmatpush1.msra.mxu0 0.0
      %9254 = vmatprep.subr.mxu0 0.0
      %9255 = vmatpush1.msra.mxu0 0.0
      %9256 = vmatprep.subr.mxu0 0.0
      %9257 = vmatpush1.msra.mxu0 0.0
      %9258 = vmatprep.subr.mxu0 0.0
      %9259 = vmatpush1.msra.mxu0 0.0
      %9260 = vmatprep.subr.mxu0 0.0
      %9261 = vmatpush1.msra.mxu0 0.0
      %9262 = vmatprep.subr.mxu0 0.0
      %9263 = vmatpush1.msra.mxu0 0.0
      %9264 = vmatprep.subr.mxu0 0.0
      %9265 = vmatpush1.msra.mxu0 0.0
      %9266 = vmatprep.subr.mxu0 0.0
      %9267 = vmatpush1.msra.mxu0 0.0
      %9268 = vmatprep.subr.mxu0 0.0
      %9269 = vmatpush1.msra.mxu0 0.0
      %9270 = vmatprep.mubr.f32.mxu0 0.0
      %9271 = vmatmul.mubr.f32.gmra.mrb[0].mxu0 %v9188
      %v9272 = vpop.f32.mrb[0].mxu0
      %v9273 = vadd.f32 0.0, %v9272
      %v9274 = vpop.f32.mrb[0].mxu0
      %9275 = vdwg.mxu0
      %v9276 = vadd.f32 %v9175, %v9273
      %s9277 = scalar_lea.vmem %s7, 384
      %v9278 = vld [vmem:[%s9277] sm:$0xff]
      %v9279 = vld [vmem:[%s9277 + $0x8] sm:$0xff]
      %v9280 = vld [vmem:[%s9277 + $0x10] sm:$0xff]
      %v9281 = vld [vmem:[%s9277 + $0x18] sm:$0xff]
      %v9282 = vld [vmem:[%s9277 + $0x20] sm:$0xff]
      %v9283 = vld [vmem:[%s9277 + $0x28] sm:$0xff]
      %v9284 = vld [vmem:[%s9277 + $0x30] sm:$0xff]
      %v9285 = vld [vmem:[%s9277 + $0x38] sm:$0xff]
      %v9286 = vld [vmem:[%s9277 + $0x40] sm:$0xff]
      %v9287 = vld [vmem:[%s9277 + $0x48] sm:$0xff]
      %v9288 = vld [vmem:[%s9277 + $0x50] sm:$0xff]
      %v9289 = vld [vmem:[%s9277 + $0x58] sm:$0xff]
      %v9290 = vld [vmem:[%s9277 + $0x60] sm:$0xff]
      %v9291 = vld [vmem:[%s9277 + $0x68] sm:$0xff]
      %v9292 = vld [vmem:[%s9277 + $0x70] sm:$0xff]
      %v9293 = vld [vmem:[%s9277 + $0x78] sm:$0xff]
      %v9295 = vrot.slane %v9188, 1
      %9297 = vmatprep.subr.mxu0 0.0
      %9298 = vmatpush1.msra.mxu0 %v9278
      %9299 = vmatprep.subr.mxu0 0.0
      %9300 = vmatpush1.msra.mxu0 %v9279
      %9301 = vmatprep.subr.mxu0 0.0
      %9302 = vmatpush1.msra.mxu0 %v9280
      %9303 = vmatprep.subr.mxu0 0.0
      %9304 = vmatpush1.msra.mxu0 %v9281
      %9305 = vmatprep.subr.mxu0 0.0
      %9306 = vmatpush1.msra.mxu0 %v9282
      %9307 = vmatprep.subr.mxu0 0.0
      %9308 = vmatpush1.msra.mxu0 %v9283
      %9309 = vmatprep.subr.mxu0 0.0
      %9310 = vmatpush1.msra.mxu0 %v9284
      %9311 = vmatprep.subr.mxu0 0.0
      %9312 = vmatpush1.msra.mxu0 %v9285
      %9313 = vmatprep.subr.mxu0 0.0
      %9314 = vmatpush1.msra.mxu0 %v9286
      %9315 = vmatprep.subr.mxu0 0.0
      %9316 = vmatpush1.msra.mxu0 %v9287
      %9317 = vmatprep.subr.mxu0 0.0
      %9318 = vmatpush1.msra.mxu0 %v9288
      %9319 = vmatprep.subr.mxu0 0.0
      %9320 = vmatpush1.msra.mxu0 %v9289
      %9321 = vmatprep.subr.mxu0 0.0
      %9322 = vmatpush1.msra.mxu0 %v9290
      %9323 = vmatprep.subr.mxu0 0.0
      %9324 = vmatpush1.msra.mxu0 %v9291
      %9325 = vmatprep.subr.mxu0 0.0
      %9326 = vmatpush1.msra.mxu0 %v9292
      %9327 = vmatprep.subr.mxu0 0.0
      %9328 = vmatpush1.msra.mxu0 %v9293
      %9329 = vmatprep.subr.mxu0 0.0
      %9330 = vmatpush1.msra.mxu0 0.0
      %9331 = vmatprep.subr.mxu0 0.0
      %9332 = vmatpush1.msra.mxu0 0.0
      %9333 = vmatprep.subr.mxu0 0.0
      %9334 = vmatpush1.msra.mxu0 0.0
      %9335 = vmatprep.subr.mxu0 0.0
      %9336 = vmatpush1.msra.mxu0 0.0
      %9337 = vmatprep.subr.mxu0 0.0
      %9338 = vmatpush1.msra.mxu0 0.0
      %9339 = vmatprep.subr.mxu0 0.0
      %9340 = vmatpush1.msra.mxu0 0.0
      %9341 = vmatprep.subr.mxu0 0.0
      %9342 = vmatpush1.msra.mxu0 0.0
      %9343 = vmatprep.subr.mxu0 0.0
      %9344 = vmatpush1.msra.mxu0 0.0
      %9345 = vmatprep.subr.mxu0 0.0
      %9346 = vmatpush1.msra.mxu0 0.0
      %9347 = vmatprep.subr.mxu0 0.0
      %9348 = vmatpush1.msra.mxu0 0.0
      %9349 = vmatprep.subr.mxu0 0.0
      %9350 = vmatpush1.msra.mxu0 0.0
      %9351 = vmatprep.subr.mxu0 0.0
      %9352 = vmatpush1.msra.mxu0 0.0
      %9353 = vmatprep.subr.mxu0 0.0
      %9354 = vmatpush1.msra.mxu0 0.0
      %9355 = vmatprep.subr.mxu0 0.0
      %9356 = vmatpush1.msra.mxu0 0.0
      %9357 = vmatprep.subr.mxu0 0.0
      %9358 = vmatpush1.msra.mxu0 0.0
      %9359 = vmatprep.subr.mxu0 0.0
      %9360 = vmatpush1.msra.mxu0 0.0
      %9361 = vmatprep.mubr.f32.mxu0 0.0
      %9362 = vmatmul.mubr.f32.gmra.mrb[0].mxu0 %v9295
      %v9363 = vpop.f32.mrb[0].mxu0
      %v9364 = vadd.f32 0.0, %v9363
      %v9365 = vpop.f32.mrb[0].mxu0
      %9366 = vdwg.mxu0
      %v9367 = vadd.f32 %v9276, %v9364
      %v9368 = vld [vmem:[%s8] sm:$0x1]
      %v9369 = vadd.f32 %v9367, %v9368
      %v9370 = vmax.f32 %v9369, 0.0
      %v9371 = vld [vmem:[%s9] sm:$0x1]
      %v9372 = vmul.f32 %v9370, %v9371
      %vm9373 = vcmask 1040384
      %v9374 = vsel %vm9373, %v9372, 0.0
      %9375 = vadd.xlane.f32.xlu0 %v9374
      %v9376 = vpop.xlane.xlu0 %9375
      %v9377 = vld [vmem:[#allocation7] sm:$0x1]
      %v9378 = vadd.f32 %v9376, %v9377
      %v9379 = vsub.f32 0.0, %v9378
      %v9380 = vmul.f32 %v9379, 1.442695
      %v9381 = vpow.pop %v9380
      %v9382 = vadd.f32 %v9381, 1.0
      %v9383 = vrcp.pop %v9382
      %v9384 = vmul.f32 1.0, %v9383
      %vm9385 = vcmask 0
      %9386 = vst.msk [vmem:[%s384] sm:$0x1] %vm9385, %v9384
      %p9387 = scmp.lt.s32.totalorder %s24, 1
      %s9388 = scalar_select %p9387, %s24, 1
      %s9389 = scalar_lea.vmem %s11, %s9388
      // Predicated region
      $region65: #{net_forward.1} parent=63 // pred_check
        %p9390 = pneg %p278
      $region66: #{net_forward.1} parent=63 // pred_check_branch
        %9392 = sbr.rel (%p9390) target = $region68
      $region67: #{net_forward.1} parent=63 // pred_region
        _
      $region68: #{net_forward.1} parent=63 // pred_fallthru
        _
    $region64: #{net_forward.1} parent=5 // pred_fallthru
      _
    %p9393 = scmp.le.s32.totalorder 2, %s19
    // Predicated region
    $region69: #{net_forward.1} parent=5 // pred_check
      %p9394 = pneg %p9393
    $region70: #{net_forward.1} parent=5 // pred_check_branch
      %9396 = sbr.rel (%p9394) target = $region72
    $region71: #{net_forward.1} parent=5 // pred_region
      %s9397 = ssub.s32 %s19, 2
      // Predicated region
      $region73: #{net_forward.1} parent=71 // pred_check
        %p9398 = pneg %p284
      $region74: #{net_forward.1} parent=71 // pred_check_branch
        %9400 = sbr.rel (%p9398) target = $region76
      $region75: #{net_forward.1} parent=71 // pred_region
        %p9401 = scmp.lt.s32.totalorder %s25, 1
        %s9402 = scalar_select %p9401, %s25, 1
        %s9403 = scalar_lea.vmem %s11, %s9402
      $region76: #{net_forward.1} parent=71 // pred_fallthru
        _
    $region72: #{net_forward.1} parent=5 // pred_fallthru
      _
  $region6: #{net_forward.1} parent=0 // loop_footer
    %s23 = sadd.s32 1, %s19
  $region7: #{net_forward.1} parent=0 // loop_footer_branch
    %18 = sbr.rel target = $region3
  $region8: #{net_forward.1} parent=0 // loop_exit
    _

</llo_original>
